<compile_context>
chip_gen: v5e
topology: v5e:2x2
jax: 0.10.0
libtpu: 0.0.40
codegen_flags: <defaults>
</compile_context>

<pallas_src>
import functools
import math

import jax
import jax.numpy as jnp
from jax import lax
from jax.experimental import pallas as pl
from jax.experimental.pallas import tpu as pltpu

LANE = 128          # channel (lane) dims padded to a multiple of this
BN_EPS = 1e-5


def _round_up(x, m):
    return (x + m - 1) // m * m


def _slab_bytes(rows, cols, itemsize):
    """VMEM footprint estimate of a (rows, cols) slab after layout padding."""
    return _round_up(max(rows, 1), 8) * _round_up(max(cols, 1), LANE) * itemsize


def _derive_vmem_limit(scratch_bytes, block_bytes):
    """Mosaic VMEM budget from the actual footprint + device capacity."""
    try:
        cap = int(pltpu.get_tpu_info().vmem_capacity_bytes)
    except Exception:                       # fall back to the smallest gen
        cap = 64 * 1024 * 1024
    need = scratch_bytes + 2 * block_bytes  # in/out blocks are double-buffered
    limit = max(2 * need, 32 * 1024 * 1024)
    return int(min(limit, cap - (8 * 1024 * 1024)))


# ----------------------------------------------------------------------------
# Fused double_conv kernel.  One grid step = one batch element ("parallel").
#
# Flattened-padding trick: the padded image ((H+2) rows x WA cols, C) is
# stored as a flat (LP, C) scratch (row-major).  The conv output at flat index
# m = i*WA + j only needs flat indices m + ky*WA + kx, so every 3x3 tap is a
# contiguous row window of the scratch -> 2-D matmul.  Outputs are computed
# "wide" (WA columns per row); the junk columns are masked to zero so they
# double as the zero padding when the stage-1 result is written back into the
# stage-2 padded scratch, and they are sliced off by the wrapper at the end.
# ----------------------------------------------------------------------------
def _make_double_conv_kernel(*, n_in, H, W, WA, MA, LP, cins, cmid, cout, tm):
    cin = sum(cins)
    lo = WA + 1                    # flat offset where the padded interior starts
    hi = (H + 1) * WA + 1          # end of interior == start of tail border
    offs = [ky * WA + kx for ky in range(3) for kx in range(3)]

    # Row-tiles of the flattened wide image (sizes stay multiples of 8).
    tiles, s = [], 0
    while s < MA:
        size = min(tm, MA - s)
        tiles.append((s, size))
        s += size

    def _col_mask(start, size):
        # 1.0 on real columns (col < W), 0.0 on the junk wide columns.
        idx = lax.broadcasted_iota(jnp.int32, (size, 1), 0) + start
        return ((idx % WA) < W).astype(jnp.float32)

    def kernel(*refs):
        x_refs = refs[0:n_in]                              # (1, MA, cins[i]) bf16
        w1_ref, s1_ref, t1_ref, w2_ref, s2_ref, t2_ref = refs[n_in:n_in + 6]
        o_ref = refs[n_in + 6]                             # (1, MA, cout) bf16
        p1_ref, p2_ref = refs[n_in + 7:n_in + 9]           # (LP,cin)/(LP,cmid) bf16

        # ---- build the padded stage-1 input in VMEM (no HBM padding).
        # Concat is fused: each input goes to its own lane range.  The junk
        # wide columns arrive zero from the wrapper pad and become the conv's
        # zero padding. ----
        p1_ref[0:lo, :] = jnp.zeros((lo, cin), jnp.bfloat16)
        p1_ref[hi:LP, :] = jnp.zeros((LP - hi, cin), jnp.bfloat16)
        off_c = 0
        for x_ref, c in zip(x_refs, cins):
            p1_ref[lo:lo + MA, off_c:off_c + c] = x_ref[0]
            off_c += c

        # ---- stage-2 padded scratch borders ----
        p2_ref[0:lo, :] = jnp.zeros((lo, cmid), jnp.bfloat16)
        p2_ref[hi:LP, :] = jnp.zeros((LP - hi, cmid), jnp.bfloat16)

        # ---- stage 1: conv3x3 + BN + ReLU, M-tiled (acc stays in vregs) ----
        for start, size in tiles:
            acc = jnp.zeros((size, cmid), jnp.float32)
            for t, off in enumerate(offs):
                acc = acc + jnp.dot(
                    p1_ref[off + start:off + start + size, :], w1_ref[t],
                    preferred_element_type=jnp.float32)
            y1 = jnp.maximum(acc * s1_ref[...] + t1_ref[...], 0.0)
            y1 = y1 * _col_mask(start, size)   # load-bearing: stage-2 zero pad
            p2_ref[lo + start:lo + start + size, :] = y1.astype(jnp.bfloat16)

        # ---- stage 2: conv3x3 + BN + ReLU; intermediate never leaves VMEM ----
        for start, size in tiles:
            acc = jnp.zeros((size, cout), jnp.float32)
            for t, off in enumerate(offs):
                acc = acc + jnp.dot(
                    p2_ref[off + start:off + start + size, :], w2_ref[t],
                    preferred_element_type=jnp.float32)
            y2 = jnp.maximum(acc * s2_ref[...] + t2_ref[...], 0.0)
            o_ref[0, start:start + size, :] = y2.astype(o_ref.dtype)

    return kernel


def fused_double_conv(inputs_nhwc, kp, out_ch):
    """inputs_nhwc: list of (B,H,W,C_i) bf16 arrays whose channel concat is the
    double_conv input (the concat itself is fused into the kernel).
    Returns (B, H, W, out_ch) bf16."""
    B, H, W = inputs_nhwc[0].shape[:3]
    cins = tuple(int(a.shape[-1]) for a in inputs_nhwc)
    for a in inputs_nhwc:
        assert a.shape[:3] == (B, H, W)
    cin = sum(cins)
    assert int(kp["w1"].shape[1]) == cin
    n_in = len(inputs_nhwc)
    cmid = int(kp["s1"].shape[-1])
    cout = int(kp["s2"].shape[-1])

    WA = _round_up(W + 2, 8)                # wide row width (junk cols, aligned)
    MA = H * WA                             # rows of the flattened wide image
    LP = _round_up((H + 2) * WA + 2, 8)     # flat padded-image scratch length
    TM = min(MA, 256)                       # M-tile (rows) for the accumulators

    # Right-pad zero columns to WA and flatten rows: the kernel then builds the
    # fully padded image with contiguous VMEM stores.  The pad MUST be zero
    # (it becomes the conv right/left padding).
    xw = [jnp.pad(a.astype(jnp.bfloat16), ((0, 0), (0, 0), (0, WA - W), (0, 0)))
          .reshape(B, MA, c) for a, c in zip(inputs_nhwc, cins)]

    kernel = _make_double_conv_kernel(n_in=n_in, H=H, W=W, WA=WA, MA=MA, LP=LP,
                                      cins=cins, cmid=cmid, cout=cout, tm=TM)

    in_specs = (
        [pl.BlockSpec((1, MA, c), lambda b: (b, 0, 0)) for c in cins]
        + [pl.BlockSpec((9, cin, cmid), lambda b: (0, 0, 0)),
           pl.BlockSpec((1, cmid), lambda b: (0, 0)),
           pl.BlockSpec((1, cmid), lambda b: (0, 0)),
           pl.BlockSpec((9, cmid, cout), lambda b: (0, 0, 0)),
           pl.BlockSpec((1, cout), lambda b: (0, 0)),
           pl.BlockSpec((1, cout), lambda b: (0, 0))])
    scratch_shapes = [pltpu.VMEM((LP, cin), jnp.bfloat16),
                      pltpu.VMEM((LP, cmid), jnp.bfloat16)]

    scratch_bytes = _slab_bytes(LP, cin, 2) + _slab_bytes(LP, cmid, 2)
    block_bytes = (sum(_slab_bytes(MA, c, 2) for c in cins)
                   + _slab_bytes(MA, cout, 2)
                   + 9 * (_slab_bytes(cin, cmid, 2) + _slab_bytes(cmid, cout, 2))
                   + 4 * _slab_bytes(1, cmid, 4))
    vmem_limit = _derive_vmem_limit(scratch_bytes, block_bytes)

    flops = 2 * B * MA * 9 * (cin * cmid + cmid * cout)
    bytes_accessed = (sum(int(x.size) * 2 for x in xw)
                      + B * MA * cout * 2
                      + 9 * cin * cmid * 2 + 9 * cmid * cout * 2)

    out_wide = pl.pallas_call(
        kernel,
        out_shape=jax.ShapeDtypeStruct((B, MA, cout), jnp.bfloat16),
        grid_spec=pltpu.PrefetchScalarGridSpec(
            num_scalar_prefetch=0,
            grid=(B,),
            in_specs=in_specs,
            out_specs=pl.BlockSpec((1, MA, cout), lambda b: (b, 0, 0)),
            scratch_shapes=scratch_shapes),
        compiler_params=pltpu.CompilerParams(
            dimension_semantics=("parallel",),
            vmem_limit_bytes=vmem_limit),
        cost_estimate=pl.CostEstimate(
            flops=flops, transcendentals=0, bytes_accessed=bytes_accessed),
    )(*xw, kp["w1"], kp["s1"], kp["t1"], kp["w2"], kp["s2"], kp["t2"])

    # Drop the junk wide columns and the zero-padded channels (stays bf16).
    return out_wide.reshape(B, H, WA, cout)[:, :, :W, :out_ch]


# ----------------------------------------------------------------------------
# Bilinear 2x upsample (align_corners=True), as interpolation matmuls (XLA).
# ----------------------------------------------------------------------------
def _interp_matrix(n_in, n_out):
    if n_in == 1:
        return jnp.ones((n_out, n_in), jnp.float32)
    src = jnp.arange(n_out, dtype=jnp.float32) * ((n_in - 1) / (n_out - 1))
    i0 = jnp.clip(jnp.floor(src).astype(jnp.int32), 0, n_in - 2)
    frac = src - i0.astype(jnp.float32)
    rows = jnp.arange(n_out)
    a = jnp.zeros((n_out, n_in), jnp.float32)
    a = a.at[rows, i0].add(1.0 - frac)
    a = a.at[rows, i0 + 1].add(frac)
    return a


def _bilinear_up_x2(x_nhwc):
    _, h, w, _ = x_nhwc.shape
    a_h = _interp_matrix(h, 2 * h)
    a_w = _interp_matrix(w, 2 * w)
    y = jnp.einsum("oh,bhwc->bowc", a_h, x_nhwc)
    y = jnp.einsum("pw,bowc->bopc", a_w, y)
    return y


def up_forward(x1_nchw, x2_nchw, kparams, *, out_ch):
    """Equivalent of up.forward (NCHW in / NCHW out, bf16 out):
       double_conv(cat([x2, bilinear_up_2x(x1)], dim=1))."""
    x1 = jnp.transpose(x1_nchw, (0, 2, 3, 1))                    # NCHW -> NHWC
    x1_up = _bilinear_up_x2(x1).astype(jnp.bfloat16)
    inputs = []
    if x2_nchw is not None:
        x2 = jnp.transpose(x2_nchw, (0, 2, 3, 1)).astype(jnp.bfloat16)
        assert x2.shape[1:3] == x1_up.shape[1:3], "skip/upsample size mismatch"
        inputs.append(x2)                           # torch.cat([x2, x1], dim=1)
    inputs.append(x1_up)
    y = fused_double_conv(inputs, kparams, out_ch)               # (B,H,W,out)
    return jnp.transpose(y, (0, 3, 1, 2))                        # NHWC -> NCHW


# ----------------------------------------------------------------------------
# Parameters (deterministic, PyTorch-shaped) and kernel-format preparation.
# ----------------------------------------------------------------------------
def init_up_params(key, in_ch, out_ch):
    ks = jax.random.split(key, 12)

    def conv(kw, kb, cin, cout):
        bound = 1.0 / math.sqrt(cin * 9)
        w = jax.random.uniform(kw, (cout, cin, 3, 3), jnp.float32, -bound, bound)
        b = jax.random.uniform(kb, (cout,), jnp.float32, -bound, bound)
        # OIHW -> (tap = kh*3 + kw, Cin, Cout)
        return jnp.transpose(w, (2, 3, 1, 0)).reshape(9, cin, cout), b

    def bn(kg, kb, km, kv, c):
        return dict(g=1.0 + 0.1 * jax.random.normal(kg, (c,), jnp.float32),
                    b=0.1 * jax.random.normal(kb, (c,), jnp.float32),
                    m=0.1 * jax.random.normal(km, (c,), jnp.float32),
                    v=jax.random.uniform(kv, (c,), jnp.float32, 0.5, 1.5))

    w1, b1 = conv(ks[0], ks[1], in_ch, out_ch)
    w2, b2 = conv(ks[2], ks[3], out_ch, out_ch)
    return dict(w1=w1, bias1=b1, bn1=bn(ks[4], ks[5], ks[6], ks[7], out_ch),
                w2=w2, bias2=b2, bn2=bn(ks[8], ks[9], ks[10], ks[11], out_ch))


def _fold_bn(bn, bias, eps=BN_EPS):
    # eval-mode BN folded with the conv bias: y = conv_nobias * scale + shift
    scale = bn["g"] / jnp.sqrt(bn["v"] + eps)
    shift = bn["b"] - bn["m"] * scale + bias * scale
    return scale, shift


def prepare_kernel_params(raw):
    """bf16 weights, channel padding to a lane multiple (unsplit K), bias
    folded into the BN shift."""
    out_ch = int(raw["w1"].shape[-1])
    cpad = _round_up(out_ch, LANE)
    po = cpad - out_ch

    w1 = jnp.pad(raw["w1"].astype(jnp.bfloat16), ((0, 0), (0, 0), (0, po)))
    w2 = jnp.pad(raw["w2"].astype(jnp.bfloat16), ((0, 0), (0, po), (0, po)))

    s1, t1 = _fold_bn(raw["bn1"], raw["bias1"])
    s2, t2 = _fold_bn(raw["bn2"], raw["bias2"])
    pad = lambda v: jnp.pad(v, (0, po)).reshape(1, cpad)   # zero scale/shift on
    return dict(w1=w1, w2=w2,                              # the padded channels
                s1=pad(s1), t1=pad(t1), s2=pad(s2), t2=pad(t2))


# ----------------------------------------------------------------------------
# Pure-JAX reference (same bf16 quantization points), for correctness check.
# ----------------------------------------------------------------------------
def _ref_conv_bn_relu(x, w9, scale, shift):
    cin, cout = w9.shape[1], w9.shape[2]
    y = lax.conv_general_dilated(x, w9.reshape(3, 3, cin, cout), (1, 1), "SAME",
                                 dimension_numbers=("NHWC", "HWIO", "NHWC"))
    return jnp.maximum(y * scale + shift, 0.0)


def ref_up_forward(x1_nchw, x2_nchw, raw):
    q = lambda a: a.astype(jnp.bfloat16).astype(jnp.float32)
    x1 = jnp.transpose(x1_nchw, (0, 2, 3, 1))
    xs = []
    if x2_nchw is not None:
        xs.append(q(jnp.transpose(x2_nchw, (0, 2, 3, 1))))
    xs.append(q(_bilinear_up_x2(x1)))
    x = jnp.concatenate(xs, axis=-1)
    s1, t1 = _fold_bn(raw["bn1"], raw["bias1"])
    s2, t2 = _fold_bn(raw["bn2"], raw["bias2"])
    y = _ref_conv_bn_relu(x, q(raw["w1"]), s1, t1)
    y = _ref_conv_bn_relu(q(y), q(raw["w2"]), s2, t2)
    return jnp.transpose(y, (0, 3, 1, 2))


if __name__ == "__main__":
    key = jax.random.PRNGKey(0)
    kx1, kx2, kp = jax.random.split(key, 3)

    B, in_ch, out_ch = 2, 4, 8
    c1 = in_ch // 2            # channels of x1 (upsampled path)
    c2 = in_ch - c1            # channels of x2 (skip connection)
    h = w = 8                  # x1 spatial; output spatial is 2h x 2w = 16x16

    x1 = jax.random.normal(kx1, (B, c1, h, w), jnp.float32)
    x2 = jax.random.normal(kx2, (B, c2, 2 * h, 2 * w), jnp.float32)

    raw = init_up_params(kp, in_ch, out_ch)
    kparams = prepare_kernel_params(raw)

    fwd = jax.jit(functools.partial(up_forward, out_ch=out_ch))
    out = jax.block_until_ready(fwd(x1, x2, kparams))

    ref = ref_up_forward(x1, x2, raw)
    assert out.shape == (B, out_ch, 2 * h, 2 * w), out.shape
    out32 = out.astype(jnp.float32)
    err = float(jnp.max(jnp.abs(out32 - ref)))
    assert jnp.allclose(out32, ref, atol=2e-2, rtol=2e-2), f"max abs err {err}"

    print("KERNEL_OK")
</pallas_src>

<mosaic_0001>
module attributes {stable_mosaic.version = 11 : i64} {
  func.func @kernel(%arg0: i32, %arg1: memref<1x384x2xbf16, #tpu.memory_space<vmem>>, %arg2: memref<1x384x2xbf16, #tpu.memory_space<vmem>>, %arg3: memref<9x4x128xbf16, #tpu.memory_space<vmem>>, %arg4: memref<1x128xf32, #tpu.memory_space<vmem>>, %arg5: memref<1x128xf32, #tpu.memory_space<vmem>>, %arg6: memref<9x128x128xbf16, #tpu.memory_space<vmem>>, %arg7: memref<1x128xf32, #tpu.memory_space<vmem>>, %arg8: memref<1x128xf32, #tpu.memory_space<vmem>>, %arg9: memref<1x384x128xbf16, #tpu.memory_space<vmem>>, %arg10: memref<440x4xbf16, #tpu.memory_space<vmem>>, %arg11: memref<440x128xbf16, #tpu.memory_space<vmem>>) attributes {dimension_semantics = [#tpu.dimension_semantics<parallel>], iteration_bounds = array<i64: 2>, scalar_prefetch = 0 : i64, scratch_operands = 2 : i64, tpu.core_type = #tpu.core_type<tc>, window_params = [{transform_indices = @transform_0, window_bounds = array<i64: 1, 384, 2>}, {transform_indices = @transform_1, window_bounds = array<i64: 1, 384, 2>}, {pipeline_mode = #tpu.pipeline_mode<synchronous>, transform_indices = @transform_2, window_bounds = array<i64: 9, 4, 128>}, {pipeline_mode = #tpu.pipeline_mode<synchronous>, transform_indices = @transform_3, window_bounds = array<i64: 1, 128>}, {pipeline_mode = #tpu.pipeline_mode<synchronous>, transform_indices = @transform_4, window_bounds = array<i64: 1, 128>}, {pipeline_mode = #tpu.pipeline_mode<synchronous>, transform_indices = @transform_5, window_bounds = array<i64: 9, 128, 128>}, {pipeline_mode = #tpu.pipeline_mode<synchronous>, transform_indices = @transform_6, window_bounds = array<i64: 1, 128>}, {pipeline_mode = #tpu.pipeline_mode<synchronous>, transform_indices = @transform_7, window_bounds = array<i64: 1, 128>}, {transform_indices = @transform_8, window_bounds = array<i64: 1, 384, 128>}]} {
    %cst = arith.constant 0.000000e+00 : bf16
    %0 = vector.broadcast %cst : bf16 to vector<25x4xbf16>
    %c0 = arith.constant 0 : index
    %c0_0 = arith.constant 0 : index
    %1 = vector.load %arg10[%c0, %c0_0] : memref<440x4xbf16, #tpu.memory_space<vmem>>, vector<25x4xbf16>
    tpu.vector_store %arg10[%c0, %c0_0], %0 {strides = array<i32>} : memref<440x4xbf16, #tpu.memory_space<vmem>>, vector<25x4xbf16>,
    %cst_1 = arith.constant 0.000000e+00 : bf16
    %2 = vector.broadcast %cst_1 : bf16 to vector<31x4xbf16>
    %c409 = arith.constant 409 : index
    %c0_2 = arith.constant 0 : index
    %3 = vector.load %arg10[%c409, %c0_2] : memref<440x4xbf16, #tpu.memory_space<vmem>>, vector<31x4xbf16>
    tpu.vector_store %arg10[%c409, %c0_2], %2 {strides = array<i32>} : memref<440x4xbf16, #tpu.memory_space<vmem>>, vector<31x4xbf16>,
    %c0_3 = arith.constant 0 : index
    %c0_4 = arith.constant 0 : index
    %c0_5 = arith.constant 0 : index
    %4 = vector.load %arg1[%c0_3, %c0_4, %c0_5] : memref<1x384x2xbf16, #tpu.memory_space<vmem>>, vector<1x384x2xbf16>
    %5 = vector.shape_cast %4 : vector<1x384x2xbf16> to vector<384x2xbf16>
    %c25 = arith.constant 25 : index
    %c0_6 = arith.constant 0 : index
    %6 = vector.load %arg10[%c25, %c0_6] : memref<440x4xbf16, #tpu.memory_space<vmem>>, vector<384x2xbf16>
    tpu.vector_store %arg10[%c25, %c0_6], %5 {strides = array<i32>} : memref<440x4xbf16, #tpu.memory_space<vmem>>, vector<384x2xbf16>,
    %c0_7 = arith.constant 0 : index
    %c0_8 = arith.constant 0 : index
    %c0_9 = arith.constant 0 : index
    %7 = vector.load %arg2[%c0_7, %c0_8, %c0_9] : memref<1x384x2xbf16, #tpu.memory_space<vmem>>, vector<1x384x2xbf16>
    %8 = vector.shape_cast %7 : vector<1x384x2xbf16> to vector<384x2xbf16>
    %c25_10 = arith.constant 25 : index
    %c2 = arith.constant 2 : index
    %9 = vector.load %arg10[%c25_10, %c2] : memref<440x4xbf16, #tpu.memory_space<vmem>>, vector<384x2xbf16>
    tpu.vector_store %arg10[%c25_10, %c2], %8 {strides = array<i32>} : memref<440x4xbf16, #tpu.memory_space<vmem>>, vector<384x2xbf16>,
    %cst_11 = arith.constant 0.000000e+00 : bf16
    %10 = vector.broadcast %cst_11 : bf16 to vector<25x128xbf16>
    %c0_12 = arith.constant 0 : index
    %c0_13 = arith.constant 0 : index
    %11 = vector.load %arg11[%c0_12, %c0_13] : memref<440x128xbf16, #tpu.memory_space<vmem>>, vector<25x128xbf16>
    tpu.vector_store %arg11[%c0_12, %c0_13], %10 {strides = array<i32>} : memref<440x128xbf16, #tpu.memory_space<vmem>>, vector<25x128xbf16>,
    %cst_14 = arith.constant 0.000000e+00 : bf16
    %12 = vector.broadcast %cst_14 : bf16 to vector<31x128xbf16>
    %c409_15 = arith.constant 409 : index
    %c0_16 = arith.constant 0 : index
    %13 = vector.load %arg11[%c409_15, %c0_16] : memref<440x128xbf16, #tpu.memory_space<vmem>>, vector<31x128xbf16>
    tpu.vector_store %arg11[%c409_15, %c0_16], %12 {strides = array<i32>} : memref<440x128xbf16, #tpu.memory_space<vmem>>, vector<31x128xbf16>,
    %cst_17 = arith.constant 0.000000e+00 : f32
    %14 = vector.broadcast %cst_17 : f32 to vector<256x128xf32>
    %c0_18 = arith.constant 0 : index
    %c0_19 = arith.constant 0 : index
    %15 = vector.load %arg10[%c0_18, %c0_19] : memref<440x4xbf16, #tpu.memory_space<vmem>>, vector<256x4xbf16>
    %c0_20 = arith.constant 0 : index
    %c0_21 = arith.constant 0 : index
    %c0_22 = arith.constant 0 : index
    %16 = vector.load %arg3[%c0_20, %c0_21, %c0_22] : memref<9x4x128xbf16, #tpu.memory_space<vmem>>, vector<1x4x128xbf16>
    %17 = vector.shape_cast %16 : vector<1x4x128xbf16> to vector<4x128xbf16>
    %cst_23 = arith.constant dense<0.000000e+00> : vector<256x128xf32>
    %18 = tpu.matmul %15, %17, %cst_23 {dimension_numbers = #tpu.dot_dimension_numbers<[1], [0], [0], [1], [0, 0, 1, 1], [], []>} : vector<256x4xbf16>, vector<4x128xbf16>, vector<256x128xf32> -> vector<256x128xf32>
    %19 = arith.addf %14, %18 : vector<256x128xf32>
    %c1 = arith.constant 1 : index
    %c0_24 = arith.constant 0 : index
    %20 = vector.load %arg10[%c1, %c0_24] : memref<440x4xbf16, #tpu.memory_space<vmem>>, vector<256x4xbf16>
    %c1_25 = arith.constant 1 : index
    %c0_26 = arith.constant 0 : index
    %c0_27 = arith.constant 0 : index
    %21 = vector.load %arg3[%c1_25, %c0_26, %c0_27] : memref<9x4x128xbf16, #tpu.memory_space<vmem>>, vector<1x4x128xbf16>
    %22 = vector.shape_cast %21 : vector<1x4x128xbf16> to vector<4x128xbf16>
    %cst_28 = arith.constant dense<0.000000e+00> : vector<256x128xf32>
    %23 = tpu.matmul %20, %22, %cst_28 {dimension_numbers = #tpu.dot_dimension_numbers<[1], [0], [0], [1], [0, 0, 1, 1], [], []>} : vector<256x4xbf16>, vector<4x128xbf16>, vector<256x128xf32> -> vector<256x128xf32>
    %24 = arith.addf %19, %23 : vector<256x128xf32>
    %c2_29 = arith.constant 2 : index
    %c0_30 = arith.constant 0 : index
    %25 = vector.load %arg10[%c2_29, %c0_30] : memref<440x4xbf16, #tpu.memory_space<vmem>>, vector<256x4xbf16>
    %c2_31 = arith.constant 2 : index
    %c0_32 = arith.constant 0 : index
    %c0_33 = arith.constant 0 : index
    %26 = vector.load %arg3[%c2_31, %c0_32, %c0_33] : memref<9x4x128xbf16, #tpu.memory_space<vmem>>, vector<1x4x128xbf16>
    %27 = vector.shape_cast %26 : vector<1x4x128xbf16> to vector<4x128xbf16>
    %cst_34 = arith.constant dense<0.000000e+00> : vector<256x128xf32>
    %28 = tpu.matmul %25, %27, %cst_34 {dimension_numbers = #tpu.dot_dimension_numbers<[1], [0], [0], [1], [0, 0, 1, 1], [], []>} : vector<256x4xbf16>, vector<4x128xbf16>, vector<256x128xf32> -> vector<256x128xf32>
    %29 = arith.addf %24, %28 : vector<256x128xf32>
    %c24 = arith.constant 24 : index
    %c0_35 = arith.constant 0 : index
    %30 = vector.load %arg10[%c24, %c0_35] : memref<440x4xbf16, #tpu.memory_space<vmem>>, vector<256x4xbf16>
    %c3 = arith.constant 3 : index
    %c0_36 = arith.constant 0 : index
    %c0_37 = arith.constant 0 : index
    %31 = vector.load %arg3[%c3, %c0_36, %c0_37] : memref<9x4x128xbf16, #tpu.memory_space<vmem>>, vector<1x4x128xbf16>
    %32 = vector.shape_cast %31 : vector<1x4x128xbf16> to vector<4x128xbf16>
    %cst_38 = arith.constant dense<0.000000e+00> : vector<256x128xf32>
    %33 = tpu.matmul %30, %32, %cst_38 {dimension_numbers = #tpu.dot_dimension_numbers<[1], [0], [0], [1], [0, 0, 1, 1], [], []>} : vector<256x4xbf16>, vector<4x128xbf16>, vector<256x128xf32> -> vector<256x128xf32>
    %34 = arith.addf %29, %33 : vector<256x128xf32>
    %c25_39 = arith.constant 25 : index
    %c0_40 = arith.constant 0 : index
    %35 = vector.load %arg10[%c25_39, %c0_40] : memref<440x4xbf16, #tpu.memory_space<vmem>>, vector<256x4xbf16>
    %c4 = arith.constant 4 : index
    %c0_41 = arith.constant 0 : index
    %c0_42 = arith.constant 0 : index
    %36 = vector.load %arg3[%c4, %c0_41, %c0_42] : memref<9x4x128xbf16, #tpu.memory_space<vmem>>, vector<1x4x128xbf16>
    %37 = vector.shape_cast %36 : vector<1x4x128xbf16> to vector<4x128xbf16>
    %cst_43 = arith.constant dense<0.000000e+00> : vector<256x128xf32>
    %38 = tpu.matmul %35, %37, %cst_43 {dimension_numbers = #tpu.dot_dimension_numbers<[1], [0], [0], [1], [0, 0, 1, 1], [], []>} : vector<256x4xbf16>, vector<4x128xbf16>, vector<256x128xf32> -> vector<256x128xf32>
    %39 = arith.addf %34, %38 : vector<256x128xf32>
    %c26 = arith.constant 26 : index
    %c0_44 = arith.constant 0 : index
    %40 = vector.load %arg10[%c26, %c0_44] : memref<440x4xbf16, #tpu.memory_space<vmem>>, vector<256x4xbf16>
    %c5 = arith.constant 5 : index
    %c0_45 = arith.constant 0 : index
    %c0_46 = arith.constant 0 : index
    %41 = vector.load %arg3[%c5, %c0_45, %c0_46] : memref<9x4x128xbf16, #tpu.memory_space<vmem>>, vector<1x4x128xbf16>
    %42 = vector.shape_cast %41 : vector<1x4x128xbf16> to vector<4x128xbf16>
    %cst_47 = arith.constant dense<0.000000e+00> : vector<256x128xf32>
    %43 = tpu.matmul %40, %42, %cst_47 {dimension_numbers = #tpu.dot_dimension_numbers<[1], [0], [0], [1], [0, 0, 1, 1], [], []>} : vector<256x4xbf16>, vector<4x128xbf16>, vector<256x128xf32> -> vector<256x128xf32>
    %44 = arith.addf %39, %43 : vector<256x128xf32>
    %c48 = arith.constant 48 : index
    %c0_48 = arith.constant 0 : index
    %45 = vector.load %arg10[%c48, %c0_48] : memref<440x4xbf16, #tpu.memory_space<vmem>>, vector<256x4xbf16>
    %c6 = arith.constant 6 : index
    %c0_49 = arith.constant 0 : index
    %c0_50 = arith.constant 0 : index
    %46 = vector.load %arg3[%c6, %c0_49, %c0_50] : memref<9x4x128xbf16, #tpu.memory_space<vmem>>, vector<1x4x128xbf16>
    %47 = vector.shape_cast %46 : vector<1x4x128xbf16> to vector<4x128xbf16>
    %cst_51 = arith.constant dense<0.000000e+00> : vector<256x128xf32>
    %48 = tpu.matmul %45, %47, %cst_51 {dimension_numbers = #tpu.dot_dimension_numbers<[1], [0], [0], [1], [0, 0, 1, 1], [], []>} : vector<256x4xbf16>, vector<4x128xbf16>, vector<256x128xf32> -> vector<256x128xf32>
    %49 = arith.addf %44, %48 : vector<256x128xf32>
    %c49 = arith.constant 49 : index
    %c0_52 = arith.constant 0 : index
    %50 = vector.load %arg10[%c49, %c0_52] : memref<440x4xbf16, #tpu.memory_space<vmem>>, vector<256x4xbf16>
    %c7 = arith.constant 7 : index
    %c0_53 = arith.constant 0 : index
    %c0_54 = arith.constant 0 : index
    %51 = vector.load %arg3[%c7, %c0_53, %c0_54] : memref<9x4x128xbf16, #tpu.memory_space<vmem>>, vector<1x4x128xbf16>
    %52 = vector.shape_cast %51 : vector<1x4x128xbf16> to vector<4x128xbf16>
    %cst_55 = arith.constant dense<0.000000e+00> : vector<256x128xf32>
    %53 = tpu.matmul %50, %52, %cst_55 {dimension_numbers = #tpu.dot_dimension_numbers<[1], [0], [0], [1], [0, 0, 1, 1], [], []>} : vector<256x4xbf16>, vector<4x128xbf16>, vector<256x128xf32> -> vector<256x128xf32>
    %54 = arith.addf %49, %53 : vector<256x128xf32>
    %c50 = arith.constant 50 : index
    %c0_56 = arith.constant 0 : index
    %55 = vector.load %arg10[%c50, %c0_56] : memref<440x4xbf16, #tpu.memory_space<vmem>>, vector<256x4xbf16>
    %c8 = arith.constant 8 : index
    %c0_57 = arith.constant 0 : index
    %c0_58 = arith.constant 0 : index
    %56 = vector.load %arg3[%c8, %c0_57, %c0_58] : memref<9x4x128xbf16, #tpu.memory_space<vmem>>, vector<1x4x128xbf16>
    %57 = vector.shape_cast %56 : vector<1x4x128xbf16> to vector<4x128xbf16>
    %cst_59 = arith.constant dense<0.000000e+00> : vector<256x128xf32>
    %58 = tpu.matmul %55, %57, %cst_59 {dimension_numbers = #tpu.dot_dimension_numbers<[1], [0], [0], [1], [0, 0, 1, 1], [], []>} : vector<256x4xbf16>, vector<4x128xbf16>, vector<256x128xf32> -> vector<256x128xf32>
    %59 = arith.addf %54, %58 : vector<256x128xf32>
    %c0_60 = arith.constant 0 : index
    %c0_61 = arith.constant 0 : index
    %60 = vector.load %arg4[%c0_60, %c0_61] : memref<1x128xf32, #tpu.memory_space<vmem>>, vector<1x128xf32>
    %61 = vector.broadcast %60 : vector<1x128xf32> to vector<256x128xf32>
    %62 = arith.mulf %59, %61 : vector<256x128xf32>
    %c0_62 = arith.constant 0 : index
    %c0_63 = arith.constant 0 : index
    %63 = vector.load %arg5[%c0_62, %c0_63] : memref<1x128xf32, #tpu.memory_space<vmem>>, vector<1x128xf32>
    %64 = vector.broadcast %63 : vector<1x128xf32> to vector<256x128xf32>
    %65 = arith.addf %62, %64 : vector<256x128xf32>
    %cst_64 = arith.constant 0.000000e+00 : f32
    %66 = vector.broadcast %cst_64 : f32 to vector<256x128xf32>
    %67 = arith.maximumf %65, %66 : vector<256x128xf32>
    %68 = tpu.iota {dimensions = array<i32: 0>} : vector<256x1xi32>
    %c0_i32 = arith.constant 0 : i32
    %69 = vector.broadcast %c0_i32 : i32 to vector<256x1xi32>
    %70 = arith.addi %68, %69 : vector<256x1xi32>
    %c24_i32 = arith.constant 24 : i32
    %c0_i32_65 = arith.constant 0 : i32
    %71 = arith.cmpi eq, %c24_i32, %c0_i32_65 : i32
    %c1_i32 = arith.constant 1 : i32
    %72 = arith.select %71, %c1_i32, %c24_i32 : i32
    %73 = vector.broadcast %72 : i32 to vector<256x1xi32>
    %74 = arith.remsi %70, %73 : vector<256x1xi32>
    %c0_i32_66 = arith.constant 0 : i32
    %75 = vector.broadcast %c0_i32_66 : i32 to vector<256x1xi32>
    %76 = arith.cmpi ne, %74, %75 : vector<256x1xi32>
    %c0_i32_67 = arith.constant 0 : i32
    %77 = vector.broadcast %c0_i32_67 : i32 to vector<256x1xi32>
    %78 = arith.cmpi slt, %74, %77 : vector<256x1xi32>
    %c0_i32_68 = arith.constant 0 : i32
    %79 = arith.cmpi slt, %72, %c0_i32_68 : i32
    %80 = vector.broadcast %79 : i1 to vector<256x1xi1>
    %81 = vector.broadcast %80 : vector<256x1xi1> to vector<256x1xi1>
    %82 = arith.xori %78, %81 : vector<256x1xi1>
    %83 = arith.andi %82, %76 : vector<256x1xi1>
    %84 = vector.broadcast %72 : i32 to vector<256x1xi32>
    %85 = arith.addi %74, %84 : vector<256x1xi32>
    %86 = arith.select %83, %85, %74 : vector<256x1xi1>, vector<256x1xi32>
    %c16_i32 = arith.constant 16 : i32
    %87 = vector.broadcast %c16_i32 : i32 to vector<256x1xi32>
    %88 = arith.cmpi slt, %86, %87 : vector<256x1xi32>
    %89 = arith.extui %88 : vector<256x1xi1> to vector<256x1xi32>
    %90 = arith.sitofp %89 : vector<256x1xi32> to vector<256x1xf32>
    %91 = vector.broadcast %90 : vector<256x1xf32> to vector<256x128xf32>
    %92 = arith.mulf %67, %91 : vector<256x128xf32>
    %93 = arith.truncf %92 : vector<256x128xf32> to vector<256x128xbf16>
    %c25_69 = arith.constant 25 : index
    %c0_70 = arith.constant 0 : index
    %94 = vector.load %arg11[%c25_69, %c0_70] : memref<440x128xbf16, #tpu.memory_space<vmem>>, vector<256x128xbf16>
    tpu.vector_store %arg11[%c25_69, %c0_70], %93 {strides = array<i32>} : memref<440x128xbf16, #tpu.memory_space<vmem>>, vector<256x128xbf16>,
    %cst_71 = arith.constant 0.000000e+00 : f32
    %95 = vector.broadcast %cst_71 : f32 to vector<128x128xf32>
    %c256 = arith.constant 256 : index
    %c0_72 = arith.constant 0 : index
    %96 = vector.load %arg10[%c256, %c0_72] : memref<440x4xbf16, #tpu.memory_space<vmem>>, vector<128x4xbf16>
    %c0_73 = arith.constant 0 : index
    %c0_74 = arith.constant 0 : index
    %c0_75 = arith.constant 0 : index
    %97 = vector.load %arg3[%c0_73, %c0_74, %c0_75] : memref<9x4x128xbf16, #tpu.memory_space<vmem>>, vector<1x4x128xbf16>
    %98 = vector.shape_cast %97 : vector<1x4x128xbf16> to vector<4x128xbf16>
    %cst_76 = arith.constant dense<0.000000e+00> : vector<128x128xf32>
    %99 = tpu.matmul %96, %98, %cst_76 {dimension_numbers = #tpu.dot_dimension_numbers<[1], [0], [0], [1], [0, 0, 1, 1], [], []>} : vector<128x4xbf16>, vector<4x128xbf16>, vector<128x128xf32> -> vector<128x128xf32>
    %100 = arith.addf %95, %99 : vector<128x128xf32>
    %c257 = arith.constant 257 : index
    %c0_77 = arith.constant 0 : index
    %101 = vector.load %arg10[%c257, %c0_77] : memref<440x4xbf16, #tpu.memory_space<vmem>>, vector<128x4xbf16>
    %c1_78 = arith.constant 1 : index
    %c0_79 = arith.constant 0 : index
    %c0_80 = arith.constant 0 : index
    %102 = vector.load %arg3[%c1_78, %c0_79, %c0_80] : memref<9x4x128xbf16, #tpu.memory_space<vmem>>, vector<1x4x128xbf16>
    %103 = vector.shape_cast %102 : vector<1x4x128xbf16> to vector<4x128xbf16>
    %cst_81 = arith.constant dense<0.000000e+00> : vector<128x128xf32>
    %104 = tpu.matmul %101, %103, %cst_81 {dimension_numbers = #tpu.dot_dimension_numbers<[1], [0], [0], [1], [0, 0, 1, 1], [], []>} : vector<128x4xbf16>, vector<4x128xbf16>, vector<128x128xf32> -> vector<128x128xf32>
    %105 = arith.addf %100, %104 : vector<128x128xf32>
    %c258 = arith.constant 258 : index
    %c0_82 = arith.constant 0 : index
    %106 = vector.load %arg10[%c258, %c0_82] : memref<440x4xbf16, #tpu.memory_space<vmem>>, vector<128x4xbf16>
    %c2_83 = arith.constant 2 : index
    %c0_84 = arith.constant 0 : index
    %c0_85 = arith.constant 0 : index
    %107 = vector.load %arg3[%c2_83, %c0_84, %c0_85] : memref<9x4x128xbf16, #tpu.memory_space<vmem>>, vector<1x4x128xbf16>
    %108 = vector.shape_cast %107 : vector<1x4x128xbf16> to vector<4x128xbf16>
    %cst_86 = arith.constant dense<0.000000e+00> : vector<128x128xf32>
    %109 = tpu.matmul %106, %108, %cst_86 {dimension_numbers = #tpu.dot_dimension_numbers<[1], [0], [0], [1], [0, 0, 1, 1], [], []>} : vector<128x4xbf16>, vector<4x128xbf16>, vector<128x128xf32> -> vector<128x128xf32>
    %110 = arith.addf %105, %109 : vector<128x128xf32>
    %c280 = arith.constant 280 : index
    %c0_87 = arith.constant 0 : index
    %111 = vector.load %arg10[%c280, %c0_87] : memref<440x4xbf16, #tpu.memory_space<vmem>>, vector<128x4xbf16>
    %c3_88 = arith.constant 3 : index
    %c0_89 = arith.constant 0 : index
    %c0_90 = arith.constant 0 : index
    %112 = vector.load %arg3[%c3_88, %c0_89, %c0_90] : memref<9x4x128xbf16, #tpu.memory_space<vmem>>, vector<1x4x128xbf16>
    %113 = vector.shape_cast %112 : vector<1x4x128xbf16> to vector<4x128xbf16>
    %cst_91 = arith.constant dense<0.000000e+00> : vector<128x128xf32>
    %114 = tpu.matmul %111, %113, %cst_91 {dimension_numbers = #tpu.dot_dimension_numbers<[1], [0], [0], [1], [0, 0, 1, 1], [], []>} : vector<128x4xbf16>, vector<4x128xbf16>, vector<128x128xf32> -> vector<128x128xf32>
    %115 = arith.addf %110, %114 : vector<128x128xf32>
    %c281 = arith.constant 281 : index
    %c0_92 = arith.constant 0 : index
    %116 = vector.load %arg10[%c281, %c0_92] : memref<440x4xbf16, #tpu.memory_space<vmem>>, vector<128x4xbf16>
    %c4_93 = arith.constant 4 : index
    %c0_94 = arith.constant 0 : index
    %c0_95 = arith.constant 0 : index
    %117 = vector.load %arg3[%c4_93, %c0_94, %c0_95] : memref<9x4x128xbf16, #tpu.memory_space<vmem>>, vector<1x4x128xbf16>
    %118 = vector.shape_cast %117 : vector<1x4x128xbf16> to vector<4x128xbf16>
    %cst_96 = arith.constant dense<0.000000e+00> : vector<128x128xf32>
    %119 = tpu.matmul %116, %118, %cst_96 {dimension_numbers = #tpu.dot_dimension_numbers<[1], [0], [0], [1], [0, 0, 1, 1], [], []>} : vector<128x4xbf16>, vector<4x128xbf16>, vector<128x128xf32> -> vector<128x128xf32>
    %120 = arith.addf %115, %119 : vector<128x128xf32>
    %c282 = arith.constant 282 : index
    %c0_97 = arith.constant 0 : index
    %121 = vector.load %arg10[%c282, %c0_97] : memref<440x4xbf16, #tpu.memory_space<vmem>>, vector<128x4xbf16>
    %c5_98 = arith.constant 5 : index
    %c0_99 = arith.constant 0 : index
    %c0_100 = arith.constant 0 : index
    %122 = vector.load %arg3[%c5_98, %c0_99, %c0_100] : memref<9x4x128xbf16, #tpu.memory_space<vmem>>, vector<1x4x128xbf16>
    %123 = vector.shape_cast %122 : vector<1x4x128xbf16> to vector<4x128xbf16>
    %cst_101 = arith.constant dense<0.000000e+00> : vector<128x128xf32>
    %124 = tpu.matmul %121, %123, %cst_101 {dimension_numbers = #tpu.dot_dimension_numbers<[1], [0], [0], [1], [0, 0, 1, 1], [], []>} : vector<128x4xbf16>, vector<4x128xbf16>, vector<128x128xf32> -> vector<128x128xf32>
    %125 = arith.addf %120, %124 : vector<128x128xf32>
    %c304 = arith.constant 304 : index
    %c0_102 = arith.constant 0 : index
    %126 = vector.load %arg10[%c304, %c0_102] : memref<440x4xbf16, #tpu.memory_space<vmem>>, vector<128x4xbf16>
    %c6_103 = arith.constant 6 : index
    %c0_104 = arith.constant 0 : index
    %c0_105 = arith.constant 0 : index
    %127 = vector.load %arg3[%c6_103, %c0_104, %c0_105] : memref<9x4x128xbf16, #tpu.memory_space<vmem>>, vector<1x4x128xbf16>
    %128 = vector.shape_cast %127 : vector<1x4x128xbf16> to vector<4x128xbf16>
    %cst_106 = arith.constant dense<0.000000e+00> : vector<128x128xf32>
    %129 = tpu.matmul %126, %128, %cst_106 {dimension_numbers = #tpu.dot_dimension_numbers<[1], [0], [0], [1], [0, 0, 1, 1], [], []>} : vector<128x4xbf16>, vector<4x128xbf16>, vector<128x128xf32> -> vector<128x128xf32>
    %130 = arith.addf %125, %129 : vector<128x128xf32>
    %c305 = arith.constant 305 : index
    %c0_107 = arith.constant 0 : index
    %131 = vector.load %arg10[%c305, %c0_107] : memref<440x4xbf16, #tpu.memory_space<vmem>>, vector<128x4xbf16>
    %c7_108 = arith.constant 7 : index
    %c0_109 = arith.constant 0 : index
    %c0_110 = arith.constant 0 : index
    %132 = vector.load %arg3[%c7_108, %c0_109, %c0_110] : memref<9x4x128xbf16, #tpu.memory_space<vmem>>, vector<1x4x128xbf16>
    %133 = vector.shape_cast %132 : vector<1x4x128xbf16> to vector<4x128xbf16>
    %cst_111 = arith.constant dense<0.000000e+00> : vector<128x128xf32>
    %134 = tpu.matmul %131, %133, %cst_111 {dimension_numbers = #tpu.dot_dimension_numbers<[1], [0], [0], [1], [0, 0, 1, 1], [], []>} : vector<128x4xbf16>, vector<4x128xbf16>, vector<128x128xf32> -> vector<128x128xf32>
    %135 = arith.addf %130, %134 : vector<128x128xf32>
    %c306 = arith.constant 306 : index
    %c0_112 = arith.constant 0 : index
    %136 = vector.load %arg10[%c306, %c0_112] : memref<440x4xbf16, #tpu.memory_space<vmem>>, vector<128x4xbf16>
    %c8_113 = arith.constant 8 : index
    %c0_114 = arith.constant 0 : index
    %c0_115 = arith.constant 0 : index
    %137 = vector.load %arg3[%c8_113, %c0_114, %c0_115] : memref<9x4x128xbf16, #tpu.memory_space<vmem>>, vector<1x4x128xbf16>
    %138 = vector.shape_cast %137 : vector<1x4x128xbf16> to vector<4x128xbf16>
    %cst_116 = arith.constant dense<0.000000e+00> : vector<128x128xf32>
    %139 = tpu.matmul %136, %138, %cst_116 {dimension_numbers = #tpu.dot_dimension_numbers<[1], [0], [0], [1], [0, 0, 1, 1], [], []>} : vector<128x4xbf16>, vector<4x128xbf16>, vector<128x128xf32> -> vector<128x128xf32>
    %140 = arith.addf %135, %139 : vector<128x128xf32>
    %c0_117 = arith.constant 0 : index
    %c0_118 = arith.constant 0 : index
    %141 = vector.load %arg4[%c0_117, %c0_118] : memref<1x128xf32, #tpu.memory_space<vmem>>, vector<1x128xf32>
    %142 = vector.broadcast %141 : vector<1x128xf32> to vector<128x128xf32>
    %143 = arith.mulf %140, %142 : vector<128x128xf32>
    %c0_119 = arith.constant 0 : index
    %c0_120 = arith.constant 0 : index
    %144 = vector.load %arg5[%c0_119, %c0_120] : memref<1x128xf32, #tpu.memory_space<vmem>>, vector<1x128xf32>
    %145 = vector.broadcast %144 : vector<1x128xf32> to vector<128x128xf32>
    %146 = arith.addf %143, %145 : vector<128x128xf32>
    %cst_121 = arith.constant 0.000000e+00 : f32
    %147 = vector.broadcast %cst_121 : f32 to vector<128x128xf32>
    %148 = arith.maximumf %146, %147 : vector<128x128xf32>
    %149 = tpu.iota {dimensions = array<i32: 0>} : vector<128x1xi32>
    %c256_i32 = arith.constant 256 : i32
    %150 = vector.broadcast %c256_i32 : i32 to vector<128x1xi32>
    %151 = arith.addi %149, %150 : vector<128x1xi32>
    %c24_i32_122 = arith.constant 24 : i32
    %c0_i32_123 = arith.constant 0 : i32
    %152 = arith.cmpi eq, %c24_i32_122, %c0_i32_123 : i32
    %c1_i32_124 = arith.constant 1 : i32
    %153 = arith.select %152, %c1_i32_124, %c24_i32_122 : i32
    %154 = vector.broadcast %153 : i32 to vector<128x1xi32>
    %155 = arith.remsi %151, %154 : vector<128x1xi32>
    %c0_i32_125 = arith.constant 0 : i32
    %156 = vector.broadcast %c0_i32_125 : i32 to vector<128x1xi32>
    %157 = arith.cmpi ne, %155, %156 : vector<128x1xi32>
    %c0_i32_126 = arith.constant 0 : i32
    %158 = vector.broadcast %c0_i32_126 : i32 to vector<128x1xi32>
    %159 = arith.cmpi slt, %155, %158 : vector<128x1xi32>
    %c0_i32_127 = arith.constant 0 : i32
    %160 = arith.cmpi slt, %153, %c0_i32_127 : i32
    %161 = vector.broadcast %160 : i1 to vector<128x1xi1>
    %162 = vector.broadcast %161 : vector<128x1xi1> to vector<128x1xi1>
    %163 = arith.xori %159, %162 : vector<128x1xi1>
    %164 = arith.andi %163, %157 : vector<128x1xi1>
    %165 = vector.broadcast %153 : i32 to vector<128x1xi32>
    %166 = arith.addi %155, %165 : vector<128x1xi32>
    %167 = arith.select %164, %166, %155 : vector<128x1xi1>, vector<128x1xi32>
    %c16_i32_128 = arith.constant 16 : i32
    %168 = vector.broadcast %c16_i32_128 : i32 to vector<128x1xi32>
    %169 = arith.cmpi slt, %167, %168 : vector<128x1xi32>
    %170 = arith.extui %169 : vector<128x1xi1> to vector<128x1xi32>
    %171 = arith.sitofp %170 : vector<128x1xi32> to vector<128x1xf32>
    %172 = vector.broadcast %171 : vector<128x1xf32> to vector<128x128xf32>
    %173 = arith.mulf %148, %172 : vector<128x128xf32>
    %174 = arith.truncf %173 : vector<128x128xf32> to vector<128x128xbf16>
    %c281_129 = arith.constant 281 : index
    %c0_130 = arith.constant 0 : index
    %175 = vector.load %arg11[%c281_129, %c0_130] : memref<440x128xbf16, #tpu.memory_space<vmem>>, vector<128x128xbf16>
    tpu.vector_store %arg11[%c281_129, %c0_130], %174 {strides = array<i32>} : memref<440x128xbf16, #tpu.memory_space<vmem>>, vector<128x128xbf16>,
    %cst_131 = arith.constant 0.000000e+00 : f32
    %176 = vector.broadcast %cst_131 : f32 to vector<256x128xf32>
    %c0_132 = arith.constant 0 : index
    %c0_133 = arith.constant 0 : index
    %177 = vector.load %arg11[%c0_132, %c0_133] : memref<440x128xbf16, #tpu.memory_space<vmem>>, vector<256x128xbf16>
    %c0_134 = arith.constant 0 : index
    %c0_135 = arith.constant 0 : index
    %c0_136 = arith.constant 0 : index
    %178 = vector.load %arg6[%c0_134, %c0_135, %c0_136] : memref<9x128x128xbf16, #tpu.memory_space<vmem>>, vector<1x128x128xbf16>
    %179 = vector.shape_cast %178 : vector<1x128x128xbf16> to vector<128x128xbf16>
    %cst_137 = arith.constant dense<0.000000e+00> : vector<256x128xf32>
    %180 = tpu.matmul %177, %179, %cst_137 {dimension_numbers = #tpu.dot_dimension_numbers<[1], [0], [0], [1], [0, 0, 1, 1], [], []>} : vector<256x128xbf16>, vector<128x128xbf16>, vector<256x128xf32> -> vector<256x128xf32>
    %181 = arith.addf %176, %180 : vector<256x128xf32>
    %c1_138 = arith.constant 1 : index
    %c0_139 = arith.constant 0 : index
    %182 = vector.load %arg11[%c1_138, %c0_139] : memref<440x128xbf16, #tpu.memory_space<vmem>>, vector<256x128xbf16>
    %c1_140 = arith.constant 1 : index
    %c0_141 = arith.constant 0 : index
    %c0_142 = arith.constant 0 : index
    %183 = vector.load %arg6[%c1_140, %c0_141, %c0_142] : memref<9x128x128xbf16, #tpu.memory_space<vmem>>, vector<1x128x128xbf16>
    %184 = vector.shape_cast %183 : vector<1x128x128xbf16> to vector<128x128xbf16>
    %cst_143 = arith.constant dense<0.000000e+00> : vector<256x128xf32>
    %185 = tpu.matmul %182, %184, %cst_143 {dimension_numbers = #tpu.dot_dimension_numbers<[1], [0], [0], [1], [0, 0, 1, 1], [], []>} : vector<256x128xbf16>, vector<128x128xbf16>, vector<256x128xf32> -> vector<256x128xf32>
    %186 = arith.addf %181, %185 : vector<256x128xf32>
    %c2_144 = arith.constant 2 : index
    %c0_145 = arith.constant 0 : index
    %187 = vector.load %arg11[%c2_144, %c0_145] : memref<440x128xbf16, #tpu.memory_space<vmem>>, vector<256x128xbf16>
    %c2_146 = arith.constant 2 : index
    %c0_147 = arith.constant 0 : index
    %c0_148 = arith.constant 0 : index
    %188 = vector.load %arg6[%c2_146, %c0_147, %c0_148] : memref<9x128x128xbf16, #tpu.memory_space<vmem>>, vector<1x128x128xbf16>
    %189 = vector.shape_cast %188 : vector<1x128x128xbf16> to vector<128x128xbf16>
    %cst_149 = arith.constant dense<0.000000e+00> : vector<256x128xf32>
    %190 = tpu.matmul %187, %189, %cst_149 {dimension_numbers = #tpu.dot_dimension_numbers<[1], [0], [0], [1], [0, 0, 1, 1], [], []>} : vector<256x128xbf16>, vector<128x128xbf16>, vector<256x128xf32> -> vector<256x128xf32>
    %191 = arith.addf %186, %190 : vector<256x128xf32>
    %c24_150 = arith.constant 24 : index
    %c0_151 = arith.constant 0 : index
    %192 = vector.load %arg11[%c24_150, %c0_151] : memref<440x128xbf16, #tpu.memory_space<vmem>>, vector<256x128xbf16>
    %c3_152 = arith.constant 3 : index
    %c0_153 = arith.constant 0 : index
    %c0_154 = arith.constant 0 : index
    %193 = vector.load %arg6[%c3_152, %c0_153, %c0_154] : memref<9x128x128xbf16, #tpu.memory_space<vmem>>, vector<1x128x128xbf16>
    %194 = vector.shape_cast %193 : vector<1x128x128xbf16> to vector<128x128xbf16>
    %cst_155 = arith.constant dense<0.000000e+00> : vector<256x128xf32>
    %195 = tpu.matmul %192, %194, %cst_155 {dimension_numbers = #tpu.dot_dimension_numbers<[1], [0], [0], [1], [0, 0, 1, 1], [], []>} : vector<256x128xbf16>, vector<128x128xbf16>, vector<256x128xf32> -> vector<256x128xf32>
    %196 = arith.addf %191, %195 : vector<256x128xf32>
    %c25_156 = arith.constant 25 : index
    %c0_157 = arith.constant 0 : index
    %197 = vector.load %arg11[%c25_156, %c0_157] : memref<440x128xbf16, #tpu.memory_space<vmem>>, vector<256x128xbf16>
    %c4_158 = arith.constant 4 : index
    %c0_159 = arith.constant 0 : index
    %c0_160 = arith.constant 0 : index
    %198 = vector.load %arg6[%c4_158, %c0_159, %c0_160] : memref<9x128x128xbf16, #tpu.memory_space<vmem>>, vector<1x128x128xbf16>
    %199 = vector.shape_cast %198 : vector<1x128x128xbf16> to vector<128x128xbf16>
    %cst_161 = arith.constant dense<0.000000e+00> : vector<256x128xf32>
    %200 = tpu.matmul %197, %199, %cst_161 {dimension_numbers = #tpu.dot_dimension_numbers<[1], [0], [0], [1], [0, 0, 1, 1], [], []>} : vector<256x128xbf16>, vector<128x128xbf16>, vector<256x128xf32> -> vector<256x128xf32>
    %201 = arith.addf %196, %200 : vector<256x128xf32>
    %c26_162 = arith.constant 26 : index
    %c0_163 = arith.constant 0 : index
    %202 = vector.load %arg11[%c26_162, %c0_163] : memref<440x128xbf16, #tpu.memory_space<vmem>>, vector<256x128xbf16>
    %c5_164 = arith.constant 5 : index
    %c0_165 = arith.constant 0 : index
    %c0_166 = arith.constant 0 : index
    %203 = vector.load %arg6[%c5_164, %c0_165, %c0_166] : memref<9x128x128xbf16, #tpu.memory_space<vmem>>, vector<1x128x128xbf16>
    %204 = vector.shape_cast %203 : vector<1x128x128xbf16> to vector<128x128xbf16>
    %cst_167 = arith.constant dense<0.000000e+00> : vector<256x128xf32>
    %205 = tpu.matmul %202, %204, %cst_167 {dimension_numbers = #tpu.dot_dimension_numbers<[1], [0], [0], [1], [0, 0, 1, 1], [], []>} : vector<256x128xbf16>, vector<128x128xbf16>, vector<256x128xf32> -> vector<256x128xf32>
    %206 = arith.addf %201, %205 : vector<256x128xf32>
    %c48_168 = arith.constant 48 : index
    %c0_169 = arith.constant 0 : index
    %207 = vector.load %arg11[%c48_168, %c0_169] : memref<440x128xbf16, #tpu.memory_space<vmem>>, vector<256x128xbf16>
    %c6_170 = arith.constant 6 : index
    %c0_171 = arith.constant 0 : index
    %c0_172 = arith.constant 0 : index
    %208 = vector.load %arg6[%c6_170, %c0_171, %c0_172] : memref<9x128x128xbf16, #tpu.memory_space<vmem>>, vector<1x128x128xbf16>
    %209 = vector.shape_cast %208 : vector<1x128x128xbf16> to vector<128x128xbf16>
    %cst_173 = arith.constant dense<0.000000e+00> : vector<256x128xf32>
    %210 = tpu.matmul %207, %209, %cst_173 {dimension_numbers = #tpu.dot_dimension_numbers<[1], [0], [0], [1], [0, 0, 1, 1], [], []>} : vector<256x128xbf16>, vector<128x128xbf16>, vector<256x128xf32> -> vector<256x128xf32>
    %211 = arith.addf %206, %210 : vector<256x128xf32>
    %c49_174 = arith.constant 49 : index
    %c0_175 = arith.constant 0 : index
    %212 = vector.load %arg11[%c49_174, %c0_175] : memref<440x128xbf16, #tpu.memory_space<vmem>>, vector<256x128xbf16>
    %c7_176 = arith.constant 7 : index
    %c0_177 = arith.constant 0 : index
    %c0_178 = arith.constant 0 : index
    %213 = vector.load %arg6[%c7_176, %c0_177, %c0_178] : memref<9x128x128xbf16, #tpu.memory_space<vmem>>, vector<1x128x128xbf16>
    %214 = vector.shape_cast %213 : vector<1x128x128xbf16> to vector<128x128xbf16>
    %cst_179 = arith.constant dense<0.000000e+00> : vector<256x128xf32>
    %215 = tpu.matmul %212, %214, %cst_179 {dimension_numbers = #tpu.dot_dimension_numbers<[1], [0], [0], [1], [0, 0, 1, 1], [], []>} : vector<256x128xbf16>, vector<128x128xbf16>, vector<256x128xf32> -> vector<256x128xf32>
    %216 = arith.addf %211, %215 : vector<256x128xf32>
    %c50_180 = arith.constant 50 : index
    %c0_181 = arith.constant 0 : index
    %217 = vector.load %arg11[%c50_180, %c0_181] : memref<440x128xbf16, #tpu.memory_space<vmem>>, vector<256x128xbf16>
    %c8_182 = arith.constant 8 : index
    %c0_183 = arith.constant 0 : index
    %c0_184 = arith.constant 0 : index
    %218 = vector.load %arg6[%c8_182, %c0_183, %c0_184] : memref<9x128x128xbf16, #tpu.memory_space<vmem>>, vector<1x128x128xbf16>
    %219 = vector.shape_cast %218 : vector<1x128x128xbf16> to vector<128x128xbf16>
    %cst_185 = arith.constant dense<0.000000e+00> : vector<256x128xf32>
    %220 = tpu.matmul %217, %219, %cst_185 {dimension_numbers = #tpu.dot_dimension_numbers<[1], [0], [0], [1], [0, 0, 1, 1], [], []>} : vector<256x128xbf16>, vector<128x128xbf16>, vector<256x128xf32> -> vector<256x128xf32>
    %221 = arith.addf %216, %220 : vector<256x128xf32>
    %c0_186 = arith.constant 0 : index
    %c0_187 = arith.constant 0 : index
    %222 = vector.load %arg7[%c0_186, %c0_187] : memref<1x128xf32, #tpu.memory_space<vmem>>, vector<1x128xf32>
    %223 = vector.broadcast %222 : vector<1x128xf32> to vector<256x128xf32>
    %224 = arith.mulf %221, %223 : vector<256x128xf32>
    %c0_188 = arith.constant 0 : index
    %c0_189 = arith.constant 0 : index
    %225 = vector.load %arg8[%c0_188, %c0_189] : memref<1x128xf32, #tpu.memory_space<vmem>>, vector<1x128xf32>
    %226 = vector.broadcast %225 : vector<1x128xf32> to vector<256x128xf32>
    %227 = arith.addf %224, %226 : vector<256x128xf32>
    %cst_190 = arith.constant 0.000000e+00 : f32
    %228 = vector.broadcast %cst_190 : f32 to vector<256x128xf32>
    %229 = arith.maximumf %227, %228 : vector<256x128xf32>
    %230 = arith.truncf %229 : vector<256x128xf32> to vector<256x128xbf16>
    %c0_191 = arith.constant 0 : index
    %c0_192 = arith.constant 0 : index
    %c0_193 = arith.constant 0 : index
    %231 = vector.load %arg9[%c0_191, %c0_192, %c0_193] : memref<1x384x128xbf16, #tpu.memory_space<vmem>>, vector<1x256x128xbf16>
    %232 = vector.shape_cast %231 : vector<1x256x128xbf16> to vector<256x128xbf16>
    %233 = vector.shape_cast %230 : vector<256x128xbf16> to vector<1x256x128xbf16>
    tpu.vector_store %arg9[%c0_191, %c0_192, %c0_193], %233 {strides = array<i32>} : memref<1x384x128xbf16, #tpu.memory_space<vmem>>, vector<1x256x128xbf16>,
    %cst_194 = arith.constant 0.000000e+00 : f32
    %234 = vector.broadcast %cst_194 : f32 to vector<128x128xf32>
    %c256_195 = arith.constant 256 : index
    %c0_196 = arith.constant 0 : index
    %235 = vector.load %arg11[%c256_195, %c0_196] : memref<440x128xbf16, #tpu.memory_space<vmem>>, vector<128x128xbf16>
    %c0_197 = arith.constant 0 : index
    %c0_198 = arith.constant 0 : index
    %c0_199 = arith.constant 0 : index
    %236 = vector.load %arg6[%c0_197, %c0_198, %c0_199] : memref<9x128x128xbf16, #tpu.memory_space<vmem>>, vector<1x128x128xbf16>
    %237 = vector.shape_cast %236 : vector<1x128x128xbf16> to vector<128x128xbf16>
    %cst_200 = arith.constant dense<0.000000e+00> : vector<128x128xf32>
    %238 = tpu.matmul %235, %237, %cst_200 {dimension_numbers = #tpu.dot_dimension_numbers<[1], [0], [0], [1], [0, 0, 1, 1], [], []>} : vector<128x128xbf16>, vector<128x128xbf16>, vector<128x128xf32> -> vector<128x128xf32>
    %239 = arith.addf %234, %238 : vector<128x128xf32>
    %c257_201 = arith.constant 257 : index
    %c0_202 = arith.constant 0 : index
    %240 = vector.load %arg11[%c257_201, %c0_202] : memref<440x128xbf16, #tpu.memory_space<vmem>>, vector<128x128xbf16>
    %c1_203 = arith.constant 1 : index
    %c0_204 = arith.constant 0 : index
    %c0_205 = arith.constant 0 : index
    %241 = vector.load %arg6[%c1_203, %c0_204, %c0_205] : memref<9x128x128xbf16, #tpu.memory_space<vmem>>, vector<1x128x128xbf16>
    %242 = vector.shape_cast %241 : vector<1x128x128xbf16> to vector<128x128xbf16>
    %cst_206 = arith.constant dense<0.000000e+00> : vector<128x128xf32>
    %243 = tpu.matmul %240, %242, %cst_206 {dimension_numbers = #tpu.dot_dimension_numbers<[1], [0], [0], [1], [0, 0, 1, 1], [], []>} : vector<128x128xbf16>, vector<128x128xbf16>, vector<128x128xf32> -> vector<128x128xf32>
    %244 = arith.addf %239, %243 : vector<128x128xf32>
    %c258_207 = arith.constant 258 : index
    %c0_208 = arith.constant 0 : index
    %245 = vector.load %arg11[%c258_207, %c0_208] : memref<440x128xbf16, #tpu.memory_space<vmem>>, vector<128x128xbf16>
    %c2_209 = arith.constant 2 : index
    %c0_210 = arith.constant 0 : index
    %c0_211 = arith.constant 0 : index
    %246 = vector.load %arg6[%c2_209, %c0_210, %c0_211] : memref<9x128x128xbf16, #tpu.memory_space<vmem>>, vector<1x128x128xbf16>
    %247 = vector.shape_cast %246 : vector<1x128x128xbf16> to vector<128x128xbf16>
    %cst_212 = arith.constant dense<0.000000e+00> : vector<128x128xf32>
    %248 = tpu.matmul %245, %247, %cst_212 {dimension_numbers = #tpu.dot_dimension_numbers<[1], [0], [0], [1], [0, 0, 1, 1], [], []>} : vector<128x128xbf16>, vector<128x128xbf16>, vector<128x128xf32> -> vector<128x128xf32>
    %249 = arith.addf %244, %248 : vector<128x128xf32>
    %c280_213 = arith.constant 280 : index
    %c0_214 = arith.constant 0 : index
    %250 = vector.load %arg11[%c280_213, %c0_214] : memref<440x128xbf16, #tpu.memory_space<vmem>>, vector<128x128xbf16>
    %c3_215 = arith.constant 3 : index
    %c0_216 = arith.constant 0 : index
    %c0_217 = arith.constant 0 : index
    %251 = vector.load %arg6[%c3_215, %c0_216, %c0_217] : memref<9x128x128xbf16, #tpu.memory_space<vmem>>, vector<1x128x128xbf16>
    %252 = vector.shape_cast %251 : vector<1x128x128xbf16> to vector<128x128xbf16>
    %cst_218 = arith.constant dense<0.000000e+00> : vector<128x128xf32>
    %253 = tpu.matmul %250, %252, %cst_218 {dimension_numbers = #tpu.dot_dimension_numbers<[1], [0], [0], [1], [0, 0, 1, 1], [], []>} : vector<128x128xbf16>, vector<128x128xbf16>, vector<128x128xf32> -> vector<128x128xf32>
    %254 = arith.addf %249, %253 : vector<128x128xf32>
    %c281_219 = arith.constant 281 : index
    %c0_220 = arith.constant 0 : index
    %255 = vector.load %arg11[%c281_219, %c0_220] : memref<440x128xbf16, #tpu.memory_space<vmem>>, vector<128x128xbf16>
    %c4_221 = arith.constant 4 : index
    %c0_222 = arith.constant 0 : index
    %c0_223 = arith.constant 0 : index
    %256 = vector.load %arg6[%c4_221, %c0_222, %c0_223] : memref<9x128x128xbf16, #tpu.memory_space<vmem>>, vector<1x128x128xbf16>
    %257 = vector.shape_cast %256 : vector<1x128x128xbf16> to vector<128x128xbf16>
    %cst_224 = arith.constant dense<0.000000e+00> : vector<128x128xf32>
    %258 = tpu.matmul %255, %257, %cst_224 {dimension_numbers = #tpu.dot_dimension_numbers<[1], [0], [0], [1], [0, 0, 1, 1], [], []>} : vector<128x128xbf16>, vector<128x128xbf16>, vector<128x128xf32> -> vector<128x128xf32>
    %259 = arith.addf %254, %258 : vector<128x128xf32>
    %c282_225 = arith.constant 282 : index
    %c0_226 = arith.constant 0 : index
    %260 = vector.load %arg11[%c282_225, %c0_226] : memref<440x128xbf16, #tpu.memory_space<vmem>>, vector<128x128xbf16>
    %c5_227 = arith.constant 5 : index
    %c0_228 = arith.constant 0 : index
    %c0_229 = arith.constant 0 : index
    %261 = vector.load %arg6[%c5_227, %c0_228, %c0_229] : memref<9x128x128xbf16, #tpu.memory_space<vmem>>, vector<1x128x128xbf16>
    %262 = vector.shape_cast %261 : vector<1x128x128xbf16> to vector<128x128xbf16>
    %cst_230 = arith.constant dense<0.000000e+00> : vector<128x128xf32>
    %263 = tpu.matmul %260, %262, %cst_230 {dimension_numbers = #tpu.dot_dimension_numbers<[1], [0], [0], [1], [0, 0, 1, 1], [], []>} : vector<128x128xbf16>, vector<128x128xbf16>, vector<128x128xf32> -> vector<128x128xf32>
    %264 = arith.addf %259, %263 : vector<128x128xf32>
    %c304_231 = arith.constant 304 : index
    %c0_232 = arith.constant 0 : index
    %265 = vector.load %arg11[%c304_231, %c0_232] : memref<440x128xbf16, #tpu.memory_space<vmem>>, vector<128x128xbf16>
    %c6_233 = arith.constant 6 : index
    %c0_234 = arith.constant 0 : index
    %c0_235 = arith.constant 0 : index
    %266 = vector.load %arg6[%c6_233, %c0_234, %c0_235] : memref<9x128x128xbf16, #tpu.memory_space<vmem>>, vector<1x128x128xbf16>
    %267 = vector.shape_cast %266 : vector<1x128x128xbf16> to vector<128x128xbf16>
    %cst_236 = arith.constant dense<0.000000e+00> : vector<128x128xf32>
    %268 = tpu.matmul %265, %267, %cst_236 {dimension_numbers = #tpu.dot_dimension_numbers<[1], [0], [0], [1], [0, 0, 1, 1], [], []>} : vector<128x128xbf16>, vector<128x128xbf16>, vector<128x128xf32> -> vector<128x128xf32>
    %269 = arith.addf %264, %268 : vector<128x128xf32>
    %c305_237 = arith.constant 305 : index
    %c0_238 = arith.constant 0 : index
    %270 = vector.load %arg11[%c305_237, %c0_238] : memref<440x128xbf16, #tpu.memory_space<vmem>>, vector<128x128xbf16>
    %c7_239 = arith.constant 7 : index
    %c0_240 = arith.constant 0 : index
    %c0_241 = arith.constant 0 : index
    %271 = vector.load %arg6[%c7_239, %c0_240, %c0_241] : memref<9x128x128xbf16, #tpu.memory_space<vmem>>, vector<1x128x128xbf16>
    %272 = vector.shape_cast %271 : vector<1x128x128xbf16> to vector<128x128xbf16>
    %cst_242 = arith.constant dense<0.000000e+00> : vector<128x128xf32>
    %273 = tpu.matmul %270, %272, %cst_242 {dimension_numbers = #tpu.dot_dimension_numbers<[1], [0], [0], [1], [0, 0, 1, 1], [], []>} : vector<128x128xbf16>, vector<128x128xbf16>, vector<128x128xf32> -> vector<128x128xf32>
    %274 = arith.addf %269, %273 : vector<128x128xf32>
    %c306_243 = arith.constant 306 : index
    %c0_244 = arith.constant 0 : index
    %275 = vector.load %arg11[%c306_243, %c0_244] : memref<440x128xbf16, #tpu.memory_space<vmem>>, vector<128x128xbf16>
    %c8_245 = arith.constant 8 : index
    %c0_246 = arith.constant 0 : index
    %c0_247 = arith.constant 0 : index
    %276 = vector.load %arg6[%c8_245, %c0_246, %c0_247] : memref<9x128x128xbf16, #tpu.memory_space<vmem>>, vector<1x128x128xbf16>
    %277 = vector.shape_cast %276 : vector<1x128x128xbf16> to vector<128x128xbf16>
    %cst_248 = arith.constant dense<0.000000e+00> : vector<128x128xf32>
    %278 = tpu.matmul %275, %277, %cst_248 {dimension_numbers = #tpu.dot_dimension_numbers<[1], [0], [0], [1], [0, 0, 1, 1], [], []>} : vector<128x128xbf16>, vector<128x128xbf16>, vector<128x128xf32> -> vector<128x128xf32>
    %279 = arith.addf %274, %278 : vector<128x128xf32>
    %c0_249 = arith.constant 0 : index
    %c0_250 = arith.constant 0 : index
    %280 = vector.load %arg7[%c0_249, %c0_250] : memref<1x128xf32, #tpu.memory_space<vmem>>, vector<1x128xf32>
    %281 = vector.broadcast %280 : vector<1x128xf32> to vector<128x128xf32>
    %282 = arith.mulf %279, %281 : vector<128x128xf32>
    %c0_251 = arith.constant 0 : index
    %c0_252 = arith.constant 0 : index
    %283 = vector.load %arg8[%c0_251, %c0_252] : memref<1x128xf32, #tpu.memory_space<vmem>>, vector<1x128xf32>
    %284 = vector.broadcast %283 : vector<1x128xf32> to vector<128x128xf32>
    %285 = arith.addf %282, %284 : vector<128x128xf32>
    %cst_253 = arith.constant 0.000000e+00 : f32
    %286 = vector.broadcast %cst_253 : f32 to vector<128x128xf32>
    %287 = arith.maximumf %285, %286 : vector<128x128xf32>
    %288 = arith.truncf %287 : vector<128x128xf32> to vector<128x128xbf16>
    %c0_254 = arith.constant 0 : index
    %c256_255 = arith.constant 256 : index
    %c0_256 = arith.constant 0 : index
    %289 = vector.load %arg9[%c0_254, %c256_255, %c0_256] : memref<1x384x128xbf16, #tpu.memory_space<vmem>>, vector<1x128x128xbf16>
    %290 = vector.shape_cast %289 : vector<1x128x128xbf16> to vector<128x128xbf16>
    %291 = vector.shape_cast %288 : vector<128x128xbf16> to vector<1x128x128xbf16>
    tpu.vector_store %arg9[%c0_254, %c256_255, %c0_256], %291 {strides = array<i32>} : memref<1x384x128xbf16, #tpu.memory_space<vmem>>, vector<1x128x128xbf16>,
    return
  }
  func.func @transform_0(%arg0: i32) -> (i32, i32, i32) {
    %c0_i32 = arith.constant 0 : i32
    %c0_i32_0 = arith.constant 0 : i32
    %c0_i32_1 = arith.constant 0 : i32
    return %arg0, %c0_i32, %c0_i32_0 : i32, i32, i32
  }
  func.func @transform_1(%arg0: i32) -> (i32, i32, i32) {
    %c0_i32 = arith.constant 0 : i32
    %c0_i32_0 = arith.constant 0 : i32
    %c0_i32_1 = arith.constant 0 : i32
    return %arg0, %c0_i32, %c0_i32_0 : i32, i32, i32
  }
  func.func @transform_2(%arg0: i32) -> (i32, i32, i32) {
    %c0_i32 = arith.constant 0 : i32
    %c0_i32_0 = arith.constant 0 : i32
    %c0_i32_1 = arith.constant 0 : i32
    %c0_i32_2 = arith.constant 0 : i32
    return %c0_i32, %c0_i32_0, %c0_i32_1 : i32, i32, i32
  }
  func.func @transform_3(%arg0: i32) -> (i32, i32) {
    %c0_i32 = arith.constant 0 : i32
    %c0_i32_0 = arith.constant 0 : i32
    %c0_i32_1 = arith.constant 0 : i32
    return %c0_i32, %c0_i32_0 : i32, i32
  }
  func.func @transform_4(%arg0: i32) -> (i32, i32) {
    %c0_i32 = arith.constant 0 : i32
    %c0_i32_0 = arith.constant 0 : i32
    %c0_i32_1 = arith.constant 0 : i32
    return %c0_i32, %c0_i32_0 : i32, i32
  }
  func.func @transform_5(%arg0: i32) -> (i32, i32, i32) {
    %c0_i32 = arith.constant 0 : i32
    %c0_i32_0 = arith.constant 0 : i32
    %c0_i32_1 = arith.constant 0 : i32
    %c0_i32_2 = arith.constant 0 : i32
    return %c0_i32, %c0_i32_0, %c0_i32_1 : i32, i32, i32
  }
  func.func @transform_6(%arg0: i32) -> (i32, i32) {
    %c0_i32 = arith.constant 0 : i32
    %c0_i32_0 = arith.constant 0 : i32
    %c0_i32_1 = arith.constant 0 : i32
    return %c0_i32, %c0_i32_0 : i32, i32
  }
  func.func @transform_7(%arg0: i32) -> (i32, i32) {
    %c0_i32 = arith.constant 0 : i32
    %c0_i32_0 = arith.constant 0 : i32
    %c0_i32_1 = arith.constant 0 : i32
    return %c0_i32, %c0_i32_0 : i32, i32
  }
  func.func @transform_8(%arg0: i32) -> (i32, i32, i32) {
    %c0_i32 = arith.constant 0 : i32
    %c0_i32_0 = arith.constant 0 : i32
    %c0_i32_1 = arith.constant 0 : i32
    return %arg0, %c0_i32, %c0_i32_0 : i32, i32, i32
  }
}

</mosaic_0001>

<llo_original>
// kernel: up_forward.1
$region0: #{up_forward.1}
  #allocation0 [shape = 'u32[]', space=smem, size = 0x4, offset = 0x4, fixed_abs, tag = 'smem constant byte address 0x4 - core index']
  #allocation1 [shape = 'u32[72,128]{1,0:T(1,128)}', space=vmem, size = 0x9000, scoped, tag = 'internal scratch']
  #allocation2 [shape = 'bf16[440,4]{1,0:T(8,128)(2,1)}', space=vmem, size = 0x1b800, scoped, tag = 'scratch operand']
  #allocation3 [shape = 'bf16[440,128]{1,0:T(8,128)(2,1)}', space=vmem, size = 0x1b800, scoped, tag = 'scratch operand']
  %s0 = inlined_call_operand.vmem [shape: bf16[2,384,2], index: 0, kind: input, shape index: {}]
  %s1 = inlined_call_operand.vmem [shape: bf16[2,384,2], index: 1, kind: input, shape index: {}]
  %s2 = inlined_call_operand.vmem [shape: bf16[9,4,128], index: 2, kind: input, shape index: {}]
  %s3 = inlined_call_operand.vmem [shape: f32[1,128], index: 3, kind: input, shape index: {}]
  %s4 = inlined_call_operand.vmem [shape: f32[1,128], index: 4, kind: input, shape index: {}]
  %s5 = inlined_call_operand.vmem [shape: bf16[9,128,128], index: 5, kind: input, shape index: {}]
  %s6 = inlined_call_operand.vmem [shape: f32[1,128], index: 6, kind: input, shape index: {}]
  %s7 = inlined_call_operand.vmem [shape: f32[1,128], index: 7, kind: input, shape index: {}]
  %s8 = inlined_call_operand.vmem [shape: bf16[2,384,128], index: 8, kind: output, shape index: {}]
  %s9 = sld [smem:[#allocation0]]
  $region65: #{up_forward.1} parent=0
    _
  %s11 = ssub.s32 1, %s9
  %s12 = scalar_select 0, %s11, %s9
  loop: start=0, step=1, limit=4
  $region2: #{up_forward.1} parent=0 // loop_pre_header
    _
  $region3: #{up_forward.1} parent=0 // loop_header
    %s14 = sphi 0, %s18
    %p15 = scmp.ge.s32.totalorder %s14, 4
    %s24 = sphi 0, %s26
    %s27 = sphi 0, %s24
    %s28 = sphi 0, %s27
    %s44 = sphi 0, %s28
    %s50 = sphi 0, %s52
    %s53 = sphi 0, %s50
    %s54 = sphi 0, %s53
    %s70 = sphi 0, %s54
    %s74 = sphi 0, %s74
    %s76 = sphi 0, %s74
    %s77 = sphi 0, %s76
    %s91 = sphi 0, %s77
    %s95 = sphi 0, %s95
    %s97 = sphi 0, %s95
    %s98 = sphi 0, %s97
    %s112 = sphi 0, %s98
    %s116 = sphi 0, %s116
    %s118 = sphi 0, %s116
    %s119 = sphi 0, %s118
    %s133 = sphi 0, %s119
    %s137 = sphi 0, %s137
    %s139 = sphi 0, %s137
    %s140 = sphi 0, %s139
    %s154 = sphi 0, %s140
    %s158 = sphi 0, %s158
    %s160 = sphi 0, %s158
    %s161 = sphi 0, %s160
    %s175 = sphi 0, %s161
    %s179 = sphi 0, %s179
    %s181 = sphi 0, %s179
    %s182 = sphi 0, %s181
    %s196 = sphi 0, %s182
    %s202 = sphi 0, %s204
    %s205 = sphi 0, %s202
    %s206 = sphi 0, %s205
    %s222 = sphi 0, %s206
  $region4: #{up_forward.1} parent=0 // loop_header_branch
    %17 = sbr.rel (%p15) target = $region8
  $region5: #{up_forward.1} parent=0 // loop_body
    %s19 = ssub.s32 %s14, 1
    %s20 = ssub.s32 %s14, 2
    %s21 = sadd.s32 %s14, 1
    %s22 = ssub.s32 %s14, %s21
    %p23 = scmp.eq.s32.totalorder %s22, 0
    %s25 = sadd.s32 %s24, 1
    %s26 = scalar_select %p23, %s24, %s25
    %p29 = pneg %p23
    %p30 = scmp.eq.s32.totalorder %s14, 1
    %p31 = por %p29, %p30
    %p32 = scmp.ne.s32.totalorder %s24, %s27
    %p33 = scmp.eq.s32.totalorder %s14, 0
    %p34 = por %p32, %p33
    %p35 = scmp.ne.s32.totalorder %s24, %s27
    %p36 = scmp.eq.s32.totalorder %s19, 1
    %p37 = por %p35, %p36
    %p38 = scmp.ne.s32.totalorder %s27, %s28
    %p39 = scmp.eq.s32.totalorder %s19, 0
    %p40 = por %p38, %p39
    %p41 = scmp.ne.s32.totalorder %s27, %s28
    %p42 = scmp.eq.s32.totalorder %s20, 1
    %p43 = por %p41, %p42
    %p45 = scmp.ne.s32.totalorder %s28, %s44
    %p46 = scmp.eq.s32.totalorder %s20, 0
    %p47 = por %p45, %p46
    %s48 = ssub.s32 %s14, %s21
    %p49 = scmp.eq.s32.totalorder %s48, 0
    %s51 = sadd.s32 %s50, 1
    %s52 = scalar_select %p49, %s50, %s51
    %p55 = pneg %p49
    %p56 = scmp.eq.s32.totalorder %s14, 1
    %p57 = por %p55, %p56
    %p58 = scmp.ne.s32.totalorder %s50, %s53
    %p59 = scmp.eq.s32.totalorder %s14, 0
    %p60 = por %p58, %p59
    %p61 = scmp.ne.s32.totalorder %s50, %s53
    %p62 = scmp.eq.s32.totalorder %s19, 1
    %p63 = por %p61, %p62
    %p64 = scmp.ne.s32.totalorder %s53, %s54
    %p65 = scmp.eq.s32.totalorder %s19, 0
    %p66 = por %p64, %p65
    %p67 = scmp.ne.s32.totalorder %s53, %s54
    %p68 = scmp.eq.s32.totalorder %s20, 1
    %p69 = por %p67, %p68
    %p71 = scmp.ne.s32.totalorder %s54, %s70
    %p72 = scmp.eq.s32.totalorder %s20, 0
    %p73 = por %p71, %p72
    %s75 = sadd.s32 %s74, 1
    %p78 = scmp.eq.s32.totalorder %s14, 1
    %p79 = scmp.ne.s32.totalorder %s74, %s76
    %p80 = scmp.eq.s32.totalorder %s14, 0
    %p81 = por %p79, %p80
    %p82 = scmp.ne.s32.totalorder %s74, %s76
    %p83 = scmp.eq.s32.totalorder %s19, 1
    %p84 = por %p82, %p83
    %p85 = scmp.ne.s32.totalorder %s76, %s77
    %p86 = scmp.eq.s32.totalorder %s19, 0
    %p87 = por %p85, %p86
    %p88 = scmp.ne.s32.totalorder %s76, %s77
    %p89 = scmp.eq.s32.totalorder %s20, 1
    %p90 = por %p88, %p89
    %p92 = scmp.ne.s32.totalorder %s77, %s91
    %p93 = scmp.eq.s32.totalorder %s20, 0
    %p94 = por %p92, %p93
    %s96 = sadd.s32 %s95, 1
    %p99 = scmp.eq.s32.totalorder %s14, 1
    %p100 = scmp.ne.s32.totalorder %s95, %s97
    %p101 = scmp.eq.s32.totalorder %s14, 0
    %p102 = por %p100, %p101
    %p103 = scmp.ne.s32.totalorder %s95, %s97
    %p104 = scmp.eq.s32.totalorder %s19, 1
    %p105 = por %p103, %p104
    %p106 = scmp.ne.s32.totalorder %s97, %s98
    %p107 = scmp.eq.s32.totalorder %s19, 0
    %p108 = por %p106, %p107
    %p109 = scmp.ne.s32.totalorder %s97, %s98
    %p110 = scmp.eq.s32.totalorder %s20, 1
    %p111 = por %p109, %p110
    %p113 = scmp.ne.s32.totalorder %s98, %s112
    %p114 = scmp.eq.s32.totalorder %s20, 0
    %p115 = por %p113, %p114
    %s117 = sadd.s32 %s116, 1
    %p120 = scmp.eq.s32.totalorder %s14, 1
    %p121 = scmp.ne.s32.totalorder %s116, %s118
    %p122 = scmp.eq.s32.totalorder %s14, 0
    %p123 = por %p121, %p122
    %p124 = scmp.ne.s32.totalorder %s116, %s118
    %p125 = scmp.eq.s32.totalorder %s19, 1
    %p126 = por %p124, %p125
    %p127 = scmp.ne.s32.totalorder %s118, %s119
    %p128 = scmp.eq.s32.totalorder %s19, 0
    %p129 = por %p127, %p128
    %p130 = scmp.ne.s32.totalorder %s118, %s119
    %p131 = scmp.eq.s32.totalorder %s20, 1
    %p132 = por %p130, %p131
    %p134 = scmp.ne.s32.totalorder %s119, %s133
    %p135 = scmp.eq.s32.totalorder %s20, 0
    %p136 = por %p134, %p135
    %s138 = sadd.s32 %s137, 1
    %p141 = scmp.eq.s32.totalorder %s14, 1
    %p142 = scmp.ne.s32.totalorder %s137, %s139
    %p143 = scmp.eq.s32.totalorder %s14, 0
    %p144 = por %p142, %p143
    %p145 = scmp.ne.s32.totalorder %s137, %s139
    %p146 = scmp.eq.s32.totalorder %s19, 1
    %p147 = por %p145, %p146
    %p148 = scmp.ne.s32.totalorder %s139, %s140
    %p149 = scmp.eq.s32.totalorder %s19, 0
    %p150 = por %p148, %p149
    %p151 = scmp.ne.s32.totalorder %s139, %s140
    %p152 = scmp.eq.s32.totalorder %s20, 1
    %p153 = por %p151, %p152
    %p155 = scmp.ne.s32.totalorder %s140, %s154
    %p156 = scmp.eq.s32.totalorder %s20, 0
    %p157 = por %p155, %p156
    %s159 = sadd.s32 %s158, 1
    %p162 = scmp.eq.s32.totalorder %s14, 1
    %p163 = scmp.ne.s32.totalorder %s158, %s160
    %p164 = scmp.eq.s32.totalorder %s14, 0
    %p165 = por %p163, %p164
    %p166 = scmp.ne.s32.totalorder %s158, %s160
    %p167 = scmp.eq.s32.totalorder %s19, 1
    %p168 = por %p166, %p167
    %p169 = scmp.ne.s32.totalorder %s160, %s161
    %p170 = scmp.eq.s32.totalorder %s19, 0
    %p171 = por %p169, %p170
    %p172 = scmp.ne.s32.totalorder %s160, %s161
    %p173 = scmp.eq.s32.totalorder %s20, 1
    %p174 = por %p172, %p173
    %p176 = scmp.ne.s32.totalorder %s161, %s175
    %p177 = scmp.eq.s32.totalorder %s20, 0
    %p178 = por %p176, %p177
    %s180 = sadd.s32 %s179, 1
    %p183 = scmp.eq.s32.totalorder %s14, 1
    %p184 = scmp.ne.s32.totalorder %s179, %s181
    %p185 = scmp.eq.s32.totalorder %s14, 0
    %p186 = por %p184, %p185
    %p187 = scmp.ne.s32.totalorder %s179, %s181
    %p188 = scmp.eq.s32.totalorder %s19, 1
    %p189 = por %p187, %p188
    %p190 = scmp.ne.s32.totalorder %s181, %s182
    %p191 = scmp.eq.s32.totalorder %s19, 0
    %p192 = por %p190, %p191
    %p193 = scmp.ne.s32.totalorder %s181, %s182
    %p194 = scmp.eq.s32.totalorder %s20, 1
    %p195 = por %p193, %p194
    %p197 = scmp.ne.s32.totalorder %s182, %s196
    %p198 = scmp.eq.s32.totalorder %s20, 0
    %p199 = por %p197, %p198
    %s200 = ssub.s32 %s14, %s21
    %p201 = scmp.eq.s32.totalorder %s200, 0
    %s203 = sadd.s32 %s202, 1
    %s204 = scalar_select %p201, %s202, %s203
    %p207 = pneg %p201
    %p208 = scmp.eq.s32.totalorder %s14, 1
    %p209 = por %p207, %p208
    %p210 = scmp.ne.s32.totalorder %s202, %s205
    %p211 = scmp.eq.s32.totalorder %s14, 0
    %p212 = por %p210, %p211
    %p213 = scmp.ne.s32.totalorder %s202, %s205
    %p214 = scmp.eq.s32.totalorder %s19, 1
    %p215 = por %p213, %p214
    %p216 = scmp.ne.s32.totalorder %s205, %s206
    %p217 = scmp.eq.s32.totalorder %s19, 0
    %p218 = por %p216, %p217
    %p219 = scmp.ne.s32.totalorder %s205, %s206
    %p220 = scmp.eq.s32.totalorder %s20, 1
    %p221 = por %p219, %p220
    %p223 = scmp.ne.s32.totalorder %s206, %s222
    %p224 = scmp.eq.s32.totalorder %s20, 0
    %p225 = por %p223, %p224
    %p226 = scmp.le.s32.totalorder 1, %s14
    %p227 = scmp.lt.s32.totalorder %s14, 3
    %p228 = pnand %p226, %p227
    %p229 = pneg %p228
    // Predicated region
    $region9: #{up_forward.1} parent=5 // pred_check
      _
    $region10: #{up_forward.1} parent=5 // pred_check_branch
      %231 = sbr.rel (%p228) target = $region12
    $region11: #{up_forward.1} parent=5 // pred_region
      %s232 = ssub.s32 %s14, 1
      // Predicated region
      $region13: #{up_forward.1} parent=11 // pred_check
        %p233 = pneg %p87
      $region14: #{up_forward.1} parent=11 // pred_check_branch
        %235 = sbr.rel (%p233) target = $region16
      $region15: #{up_forward.1} parent=11 // pred_region
        _
      $region16: #{up_forward.1} parent=11 // pred_fallthru
        _
      // Predicated region
      $region17: #{up_forward.1} parent=11 // pred_check
        %p236 = pneg %p108
      $region18: #{up_forward.1} parent=11 // pred_check_branch
        %238 = sbr.rel (%p236) target = $region20
      $region19: #{up_forward.1} parent=11 // pred_region
        _
      $region20: #{up_forward.1} parent=11 // pred_fallthru
        _
      // Predicated region
      $region21: #{up_forward.1} parent=11 // pred_check
        %p239 = pneg %p129
      $region22: #{up_forward.1} parent=11 // pred_check_branch
        %241 = sbr.rel (%p239) target = $region24
      $region23: #{up_forward.1} parent=11 // pred_region
        _
      $region24: #{up_forward.1} parent=11 // pred_fallthru
        _
      // Predicated region
      $region25: #{up_forward.1} parent=11 // pred_check
        %p242 = pneg %p150
      $region26: #{up_forward.1} parent=11 // pred_check_branch
        %244 = sbr.rel (%p242) target = $region28
      $region27: #{up_forward.1} parent=11 // pred_region
        _
      $region28: #{up_forward.1} parent=11 // pred_fallthru
        _
      // Predicated region
      $region29: #{up_forward.1} parent=11 // pred_check
        %p245 = pneg %p171
      $region30: #{up_forward.1} parent=11 // pred_check_branch
        %247 = sbr.rel (%p245) target = $region32
      $region31: #{up_forward.1} parent=11 // pred_region
        _
      $region32: #{up_forward.1} parent=11 // pred_fallthru
        _
      // Predicated region
      $region33: #{up_forward.1} parent=11 // pred_check
        %p248 = pneg %p192
      $region34: #{up_forward.1} parent=11 // pred_check_branch
        %250 = sbr.rel (%p248) target = $region36
      $region35: #{up_forward.1} parent=11 // pred_region
        _
      $region36: #{up_forward.1} parent=11 // pred_fallthru
        _
    $region12: #{up_forward.1} parent=5 // pred_fallthru
      _
    %p251 = scmp.lt.s32.totalorder %s14, 2
    // Predicated region
    $region37: #{up_forward.1} parent=5 // pred_check
      %p252 = pneg %p251
    $region38: #{up_forward.1} parent=5 // pred_check_branch
      %254 = sbr.rel (%p252) target = $region40
    $region39: #{up_forward.1} parent=5 // pred_region
      // Predicated region
      $region41: #{up_forward.1} parent=39 // pred_check
        %p255 = pneg %p34
      $region42: #{up_forward.1} parent=39 // pred_check_branch
        %257 = sbr.rel (%p255) target = $region44
      $region43: #{up_forward.1} parent=39 // pred_region
        %p258 = scmp.lt.s32.totalorder %s14, 1
        %s259 = scalar_select %p258, %s14, 1
        %s260 = smul.addr %s259, 48
        %s261 = smul.addr %s260, 4
        %s262 = scalar_lea.vmem %s0, %s261
      $region44: #{up_forward.1} parent=39 // pred_fallthru
        _
      // Predicated region
      $region45: #{up_forward.1} parent=39 // pred_check
        %p263 = pneg %p60
      $region46: #{up_forward.1} parent=39 // pred_check_branch
        %265 = sbr.rel (%p263) target = $region48
      $region47: #{up_forward.1} parent=39 // pred_region
        %p266 = scmp.lt.s32.totalorder %s14, 1
        %s267 = scalar_select %p266, %s14, 1
        %s268 = smul.addr %s267, 48
        %s269 = smul.addr %s268, 4
        %s270 = scalar_lea.vmem %s1, %s269
      $region48: #{up_forward.1} parent=39 // pred_fallthru
        _
    $region40: #{up_forward.1} parent=5 // pred_fallthru
      _
    %p271 = scmp.le.s32.totalorder 1, %s14
    %p272 = scmp.lt.s32.totalorder %s14, 3
    %p273 = pnand %p271, %p272
    %p274 = pneg %p273
    // Predicated region
    $region49: #{up_forward.1} parent=5 // pred_check
      _
    $region50: #{up_forward.1} parent=5 // pred_check_branch
      %276 = sbr.rel (%p273) target = $region52
    $region51: #{up_forward.1} parent=5 // pred_region
      %s277 = ssub.s32 %s14, 1
      %p278 = scmp.lt.s32.totalorder %s19, 1
      %s279 = scalar_select %p278, %s19, 1
      %s280 = smul.addr %s279, 48
      %s281 = smul.addr %s280, 4
      %s282 = scalar_lea.vmem %s0, %s281
      %p283 = pneg %p40
      %p284 = pneg %p37
      %p285 = scmp.lt.s32.totalorder %s19, 1
      %s286 = scalar_select %p285, %s19, 1
      %s287 = smul.addr %s286, 48
      %s288 = smul.addr %s287, 4
      %s289 = scalar_lea.vmem %s1, %s288
      %p290 = pneg %p66
      %p291 = pneg %p63
      %p292 = pneg %p87
      %p293 = pneg %p84
      %p294 = pneg %p108
      %p295 = pneg %p105
      %p296 = pneg %p129
      %p297 = pneg %p126
      %p298 = pneg %p150
      %p299 = pneg %p147
      %p300 = pneg %p171
      %p301 = pneg %p168
      %p302 = pneg %p192
      %p303 = pneg %p189
      %p304 = pneg %p218
      %p305 = pneg %p215
      %p306 = scmp.lt.s32.totalorder %s19, 1
      %s307 = scalar_select %p306, %s19, 1
      %s308 = smul.addr %s307, 48
      %s309 = smul.addr %s308, 4
      %s310 = scalar_lea.vmem %s8, %s309
      %p311 = scmp.lt.s32.totalorder %s19, 1
      %s312 = scalar_select %p311, %s19, 1
      %s313 = smul.addr %s312, 48
      %s314 = smul.addr %s313, 4
      %s315 = scalar_lea.vmem %s0, %s314
      %p316 = scmp.lt.s32.totalorder %s19, 1
      %s317 = scalar_select %p316, %s19, 1
      %s318 = smul.addr %s317, 48
      %s319 = smul.addr %s318, 4
      %s320 = scalar_lea.vmem %s1, %s319
      %p321 = scmp.lt.s32.totalorder %s19, 1
      %s322 = scalar_select %p321, %s19, 1
      %s323 = smul.addr %s322, 48
      %s324 = smul.addr %s323, 4
      %s325 = scalar_lea.vmem %s8, %s324
      %vm327 = vcmask 27648
      %328 = vst.msk [vmem:[#allocation2] sm:$0xf] %vm327, 0
      %329 = vst.msk [vmem:[#allocation2 + $0x4] sm:$0xf] %vm327, 0
      %330 = vst.msk [vmem:[#allocation2 + $0x8] sm:$0xf] %vm327, 0
      %vm331 = vcmask 24576
      %vm332 = vsmask.f32 256
      %vm333 = vmand %vm331, %vm332
      %v334 = vld [vmem:[#allocation2 + $0xc] sm:$0x1]
      %v335 = vsel %vm333, 0, %v334
      %336 = vst [vmem:[#allocation2 + $0xc] sm:$0x1] %v335
      %vm337 = vcmask 27648
      %vm338 = vsmask.f32 7938
      %vm339 = vmand %vm337, %vm338
      %v340 = vld [vmem:[#allocation2 + $0xcc] sm:$0xf]
      %v341 = vsel %vm339, 0, %v340
      %342 = vst [vmem:[#allocation2 + $0xcc] sm:$0xf] %v341
      %343 = vst.msk [vmem:[#allocation2 + $0xd0] sm:$0xf] %vm327, 0
      %344 = vst.msk [vmem:[#allocation2 + $0xd4] sm:$0xf] %vm327, 0
      %345 = vst.msk [vmem:[#allocation2 + $0xd8] sm:$0xf] %vm327, 0
      %v346 = vld [vmem:[%s315] sm:$0xf]
      %v347 = vld [vmem:[%s315 + $0x4] sm:$0xf]
      %v348 = vld [vmem:[%s315 + $0x8] sm:$0xf]
      %v349 = vld [vmem:[%s315 + $0xc] sm:$0xf]
      %v350 = vld [vmem:[%s315 + $0x10] sm:$0xf]
      %v351 = vld [vmem:[%s315 + $0x14] sm:$0xf]
      %v352 = vld [vmem:[%s315 + $0x18] sm:$0xf]
      %v353 = vld [vmem:[%s315 + $0x1c] sm:$0xf]
      %v354 = vld [vmem:[%s315 + $0x20] sm:$0xf]
      %v355 = vld [vmem:[%s315 + $0x24] sm:$0xf]
      %v356 = vld [vmem:[%s315 + $0x28] sm:$0xf]
      %v357 = vld [vmem:[%s315 + $0x2c] sm:$0xf]
      %v358 = vld [vmem:[%s315 + $0x30] sm:$0xf]
      %v359 = vld [vmem:[%s315 + $0x34] sm:$0xf]
      %v360 = vld [vmem:[%s315 + $0x38] sm:$0xf]
      %v361 = vld [vmem:[%s315 + $0x3c] sm:$0xf]
      %v362 = vld [vmem:[%s315 + $0x40] sm:$0xf]
      %v363 = vld [vmem:[%s315 + $0x44] sm:$0xf]
      %v364 = vld [vmem:[%s315 + $0x48] sm:$0xf]
      %v365 = vld [vmem:[%s315 + $0x4c] sm:$0xf]
      %v366 = vld [vmem:[%s315 + $0x50] sm:$0xf]
      %v367 = vld [vmem:[%s315 + $0x54] sm:$0xf]
      %v368 = vld [vmem:[%s315 + $0x58] sm:$0xf]
      %v369 = vld [vmem:[%s315 + $0x5c] sm:$0xf]
      %v370 = vld [vmem:[%s315 + $0x60] sm:$0xf]
      %v371 = vld [vmem:[%s315 + $0x64] sm:$0xf]
      %v372 = vld [vmem:[%s315 + $0x68] sm:$0xf]
      %v373 = vld [vmem:[%s315 + $0x6c] sm:$0xf]
      %v374 = vld [vmem:[%s315 + $0x70] sm:$0xf]
      %v375 = vld [vmem:[%s315 + $0x74] sm:$0xf]
      %v376 = vld [vmem:[%s315 + $0x78] sm:$0xf]
      %v377 = vld [vmem:[%s315 + $0x7c] sm:$0xf]
      %v378 = vld [vmem:[%s315 + $0x80] sm:$0xf]
      %v379 = vld [vmem:[%s315 + $0x84] sm:$0xf]
      %v380 = vld [vmem:[%s315 + $0x88] sm:$0xf]
      %v381 = vld [vmem:[%s315 + $0x8c] sm:$0xf]
      %v382 = vld [vmem:[%s315 + $0x90] sm:$0xf]
      %v383 = vld [vmem:[%s315 + $0x94] sm:$0xf]
      %v384 = vld [vmem:[%s315 + $0x98] sm:$0xf]
      %v385 = vld [vmem:[%s315 + $0x9c] sm:$0xf]
      %v386 = vld [vmem:[%s315 + $0xa0] sm:$0xf]
      %v387 = vld [vmem:[%s315 + $0xa4] sm:$0xf]
      %v388 = vld [vmem:[%s315 + $0xa8] sm:$0xf]
      %v389 = vld [vmem:[%s315 + $0xac] sm:$0xf]
      %v390 = vld [vmem:[%s315 + $0xb0] sm:$0xf]
      %v391 = vld [vmem:[%s315 + $0xb4] sm:$0xf]
      %v392 = vld [vmem:[%s315 + $0xb8] sm:$0xf]
      %v393 = vld [vmem:[%s315 + $0xbc] sm:$0xf]
      %vm394 = vsmask.f32 4368
      %vm395 = vmor %vm332, %vm394
      %v397 = vshrl.u32 %v346, 16
      %v399 = vrot.slane %v397, 7
      %v400 = vshll.u32 %v346, 16
      %v402 = vor.u32 %v399, %v400
      %v403 = vrot.slane %v399, 4
      %v405 = vshrl.u32 %v347, 16
      %v407 = vrot.slane %v405, 7
      %v408 = vshll.u32 %v347, 16
      %v410 = vor.u32 %v407, %v408
      %v411 = vsel %vm395, %v403, %v410
      %v412 = vrot.slane %v407, 4
      %v414 = vshrl.u32 %v348, 16
      %v416 = vrot.slane %v414, 7
      %v417 = vshll.u32 %v348, 16
      %v419 = vor.u32 %v416, %v417
      %v420 = vsel %vm395, %v412, %v419
      %v421 = vrot.slane %v416, 4
      %v423 = vshrl.u32 %v349, 16
      %v425 = vrot.slane %v423, 7
      %v426 = vshll.u32 %v349, 16
      %v428 = vor.u32 %v425, %v426
      %v429 = vsel %vm395, %v421, %v428
      %v430 = vrot.slane %v425, 4
      %v432 = vshrl.u32 %v350, 16
      %v434 = vrot.slane %v432, 7
      %v435 = vshll.u32 %v350, 16
      %v437 = vor.u32 %v434, %v435
      %v438 = vsel %vm395, %v430, %v437
      %v439 = vrot.slane %v434, 4
      %v441 = vshrl.u32 %v351, 16
      %v443 = vrot.slane %v441, 7
      %v444 = vshll.u32 %v351, 16
      %v446 = vor.u32 %v443, %v444
      %v447 = vsel %vm395, %v439, %v446
      %v448 = vrot.slane %v443, 4
      %v450 = vshrl.u32 %v352, 16
      %v452 = vrot.slane %v450, 7
      %v453 = vshll.u32 %v352, 16
      %v455 = vor.u32 %v452, %v453
      %v456 = vsel %vm395, %v448, %v455
      %v457 = vrot.slane %v452, 4
      %v459 = vshrl.u32 %v353, 16
      %v461 = vrot.slane %v459, 7
      %v462 = vshll.u32 %v353, 16
      %v464 = vor.u32 %v461, %v462
      %v465 = vsel %vm395, %v457, %v464
      %v466 = vrot.slane %v461, 4
      %v468 = vshrl.u32 %v354, 16
      %v470 = vrot.slane %v468, 7
      %v471 = vshll.u32 %v354, 16
      %v473 = vor.u32 %v470, %v471
      %v474 = vsel %vm395, %v466, %v473
      %v475 = vrot.slane %v470, 4
      %v477 = vshrl.u32 %v355, 16
      %v479 = vrot.slane %v477, 7
      %v480 = vshll.u32 %v355, 16
      %v482 = vor.u32 %v479, %v480
      %v483 = vsel %vm395, %v475, %v482
      %v484 = vrot.slane %v479, 4
      %v486 = vshrl.u32 %v356, 16
      %v488 = vrot.slane %v486, 7
      %v489 = vshll.u32 %v356, 16
      %v491 = vor.u32 %v488, %v489
      %v492 = vsel %vm395, %v484, %v491
      %v493 = vrot.slane %v488, 4
      %v495 = vshrl.u32 %v357, 16
      %v497 = vrot.slane %v495, 7
      %v498 = vshll.u32 %v357, 16
      %v500 = vor.u32 %v497, %v498
      %v501 = vsel %vm395, %v493, %v500
      %v502 = vrot.slane %v497, 4
      %v504 = vshrl.u32 %v358, 16
      %v506 = vrot.slane %v504, 7
      %v507 = vshll.u32 %v358, 16
      %v509 = vor.u32 %v506, %v507
      %v510 = vsel %vm395, %v502, %v509
      %v511 = vrot.slane %v506, 4
      %v513 = vshrl.u32 %v359, 16
      %v515 = vrot.slane %v513, 7
      %v516 = vshll.u32 %v359, 16
      %v518 = vor.u32 %v515, %v516
      %v519 = vsel %vm395, %v511, %v518
      %v520 = vrot.slane %v515, 4
      %v522 = vshrl.u32 %v360, 16
      %v524 = vrot.slane %v522, 7
      %v525 = vshll.u32 %v360, 16
      %v527 = vor.u32 %v524, %v525
      %v528 = vsel %vm395, %v520, %v527
      %v529 = vrot.slane %v524, 4
      %v531 = vshrl.u32 %v361, 16
      %v533 = vrot.slane %v531, 7
      %v534 = vshll.u32 %v361, 16
      %v536 = vor.u32 %v533, %v534
      %v537 = vsel %vm395, %v529, %v536
      %v538 = vrot.slane %v533, 4
      %v540 = vshrl.u32 %v362, 16
      %v542 = vrot.slane %v540, 7
      %v543 = vshll.u32 %v362, 16
      %v545 = vor.u32 %v542, %v543
      %v546 = vsel %vm395, %v538, %v545
      %v547 = vrot.slane %v542, 4
      %v549 = vshrl.u32 %v363, 16
      %v551 = vrot.slane %v549, 7
      %v552 = vshll.u32 %v363, 16
      %v554 = vor.u32 %v551, %v552
      %v555 = vsel %vm395, %v547, %v554
      %v556 = vrot.slane %v551, 4
      %v558 = vshrl.u32 %v364, 16
      %v560 = vrot.slane %v558, 7
      %v561 = vshll.u32 %v364, 16
      %v563 = vor.u32 %v560, %v561
      %v564 = vsel %vm395, %v556, %v563
      %v565 = vrot.slane %v560, 4
      %v567 = vshrl.u32 %v365, 16
      %v569 = vrot.slane %v567, 7
      %v570 = vshll.u32 %v365, 16
      %v572 = vor.u32 %v569, %v570
      %v573 = vsel %vm395, %v565, %v572
      %v574 = vrot.slane %v569, 4
      %v576 = vshrl.u32 %v366, 16
      %v578 = vrot.slane %v576, 7
      %v579 = vshll.u32 %v366, 16
      %v581 = vor.u32 %v578, %v579
      %v582 = vsel %vm395, %v574, %v581
      %v583 = vrot.slane %v578, 4
      %v585 = vshrl.u32 %v367, 16
      %v587 = vrot.slane %v585, 7
      %v588 = vshll.u32 %v367, 16
      %v590 = vor.u32 %v587, %v588
      %v591 = vsel %vm395, %v583, %v590
      %v592 = vrot.slane %v587, 4
      %v594 = vshrl.u32 %v368, 16
      %v596 = vrot.slane %v594, 7
      %v597 = vshll.u32 %v368, 16
      %v599 = vor.u32 %v596, %v597
      %v600 = vsel %vm395, %v592, %v599
      %v601 = vrot.slane %v596, 4
      %v603 = vshrl.u32 %v369, 16
      %v605 = vrot.slane %v603, 7
      %v606 = vshll.u32 %v369, 16
      %v608 = vor.u32 %v605, %v606
      %v609 = vsel %vm395, %v601, %v608
      %v610 = vrot.slane %v605, 4
      %v612 = vshrl.u32 %v370, 16
      %v614 = vrot.slane %v612, 7
      %v615 = vshll.u32 %v370, 16
      %v617 = vor.u32 %v614, %v615
      %v618 = vsel %vm395, %v610, %v617
      %v619 = vrot.slane %v614, 4
      %v621 = vshrl.u32 %v371, 16
      %v623 = vrot.slane %v621, 7
      %v624 = vshll.u32 %v371, 16
      %v626 = vor.u32 %v623, %v624
      %v627 = vsel %vm395, %v619, %v626
      %v628 = vrot.slane %v623, 4
      %v630 = vshrl.u32 %v372, 16
      %v632 = vrot.slane %v630, 7
      %v633 = vshll.u32 %v372, 16
      %v635 = vor.u32 %v632, %v633
      %v636 = vsel %vm395, %v628, %v635
      %v637 = vrot.slane %v632, 4
      %v639 = vshrl.u32 %v373, 16
      %v641 = vrot.slane %v639, 7
      %v642 = vshll.u32 %v373, 16
      %v644 = vor.u32 %v641, %v642
      %v645 = vsel %vm395, %v637, %v644
      %v646 = vrot.slane %v641, 4
      %v648 = vshrl.u32 %v374, 16
      %v650 = vrot.slane %v648, 7
      %v651 = vshll.u32 %v374, 16
      %v653 = vor.u32 %v650, %v651
      %v654 = vsel %vm395, %v646, %v653
      %v655 = vrot.slane %v650, 4
      %v657 = vshrl.u32 %v375, 16
      %v659 = vrot.slane %v657, 7
      %v660 = vshll.u32 %v375, 16
      %v662 = vor.u32 %v659, %v660
      %v663 = vsel %vm395, %v655, %v662
      %v664 = vrot.slane %v659, 4
      %v666 = vshrl.u32 %v376, 16
      %v668 = vrot.slane %v666, 7
      %v669 = vshll.u32 %v376, 16
      %v671 = vor.u32 %v668, %v669
      %v672 = vsel %vm395, %v664, %v671
      %v673 = vrot.slane %v668, 4
      %v675 = vshrl.u32 %v377, 16
      %v677 = vrot.slane %v675, 7
      %v678 = vshll.u32 %v377, 16
      %v680 = vor.u32 %v677, %v678
      %v681 = vsel %vm395, %v673, %v680
      %v682 = vrot.slane %v677, 4
      %v684 = vshrl.u32 %v378, 16
      %v686 = vrot.slane %v684, 7
      %v687 = vshll.u32 %v378, 16
      %v689 = vor.u32 %v686, %v687
      %v690 = vsel %vm395, %v682, %v689
      %v691 = vrot.slane %v686, 4
      %v693 = vshrl.u32 %v379, 16
      %v695 = vrot.slane %v693, 7
      %v696 = vshll.u32 %v379, 16
      %v698 = vor.u32 %v695, %v696
      %v699 = vsel %vm395, %v691, %v698
      %v700 = vrot.slane %v695, 4
      %v702 = vshrl.u32 %v380, 16
      %v704 = vrot.slane %v702, 7
      %v705 = vshll.u32 %v380, 16
      %v707 = vor.u32 %v704, %v705
      %v708 = vsel %vm395, %v700, %v707
      %v709 = vrot.slane %v704, 4
      %v711 = vshrl.u32 %v381, 16
      %v713 = vrot.slane %v711, 7
      %v714 = vshll.u32 %v381, 16
      %v716 = vor.u32 %v713, %v714
      %v717 = vsel %vm395, %v709, %v716
      %v718 = vrot.slane %v713, 4
      %v720 = vshrl.u32 %v382, 16
      %v722 = vrot.slane %v720, 7
      %v723 = vshll.u32 %v382, 16
      %v725 = vor.u32 %v722, %v723
      %v726 = vsel %vm395, %v718, %v725
      %v727 = vrot.slane %v722, 4
      %v729 = vshrl.u32 %v383, 16
      %v731 = vrot.slane %v729, 7
      %v732 = vshll.u32 %v383, 16
      %v734 = vor.u32 %v731, %v732
      %v735 = vsel %vm395, %v727, %v734
      %v736 = vrot.slane %v731, 4
      %v738 = vshrl.u32 %v384, 16
      %v740 = vrot.slane %v738, 7
      %v741 = vshll.u32 %v384, 16
      %v743 = vor.u32 %v740, %v741
      %v744 = vsel %vm395, %v736, %v743
      %v745 = vrot.slane %v740, 4
      %v747 = vshrl.u32 %v385, 16
      %v749 = vrot.slane %v747, 7
      %v750 = vshll.u32 %v385, 16
      %v752 = vor.u32 %v749, %v750
      %v753 = vsel %vm395, %v745, %v752
      %v754 = vrot.slane %v749, 4
      %v756 = vshrl.u32 %v386, 16
      %v758 = vrot.slane %v756, 7
      %v759 = vshll.u32 %v386, 16
      %v761 = vor.u32 %v758, %v759
      %v762 = vsel %vm395, %v754, %v761
      %v763 = vrot.slane %v758, 4
      %v765 = vshrl.u32 %v387, 16
      %v767 = vrot.slane %v765, 7
      %v768 = vshll.u32 %v387, 16
      %v770 = vor.u32 %v767, %v768
      %v771 = vsel %vm395, %v763, %v770
      %v772 = vrot.slane %v767, 4
      %v774 = vshrl.u32 %v388, 16
      %v776 = vrot.slane %v774, 7
      %v777 = vshll.u32 %v388, 16
      %v779 = vor.u32 %v776, %v777
      %v780 = vsel %vm395, %v772, %v779
      %v781 = vrot.slane %v776, 4
      %v783 = vshrl.u32 %v389, 16
      %v785 = vrot.slane %v783, 7
      %v786 = vshll.u32 %v389, 16
      %v788 = vor.u32 %v785, %v786
      %v789 = vsel %vm395, %v781, %v788
      %v790 = vrot.slane %v785, 4
      %v792 = vshrl.u32 %v390, 16
      %v794 = vrot.slane %v792, 7
      %v795 = vshll.u32 %v390, 16
      %v797 = vor.u32 %v794, %v795
      %v798 = vsel %vm395, %v790, %v797
      %v799 = vrot.slane %v794, 4
      %v801 = vshrl.u32 %v391, 16
      %v803 = vrot.slane %v801, 7
      %v804 = vshll.u32 %v391, 16
      %v806 = vor.u32 %v803, %v804
      %v807 = vsel %vm395, %v799, %v806
      %v808 = vrot.slane %v803, 4
      %v810 = vshrl.u32 %v392, 16
      %v812 = vrot.slane %v810, 7
      %v813 = vshll.u32 %v392, 16
      %v815 = vor.u32 %v812, %v813
      %v816 = vsel %vm395, %v808, %v815
      %v817 = vrot.slane %v812, 4
      %v819 = vshrl.u32 %v393, 16
      %v821 = vrot.slane %v819, 7
      %v822 = vshll.u32 %v393, 16
      %v824 = vor.u32 %v821, %v822
      %v825 = vsel %vm395, %v817, %v824
      %v826 = vrot.slane %v821, 4
      %vm876 = vcmask 11264
      %vm877 = vmand %vm876, %vm338
      %v878 = vld [vmem:[#allocation2 + $0xc] sm:$0xf]
      %v879 = vsel %vm877, %v402, %v878
      %880 = vst [vmem:[#allocation2 + $0xc] sm:$0xf] %v879
      %vm881 = vcmask 11264
      %882 = vst.msk [vmem:[#allocation2 + $0x10] sm:$0xf] %vm881, %v411
      %883 = vst.msk [vmem:[#allocation2 + $0x14] sm:$0xf] %vm881, %v420
      %884 = vst.msk [vmem:[#allocation2 + $0x18] sm:$0xf] %vm881, %v429
      %885 = vst.msk [vmem:[#allocation2 + $0x1c] sm:$0xf] %vm881, %v438
      %886 = vst.msk [vmem:[#allocation2 + $0x20] sm:$0xf] %vm881, %v447
      %887 = vst.msk [vmem:[#allocation2 + $0x24] sm:$0xf] %vm881, %v456
      %888 = vst.msk [vmem:[#allocation2 + $0x28] sm:$0xf] %vm881, %v465
      %889 = vst.msk [vmem:[#allocation2 + $0x2c] sm:$0xf] %vm881, %v474
      %890 = vst.msk [vmem:[#allocation2 + $0x30] sm:$0xf] %vm881, %v483
      %891 = vst.msk [vmem:[#allocation2 + $0x34] sm:$0xf] %vm881, %v492
      %892 = vst.msk [vmem:[#allocation2 + $0x38] sm:$0xf] %vm881, %v501
      %893 = vst.msk [vmem:[#allocation2 + $0x3c] sm:$0xf] %vm881, %v510
      %894 = vst.msk [vmem:[#allocation2 + $0x40] sm:$0xf] %vm881, %v519
      %895 = vst.msk [vmem:[#allocation2 + $0x44] sm:$0xf] %vm881, %v528
      %896 = vst.msk [vmem:[#allocation2 + $0x48] sm:$0xf] %vm881, %v537
      %897 = vst.msk [vmem:[#allocation2 + $0x4c] sm:$0xf] %vm881, %v546
      %898 = vst.msk [vmem:[#allocation2 + $0x50] sm:$0xf] %vm881, %v555
      %899 = vst.msk [vmem:[#allocation2 + $0x54] sm:$0xf] %vm881, %v564
      %900 = vst.msk [vmem:[#allocation2 + $0x58] sm:$0xf] %vm881, %v573
      %901 = vst.msk [vmem:[#allocation2 + $0x5c] sm:$0xf] %vm881, %v582
      %902 = vst.msk [vmem:[#allocation2 + $0x60] sm:$0xf] %vm881, %v591
      %903 = vst.msk [vmem:[#allocation2 + $0x64] sm:$0xf] %vm881, %v600
      %904 = vst.msk [vmem:[#allocation2 + $0x68] sm:$0xf] %vm881, %v609
      %905 = vst.msk [vmem:[#allocation2 + $0x6c] sm:$0xf] %vm881, %v618
      %906 = vst.msk [vmem:[#allocation2 + $0x70] sm:$0xf] %vm881, %v627
      %907 = vst.msk [vmem:[#allocation2 + $0x74] sm:$0xf] %vm881, %v636
      %908 = vst.msk [vmem:[#allocation2 + $0x78] sm:$0xf] %vm881, %v645
      %909 = vst.msk [vmem:[#allocation2 + $0x7c] sm:$0xf] %vm881, %v654
      %910 = vst.msk [vmem:[#allocation2 + $0x80] sm:$0xf] %vm881, %v663
      %911 = vst.msk [vmem:[#allocation2 + $0x84] sm:$0xf] %vm881, %v672
      %912 = vst.msk [vmem:[#allocation2 + $0x88] sm:$0xf] %vm881, %v681
      %913 = vst.msk [vmem:[#allocation2 + $0x8c] sm:$0xf] %vm881, %v690
      %914 = vst.msk [vmem:[#allocation2 + $0x90] sm:$0xf] %vm881, %v699
      %915 = vst.msk [vmem:[#allocation2 + $0x94] sm:$0xf] %vm881, %v708
      %916 = vst.msk [vmem:[#allocation2 + $0x98] sm:$0xf] %vm881, %v717
      %917 = vst.msk [vmem:[#allocation2 + $0x9c] sm:$0xf] %vm881, %v726
      %918 = vst.msk [vmem:[#allocation2 + $0xa0] sm:$0xf] %vm881, %v735
      %919 = vst.msk [vmem:[#allocation2 + $0xa4] sm:$0xf] %vm881, %v744
      %920 = vst.msk [vmem:[#allocation2 + $0xa8] sm:$0xf] %vm881, %v753
      %921 = vst.msk [vmem:[#allocation2 + $0xac] sm:$0xf] %vm881, %v762
      %922 = vst.msk [vmem:[#allocation2 + $0xb0] sm:$0xf] %vm881, %v771
      %923 = vst.msk [vmem:[#allocation2 + $0xb4] sm:$0xf] %vm881, %v780
      %924 = vst.msk [vmem:[#allocation2 + $0xb8] sm:$0xf] %vm881, %v789
      %925 = vst.msk [vmem:[#allocation2 + $0xbc] sm:$0xf] %vm881, %v798
      %926 = vst.msk [vmem:[#allocation2 + $0xc0] sm:$0xf] %vm881, %v807
      %927 = vst.msk [vmem:[#allocation2 + $0xc4] sm:$0xf] %vm881, %v816
      %928 = vst.msk [vmem:[#allocation2 + $0xc8] sm:$0xf] %vm881, %v825
      %vm929 = vcmask 8192
      %vm930 = vmand %vm929, %vm332
      %v931 = vld [vmem:[#allocation2 + $0xcc] sm:$0x1]
      %v932 = vsel %vm930, %v826, %v931
      %933 = vst [vmem:[#allocation2 + $0xcc] sm:$0x1] %v932
      %v934 = vld [vmem:[%s320] sm:$0xf]
      %v935 = vld [vmem:[%s320 + $0x4] sm:$0xf]
      %v936 = vld [vmem:[%s320 + $0x8] sm:$0xf]
      %v937 = vld [vmem:[%s320 + $0xc] sm:$0xf]
      %v938 = vld [vmem:[%s320 + $0x10] sm:$0xf]
      %v939 = vld [vmem:[%s320 + $0x14] sm:$0xf]
      %v940 = vld [vmem:[%s320 + $0x18] sm:$0xf]
      %v941 = vld [vmem:[%s320 + $0x1c] sm:$0xf]
      %v942 = vld [vmem:[%s320 + $0x20] sm:$0xf]
      %v943 = vld [vmem:[%s320 + $0x24] sm:$0xf]
      %v944 = vld [vmem:[%s320 + $0x28] sm:$0xf]
      %v945 = vld [vmem:[%s320 + $0x2c] sm:$0xf]
      %v946 = vld [vmem:[%s320 + $0x30] sm:$0xf]
      %v947 = vld [vmem:[%s320 + $0x34] sm:$0xf]
      %v948 = vld [vmem:[%s320 + $0x38] sm:$0xf]
      %v949 = vld [vmem:[%s320 + $0x3c] sm:$0xf]
      %v950 = vld [vmem:[%s320 + $0x40] sm:$0xf]
      %v951 = vld [vmem:[%s320 + $0x44] sm:$0xf]
      %v952 = vld [vmem:[%s320 + $0x48] sm:$0xf]
      %v953 = vld [vmem:[%s320 + $0x4c] sm:$0xf]
      %v954 = vld [vmem:[%s320 + $0x50] sm:$0xf]
      %v955 = vld [vmem:[%s320 + $0x54] sm:$0xf]
      %v956 = vld [vmem:[%s320 + $0x58] sm:$0xf]
      %v957 = vld [vmem:[%s320 + $0x5c] sm:$0xf]
      %v958 = vld [vmem:[%s320 + $0x60] sm:$0xf]
      %v959 = vld [vmem:[%s320 + $0x64] sm:$0xf]
      %v960 = vld [vmem:[%s320 + $0x68] sm:$0xf]
      %v961 = vld [vmem:[%s320 + $0x6c] sm:$0xf]
      %v962 = vld [vmem:[%s320 + $0x70] sm:$0xf]
      %v963 = vld [vmem:[%s320 + $0x74] sm:$0xf]
      %v964 = vld [vmem:[%s320 + $0x78] sm:$0xf]
      %v965 = vld [vmem:[%s320 + $0x7c] sm:$0xf]
      %v966 = vld [vmem:[%s320 + $0x80] sm:$0xf]
      %v967 = vld [vmem:[%s320 + $0x84] sm:$0xf]
      %v968 = vld [vmem:[%s320 + $0x88] sm:$0xf]
      %v969 = vld [vmem:[%s320 + $0x8c] sm:$0xf]
      %v970 = vld [vmem:[%s320 + $0x90] sm:$0xf]
      %v971 = vld [vmem:[%s320 + $0x94] sm:$0xf]
      %v972 = vld [vmem:[%s320 + $0x98] sm:$0xf]
      %v973 = vld [vmem:[%s320 + $0x9c] sm:$0xf]
      %v974 = vld [vmem:[%s320 + $0xa0] sm:$0xf]
      %v975 = vld [vmem:[%s320 + $0xa4] sm:$0xf]
      %v976 = vld [vmem:[%s320 + $0xa8] sm:$0xf]
      %v977 = vld [vmem:[%s320 + $0xac] sm:$0xf]
      %v978 = vld [vmem:[%s320 + $0xb0] sm:$0xf]
      %v979 = vld [vmem:[%s320 + $0xb4] sm:$0xf]
      %v980 = vld [vmem:[%s320 + $0xb8] sm:$0xf]
      %v981 = vld [vmem:[%s320 + $0xbc] sm:$0xf]
      %v983 = vshrl.u32 %v934, 16
      %v985 = vrot.slane %v983, 7
      %v986 = vshll.u32 %v934, 16
      %v988 = vor.u32 %v985, %v986
      %v989 = vrot.slane %v985, 4
      %v991 = vshrl.u32 %v935, 16
      %v993 = vrot.slane %v991, 7
      %v994 = vshll.u32 %v935, 16
      %v996 = vor.u32 %v993, %v994
      %v997 = vsel %vm395, %v989, %v996
      %v998 = vrot.slane %v993, 4
      %v1000 = vshrl.u32 %v936, 16
      %v1002 = vrot.slane %v1000, 7
      %v1003 = vshll.u32 %v936, 16
      %v1005 = vor.u32 %v1002, %v1003
      %v1006 = vsel %vm395, %v998, %v1005
      %v1007 = vrot.slane %v1002, 4
      %v1009 = vshrl.u32 %v937, 16
      %v1011 = vrot.slane %v1009, 7
      %v1012 = vshll.u32 %v937, 16
      %v1014 = vor.u32 %v1011, %v1012
      %v1015 = vsel %vm395, %v1007, %v1014
      %v1016 = vrot.slane %v1011, 4
      %v1018 = vshrl.u32 %v938, 16
      %v1020 = vrot.slane %v1018, 7
      %v1021 = vshll.u32 %v938, 16
      %v1023 = vor.u32 %v1020, %v1021
      %v1024 = vsel %vm395, %v1016, %v1023
      %v1025 = vrot.slane %v1020, 4
      %v1027 = vshrl.u32 %v939, 16
      %v1029 = vrot.slane %v1027, 7
      %v1030 = vshll.u32 %v939, 16
      %v1032 = vor.u32 %v1029, %v1030
      %v1033 = vsel %vm395, %v1025, %v1032
      %v1034 = vrot.slane %v1029, 4
      %v1036 = vshrl.u32 %v940, 16
      %v1038 = vrot.slane %v1036, 7
      %v1039 = vshll.u32 %v940, 16
      %v1041 = vor.u32 %v1038, %v1039
      %v1042 = vsel %vm395, %v1034, %v1041
      %v1043 = vrot.slane %v1038, 4
      %v1045 = vshrl.u32 %v941, 16
      %v1047 = vrot.slane %v1045, 7
      %v1048 = vshll.u32 %v941, 16
      %v1050 = vor.u32 %v1047, %v1048
      %v1051 = vsel %vm395, %v1043, %v1050
      %v1052 = vrot.slane %v1047, 4
      %v1054 = vshrl.u32 %v942, 16
      %v1056 = vrot.slane %v1054, 7
      %v1057 = vshll.u32 %v942, 16
      %v1059 = vor.u32 %v1056, %v1057
      %v1060 = vsel %vm395, %v1052, %v1059
      %v1061 = vrot.slane %v1056, 4
      %v1063 = vshrl.u32 %v943, 16
      %v1065 = vrot.slane %v1063, 7
      %v1066 = vshll.u32 %v943, 16
      %v1068 = vor.u32 %v1065, %v1066
      %v1069 = vsel %vm395, %v1061, %v1068
      %v1070 = vrot.slane %v1065, 4
      %v1072 = vshrl.u32 %v944, 16
      %v1074 = vrot.slane %v1072, 7
      %v1075 = vshll.u32 %v944, 16
      %v1077 = vor.u32 %v1074, %v1075
      %v1078 = vsel %vm395, %v1070, %v1077
      %v1079 = vrot.slane %v1074, 4
      %v1081 = vshrl.u32 %v945, 16
      %v1083 = vrot.slane %v1081, 7
      %v1084 = vshll.u32 %v945, 16
      %v1086 = vor.u32 %v1083, %v1084
      %v1087 = vsel %vm395, %v1079, %v1086
      %v1088 = vrot.slane %v1083, 4
      %v1090 = vshrl.u32 %v946, 16
      %v1092 = vrot.slane %v1090, 7
      %v1093 = vshll.u32 %v946, 16
      %v1095 = vor.u32 %v1092, %v1093
      %v1096 = vsel %vm395, %v1088, %v1095
      %v1097 = vrot.slane %v1092, 4
      %v1099 = vshrl.u32 %v947, 16
      %v1101 = vrot.slane %v1099, 7
      %v1102 = vshll.u32 %v947, 16
      %v1104 = vor.u32 %v1101, %v1102
      %v1105 = vsel %vm395, %v1097, %v1104
      %v1106 = vrot.slane %v1101, 4
      %v1108 = vshrl.u32 %v948, 16
      %v1110 = vrot.slane %v1108, 7
      %v1111 = vshll.u32 %v948, 16
      %v1113 = vor.u32 %v1110, %v1111
      %v1114 = vsel %vm395, %v1106, %v1113
      %v1115 = vrot.slane %v1110, 4
      %v1117 = vshrl.u32 %v949, 16
      %v1119 = vrot.slane %v1117, 7
      %v1120 = vshll.u32 %v949, 16
      %v1122 = vor.u32 %v1119, %v1120
      %v1123 = vsel %vm395, %v1115, %v1122
      %v1124 = vrot.slane %v1119, 4
      %v1126 = vshrl.u32 %v950, 16
      %v1128 = vrot.slane %v1126, 7
      %v1129 = vshll.u32 %v950, 16
      %v1131 = vor.u32 %v1128, %v1129
      %v1132 = vsel %vm395, %v1124, %v1131
      %v1133 = vrot.slane %v1128, 4
      %v1135 = vshrl.u32 %v951, 16
      %v1137 = vrot.slane %v1135, 7
      %v1138 = vshll.u32 %v951, 16
      %v1140 = vor.u32 %v1137, %v1138
      %v1141 = vsel %vm395, %v1133, %v1140
      %v1142 = vrot.slane %v1137, 4
      %v1144 = vshrl.u32 %v952, 16
      %v1146 = vrot.slane %v1144, 7
      %v1147 = vshll.u32 %v952, 16
      %v1149 = vor.u32 %v1146, %v1147
      %v1150 = vsel %vm395, %v1142, %v1149
      %v1151 = vrot.slane %v1146, 4
      %v1153 = vshrl.u32 %v953, 16
      %v1155 = vrot.slane %v1153, 7
      %v1156 = vshll.u32 %v953, 16
      %v1158 = vor.u32 %v1155, %v1156
      %v1159 = vsel %vm395, %v1151, %v1158
      %v1160 = vrot.slane %v1155, 4
      %v1162 = vshrl.u32 %v954, 16
      %v1164 = vrot.slane %v1162, 7
      %v1165 = vshll.u32 %v954, 16
      %v1167 = vor.u32 %v1164, %v1165
      %v1168 = vsel %vm395, %v1160, %v1167
      %v1169 = vrot.slane %v1164, 4
      %v1171 = vshrl.u32 %v955, 16
      %v1173 = vrot.slane %v1171, 7
      %v1174 = vshll.u32 %v955, 16
      %v1176 = vor.u32 %v1173, %v1174
      %v1177 = vsel %vm395, %v1169, %v1176
      %v1178 = vrot.slane %v1173, 4
      %v1180 = vshrl.u32 %v956, 16
      %v1182 = vrot.slane %v1180, 7
      %v1183 = vshll.u32 %v956, 16
      %v1185 = vor.u32 %v1182, %v1183
      %v1186 = vsel %vm395, %v1178, %v1185
      %v1187 = vrot.slane %v1182, 4
      %v1189 = vshrl.u32 %v957, 16
      %v1191 = vrot.slane %v1189, 7
      %v1192 = vshll.u32 %v957, 16
      %v1194 = vor.u32 %v1191, %v1192
      %v1195 = vsel %vm395, %v1187, %v1194
      %v1196 = vrot.slane %v1191, 4
      %v1198 = vshrl.u32 %v958, 16
      %v1200 = vrot.slane %v1198, 7
      %v1201 = vshll.u32 %v958, 16
      %v1203 = vor.u32 %v1200, %v1201
      %v1204 = vsel %vm395, %v1196, %v1203
      %v1205 = vrot.slane %v1200, 4
      %v1207 = vshrl.u32 %v959, 16
      %v1209 = vrot.slane %v1207, 7
      %v1210 = vshll.u32 %v959, 16
      %v1212 = vor.u32 %v1209, %v1210
      %v1213 = vsel %vm395, %v1205, %v1212
      %v1214 = vrot.slane %v1209, 4
      %v1216 = vshrl.u32 %v960, 16
      %v1218 = vrot.slane %v1216, 7
      %v1219 = vshll.u32 %v960, 16
      %v1221 = vor.u32 %v1218, %v1219
      %v1222 = vsel %vm395, %v1214, %v1221
      %v1223 = vrot.slane %v1218, 4
      %v1225 = vshrl.u32 %v961, 16
      %v1227 = vrot.slane %v1225, 7
      %v1228 = vshll.u32 %v961, 16
      %v1230 = vor.u32 %v1227, %v1228
      %v1231 = vsel %vm395, %v1223, %v1230
      %v1232 = vrot.slane %v1227, 4
      %v1234 = vshrl.u32 %v962, 16
      %v1236 = vrot.slane %v1234, 7
      %v1237 = vshll.u32 %v962, 16
      %v1239 = vor.u32 %v1236, %v1237
      %v1240 = vsel %vm395, %v1232, %v1239
      %v1241 = vrot.slane %v1236, 4
      %v1243 = vshrl.u32 %v963, 16
      %v1245 = vrot.slane %v1243, 7
      %v1246 = vshll.u32 %v963, 16
      %v1248 = vor.u32 %v1245, %v1246
      %v1249 = vsel %vm395, %v1241, %v1248
      %v1250 = vrot.slane %v1245, 4
      %v1252 = vshrl.u32 %v964, 16
      %v1254 = vrot.slane %v1252, 7
      %v1255 = vshll.u32 %v964, 16
      %v1257 = vor.u32 %v1254, %v1255
      %v1258 = vsel %vm395, %v1250, %v1257
      %v1259 = vrot.slane %v1254, 4
      %v1261 = vshrl.u32 %v965, 16
      %v1263 = vrot.slane %v1261, 7
      %v1264 = vshll.u32 %v965, 16
      %v1266 = vor.u32 %v1263, %v1264
      %v1267 = vsel %vm395, %v1259, %v1266
      %v1268 = vrot.slane %v1263, 4
      %v1270 = vshrl.u32 %v966, 16
      %v1272 = vrot.slane %v1270, 7
      %v1273 = vshll.u32 %v966, 16
      %v1275 = vor.u32 %v1272, %v1273
      %v1276 = vsel %vm395, %v1268, %v1275
      %v1277 = vrot.slane %v1272, 4
      %v1279 = vshrl.u32 %v967, 16
      %v1281 = vrot.slane %v1279, 7
      %v1282 = vshll.u32 %v967, 16
      %v1284 = vor.u32 %v1281, %v1282
      %v1285 = vsel %vm395, %v1277, %v1284
      %v1286 = vrot.slane %v1281, 4
      %v1288 = vshrl.u32 %v968, 16
      %v1290 = vrot.slane %v1288, 7
      %v1291 = vshll.u32 %v968, 16
      %v1293 = vor.u32 %v1290, %v1291
      %v1294 = vsel %vm395, %v1286, %v1293
      %v1295 = vrot.slane %v1290, 4
      %v1297 = vshrl.u32 %v969, 16
      %v1299 = vrot.slane %v1297, 7
      %v1300 = vshll.u32 %v969, 16
      %v1302 = vor.u32 %v1299, %v1300
      %v1303 = vsel %vm395, %v1295, %v1302
      %v1304 = vrot.slane %v1299, 4
      %v1306 = vshrl.u32 %v970, 16
      %v1308 = vrot.slane %v1306, 7
      %v1309 = vshll.u32 %v970, 16
      %v1311 = vor.u32 %v1308, %v1309
      %v1312 = vsel %vm395, %v1304, %v1311
      %v1313 = vrot.slane %v1308, 4
      %v1315 = vshrl.u32 %v971, 16
      %v1317 = vrot.slane %v1315, 7
      %v1318 = vshll.u32 %v971, 16
      %v1320 = vor.u32 %v1317, %v1318
      %v1321 = vsel %vm395, %v1313, %v1320
      %v1322 = vrot.slane %v1317, 4
      %v1324 = vshrl.u32 %v972, 16
      %v1326 = vrot.slane %v1324, 7
      %v1327 = vshll.u32 %v972, 16
      %v1329 = vor.u32 %v1326, %v1327
      %v1330 = vsel %vm395, %v1322, %v1329
      %v1331 = vrot.slane %v1326, 4
      %v1333 = vshrl.u32 %v973, 16
      %v1335 = vrot.slane %v1333, 7
      %v1336 = vshll.u32 %v973, 16
      %v1338 = vor.u32 %v1335, %v1336
      %v1339 = vsel %vm395, %v1331, %v1338
      %v1340 = vrot.slane %v1335, 4
      %v1342 = vshrl.u32 %v974, 16
      %v1344 = vrot.slane %v1342, 7
      %v1345 = vshll.u32 %v974, 16
      %v1347 = vor.u32 %v1344, %v1345
      %v1348 = vsel %vm395, %v1340, %v1347
      %v1349 = vrot.slane %v1344, 4
      %v1351 = vshrl.u32 %v975, 16
      %v1353 = vrot.slane %v1351, 7
      %v1354 = vshll.u32 %v975, 16
      %v1356 = vor.u32 %v1353, %v1354
      %v1357 = vsel %vm395, %v1349, %v1356
      %v1358 = vrot.slane %v1353, 4
      %v1360 = vshrl.u32 %v976, 16
      %v1362 = vrot.slane %v1360, 7
      %v1363 = vshll.u32 %v976, 16
      %v1365 = vor.u32 %v1362, %v1363
      %v1366 = vsel %vm395, %v1358, %v1365
      %v1367 = vrot.slane %v1362, 4
      %v1369 = vshrl.u32 %v977, 16
      %v1371 = vrot.slane %v1369, 7
      %v1372 = vshll.u32 %v977, 16
      %v1374 = vor.u32 %v1371, %v1372
      %v1375 = vsel %vm395, %v1367, %v1374
      %v1376 = vrot.slane %v1371, 4
      %v1378 = vshrl.u32 %v978, 16
      %v1380 = vrot.slane %v1378, 7
      %v1381 = vshll.u32 %v978, 16
      %v1383 = vor.u32 %v1380, %v1381
      %v1384 = vsel %vm395, %v1376, %v1383
      %v1385 = vrot.slane %v1380, 4
      %v1387 = vshrl.u32 %v979, 16
      %v1389 = vrot.slane %v1387, 7
      %v1390 = vshll.u32 %v979, 16
      %v1392 = vor.u32 %v1389, %v1390
      %v1393 = vsel %vm395, %v1385, %v1392
      %v1394 = vrot.slane %v1389, 4
      %v1396 = vshrl.u32 %v980, 16
      %v1398 = vrot.slane %v1396, 7
      %v1399 = vshll.u32 %v980, 16
      %v1401 = vor.u32 %v1398, %v1399
      %v1402 = vsel %vm395, %v1394, %v1401
      %v1403 = vrot.slane %v1398, 4
      %v1405 = vshrl.u32 %v981, 16
      %v1407 = vrot.slane %v1405, 7
      %v1408 = vshll.u32 %v981, 16
      %v1410 = vor.u32 %v1407, %v1408
      %v1411 = vsel %vm395, %v1403, %v1410
      %v1412 = vrot.slane %v1407, 4
      %1413 = vrot.lane.b32.xlu0 %v988, 2
      %v1414 = vpop.permute.xlu0 %1413
      %1415 = vrot.lane.b32.xlu0 %v997, 2
      %v1416 = vpop.permute.xlu0 %1415
      %1417 = vrot.lane.b32.xlu0 %v1006, 2
      %v1418 = vpop.permute.xlu0 %1417
      %1419 = vrot.lane.b32.xlu0 %v1015, 2
      %v1420 = vpop.permute.xlu0 %1419
      %1421 = vrot.lane.b32.xlu0 %v1024, 2
      %v1422 = vpop.permute.xlu0 %1421
      %1423 = vrot.lane.b32.xlu0 %v1033, 2
      %v1424 = vpop.permute.xlu0 %1423
      %1425 = vrot.lane.b32.xlu0 %v1042, 2
      %v1426 = vpop.permute.xlu0 %1425
      %1427 = vrot.lane.b32.xlu0 %v1051, 2
      %v1428 = vpop.permute.xlu0 %1427
      %1429 = vrot.lane.b32.xlu0 %v1060, 2
      %v1430 = vpop.permute.xlu0 %1429
      %1431 = vrot.lane.b32.xlu0 %v1069, 2
      %v1432 = vpop.permute.xlu0 %1431
      %1433 = vrot.lane.b32.xlu0 %v1078, 2
      %v1434 = vpop.permute.xlu0 %1433
      %1435 = vrot.lane.b32.xlu0 %v1087, 2
      %v1436 = vpop.permute.xlu0 %1435
      %1437 = vrot.lane.b32.xlu0 %v1096, 2
      %v1438 = vpop.permute.xlu0 %1437
      %1439 = vrot.lane.b32.xlu0 %v1105, 2
      %v1440 = vpop.permute.xlu0 %1439
      %1441 = vrot.lane.b32.xlu0 %v1114, 2
      %v1442 = vpop.permute.xlu0 %1441
      %1443 = vrot.lane.b32.xlu0 %v1123, 2
      %v1444 = vpop.permute.xlu0 %1443
      %1445 = vrot.lane.b32.xlu0 %v1132, 2
      %v1446 = vpop.permute.xlu0 %1445
      %1447 = vrot.lane.b32.xlu0 %v1141, 2
      %v1448 = vpop.permute.xlu0 %1447
      %1449 = vrot.lane.b32.xlu0 %v1150, 2
      %v1450 = vpop.permute.xlu0 %1449
      %1451 = vrot.lane.b32.xlu0 %v1159, 2
      %v1452 = vpop.permute.xlu0 %1451
      %1453 = vrot.lane.b32.xlu0 %v1168, 2
      %v1454 = vpop.permute.xlu0 %1453
      %1455 = vrot.lane.b32.xlu0 %v1177, 2
      %v1456 = vpop.permute.xlu0 %1455
      %1457 = vrot.lane.b32.xlu0 %v1186, 2
      %v1458 = vpop.permute.xlu0 %1457
      %1459 = vrot.lane.b32.xlu0 %v1195, 2
      %v1460 = vpop.permute.xlu0 %1459
      %1461 = vrot.lane.b32.xlu0 %v1204, 2
      %v1462 = vpop.permute.xlu0 %1461
      %1463 = vrot.lane.b32.xlu0 %v1213, 2
      %v1464 = vpop.permute.xlu0 %1463
      %1465 = vrot.lane.b32.xlu0 %v1222, 2
      %v1466 = vpop.permute.xlu0 %1465
      %1467 = vrot.lane.b32.xlu0 %v1231, 2
      %v1468 = vpop.permute.xlu0 %1467
      %1469 = vrot.lane.b32.xlu0 %v1240, 2
      %v1470 = vpop.permute.xlu0 %1469
      %1471 = vrot.lane.b32.xlu0 %v1249, 2
      %v1472 = vpop.permute.xlu0 %1471
      %1473 = vrot.lane.b32.xlu0 %v1258, 2
      %v1474 = vpop.permute.xlu0 %1473
      %1475 = vrot.lane.b32.xlu0 %v1267, 2
      %v1476 = vpop.permute.xlu0 %1475
      %1477 = vrot.lane.b32.xlu0 %v1276, 2
      %v1478 = vpop.permute.xlu0 %1477
      %1479 = vrot.lane.b32.xlu0 %v1285, 2
      %v1480 = vpop.permute.xlu0 %1479
      %1481 = vrot.lane.b32.xlu0 %v1294, 2
      %v1482 = vpop.permute.xlu0 %1481
      %1483 = vrot.lane.b32.xlu0 %v1303, 2
      %v1484 = vpop.permute.xlu0 %1483
      %1485 = vrot.lane.b32.xlu0 %v1312, 2
      %v1486 = vpop.permute.xlu0 %1485
      %1487 = vrot.lane.b32.xlu0 %v1321, 2
      %v1488 = vpop.permute.xlu0 %1487
      %1489 = vrot.lane.b32.xlu0 %v1330, 2
      %v1490 = vpop.permute.xlu0 %1489
      %1491 = vrot.lane.b32.xlu0 %v1339, 2
      %v1492 = vpop.permute.xlu0 %1491
      %1493 = vrot.lane.b32.xlu0 %v1348, 2
      %v1494 = vpop.permute.xlu0 %1493
      %1495 = vrot.lane.b32.xlu0 %v1357, 2
      %v1496 = vpop.permute.xlu0 %1495
      %1497 = vrot.lane.b32.xlu0 %v1366, 2
      %v1498 = vpop.permute.xlu0 %1497
      %1499 = vrot.lane.b32.xlu0 %v1375, 2
      %v1500 = vpop.permute.xlu0 %1499
      %1501 = vrot.lane.b32.xlu0 %v1384, 2
      %v1502 = vpop.permute.xlu0 %1501
      %1503 = vrot.lane.b32.xlu0 %v1393, 2
      %v1504 = vpop.permute.xlu0 %1503
      %1505 = vrot.lane.b32.xlu0 %v1402, 2
      %v1506 = vpop.permute.xlu0 %1505
      %1507 = vrot.lane.b32.xlu0 %v1411, 2
      %v1508 = vpop.permute.xlu0 %1507
      %1509 = vrot.lane.b32.xlu0 %v1412, 2
      %v1510 = vpop.permute.xlu0 %1509
      %vm1560 = vcmask 27664
      %vm1561 = vmand %vm1560, %vm338
      %v1562 = vld [vmem:[#allocation2 + $0xc] sm:$0xf]
      %v1563 = vsel %vm1561, %v1414, %v1562
      %1564 = vst [vmem:[#allocation2 + $0xc] sm:$0xf] %v1563
      %vm1565 = vcmask 27664
      %1566 = vst.msk [vmem:[#allocation2 + $0x10] sm:$0xf] %vm1565, %v1416
      %1567 = vst.msk [vmem:[#allocation2 + $0x14] sm:$0xf] %vm1565, %v1418
      %1568 = vst.msk [vmem:[#allocation2 + $0x18] sm:$0xf] %vm1565, %v1420
      %1569 = vst.msk [vmem:[#allocation2 + $0x1c] sm:$0xf] %vm1565, %v1422
      %1570 = vst.msk [vmem:[#allocation2 + $0x20] sm:$0xf] %vm1565, %v1424
      %1571 = vst.msk [vmem:[#allocation2 + $0x24] sm:$0xf] %vm1565, %v1426
      %1572 = vst.msk [vmem:[#allocation2 + $0x28] sm:$0xf] %vm1565, %v1428
      %1573 = vst.msk [vmem:[#allocation2 + $0x2c] sm:$0xf] %vm1565, %v1430
      %1574 = vst.msk [vmem:[#allocation2 + $0x30] sm:$0xf] %vm1565, %v1432
      %1575 = vst.msk [vmem:[#allocation2 + $0x34] sm:$0xf] %vm1565, %v1434
      %1576 = vst.msk [vmem:[#allocation2 + $0x38] sm:$0xf] %vm1565, %v1436
      %1577 = vst.msk [vmem:[#allocation2 + $0x3c] sm:$0xf] %vm1565, %v1438
      %1578 = vst.msk [vmem:[#allocation2 + $0x40] sm:$0xf] %vm1565, %v1440
      %1579 = vst.msk [vmem:[#allocation2 + $0x44] sm:$0xf] %vm1565, %v1442
      %1580 = vst.msk [vmem:[#allocation2 + $0x48] sm:$0xf] %vm1565, %v1444
      %1581 = vst.msk [vmem:[#allocation2 + $0x4c] sm:$0xf] %vm1565, %v1446
      %1582 = vst.msk [vmem:[#allocation2 + $0x50] sm:$0xf] %vm1565, %v1448
      %1583 = vst.msk [vmem:[#allocation2 + $0x54] sm:$0xf] %vm1565, %v1450
      %1584 = vst.msk [vmem:[#allocation2 + $0x58] sm:$0xf] %vm1565, %v1452
      %1585 = vst.msk [vmem:[#allocation2 + $0x5c] sm:$0xf] %vm1565, %v1454
      %1586 = vst.msk [vmem:[#allocation2 + $0x60] sm:$0xf] %vm1565, %v1456
      %1587 = vst.msk [vmem:[#allocation2 + $0x64] sm:$0xf] %vm1565, %v1458
      %1588 = vst.msk [vmem:[#allocation2 + $0x68] sm:$0xf] %vm1565, %v1460
      %1589 = vst.msk [vmem:[#allocation2 + $0x6c] sm:$0xf] %vm1565, %v1462
      %1590 = vst.msk [vmem:[#allocation2 + $0x70] sm:$0xf] %vm1565, %v1464
      %1591 = vst.msk [vmem:[#allocation2 + $0x74] sm:$0xf] %vm1565, %v1466
      %1592 = vst.msk [vmem:[#allocation2 + $0x78] sm:$0xf] %vm1565, %v1468
      %1593 = vst.msk [vmem:[#allocation2 + $0x7c] sm:$0xf] %vm1565, %v1470
      %1594 = vst.msk [vmem:[#allocation2 + $0x80] sm:$0xf] %vm1565, %v1472
      %1595 = vst.msk [vmem:[#allocation2 + $0x84] sm:$0xf] %vm1565, %v1474
      %1596 = vst.msk [vmem:[#allocation2 + $0x88] sm:$0xf] %vm1565, %v1476
      %1597 = vst.msk [vmem:[#allocation2 + $0x8c] sm:$0xf] %vm1565, %v1478
      %1598 = vst.msk [vmem:[#allocation2 + $0x90] sm:$0xf] %vm1565, %v1480
      %1599 = vst.msk [vmem:[#allocation2 + $0x94] sm:$0xf] %vm1565, %v1482
      %1600 = vst.msk [vmem:[#allocation2 + $0x98] sm:$0xf] %vm1565, %v1484
      %1601 = vst.msk [vmem:[#allocation2 + $0x9c] sm:$0xf] %vm1565, %v1486
      %1602 = vst.msk [vmem:[#allocation2 + $0xa0] sm:$0xf] %vm1565, %v1488
      %1603 = vst.msk [vmem:[#allocation2 + $0xa4] sm:$0xf] %vm1565, %v1490
      %1604 = vst.msk [vmem:[#allocation2 + $0xa8] sm:$0xf] %vm1565, %v1492
      %1605 = vst.msk [vmem:[#allocation2 + $0xac] sm:$0xf] %vm1565, %v1494
      %1606 = vst.msk [vmem:[#allocation2 + $0xb0] sm:$0xf] %vm1565, %v1496
      %1607 = vst.msk [vmem:[#allocation2 + $0xb4] sm:$0xf] %vm1565, %v1498
      %1608 = vst.msk [vmem:[#allocation2 + $0xb8] sm:$0xf] %vm1565, %v1500
      %1609 = vst.msk [vmem:[#allocation2 + $0xbc] sm:$0xf] %vm1565, %v1502
      %1610 = vst.msk [vmem:[#allocation2 + $0xc0] sm:$0xf] %vm1565, %v1504
      %1611 = vst.msk [vmem:[#allocation2 + $0xc4] sm:$0xf] %vm1565, %v1506
      %1612 = vst.msk [vmem:[#allocation2 + $0xc8] sm:$0xf] %vm1565, %v1508
      %vm1613 = vcmask 24592
      %vm1614 = vmand %vm1613, %vm332
      %v1615 = vld [vmem:[#allocation2 + $0xcc] sm:$0x1]
      %v1616 = vsel %vm1614, %v1510, %v1615
      %1617 = vst [vmem:[#allocation2 + $0xcc] sm:$0x1] %v1616
      %1618 = vst [vmem:[#allocation3] sm:$0xf] 0
      %1619 = vst [vmem:[#allocation3 + $0x4] sm:$0xf] 0
      %1620 = vst [vmem:[#allocation3 + $0x8] sm:$0xf] 0
      %vm1621 = vcmask 1040384
      %vm1622 = vmand %vm1621, %vm332
      %v1623 = vld [vmem:[#allocation3 + $0xc] sm:$0x1]
      %v1624 = vsel %vm1622, 0, %v1623
      %1625 = vst [vmem:[#allocation3 + $0xc] sm:$0x1] %v1624
      %vm1626 = vcmask 1043456
      %vm1627 = vmand %vm1626, %vm338
      %v1628 = vld [vmem:[#allocation3 + $0xcc] sm:$0xf]
      %v1629 = vsel %vm1627, 0, %v1628
      %1630 = vst [vmem:[#allocation3 + $0xcc] sm:$0xf] %v1629
      %1631 = vst [vmem:[#allocation3 + $0xd0] sm:$0xf] 0
      %1632 = vst [vmem:[#allocation3 + $0xd4] sm:$0xf] 0
      %1633 = vst [vmem:[#allocation3 + $0xd8] sm:$0xf] 0
      %v1634 = vld [vmem:[#allocation2] sm:$0xf]
      %v1635 = vld [vmem:[#allocation2 + $0x4] sm:$0xf]
      %v1636 = vld [vmem:[#allocation2 + $0x8] sm:$0xf]
      %v1637 = vld [vmem:[#allocation2 + $0xc] sm:$0xf]
      %v1638 = vld [vmem:[#allocation2 + $0x10] sm:$0xf]
      %v1639 = vld [vmem:[#allocation2 + $0x14] sm:$0xf]
      %v1640 = vld [vmem:[#allocation2 + $0x18] sm:$0xf]
      %v1641 = vld [vmem:[#allocation2 + $0x1c] sm:$0xf]
      %v1642 = vld [vmem:[#allocation2 + $0x20] sm:$0xf]
      %v1643 = vld [vmem:[#allocation2 + $0x24] sm:$0xf]
      %v1644 = vld [vmem:[#allocation2 + $0x28] sm:$0xf]
      %v1645 = vld [vmem:[#allocation2 + $0x2c] sm:$0xf]
      %v1646 = vld [vmem:[#allocation2 + $0x30] sm:$0xf]
      %v1647 = vld [vmem:[#allocation2 + $0x34] sm:$0xf]
      %v1648 = vld [vmem:[#allocation2 + $0x38] sm:$0xf]
      %v1649 = vld [vmem:[#allocation2 + $0x3c] sm:$0xf]
      %v1650 = vld [vmem:[#allocation2 + $0x40] sm:$0xf]
      %v1651 = vld [vmem:[#allocation2 + $0x44] sm:$0xf]
      %v1652 = vld [vmem:[#allocation2 + $0x48] sm:$0xf]
      %v1653 = vld [vmem:[#allocation2 + $0x4c] sm:$0xf]
      %v1654 = vld [vmem:[#allocation2 + $0x50] sm:$0xf]
      %v1655 = vld [vmem:[#allocation2 + $0x54] sm:$0xf]
      %v1656 = vld [vmem:[#allocation2 + $0x58] sm:$0xf]
      %v1657 = vld [vmem:[#allocation2 + $0x5c] sm:$0xf]
      %v1658 = vld [vmem:[#allocation2 + $0x60] sm:$0xf]
      %v1659 = vld [vmem:[#allocation2 + $0x64] sm:$0xf]
      %v1660 = vld [vmem:[#allocation2 + $0x68] sm:$0xf]
      %v1661 = vld [vmem:[#allocation2 + $0x6c] sm:$0xf]
      %v1662 = vld [vmem:[#allocation2 + $0x70] sm:$0xf]
      %v1663 = vld [vmem:[#allocation2 + $0x74] sm:$0xf]
      %v1664 = vld [vmem:[#allocation2 + $0x78] sm:$0xf]
      %v1665 = vld [vmem:[#allocation2 + $0x7c] sm:$0xf]
      %v1666 = vld [vmem:[%s2] sm:$0x3]
      %v1667 = vld [vmem:[#allocation2 + $0x80] sm:$0x1]
      %s1668 = scalar_lea.vmem %s2, 2
      %v1669 = vld [vmem:[%s1668] sm:$0x3]
      %v1703 = vunpack.c.l.b16 %v1634
      %v1704 = vunpack.c.l.b16 %v1635
      %v1705 = vunpack.c.l.b16 %v1636
      %v1706 = vunpack.c.l.b16 %v1637
      %v1707 = vunpack.c.l.b16 %v1638
      %v1708 = vunpack.c.l.b16 %v1639
      %v1709 = vunpack.c.l.b16 %v1640
      %v1710 = vunpack.c.l.b16 %v1641
      %v1711 = vunpack.c.l.b16 %v1642
      %v1712 = vunpack.c.l.b16 %v1643
      %v1713 = vunpack.c.l.b16 %v1644
      %v1714 = vunpack.c.l.b16 %v1645
      %v1715 = vunpack.c.l.b16 %v1646
      %v1716 = vunpack.c.l.b16 %v1647
      %v1717 = vunpack.c.l.b16 %v1648
      %v1718 = vunpack.c.l.b16 %v1649
      %v1719 = vunpack.c.l.b16 %v1650
      %v1720 = vunpack.c.l.b16 %v1651
      %v1721 = vunpack.c.l.b16 %v1652
      %v1722 = vunpack.c.l.b16 %v1653
      %v1723 = vunpack.c.l.b16 %v1654
      %v1724 = vunpack.c.l.b16 %v1655
      %v1725 = vunpack.c.l.b16 %v1656
      %v1726 = vunpack.c.l.b16 %v1657
      %v1727 = vunpack.c.l.b16 %v1658
      %v1728 = vunpack.c.l.b16 %v1659
      %v1729 = vunpack.c.l.b16 %v1660
      %v1730 = vunpack.c.l.b16 %v1661
      %v1731 = vunpack.c.l.b16 %v1662
      %v1732 = vunpack.c.l.b16 %v1663
      %v1733 = vunpack.c.l.b16 %v1664
      %v1734 = vunpack.c.l.b16 %v1665
      %v1735 = vunpack.c.l.b16 %v1667
      %v1736 = vpack.c.b16 %v1704, %v1703
      %v1737 = vpack.c.b16 %v1706, %v1705
      %v1738 = vpack.c.b16 %v1708, %v1707
      %v1739 = vpack.c.b16 %v1710, %v1709
      %v1740 = vpack.c.b16 %v1712, %v1711
      %v1741 = vpack.c.b16 %v1714, %v1713
      %v1742 = vpack.c.b16 %v1716, %v1715
      %v1743 = vpack.c.b16 %v1718, %v1717
      %v1744 = vpack.c.b16 %v1720, %v1719
      %v1745 = vpack.c.b16 %v1722, %v1721
      %v1746 = vpack.c.b16 %v1724, %v1723
      %v1747 = vpack.c.b16 %v1726, %v1725
      %v1748 = vpack.c.b16 %v1728, %v1727
      %v1749 = vpack.c.b16 %v1730, %v1729
      %v1750 = vpack.c.b16 %v1732, %v1731
      %v1751 = vpack.c.b16 %v1734, %v1733
      %v1752 = vpack.c.b16 %v1735, %v1735
      %vm1753 = vsmask.f32 7424
      %v1755 = vshrl.u32 %v1736, 16
      %v1757 = vshll.u32 %v1736, 16
      %v1759 = vrot.slane %v1757, 1
      %v1760 = vor.u32 %v1755, %v1759
      %v1762 = vshll.u32 %v1737, 16
      %v1764 = vrot.slane %v1762, 1
      %v1765 = vsel %vm1753, %v1760, %v1764
      %v1766 = vshrl.u32 %v1737, 16
      %v1768 = vor.u32 %v1766, %v1764
      %v1770 = vshll.u32 %v1738, 16
      %v1772 = vrot.slane %v1770, 1
      %v1773 = vsel %vm1753, %v1768, %v1772
      %v1774 = vshrl.u32 %v1738, 16
      %v1776 = vor.u32 %v1774, %v1772
      %v1778 = vshll.u32 %v1739, 16
      %v1780 = vrot.slane %v1778, 1
      %v1781 = vsel %vm1753, %v1776, %v1780
      %v1782 = vshrl.u32 %v1739, 16
      %v1784 = vor.u32 %v1782, %v1780
      %v1786 = vshll.u32 %v1740, 16
      %v1788 = vrot.slane %v1786, 1
      %v1789 = vsel %vm1753, %v1784, %v1788
      %v1790 = vshrl.u32 %v1740, 16
      %v1792 = vor.u32 %v1790, %v1788
      %v1794 = vshll.u32 %v1741, 16
      %v1796 = vrot.slane %v1794, 1
      %v1797 = vsel %vm1753, %v1792, %v1796
      %v1798 = vshrl.u32 %v1741, 16
      %v1800 = vor.u32 %v1798, %v1796
      %v1802 = vshll.u32 %v1742, 16
      %v1804 = vrot.slane %v1802, 1
      %v1805 = vsel %vm1753, %v1800, %v1804
      %v1806 = vshrl.u32 %v1742, 16
      %v1808 = vor.u32 %v1806, %v1804
      %v1810 = vshll.u32 %v1743, 16
      %v1812 = vrot.slane %v1810, 1
      %v1813 = vsel %vm1753, %v1808, %v1812
      %v1814 = vshrl.u32 %v1743, 16
      %v1816 = vor.u32 %v1814, %v1812
      %v1818 = vshll.u32 %v1744, 16
      %v1820 = vrot.slane %v1818, 1
      %v1821 = vsel %vm1753, %v1816, %v1820
      %v1822 = vshrl.u32 %v1744, 16
      %v1824 = vor.u32 %v1822, %v1820
      %v1826 = vshll.u32 %v1745, 16
      %v1828 = vrot.slane %v1826, 1
      %v1829 = vsel %vm1753, %v1824, %v1828
      %v1830 = vshrl.u32 %v1745, 16
      %v1832 = vor.u32 %v1830, %v1828
      %v1834 = vshll.u32 %v1746, 16
      %v1836 = vrot.slane %v1834, 1
      %v1837 = vsel %vm1753, %v1832, %v1836
      %v1838 = vshrl.u32 %v1746, 16
      %v1840 = vor.u32 %v1838, %v1836
      %v1842 = vshll.u32 %v1747, 16
      %v1844 = vrot.slane %v1842, 1
      %v1845 = vsel %vm1753, %v1840, %v1844
      %v1846 = vshrl.u32 %v1747, 16
      %v1848 = vor.u32 %v1846, %v1844
      %v1850 = vshll.u32 %v1748, 16
      %v1852 = vrot.slane %v1850, 1
      %v1853 = vsel %vm1753, %v1848, %v1852
      %v1854 = vshrl.u32 %v1748, 16
      %v1856 = vor.u32 %v1854, %v1852
      %v1858 = vshll.u32 %v1749, 16
      %v1860 = vrot.slane %v1858, 1
      %v1861 = vsel %vm1753, %v1856, %v1860
      %v1862 = vshrl.u32 %v1749, 16
      %v1864 = vor.u32 %v1862, %v1860
      %v1866 = vshll.u32 %v1750, 16
      %v1868 = vrot.slane %v1866, 1
      %v1869 = vsel %vm1753, %v1864, %v1868
      %v1870 = vshrl.u32 %v1750, 16
      %v1872 = vor.u32 %v1870, %v1868
      %v1874 = vshll.u32 %v1751, 16
      %v1876 = vrot.slane %v1874, 1
      %v1877 = vsel %vm1753, %v1872, %v1876
      %v1878 = vshrl.u32 %v1751, 16
      %v1880 = vor.u32 %v1878, %v1876
      %v1882 = vshll.u32 %v1752, 16
      %v1884 = vrot.slane %v1882, 1
      %v1885 = vsel %vm1753, %v1880, %v1884
      %vm1886 = vcmask 31744
      %v1888 = vsel %vm1886, %v1765, 0
      %v1891 = vsel %vm1886, %v1773, 0
      %v1894 = vsel %vm1886, %v1781, 0
      %v1897 = vsel %vm1886, %v1789, 0
      %v1900 = vsel %vm1886, %v1797, 0
      %v1903 = vsel %vm1886, %v1805, 0
      %v1906 = vsel %vm1886, %v1813, 0
      %v1909 = vsel %vm1886, %v1821, 0
      %v1912 = vsel %vm1886, %v1829, 0
      %v1915 = vsel %vm1886, %v1837, 0
      %v1918 = vsel %vm1886, %v1845, 0
      %v1921 = vsel %vm1886, %v1853, 0
      %v1924 = vsel %vm1886, %v1861, 0
      %v1927 = vsel %vm1886, %v1869, 0
      %v1930 = vsel %vm1886, %v1877, 0
      %v1933 = vsel %vm1886, %v1885, 0
      %vm1935 = vcmask 1041408
      %v1937 = vsel %vm1935, %v1669, 0
      %1939 = vmatpush.bf16.msra.mxu0 0
      %1940 = vmatpush.bf16.msra.mxu0 0
      %1941 = vmatpush.bf16.msra.mxu0 0
      %1942 = vmatpush.bf16.msra.mxu0 0
      %1943 = vmatpush.bf16.msra.mxu0 0
      %1944 = vmatpush.bf16.msra.mxu0 0
      %1945 = vmatpush.bf16.msra.mxu0 0
      %1946 = vmatpush.bf16.msra.mxu0 %v1937
      %1947 = vmatmul.bf16.gmra.mxu0 %v1888
      %v1948 = vpop.f32.mrf.mxu0
      %v1949 = vadd.f32 0.0, %v1948
      %v1950 = vpop.f32.mrf.mxu0
      %v1951 = vadd.f32 0.0, %v1950
      %1952 = vmatmul.bf16.gmra.mxu0 %v1891
      %v1953 = vpop.f32.mrf.mxu0
      %v1954 = vadd.f32 0.0, %v1953
      %v1955 = vpop.f32.mrf.mxu0
      %v1956 = vadd.f32 0.0, %v1955
      %1957 = vmatmul.bf16.gmra.mxu0 %v1894
      %v1958 = vpop.f32.mrf.mxu0
      %v1959 = vadd.f32 0.0, %v1958
      %v1960 = vpop.f32.mrf.mxu0
      %v1961 = vadd.f32 0.0, %v1960
      %1962 = vmatmul.bf16.gmra.mxu0 %v1897
      %v1963 = vpop.f32.mrf.mxu0
      %v1964 = vadd.f32 0.0, %v1963
      %v1965 = vpop.f32.mrf.mxu0
      %v1966 = vadd.f32 0.0, %v1965
      %1967 = vmatmul.bf16.gmra.mxu0 %v1900
      %v1968 = vpop.f32.mrf.mxu0
      %v1969 = vadd.f32 0.0, %v1968
      %v1970 = vpop.f32.mrf.mxu0
      %v1971 = vadd.f32 0.0, %v1970
      %1972 = vmatmul.bf16.gmra.mxu0 %v1903
      %v1973 = vpop.f32.mrf.mxu0
      %v1974 = vadd.f32 0.0, %v1973
      %v1975 = vpop.f32.mrf.mxu0
      %v1976 = vadd.f32 0.0, %v1975
      %1977 = vmatmul.bf16.gmra.mxu0 %v1906
      %v1978 = vpop.f32.mrf.mxu0
      %v1979 = vadd.f32 0.0, %v1978
      %v1980 = vpop.f32.mrf.mxu0
      %v1981 = vadd.f32 0.0, %v1980
      %1982 = vmatmul.bf16.gmra.mxu0 %v1909
      %v1983 = vpop.f32.mrf.mxu0
      %v1984 = vadd.f32 0.0, %v1983
      %v1985 = vpop.f32.mrf.mxu0
      %v1986 = vadd.f32 0.0, %v1985
      %1987 = vmatmul.bf16.gmra.mxu0 %v1912
      %v1988 = vpop.f32.mrf.mxu0
      %v1989 = vadd.f32 0.0, %v1988
      %v1990 = vpop.f32.mrf.mxu0
      %v1991 = vadd.f32 0.0, %v1990
      %1992 = vmatmul.bf16.gmra.mxu0 %v1915
      %v1993 = vpop.f32.mrf.mxu0
      %v1994 = vadd.f32 0.0, %v1993
      %v1995 = vpop.f32.mrf.mxu0
      %v1996 = vadd.f32 0.0, %v1995
      %1997 = vmatmul.bf16.gmra.mxu0 %v1918
      %v1998 = vpop.f32.mrf.mxu0
      %v1999 = vadd.f32 0.0, %v1998
      %v2000 = vpop.f32.mrf.mxu0
      %v2001 = vadd.f32 0.0, %v2000
      %2002 = vmatmul.bf16.gmra.mxu0 %v1921
      %v2003 = vpop.f32.mrf.mxu0
      %v2004 = vadd.f32 0.0, %v2003
      %v2005 = vpop.f32.mrf.mxu0
      %v2006 = vadd.f32 0.0, %v2005
      %2007 = vmatmul.bf16.gmra.mxu0 %v1924
      %v2008 = vpop.f32.mrf.mxu0
      %v2009 = vadd.f32 0.0, %v2008
      %v2010 = vpop.f32.mrf.mxu0
      %v2011 = vadd.f32 0.0, %v2010
      %2012 = vmatmul.bf16.gmra.mxu0 %v1927
      %v2013 = vpop.f32.mrf.mxu0
      %v2014 = vadd.f32 0.0, %v2013
      %v2015 = vpop.f32.mrf.mxu0
      %v2016 = vadd.f32 0.0, %v2015
      %2017 = vmatmul.bf16.gmra.mxu0 %v1930
      %v2018 = vpop.f32.mrf.mxu0
      %v2019 = vadd.f32 0.0, %v2018
      %v2020 = vpop.f32.mrf.mxu0
      %v2021 = vadd.f32 0.0, %v2020
      %2022 = vmatmul.bf16.gmra.mxu0 %v1933
      %v2023 = vpop.f32.mrf.mxu0
      %v2024 = vadd.f32 0.0, %v2023
      %v2025 = vpop.f32.mrf.mxu0
      %v2026 = vadd.f32 0.0, %v2025
      %2027 = vdwg.mxu0
      %v2028 = vsel %vm1886, %v1736, 0
      %v2030 = vsel %vm1886, %v1737, 0
      %v2032 = vsel %vm1886, %v1738, 0
      %v2034 = vsel %vm1886, %v1739, 0
      %v2036 = vsel %vm1886, %v1740, 0
      %v2038 = vsel %vm1886, %v1741, 0
      %v2040 = vsel %vm1886, %v1742, 0
      %v2042 = vsel %vm1886, %v1743, 0
      %v2044 = vsel %vm1886, %v1744, 0
      %v2046 = vsel %vm1886, %v1745, 0
      %v2048 = vsel %vm1886, %v1746, 0
      %v2050 = vsel %vm1886, %v1747, 0
      %v2052 = vsel %vm1886, %v1748, 0
      %v2054 = vsel %vm1886, %v1749, 0
      %v2056 = vsel %vm1886, %v1750, 0
      %v2058 = vsel %vm1886, %v1751, 0
      %v2061 = vsel %vm1935, %v1666, 0
      %2063 = vmatpush.bf16.msra.mxu0 0
      %2064 = vmatpush.bf16.msra.mxu0 0
      %2065 = vmatpush.bf16.msra.mxu0 0
      %2066 = vmatpush.bf16.msra.mxu0 0
      %2067 = vmatpush.bf16.msra.mxu0 0
      %2068 = vmatpush.bf16.msra.mxu0 0
      %2069 = vmatpush.bf16.msra.mxu0 0
      %2070 = vmatpush.bf16.msra.mxu0 %v2061
      %2071 = vmatmul.bf16.gmra.mxu0 %v2028
      %v2072 = vpop.f32.mrf.mxu0
      %v2073 = vadd.f32 %v1949, %v2072
      %v2074 = vpop.f32.mrf.mxu0
      %v2075 = vadd.f32 %v1951, %v2074
      %2076 = vmatmul.bf16.gmra.mxu0 %v2030
      %v2077 = vpop.f32.mrf.mxu0
      %v2078 = vadd.f32 %v1954, %v2077
      %v2079 = vpop.f32.mrf.mxu0
      %v2080 = vadd.f32 %v1956, %v2079
      %2081 = vmatmul.bf16.gmra.mxu0 %v2032
      %v2082 = vpop.f32.mrf.mxu0
      %v2083 = vadd.f32 %v1959, %v2082
      %v2084 = vpop.f32.mrf.mxu0
      %v2085 = vadd.f32 %v1961, %v2084
      %2086 = vmatmul.bf16.gmra.mxu0 %v2034
      %v2087 = vpop.f32.mrf.mxu0
      %v2088 = vadd.f32 %v1964, %v2087
      %v2089 = vpop.f32.mrf.mxu0
      %v2090 = vadd.f32 %v1966, %v2089
      %2091 = vmatmul.bf16.gmra.mxu0 %v2036
      %v2092 = vpop.f32.mrf.mxu0
      %v2093 = vadd.f32 %v1969, %v2092
      %v2094 = vpop.f32.mrf.mxu0
      %v2095 = vadd.f32 %v1971, %v2094
      %2096 = vmatmul.bf16.gmra.mxu0 %v2038
      %v2097 = vpop.f32.mrf.mxu0
      %v2098 = vadd.f32 %v1974, %v2097
      %v2099 = vpop.f32.mrf.mxu0
      %v2100 = vadd.f32 %v1976, %v2099
      %2101 = vmatmul.bf16.gmra.mxu0 %v2040
      %v2102 = vpop.f32.mrf.mxu0
      %v2103 = vadd.f32 %v1979, %v2102
      %v2104 = vpop.f32.mrf.mxu0
      %v2105 = vadd.f32 %v1981, %v2104
      %2106 = vmatmul.bf16.gmra.mxu0 %v2042
      %v2107 = vpop.f32.mrf.mxu0
      %v2108 = vadd.f32 %v1984, %v2107
      %v2109 = vpop.f32.mrf.mxu0
      %v2110 = vadd.f32 %v1986, %v2109
      %2111 = vmatmul.bf16.gmra.mxu0 %v2044
      %v2112 = vpop.f32.mrf.mxu0
      %v2113 = vadd.f32 %v1989, %v2112
      %v2114 = vpop.f32.mrf.mxu0
      %v2115 = vadd.f32 %v1991, %v2114
      %2116 = vmatmul.bf16.gmra.mxu0 %v2046
      %v2117 = vpop.f32.mrf.mxu0
      %v2118 = vadd.f32 %v1994, %v2117
      %v2119 = vpop.f32.mrf.mxu0
      %v2120 = vadd.f32 %v1996, %v2119
      %2121 = vmatmul.bf16.gmra.mxu0 %v2048
      %v2122 = vpop.f32.mrf.mxu0
      %v2123 = vadd.f32 %v1999, %v2122
      %v2124 = vpop.f32.mrf.mxu0
      %v2125 = vadd.f32 %v2001, %v2124
      %2126 = vmatmul.bf16.gmra.mxu0 %v2050
      %v2127 = vpop.f32.mrf.mxu0
      %v2128 = vadd.f32 %v2004, %v2127
      %v2129 = vpop.f32.mrf.mxu0
      %v2130 = vadd.f32 %v2006, %v2129
      %2131 = vmatmul.bf16.gmra.mxu0 %v2052
      %v2132 = vpop.f32.mrf.mxu0
      %v2133 = vadd.f32 %v2009, %v2132
      %v2134 = vpop.f32.mrf.mxu0
      %v2135 = vadd.f32 %v2011, %v2134
      %2136 = vmatmul.bf16.gmra.mxu0 %v2054
      %v2137 = vpop.f32.mrf.mxu0
      %v2138 = vadd.f32 %v2014, %v2137
      %v2139 = vpop.f32.mrf.mxu0
      %v2140 = vadd.f32 %v2016, %v2139
      %2141 = vmatmul.bf16.gmra.mxu0 %v2056
      %v2142 = vpop.f32.mrf.mxu0
      %v2143 = vadd.f32 %v2019, %v2142
      %v2144 = vpop.f32.mrf.mxu0
      %v2145 = vadd.f32 %v2021, %v2144
      %2146 = vmatmul.bf16.gmra.mxu0 %v2058
      %v2147 = vpop.f32.mrf.mxu0
      %v2148 = vadd.f32 %v2024, %v2147
      %v2149 = vpop.f32.mrf.mxu0
      %v2150 = vadd.f32 %v2026, %v2149
      %2151 = vdwg.mxu0
      %v2152 = vld [vmem:[#allocation2] sm:$0xe]
      %s2153 = scalar_lea.vmem %s2, 4
      %v2154 = vld [vmem:[%s2153] sm:$0x3]
      %v2156 = vunpack.c.l.b16 %v2152
      %v2157 = vpack.c.b16 %v1704, %v2156
      %vm2158 = vcmask 1046528
      %v2159 = vrot.slane %v2157, 1
      %v2160 = vrot.slane %v1737, 1
      %v2161 = vsel %vm2158, %v2159, %v2160
      %v2162 = vrot.slane %v1738, 1
      %v2163 = vsel %vm2158, %v2160, %v2162
      %v2164 = vrot.slane %v1739, 1
      %v2165 = vsel %vm2158, %v2162, %v2164
      %v2166 = vrot.slane %v1740, 1
      %v2167 = vsel %vm2158, %v2164, %v2166
      %v2168 = vrot.slane %v1741, 1
      %v2169 = vsel %vm2158, %v2166, %v2168
      %v2170 = vrot.slane %v1742, 1
      %v2171 = vsel %vm2158, %v2168, %v2170
      %v2172 = vrot.slane %v1743, 1
      %v2173 = vsel %vm2158, %v2170, %v2172
      %v2174 = vrot.slane %v1744, 1
      %v2175 = vsel %vm2158, %v2172, %v2174
      %v2176 = vrot.slane %v1745, 1
      %v2177 = vsel %vm2158, %v2174, %v2176
      %v2178 = vrot.slane %v1746, 1
      %v2179 = vsel %vm2158, %v2176, %v2178
      %v2180 = vrot.slane %v1747, 1
      %v2181 = vsel %vm2158, %v2178, %v2180
      %v2182 = vrot.slane %v1748, 1
      %v2183 = vsel %vm2158, %v2180, %v2182
      %v2184 = vrot.slane %v1749, 1
      %v2185 = vsel %vm2158, %v2182, %v2184
      %v2186 = vrot.slane %v1750, 1
      %v2187 = vsel %vm2158, %v2184, %v2186
      %v2188 = vrot.slane %v1751, 1
      %v2189 = vsel %vm2158, %v2186, %v2188
      %v2190 = vrot.slane %v1752, 1
      %v2191 = vsel %vm2158, %v2188, %v2190
      %v2193 = vsel %vm1886, %v2161, 0
      %v2196 = vsel %vm1886, %v2163, 0
      %v2199 = vsel %vm1886, %v2165, 0
      %v2202 = vsel %vm1886, %v2167, 0
      %v2205 = vsel %vm1886, %v2169, 0
      %v2208 = vsel %vm1886, %v2171, 0
      %v2211 = vsel %vm1886, %v2173, 0
      %v2214 = vsel %vm1886, %v2175, 0
      %v2217 = vsel %vm1886, %v2177, 0
      %v2220 = vsel %vm1886, %v2179, 0
      %v2223 = vsel %vm1886, %v2181, 0
      %v2226 = vsel %vm1886, %v2183, 0
      %v2229 = vsel %vm1886, %v2185, 0
      %v2232 = vsel %vm1886, %v2187, 0
      %v2235 = vsel %vm1886, %v2189, 0
      %v2238 = vsel %vm1886, %v2191, 0
      %v2241 = vsel %vm1935, %v2154, 0
      %2243 = vmatpush.bf16.msra.mxu0 0
      %2244 = vmatpush.bf16.msra.mxu0 0
      %2245 = vmatpush.bf16.msra.mxu0 0
      %2246 = vmatpush.bf16.msra.mxu0 0
      %2247 = vmatpush.bf16.msra.mxu0 0
      %2248 = vmatpush.bf16.msra.mxu0 0
      %2249 = vmatpush.bf16.msra.mxu0 0
      %2250 = vmatpush.bf16.msra.mxu0 %v2241
      %2251 = vmatmul.bf16.gmra.mxu0 %v2193
      %v2252 = vpop.f32.mrf.mxu0
      %v2253 = vadd.f32 0.0, %v2252
      %v2254 = vpop.f32.mrf.mxu0
      %v2255 = vadd.f32 0.0, %v2254
      %2256 = vmatmul.bf16.gmra.mxu0 %v2196
      %v2257 = vpop.f32.mrf.mxu0
      %v2258 = vadd.f32 0.0, %v2257
      %v2259 = vpop.f32.mrf.mxu0
      %v2260 = vadd.f32 0.0, %v2259
      %2261 = vmatmul.bf16.gmra.mxu0 %v2199
      %v2262 = vpop.f32.mrf.mxu0
      %v2263 = vadd.f32 0.0, %v2262
      %v2264 = vpop.f32.mrf.mxu0
      %v2265 = vadd.f32 0.0, %v2264
      %2266 = vmatmul.bf16.gmra.mxu0 %v2202
      %v2267 = vpop.f32.mrf.mxu0
      %v2268 = vadd.f32 0.0, %v2267
      %v2269 = vpop.f32.mrf.mxu0
      %v2270 = vadd.f32 0.0, %v2269
      %2271 = vmatmul.bf16.gmra.mxu0 %v2205
      %v2272 = vpop.f32.mrf.mxu0
      %v2273 = vadd.f32 0.0, %v2272
      %v2274 = vpop.f32.mrf.mxu0
      %v2275 = vadd.f32 0.0, %v2274
      %2276 = vmatmul.bf16.gmra.mxu0 %v2208
      %v2277 = vpop.f32.mrf.mxu0
      %v2278 = vadd.f32 0.0, %v2277
      %v2279 = vpop.f32.mrf.mxu0
      %v2280 = vadd.f32 0.0, %v2279
      %2281 = vmatmul.bf16.gmra.mxu0 %v2211
      %v2282 = vpop.f32.mrf.mxu0
      %v2283 = vadd.f32 0.0, %v2282
      %v2284 = vpop.f32.mrf.mxu0
      %v2285 = vadd.f32 0.0, %v2284
      %2286 = vmatmul.bf16.gmra.mxu0 %v2214
      %v2287 = vpop.f32.mrf.mxu0
      %v2288 = vadd.f32 0.0, %v2287
      %v2289 = vpop.f32.mrf.mxu0
      %v2290 = vadd.f32 0.0, %v2289
      %2291 = vmatmul.bf16.gmra.mxu0 %v2217
      %v2292 = vpop.f32.mrf.mxu0
      %v2293 = vadd.f32 0.0, %v2292
      %v2294 = vpop.f32.mrf.mxu0
      %v2295 = vadd.f32 0.0, %v2294
      %2296 = vmatmul.bf16.gmra.mxu0 %v2220
      %v2297 = vpop.f32.mrf.mxu0
      %v2298 = vadd.f32 0.0, %v2297
      %v2299 = vpop.f32.mrf.mxu0
      %v2300 = vadd.f32 0.0, %v2299
      %2301 = vmatmul.bf16.gmra.mxu0 %v2223
      %v2302 = vpop.f32.mrf.mxu0
      %v2303 = vadd.f32 0.0, %v2302
      %v2304 = vpop.f32.mrf.mxu0
      %v2305 = vadd.f32 0.0, %v2304
      %2306 = vmatmul.bf16.gmra.mxu0 %v2226
      %v2307 = vpop.f32.mrf.mxu0
      %v2308 = vadd.f32 0.0, %v2307
      %v2309 = vpop.f32.mrf.mxu0
      %v2310 = vadd.f32 0.0, %v2309
      %2311 = vmatmul.bf16.gmra.mxu0 %v2229
      %v2312 = vpop.f32.mrf.mxu0
      %v2313 = vadd.f32 0.0, %v2312
      %v2314 = vpop.f32.mrf.mxu0
      %v2315 = vadd.f32 0.0, %v2314
      %2316 = vmatmul.bf16.gmra.mxu0 %v2232
      %v2317 = vpop.f32.mrf.mxu0
      %v2318 = vadd.f32 0.0, %v2317
      %v2319 = vpop.f32.mrf.mxu0
      %v2320 = vadd.f32 0.0, %v2319
      %2321 = vmatmul.bf16.gmra.mxu0 %v2235
      %v2322 = vpop.f32.mrf.mxu0
      %v2323 = vadd.f32 0.0, %v2322
      %v2324 = vpop.f32.mrf.mxu0
      %v2325 = vadd.f32 0.0, %v2324
      %2326 = vmatmul.bf16.gmra.mxu0 %v2238
      %v2327 = vpop.f32.mrf.mxu0
      %v2328 = vadd.f32 0.0, %v2327
      %v2329 = vpop.f32.mrf.mxu0
      %v2330 = vadd.f32 0.0, %v2329
      %2331 = vdwg.mxu0
      %v2332 = vadd.f32 %v2073, %v2253
      %v2333 = vadd.f32 %v2075, %v2255
      %v2334 = vadd.f32 %v2078, %v2258
      %v2335 = vadd.f32 %v2080, %v2260
      %v2336 = vadd.f32 %v2083, %v2263
      %v2337 = vadd.f32 %v2085, %v2265
      %v2338 = vadd.f32 %v2088, %v2268
      %v2339 = vadd.f32 %v2090, %v2270
      %v2340 = vadd.f32 %v2093, %v2273
      %v2341 = vadd.f32 %v2095, %v2275
      %v2342 = vadd.f32 %v2098, %v2278
      %v2343 = vadd.f32 %v2100, %v2280
      %v2344 = vadd.f32 %v2103, %v2283
      %v2345 = vadd.f32 %v2105, %v2285
      %v2346 = vadd.f32 %v2108, %v2288
      %v2347 = vadd.f32 %v2110, %v2290
      %v2348 = vadd.f32 %v2113, %v2293
      %v2349 = vadd.f32 %v2115, %v2295
      %v2350 = vadd.f32 %v2118, %v2298
      %v2351 = vadd.f32 %v2120, %v2300
      %v2352 = vadd.f32 %v2123, %v2303
      %v2353 = vadd.f32 %v2125, %v2305
      %v2354 = vadd.f32 %v2128, %v2308
      %v2355 = vadd.f32 %v2130, %v2310
      %v2356 = vadd.f32 %v2133, %v2313
      %v2357 = vadd.f32 %v2135, %v2315
      %v2358 = vadd.f32 %v2138, %v2318
      %v2359 = vadd.f32 %v2140, %v2320
      %v2360 = vadd.f32 %v2143, %v2323
      %v2361 = vadd.f32 %v2145, %v2325
      %v2362 = vadd.f32 %v2148, %v2328
      %v2363 = vadd.f32 %v2150, %v2330
      %v2364 = vld [vmem:[#allocation2 + $0xc] sm:$0xf]
      %v2365 = vld [vmem:[#allocation2 + $0x10] sm:$0xf]
      %v2366 = vld [vmem:[#allocation2 + $0x14] sm:$0xf]
      %v2367 = vld [vmem:[#allocation2 + $0x18] sm:$0xf]
      %v2368 = vld [vmem:[#allocation2 + $0x1c] sm:$0xf]
      %v2369 = vld [vmem:[#allocation2 + $0x20] sm:$0xf]
      %v2370 = vld [vmem:[#allocation2 + $0x24] sm:$0xf]
      %v2371 = vld [vmem:[#allocation2 + $0x28] sm:$0xf]
      %v2372 = vld [vmem:[#allocation2 + $0x2c] sm:$0xf]
      %v2373 = vld [vmem:[#allocation2 + $0x30] sm:$0xf]
      %v2374 = vld [vmem:[#allocation2 + $0x34] sm:$0xf]
      %v2375 = vld [vmem:[#allocation2 + $0x38] sm:$0xf]
      %v2376 = vld [vmem:[#allocation2 + $0x3c] sm:$0xf]
      %v2377 = vld [vmem:[#allocation2 + $0x40] sm:$0xf]
      %v2378 = vld [vmem:[#allocation2 + $0x44] sm:$0xf]
      %v2379 = vld [vmem:[#allocation2 + $0x48] sm:$0xf]
      %v2380 = vld [vmem:[#allocation2 + $0x4c] sm:$0xf]
      %v2381 = vld [vmem:[#allocation2 + $0x50] sm:$0xf]
      %v2382 = vld [vmem:[#allocation2 + $0x54] sm:$0xf]
      %v2383 = vld [vmem:[#allocation2 + $0x58] sm:$0xf]
      %v2384 = vld [vmem:[#allocation2 + $0x5c] sm:$0xf]
      %v2385 = vld [vmem:[#allocation2 + $0x60] sm:$0xf]
      %v2386 = vld [vmem:[#allocation2 + $0x64] sm:$0xf]
      %v2387 = vld [vmem:[#allocation2 + $0x68] sm:$0xf]
      %v2388 = vld [vmem:[#allocation2 + $0x6c] sm:$0xf]
      %v2389 = vld [vmem:[#allocation2 + $0x70] sm:$0xf]
      %v2390 = vld [vmem:[#allocation2 + $0x74] sm:$0xf]
      %v2391 = vld [vmem:[#allocation2 + $0x78] sm:$0xf]
      %v2392 = vld [vmem:[#allocation2 + $0x7c] sm:$0xf]
      %v2393 = vld [vmem:[#allocation2 + $0x80] sm:$0xf]
      %v2394 = vld [vmem:[#allocation2 + $0x84] sm:$0xf]
      %v2395 = vld [vmem:[#allocation2 + $0x88] sm:$0xf]
      %s2396 = scalar_lea.vmem %s2, 6
      %v2397 = vld [vmem:[%s2396] sm:$0x3]
      %v2430 = vunpack.c.l.b16 %v2364
      %v2431 = vunpack.c.l.b16 %v2365
      %v2432 = vunpack.c.l.b16 %v2366
      %v2433 = vunpack.c.l.b16 %v2367
      %v2434 = vunpack.c.l.b16 %v2368
      %v2435 = vunpack.c.l.b16 %v2369
      %v2436 = vunpack.c.l.b16 %v2370
      %v2437 = vunpack.c.l.b16 %v2371
      %v2438 = vunpack.c.l.b16 %v2372
      %v2439 = vunpack.c.l.b16 %v2373
      %v2440 = vunpack.c.l.b16 %v2374
      %v2441 = vunpack.c.l.b16 %v2375
      %v2442 = vunpack.c.l.b16 %v2376
      %v2443 = vunpack.c.l.b16 %v2377
      %v2444 = vunpack.c.l.b16 %v2378
      %v2445 = vunpack.c.l.b16 %v2379
      %v2446 = vunpack.c.l.b16 %v2380
      %v2447 = vunpack.c.l.b16 %v2381
      %v2448 = vunpack.c.l.b16 %v2382
      %v2449 = vunpack.c.l.b16 %v2383
      %v2450 = vunpack.c.l.b16 %v2384
      %v2451 = vunpack.c.l.b16 %v2385
      %v2452 = vunpack.c.l.b16 %v2386
      %v2453 = vunpack.c.l.b16 %v2387
      %v2454 = vunpack.c.l.b16 %v2388
      %v2455 = vunpack.c.l.b16 %v2389
      %v2456 = vunpack.c.l.b16 %v2390
      %v2457 = vunpack.c.l.b16 %v2391
      %v2458 = vunpack.c.l.b16 %v2392
      %v2459 = vunpack.c.l.b16 %v2393
      %v2460 = vunpack.c.l.b16 %v2394
      %v2461 = vunpack.c.l.b16 %v2395
      %v2462 = vpack.c.b16 %v2431, %v2430
      %v2463 = vpack.c.b16 %v2433, %v2432
      %v2464 = vpack.c.b16 %v2435, %v2434
      %v2465 = vpack.c.b16 %v2437, %v2436
      %v2466 = vpack.c.b16 %v2439, %v2438
      %v2467 = vpack.c.b16 %v2441, %v2440
      %v2468 = vpack.c.b16 %v2443, %v2442
      %v2469 = vpack.c.b16 %v2445, %v2444
      %v2470 = vpack.c.b16 %v2447, %v2446
      %v2471 = vpack.c.b16 %v2449, %v2448
      %v2472 = vpack.c.b16 %v2451, %v2450
      %v2473 = vpack.c.b16 %v2453, %v2452
      %v2474 = vpack.c.b16 %v2455, %v2454
      %v2475 = vpack.c.b16 %v2457, %v2456
      %v2476 = vpack.c.b16 %v2459, %v2458
      %v2477 = vpack.c.b16 %v2461, %v2460
      %v2479 = vsel %vm1886, %v2462, 0
      %v2482 = vsel %vm1886, %v2463, 0
      %v2485 = vsel %vm1886, %v2464, 0
      %v2488 = vsel %vm1886, %v2465, 0
      %v2491 = vsel %vm1886, %v2466, 0
      %v2494 = vsel %vm1886, %v2467, 0
      %v2497 = vsel %vm1886, %v2468, 0
      %v2500 = vsel %vm1886, %v2469, 0
      %v2503 = vsel %vm1886, %v2470, 0
      %v2506 = vsel %vm1886, %v2471, 0
      %v2509 = vsel %vm1886, %v2472, 0
      %v2512 = vsel %vm1886, %v2473, 0
      %v2515 = vsel %vm1886, %v2474, 0
      %v2518 = vsel %vm1886, %v2475, 0
      %v2521 = vsel %vm1886, %v2476, 0
      %v2524 = vsel %vm1886, %v2477, 0
      %v2527 = vsel %vm1935, %v2397, 0
      %2529 = vmatpush.bf16.msra.mxu0 0
      %2530 = vmatpush.bf16.msra.mxu0 0
      %2531 = vmatpush.bf16.msra.mxu0 0
      %2532 = vmatpush.bf16.msra.mxu0 0
      %2533 = vmatpush.bf16.msra.mxu0 0
      %2534 = vmatpush.bf16.msra.mxu0 0
      %2535 = vmatpush.bf16.msra.mxu0 0
      %2536 = vmatpush.bf16.msra.mxu0 %v2527
      %2537 = vmatmul.bf16.gmra.mxu0 %v2479
      %v2538 = vpop.f32.mrf.mxu0
      %v2539 = vadd.f32 0.0, %v2538
      %v2540 = vpop.f32.mrf.mxu0
      %v2541 = vadd.f32 0.0, %v2540
      %2542 = vmatmul.bf16.gmra.mxu0 %v2482
      %v2543 = vpop.f32.mrf.mxu0
      %v2544 = vadd.f32 0.0, %v2543
      %v2545 = vpop.f32.mrf.mxu0
      %v2546 = vadd.f32 0.0, %v2545
      %2547 = vmatmul.bf16.gmra.mxu0 %v2485
      %v2548 = vpop.f32.mrf.mxu0
      %v2549 = vadd.f32 0.0, %v2548
      %v2550 = vpop.f32.mrf.mxu0
      %v2551 = vadd.f32 0.0, %v2550
      %2552 = vmatmul.bf16.gmra.mxu0 %v2488
      %v2553 = vpop.f32.mrf.mxu0
      %v2554 = vadd.f32 0.0, %v2553
      %v2555 = vpop.f32.mrf.mxu0
      %v2556 = vadd.f32 0.0, %v2555
      %2557 = vmatmul.bf16.gmra.mxu0 %v2491
      %v2558 = vpop.f32.mrf.mxu0
      %v2559 = vadd.f32 0.0, %v2558
      %v2560 = vpop.f32.mrf.mxu0
      %v2561 = vadd.f32 0.0, %v2560
      %2562 = vmatmul.bf16.gmra.mxu0 %v2494
      %v2563 = vpop.f32.mrf.mxu0
      %v2564 = vadd.f32 0.0, %v2563
      %v2565 = vpop.f32.mrf.mxu0
      %v2566 = vadd.f32 0.0, %v2565
      %2567 = vmatmul.bf16.gmra.mxu0 %v2497
      %v2568 = vpop.f32.mrf.mxu0
      %v2569 = vadd.f32 0.0, %v2568
      %v2570 = vpop.f32.mrf.mxu0
      %v2571 = vadd.f32 0.0, %v2570
      %2572 = vmatmul.bf16.gmra.mxu0 %v2500
      %v2573 = vpop.f32.mrf.mxu0
      %v2574 = vadd.f32 0.0, %v2573
      %v2575 = vpop.f32.mrf.mxu0
      %v2576 = vadd.f32 0.0, %v2575
      %2577 = vmatmul.bf16.gmra.mxu0 %v2503
      %v2578 = vpop.f32.mrf.mxu0
      %v2579 = vadd.f32 0.0, %v2578
      %v2580 = vpop.f32.mrf.mxu0
      %v2581 = vadd.f32 0.0, %v2580
      %2582 = vmatmul.bf16.gmra.mxu0 %v2506
      %v2583 = vpop.f32.mrf.mxu0
      %v2584 = vadd.f32 0.0, %v2583
      %v2585 = vpop.f32.mrf.mxu0
      %v2586 = vadd.f32 0.0, %v2585
      %2587 = vmatmul.bf16.gmra.mxu0 %v2509
      %v2588 = vpop.f32.mrf.mxu0
      %v2589 = vadd.f32 0.0, %v2588
      %v2590 = vpop.f32.mrf.mxu0
      %v2591 = vadd.f32 0.0, %v2590
      %2592 = vmatmul.bf16.gmra.mxu0 %v2512
      %v2593 = vpop.f32.mrf.mxu0
      %v2594 = vadd.f32 0.0, %v2593
      %v2595 = vpop.f32.mrf.mxu0
      %v2596 = vadd.f32 0.0, %v2595
      %2597 = vmatmul.bf16.gmra.mxu0 %v2515
      %v2598 = vpop.f32.mrf.mxu0
      %v2599 = vadd.f32 0.0, %v2598
      %v2600 = vpop.f32.mrf.mxu0
      %v2601 = vadd.f32 0.0, %v2600
      %2602 = vmatmul.bf16.gmra.mxu0 %v2518
      %v2603 = vpop.f32.mrf.mxu0
      %v2604 = vadd.f32 0.0, %v2603
      %v2605 = vpop.f32.mrf.mxu0
      %v2606 = vadd.f32 0.0, %v2605
      %2607 = vmatmul.bf16.gmra.mxu0 %v2521
      %v2608 = vpop.f32.mrf.mxu0
      %v2609 = vadd.f32 0.0, %v2608
      %v2610 = vpop.f32.mrf.mxu0
      %v2611 = vadd.f32 0.0, %v2610
      %2612 = vmatmul.bf16.gmra.mxu0 %v2524
      %v2613 = vpop.f32.mrf.mxu0
      %v2614 = vadd.f32 0.0, %v2613
      %v2615 = vpop.f32.mrf.mxu0
      %v2616 = vadd.f32 0.0, %v2615
      %2617 = vdwg.mxu0
      %v2618 = vadd.f32 %v2332, %v2539
      %v2619 = vadd.f32 %v2333, %v2541
      %v2620 = vadd.f32 %v2334, %v2544
      %v2621 = vadd.f32 %v2335, %v2546
      %v2622 = vadd.f32 %v2336, %v2549
      %v2623 = vadd.f32 %v2337, %v2551
      %v2624 = vadd.f32 %v2338, %v2554
      %v2625 = vadd.f32 %v2339, %v2556
      %v2626 = vadd.f32 %v2340, %v2559
      %v2627 = vadd.f32 %v2341, %v2561
      %v2628 = vadd.f32 %v2342, %v2564
      %v2629 = vadd.f32 %v2343, %v2566
      %v2630 = vadd.f32 %v2344, %v2569
      %v2631 = vadd.f32 %v2345, %v2571
      %v2632 = vadd.f32 %v2346, %v2574
      %v2633 = vadd.f32 %v2347, %v2576
      %v2634 = vadd.f32 %v2348, %v2579
      %v2635 = vadd.f32 %v2349, %v2581
      %v2636 = vadd.f32 %v2350, %v2584
      %v2637 = vadd.f32 %v2351, %v2586
      %v2638 = vadd.f32 %v2352, %v2589
      %v2639 = vadd.f32 %v2353, %v2591
      %v2640 = vadd.f32 %v2354, %v2594
      %v2641 = vadd.f32 %v2355, %v2596
      %v2642 = vadd.f32 %v2356, %v2599
      %v2643 = vadd.f32 %v2357, %v2601
      %v2644 = vadd.f32 %v2358, %v2604
      %v2645 = vadd.f32 %v2359, %v2606
      %v2646 = vadd.f32 %v2360, %v2609
      %v2647 = vadd.f32 %v2361, %v2611
      %v2648 = vadd.f32 %v2362, %v2614
      %v2649 = vadd.f32 %v2363, %v2616
      %v2650 = vld [vmem:[#allocation2 + $0xc] sm:$0xf]
      %v2651 = vld [vmem:[#allocation2 + $0x10] sm:$0xf]
      %v2652 = vld [vmem:[#allocation2 + $0x14] sm:$0xf]
      %v2653 = vld [vmem:[#allocation2 + $0x18] sm:$0xf]
      %v2654 = vld [vmem:[#allocation2 + $0x1c] sm:$0xf]
      %v2655 = vld [vmem:[#allocation2 + $0x20] sm:$0xf]
      %v2656 = vld [vmem:[#allocation2 + $0x24] sm:$0xf]
      %v2657 = vld [vmem:[#allocation2 + $0x28] sm:$0xf]
      %v2658 = vld [vmem:[#allocation2 + $0x2c] sm:$0xf]
      %v2659 = vld [vmem:[#allocation2 + $0x30] sm:$0xf]
      %v2660 = vld [vmem:[#allocation2 + $0x34] sm:$0xf]
      %v2661 = vld [vmem:[#allocation2 + $0x38] sm:$0xf]
      %v2662 = vld [vmem:[#allocation2 + $0x3c] sm:$0xf]
      %v2663 = vld [vmem:[#allocation2 + $0x40] sm:$0xf]
      %v2664 = vld [vmem:[#allocation2 + $0x44] sm:$0xf]
      %v2665 = vld [vmem:[#allocation2 + $0x48] sm:$0xf]
      %v2666 = vld [vmem:[#allocation2 + $0x4c] sm:$0xf]
      %v2667 = vld [vmem:[#allocation2 + $0x50] sm:$0xf]
      %v2668 = vld [vmem:[#allocation2 + $0x54] sm:$0xf]
      %v2669 = vld [vmem:[#allocation2 + $0x58] sm:$0xf]
      %v2670 = vld [vmem:[#allocation2 + $0x5c] sm:$0xf]
      %v2671 = vld [vmem:[#allocation2 + $0x60] sm:$0xf]
      %v2672 = vld [vmem:[#allocation2 + $0x64] sm:$0xf]
      %v2673 = vld [vmem:[#allocation2 + $0x68] sm:$0xf]
      %v2674 = vld [vmem:[#allocation2 + $0x6c] sm:$0xf]
      %v2675 = vld [vmem:[#allocation2 + $0x70] sm:$0xf]
      %v2676 = vld [vmem:[#allocation2 + $0x74] sm:$0xf]
      %v2677 = vld [vmem:[#allocation2 + $0x78] sm:$0xf]
      %v2678 = vld [vmem:[#allocation2 + $0x7c] sm:$0xf]
      %v2679 = vld [vmem:[#allocation2 + $0x80] sm:$0xf]
      %v2680 = vld [vmem:[#allocation2 + $0x84] sm:$0xf]
      %v2681 = vld [vmem:[#allocation2 + $0x88] sm:$0xf]
      %v2682 = vld [vmem:[#allocation2 + $0x8c] sm:$0x1]
      %s2683 = scalar_lea.vmem %s2, 8
      %v2684 = vld [vmem:[%s2683] sm:$0x3]
      %v2718 = vunpack.c.l.b16 %v2650
      %v2719 = vunpack.c.l.b16 %v2651
      %v2720 = vunpack.c.l.b16 %v2652
      %v2721 = vunpack.c.l.b16 %v2653
      %v2722 = vunpack.c.l.b16 %v2654
      %v2723 = vunpack.c.l.b16 %v2655
      %v2724 = vunpack.c.l.b16 %v2656
      %v2725 = vunpack.c.l.b16 %v2657
      %v2726 = vunpack.c.l.b16 %v2658
      %v2727 = vunpack.c.l.b16 %v2659
      %v2728 = vunpack.c.l.b16 %v2660
      %v2729 = vunpack.c.l.b16 %v2661
      %v2730 = vunpack.c.l.b16 %v2662
      %v2731 = vunpack.c.l.b16 %v2663
      %v2732 = vunpack.c.l.b16 %v2664
      %v2733 = vunpack.c.l.b16 %v2665
      %v2734 = vunpack.c.l.b16 %v2666
      %v2735 = vunpack.c.l.b16 %v2667
      %v2736 = vunpack.c.l.b16 %v2668
      %v2737 = vunpack.c.l.b16 %v2669
      %v2738 = vunpack.c.l.b16 %v2670
      %v2739 = vunpack.c.l.b16 %v2671
      %v2740 = vunpack.c.l.b16 %v2672
      %v2741 = vunpack.c.l.b16 %v2673
      %v2742 = vunpack.c.l.b16 %v2674
      %v2743 = vunpack.c.l.b16 %v2675
      %v2744 = vunpack.c.l.b16 %v2676
      %v2745 = vunpack.c.l.b16 %v2677
      %v2746 = vunpack.c.l.b16 %v2678
      %v2747 = vunpack.c.l.b16 %v2679
      %v2748 = vunpack.c.l.b16 %v2680
      %v2749 = vunpack.c.l.b16 %v2681
      %v2750 = vunpack.c.l.b16 %v2682
      %v2751 = vpack.c.b16 %v2719, %v2718
      %v2752 = vpack.c.b16 %v2721, %v2720
      %v2753 = vpack.c.b16 %v2723, %v2722
      %v2754 = vpack.c.b16 %v2725, %v2724
      %v2755 = vpack.c.b16 %v2727, %v2726
      %v2756 = vpack.c.b16 %v2729, %v2728
      %v2757 = vpack.c.b16 %v2731, %v2730
      %v2758 = vpack.c.b16 %v2733, %v2732
      %v2759 = vpack.c.b16 %v2735, %v2734
      %v2760 = vpack.c.b16 %v2737, %v2736
      %v2761 = vpack.c.b16 %v2739, %v2738
      %v2762 = vpack.c.b16 %v2741, %v2740
      %v2763 = vpack.c.b16 %v2743, %v2742
      %v2764 = vpack.c.b16 %v2745, %v2744
      %v2765 = vpack.c.b16 %v2747, %v2746
      %v2766 = vpack.c.b16 %v2749, %v2748
      %v2767 = vpack.c.b16 %v2750, %v2750
      %v2769 = vshrl.u32 %v2751, 16
      %v2771 = vshll.u32 %v2751, 16
      %v2773 = vrot.slane %v2771, 1
      %v2774 = vor.u32 %v2769, %v2773
      %v2776 = vshll.u32 %v2752, 16
      %v2778 = vrot.slane %v2776, 1
      %v2779 = vsel %vm1753, %v2774, %v2778
      %v2780 = vshrl.u32 %v2752, 16
      %v2782 = vor.u32 %v2780, %v2778
      %v2784 = vshll.u32 %v2753, 16
      %v2786 = vrot.slane %v2784, 1
      %v2787 = vsel %vm1753, %v2782, %v2786
      %v2788 = vshrl.u32 %v2753, 16
      %v2790 = vor.u32 %v2788, %v2786
      %v2792 = vshll.u32 %v2754, 16
      %v2794 = vrot.slane %v2792, 1
      %v2795 = vsel %vm1753, %v2790, %v2794
      %v2796 = vshrl.u32 %v2754, 16
      %v2798 = vor.u32 %v2796, %v2794
      %v2800 = vshll.u32 %v2755, 16
      %v2802 = vrot.slane %v2800, 1
      %v2803 = vsel %vm1753, %v2798, %v2802
      %v2804 = vshrl.u32 %v2755, 16
      %v2806 = vor.u32 %v2804, %v2802
      %v2808 = vshll.u32 %v2756, 16
      %v2810 = vrot.slane %v2808, 1
      %v2811 = vsel %vm1753, %v2806, %v2810
      %v2812 = vshrl.u32 %v2756, 16
      %v2814 = vor.u32 %v2812, %v2810
      %v2816 = vshll.u32 %v2757, 16
      %v2818 = vrot.slane %v2816, 1
      %v2819 = vsel %vm1753, %v2814, %v2818
      %v2820 = vshrl.u32 %v2757, 16
      %v2822 = vor.u32 %v2820, %v2818
      %v2824 = vshll.u32 %v2758, 16
      %v2826 = vrot.slane %v2824, 1
      %v2827 = vsel %vm1753, %v2822, %v2826
      %v2828 = vshrl.u32 %v2758, 16
      %v2830 = vor.u32 %v2828, %v2826
      %v2832 = vshll.u32 %v2759, 16
      %v2834 = vrot.slane %v2832, 1
      %v2835 = vsel %vm1753, %v2830, %v2834
      %v2836 = vshrl.u32 %v2759, 16
      %v2838 = vor.u32 %v2836, %v2834
      %v2840 = vshll.u32 %v2760, 16
      %v2842 = vrot.slane %v2840, 1
      %v2843 = vsel %vm1753, %v2838, %v2842
      %v2844 = vshrl.u32 %v2760, 16
      %v2846 = vor.u32 %v2844, %v2842
      %v2848 = vshll.u32 %v2761, 16
      %v2850 = vrot.slane %v2848, 1
      %v2851 = vsel %vm1753, %v2846, %v2850
      %v2852 = vshrl.u32 %v2761, 16
      %v2854 = vor.u32 %v2852, %v2850
      %v2856 = vshll.u32 %v2762, 16
      %v2858 = vrot.slane %v2856, 1
      %v2859 = vsel %vm1753, %v2854, %v2858
      %v2860 = vshrl.u32 %v2762, 16
      %v2862 = vor.u32 %v2860, %v2858
      %v2864 = vshll.u32 %v2763, 16
      %v2866 = vrot.slane %v2864, 1
      %v2867 = vsel %vm1753, %v2862, %v2866
      %v2868 = vshrl.u32 %v2763, 16
      %v2870 = vor.u32 %v2868, %v2866
      %v2872 = vshll.u32 %v2764, 16
      %v2874 = vrot.slane %v2872, 1
      %v2875 = vsel %vm1753, %v2870, %v2874
      %v2876 = vshrl.u32 %v2764, 16
      %v2878 = vor.u32 %v2876, %v2874
      %v2880 = vshll.u32 %v2765, 16
      %v2882 = vrot.slane %v2880, 1
      %v2883 = vsel %vm1753, %v2878, %v2882
      %v2884 = vshrl.u32 %v2765, 16
      %v2886 = vor.u32 %v2884, %v2882
      %v2888 = vshll.u32 %v2766, 16
      %v2890 = vrot.slane %v2888, 1
      %v2891 = vsel %vm1753, %v2886, %v2890
      %v2892 = vshrl.u32 %v2766, 16
      %v2894 = vor.u32 %v2892, %v2890
      %v2896 = vshll.u32 %v2767, 16
      %v2898 = vrot.slane %v2896, 1
      %v2899 = vsel %vm1753, %v2894, %v2898
      %v2901 = vsel %vm1886, %v2779, 0
      %v2904 = vsel %vm1886, %v2787, 0
      %v2907 = vsel %vm1886, %v2795, 0
      %v2910 = vsel %vm1886, %v2803, 0
      %v2913 = vsel %vm1886, %v2811, 0
      %v2916 = vsel %vm1886, %v2819, 0
      %v2919 = vsel %vm1886, %v2827, 0
      %v2922 = vsel %vm1886, %v2835, 0
      %v2925 = vsel %vm1886, %v2843, 0
      %v2928 = vsel %vm1886, %v2851, 0
      %v2931 = vsel %vm1886, %v2859, 0
      %v2934 = vsel %vm1886, %v2867, 0
      %v2937 = vsel %vm1886, %v2875, 0
      %v2940 = vsel %vm1886, %v2883, 0
      %v2943 = vsel %vm1886, %v2891, 0
      %v2946 = vsel %vm1886, %v2899, 0
      %v2949 = vsel %vm1935, %v2684, 0
      %2951 = vmatpush.bf16.msra.mxu0 0
      %2952 = vmatpush.bf16.msra.mxu0 0
      %2953 = vmatpush.bf16.msra.mxu0 0
      %2954 = vmatpush.bf16.msra.mxu0 0
      %2955 = vmatpush.bf16.msra.mxu0 0
      %2956 = vmatpush.bf16.msra.mxu0 0
      %2957 = vmatpush.bf16.msra.mxu0 0
      %2958 = vmatpush.bf16.msra.mxu0 %v2949
      %2959 = vmatmul.bf16.gmra.mxu0 %v2901
      %v2960 = vpop.f32.mrf.mxu0
      %v2961 = vadd.f32 0.0, %v2960
      %v2962 = vpop.f32.mrf.mxu0
      %v2963 = vadd.f32 0.0, %v2962
      %2964 = vmatmul.bf16.gmra.mxu0 %v2904
      %v2965 = vpop.f32.mrf.mxu0
      %v2966 = vadd.f32 0.0, %v2965
      %v2967 = vpop.f32.mrf.mxu0
      %v2968 = vadd.f32 0.0, %v2967
      %2969 = vmatmul.bf16.gmra.mxu0 %v2907
      %v2970 = vpop.f32.mrf.mxu0
      %v2971 = vadd.f32 0.0, %v2970
      %v2972 = vpop.f32.mrf.mxu0
      %v2973 = vadd.f32 0.0, %v2972
      %2974 = vmatmul.bf16.gmra.mxu0 %v2910
      %v2975 = vpop.f32.mrf.mxu0
      %v2976 = vadd.f32 0.0, %v2975
      %v2977 = vpop.f32.mrf.mxu0
      %v2978 = vadd.f32 0.0, %v2977
      %2979 = vmatmul.bf16.gmra.mxu0 %v2913
      %v2980 = vpop.f32.mrf.mxu0
      %v2981 = vadd.f32 0.0, %v2980
      %v2982 = vpop.f32.mrf.mxu0
      %v2983 = vadd.f32 0.0, %v2982
      %2984 = vmatmul.bf16.gmra.mxu0 %v2916
      %v2985 = vpop.f32.mrf.mxu0
      %v2986 = vadd.f32 0.0, %v2985
      %v2987 = vpop.f32.mrf.mxu0
      %v2988 = vadd.f32 0.0, %v2987
      %2989 = vmatmul.bf16.gmra.mxu0 %v2919
      %v2990 = vpop.f32.mrf.mxu0
      %v2991 = vadd.f32 0.0, %v2990
      %v2992 = vpop.f32.mrf.mxu0
      %v2993 = vadd.f32 0.0, %v2992
      %2994 = vmatmul.bf16.gmra.mxu0 %v2922
      %v2995 = vpop.f32.mrf.mxu0
      %v2996 = vadd.f32 0.0, %v2995
      %v2997 = vpop.f32.mrf.mxu0
      %v2998 = vadd.f32 0.0, %v2997
      %2999 = vmatmul.bf16.gmra.mxu0 %v2925
      %v3000 = vpop.f32.mrf.mxu0
      %v3001 = vadd.f32 0.0, %v3000
      %v3002 = vpop.f32.mrf.mxu0
      %v3003 = vadd.f32 0.0, %v3002
      %3004 = vmatmul.bf16.gmra.mxu0 %v2928
      %v3005 = vpop.f32.mrf.mxu0
      %v3006 = vadd.f32 0.0, %v3005
      %v3007 = vpop.f32.mrf.mxu0
      %v3008 = vadd.f32 0.0, %v3007
      %3009 = vmatmul.bf16.gmra.mxu0 %v2931
      %v3010 = vpop.f32.mrf.mxu0
      %v3011 = vadd.f32 0.0, %v3010
      %v3012 = vpop.f32.mrf.mxu0
      %v3013 = vadd.f32 0.0, %v3012
      %3014 = vmatmul.bf16.gmra.mxu0 %v2934
      %v3015 = vpop.f32.mrf.mxu0
      %v3016 = vadd.f32 0.0, %v3015
      %v3017 = vpop.f32.mrf.mxu0
      %v3018 = vadd.f32 0.0, %v3017
      %3019 = vmatmul.bf16.gmra.mxu0 %v2937
      %v3020 = vpop.f32.mrf.mxu0
      %v3021 = vadd.f32 0.0, %v3020
      %v3022 = vpop.f32.mrf.mxu0
      %v3023 = vadd.f32 0.0, %v3022
      %3024 = vmatmul.bf16.gmra.mxu0 %v2940
      %v3025 = vpop.f32.mrf.mxu0
      %v3026 = vadd.f32 0.0, %v3025
      %v3027 = vpop.f32.mrf.mxu0
      %v3028 = vadd.f32 0.0, %v3027
      %3029 = vmatmul.bf16.gmra.mxu0 %v2943
      %v3030 = vpop.f32.mrf.mxu0
      %v3031 = vadd.f32 0.0, %v3030
      %v3032 = vpop.f32.mrf.mxu0
      %v3033 = vadd.f32 0.0, %v3032
      %3034 = vmatmul.bf16.gmra.mxu0 %v2946
      %v3035 = vpop.f32.mrf.mxu0
      %v3036 = vadd.f32 0.0, %v3035
      %v3037 = vpop.f32.mrf.mxu0
      %v3038 = vadd.f32 0.0, %v3037
      %3039 = vdwg.mxu0
      %v3040 = vadd.f32 %v2618, %v2961
      %v3041 = vadd.f32 %v2619, %v2963
      %v3042 = vadd.f32 %v2620, %v2966
      %v3043 = vadd.f32 %v2621, %v2968
      %v3044 = vadd.f32 %v2622, %v2971
      %v3045 = vadd.f32 %v2623, %v2973
      %v3046 = vadd.f32 %v2624, %v2976
      %v3047 = vadd.f32 %v2625, %v2978
      %v3048 = vadd.f32 %v2626, %v2981
      %v3049 = vadd.f32 %v2627, %v2983
      %v3050 = vadd.f32 %v2628, %v2986
      %v3051 = vadd.f32 %v2629, %v2988
      %v3052 = vadd.f32 %v2630, %v2991
      %v3053 = vadd.f32 %v2631, %v2993
      %v3054 = vadd.f32 %v2632, %v2996
      %v3055 = vadd.f32 %v2633, %v2998
      %v3056 = vadd.f32 %v2634, %v3001
      %v3057 = vadd.f32 %v2635, %v3003
      %v3058 = vadd.f32 %v2636, %v3006
      %v3059 = vadd.f32 %v2637, %v3008
      %v3060 = vadd.f32 %v2638, %v3011
      %v3061 = vadd.f32 %v2639, %v3013
      %v3062 = vadd.f32 %v2640, %v3016
      %v3063 = vadd.f32 %v2641, %v3018
      %v3064 = vadd.f32 %v2642, %v3021
      %v3065 = vadd.f32 %v2643, %v3023
      %v3066 = vadd.f32 %v2644, %v3026
      %v3067 = vadd.f32 %v2645, %v3028
      %v3068 = vadd.f32 %v2646, %v3031
      %v3069 = vadd.f32 %v2647, %v3033
      %v3070 = vadd.f32 %v2648, %v3036
      %v3071 = vadd.f32 %v2649, %v3038
      %v3072 = vld [vmem:[#allocation2 + $0xc] sm:$0xe]
      %s3073 = scalar_lea.vmem %s2, 10
      %v3074 = vld [vmem:[%s3073] sm:$0x3]
      %v3076 = vunpack.c.l.b16 %v3072
      %v3077 = vpack.c.b16 %v2719, %v3076
      %v3078 = vrot.slane %v3077, 1
      %v3079 = vrot.slane %v2752, 1
      %v3080 = vsel %vm2158, %v3078, %v3079
      %v3081 = vrot.slane %v2753, 1
      %v3082 = vsel %vm2158, %v3079, %v3081
      %v3083 = vrot.slane %v2754, 1
      %v3084 = vsel %vm2158, %v3081, %v3083
      %v3085 = vrot.slane %v2755, 1
      %v3086 = vsel %vm2158, %v3083, %v3085
      %v3087 = vrot.slane %v2756, 1
      %v3088 = vsel %vm2158, %v3085, %v3087
      %v3089 = vrot.slane %v2757, 1
      %v3090 = vsel %vm2158, %v3087, %v3089
      %v3091 = vrot.slane %v2758, 1
      %v3092 = vsel %vm2158, %v3089, %v3091
      %v3093 = vrot.slane %v2759, 1
      %v3094 = vsel %vm2158, %v3091, %v3093
      %v3095 = vrot.slane %v2760, 1
      %v3096 = vsel %vm2158, %v3093, %v3095
      %v3097 = vrot.slane %v2761, 1
      %v3098 = vsel %vm2158, %v3095, %v3097
      %v3099 = vrot.slane %v2762, 1
      %v3100 = vsel %vm2158, %v3097, %v3099
      %v3101 = vrot.slane %v2763, 1
      %v3102 = vsel %vm2158, %v3099, %v3101
      %v3103 = vrot.slane %v2764, 1
      %v3104 = vsel %vm2158, %v3101, %v3103
      %v3105 = vrot.slane %v2765, 1
      %v3106 = vsel %vm2158, %v3103, %v3105
      %v3107 = vrot.slane %v2766, 1
      %v3108 = vsel %vm2158, %v3105, %v3107
      %v3109 = vrot.slane %v2767, 1
      %v3110 = vsel %vm2158, %v3107, %v3109
      %v3112 = vsel %vm1886, %v3080, 0
      %v3115 = vsel %vm1886, %v3082, 0
      %v3118 = vsel %vm1886, %v3084, 0
      %v3121 = vsel %vm1886, %v3086, 0
      %v3124 = vsel %vm1886, %v3088, 0
      %v3127 = vsel %vm1886, %v3090, 0
      %v3130 = vsel %vm1886, %v3092, 0
      %v3133 = vsel %vm1886, %v3094, 0
      %v3136 = vsel %vm1886, %v3096, 0
      %v3139 = vsel %vm1886, %v3098, 0
      %v3142 = vsel %vm1886, %v3100, 0
      %v3145 = vsel %vm1886, %v3102, 0
      %v3148 = vsel %vm1886, %v3104, 0
      %v3151 = vsel %vm1886, %v3106, 0
      %v3154 = vsel %vm1886, %v3108, 0
      %v3157 = vsel %vm1886, %v3110, 0
      %v3160 = vsel %vm1935, %v3074, 0
      %3162 = vmatpush.bf16.msra.mxu0 0
      %3163 = vmatpush.bf16.msra.mxu0 0
      %3164 = vmatpush.bf16.msra.mxu0 0
      %3165 = vmatpush.bf16.msra.mxu0 0
      %3166 = vmatpush.bf16.msra.mxu0 0
      %3167 = vmatpush.bf16.msra.mxu0 0
      %3168 = vmatpush.bf16.msra.mxu0 0
      %3169 = vmatpush.bf16.msra.mxu0 %v3160
      %3170 = vmatmul.bf16.gmra.mxu0 %v3112
      %v3171 = vpop.f32.mrf.mxu0
      %v3172 = vadd.f32 0.0, %v3171
      %v3173 = vpop.f32.mrf.mxu0
      %v3174 = vadd.f32 0.0, %v3173
      %3175 = vmatmul.bf16.gmra.mxu0 %v3115
      %v3176 = vpop.f32.mrf.mxu0
      %v3177 = vadd.f32 0.0, %v3176
      %v3178 = vpop.f32.mrf.mxu0
      %v3179 = vadd.f32 0.0, %v3178
      %3180 = vmatmul.bf16.gmra.mxu0 %v3118
      %v3181 = vpop.f32.mrf.mxu0
      %v3182 = vadd.f32 0.0, %v3181
      %v3183 = vpop.f32.mrf.mxu0
      %v3184 = vadd.f32 0.0, %v3183
      %3185 = vmatmul.bf16.gmra.mxu0 %v3121
      %v3186 = vpop.f32.mrf.mxu0
      %v3187 = vadd.f32 0.0, %v3186
      %v3188 = vpop.f32.mrf.mxu0
      %v3189 = vadd.f32 0.0, %v3188
      %3190 = vmatmul.bf16.gmra.mxu0 %v3124
      %v3191 = vpop.f32.mrf.mxu0
      %v3192 = vadd.f32 0.0, %v3191
      %v3193 = vpop.f32.mrf.mxu0
      %v3194 = vadd.f32 0.0, %v3193
      %3195 = vmatmul.bf16.gmra.mxu0 %v3127
      %v3196 = vpop.f32.mrf.mxu0
      %v3197 = vadd.f32 0.0, %v3196
      %v3198 = vpop.f32.mrf.mxu0
      %v3199 = vadd.f32 0.0, %v3198
      %3200 = vmatmul.bf16.gmra.mxu0 %v3130
      %v3201 = vpop.f32.mrf.mxu0
      %v3202 = vadd.f32 0.0, %v3201
      %v3203 = vpop.f32.mrf.mxu0
      %v3204 = vadd.f32 0.0, %v3203
      %3205 = vmatmul.bf16.gmra.mxu0 %v3133
      %v3206 = vpop.f32.mrf.mxu0
      %v3207 = vadd.f32 0.0, %v3206
      %v3208 = vpop.f32.mrf.mxu0
      %v3209 = vadd.f32 0.0, %v3208
      %3210 = vmatmul.bf16.gmra.mxu0 %v3136
      %v3211 = vpop.f32.mrf.mxu0
      %v3212 = vadd.f32 0.0, %v3211
      %v3213 = vpop.f32.mrf.mxu0
      %v3214 = vadd.f32 0.0, %v3213
      %3215 = vmatmul.bf16.gmra.mxu0 %v3139
      %v3216 = vpop.f32.mrf.mxu0
      %v3217 = vadd.f32 0.0, %v3216
      %v3218 = vpop.f32.mrf.mxu0
      %v3219 = vadd.f32 0.0, %v3218
      %3220 = vmatmul.bf16.gmra.mxu0 %v3142
      %v3221 = vpop.f32.mrf.mxu0
      %v3222 = vadd.f32 0.0, %v3221
      %v3223 = vpop.f32.mrf.mxu0
      %v3224 = vadd.f32 0.0, %v3223
      %3225 = vmatmul.bf16.gmra.mxu0 %v3145
      %v3226 = vpop.f32.mrf.mxu0
      %v3227 = vadd.f32 0.0, %v3226
      %v3228 = vpop.f32.mrf.mxu0
      %v3229 = vadd.f32 0.0, %v3228
      %3230 = vmatmul.bf16.gmra.mxu0 %v3148
      %v3231 = vpop.f32.mrf.mxu0
      %v3232 = vadd.f32 0.0, %v3231
      %v3233 = vpop.f32.mrf.mxu0
      %v3234 = vadd.f32 0.0, %v3233
      %3235 = vmatmul.bf16.gmra.mxu0 %v3151
      %v3236 = vpop.f32.mrf.mxu0
      %v3237 = vadd.f32 0.0, %v3236
      %v3238 = vpop.f32.mrf.mxu0
      %v3239 = vadd.f32 0.0, %v3238
      %3240 = vmatmul.bf16.gmra.mxu0 %v3154
      %v3241 = vpop.f32.mrf.mxu0
      %v3242 = vadd.f32 0.0, %v3241
      %v3243 = vpop.f32.mrf.mxu0
      %v3244 = vadd.f32 0.0, %v3243
      %3245 = vmatmul.bf16.gmra.mxu0 %v3157
      %v3246 = vpop.f32.mrf.mxu0
      %v3247 = vadd.f32 0.0, %v3246
      %v3248 = vpop.f32.mrf.mxu0
      %v3249 = vadd.f32 0.0, %v3248
      %3250 = vdwg.mxu0
      %v3251 = vadd.f32 %v3040, %v3172
      %v3252 = vadd.f32 %v3041, %v3174
      %v3253 = vadd.f32 %v3042, %v3177
      %v3254 = vadd.f32 %v3043, %v3179
      %v3255 = vadd.f32 %v3044, %v3182
      %v3256 = vadd.f32 %v3045, %v3184
      %v3257 = vadd.f32 %v3046, %v3187
      %v3258 = vadd.f32 %v3047, %v3189
      %v3259 = vadd.f32 %v3048, %v3192
      %v3260 = vadd.f32 %v3049, %v3194
      %v3261 = vadd.f32 %v3050, %v3197
      %v3262 = vadd.f32 %v3051, %v3199
      %v3263 = vadd.f32 %v3052, %v3202
      %v3264 = vadd.f32 %v3053, %v3204
      %v3265 = vadd.f32 %v3054, %v3207
      %v3266 = vadd.f32 %v3055, %v3209
      %v3267 = vadd.f32 %v3056, %v3212
      %v3268 = vadd.f32 %v3057, %v3214
      %v3269 = vadd.f32 %v3058, %v3217
      %v3270 = vadd.f32 %v3059, %v3219
      %v3271 = vadd.f32 %v3060, %v3222
      %v3272 = vadd.f32 %v3061, %v3224
      %v3273 = vadd.f32 %v3062, %v3227
      %v3274 = vadd.f32 %v3063, %v3229
      %v3275 = vadd.f32 %v3064, %v3232
      %v3276 = vadd.f32 %v3065, %v3234
      %v3277 = vadd.f32 %v3066, %v3237
      %v3278 = vadd.f32 %v3067, %v3239
      %v3279 = vadd.f32 %v3068, %v3242
      %v3280 = vadd.f32 %v3069, %v3244
      %v3281 = vadd.f32 %v3070, %v3247
      %v3282 = vadd.f32 %v3071, %v3249
      %v3283 = vld [vmem:[#allocation2 + $0x18] sm:$0xf]
      %v3284 = vld [vmem:[#allocation2 + $0x1c] sm:$0xf]
      %v3285 = vld [vmem:[#allocation2 + $0x20] sm:$0xf]
      %v3286 = vld [vmem:[#allocation2 + $0x24] sm:$0xf]
      %v3287 = vld [vmem:[#allocation2 + $0x28] sm:$0xf]
      %v3288 = vld [vmem:[#allocation2 + $0x2c] sm:$0xf]
      %v3289 = vld [vmem:[#allocation2 + $0x30] sm:$0xf]
      %v3290 = vld [vmem:[#allocation2 + $0x34] sm:$0xf]
      %v3291 = vld [vmem:[#allocation2 + $0x38] sm:$0xf]
      %v3292 = vld [vmem:[#allocation2 + $0x3c] sm:$0xf]
      %v3293 = vld [vmem:[#allocation2 + $0x40] sm:$0xf]
      %v3294 = vld [vmem:[#allocation2 + $0x44] sm:$0xf]
      %v3295 = vld [vmem:[#allocation2 + $0x48] sm:$0xf]
      %v3296 = vld [vmem:[#allocation2 + $0x4c] sm:$0xf]
      %v3297 = vld [vmem:[#allocation2 + $0x50] sm:$0xf]
      %v3298 = vld [vmem:[#allocation2 + $0x54] sm:$0xf]
      %v3299 = vld [vmem:[#allocation2 + $0x58] sm:$0xf]
      %v3300 = vld [vmem:[#allocation2 + $0x5c] sm:$0xf]
      %v3301 = vld [vmem:[#allocation2 + $0x60] sm:$0xf]
      %v3302 = vld [vmem:[#allocation2 + $0x64] sm:$0xf]
      %v3303 = vld [vmem:[#allocation2 + $0x68] sm:$0xf]
      %v3304 = vld [vmem:[#allocation2 + $0x6c] sm:$0xf]
      %v3305 = vld [vmem:[#allocation2 + $0x70] sm:$0xf]
      %v3306 = vld [vmem:[#allocation2 + $0x74] sm:$0xf]
      %v3307 = vld [vmem:[#allocation2 + $0x78] sm:$0xf]
      %v3308 = vld [vmem:[#allocation2 + $0x7c] sm:$0xf]
      %v3309 = vld [vmem:[#allocation2 + $0x80] sm:$0xf]
      %v3310 = vld [vmem:[#allocation2 + $0x84] sm:$0xf]
      %v3311 = vld [vmem:[#allocation2 + $0x88] sm:$0xf]
      %v3312 = vld [vmem:[#allocation2 + $0x8c] sm:$0xf]
      %v3313 = vld [vmem:[#allocation2 + $0x90] sm:$0xf]
      %v3314 = vld [vmem:[#allocation2 + $0x94] sm:$0xf]
      %s3315 = scalar_lea.vmem %s2, 12
      %v3316 = vld [vmem:[%s3315] sm:$0x3]
      %v3349 = vunpack.c.l.b16 %v3283
      %v3350 = vunpack.c.l.b16 %v3284
      %v3351 = vunpack.c.l.b16 %v3285
      %v3352 = vunpack.c.l.b16 %v3286
      %v3353 = vunpack.c.l.b16 %v3287
      %v3354 = vunpack.c.l.b16 %v3288
      %v3355 = vunpack.c.l.b16 %v3289
      %v3356 = vunpack.c.l.b16 %v3290
      %v3357 = vunpack.c.l.b16 %v3291
      %v3358 = vunpack.c.l.b16 %v3292
      %v3359 = vunpack.c.l.b16 %v3293
      %v3360 = vunpack.c.l.b16 %v3294
      %v3361 = vunpack.c.l.b16 %v3295
      %v3362 = vunpack.c.l.b16 %v3296
      %v3363 = vunpack.c.l.b16 %v3297
      %v3364 = vunpack.c.l.b16 %v3298
      %v3365 = vunpack.c.l.b16 %v3299
      %v3366 = vunpack.c.l.b16 %v3300
      %v3367 = vunpack.c.l.b16 %v3301
      %v3368 = vunpack.c.l.b16 %v3302
      %v3369 = vunpack.c.l.b16 %v3303
      %v3370 = vunpack.c.l.b16 %v3304
      %v3371 = vunpack.c.l.b16 %v3305
      %v3372 = vunpack.c.l.b16 %v3306
      %v3373 = vunpack.c.l.b16 %v3307
      %v3374 = vunpack.c.l.b16 %v3308
      %v3375 = vunpack.c.l.b16 %v3309
      %v3376 = vunpack.c.l.b16 %v3310
      %v3377 = vunpack.c.l.b16 %v3311
      %v3378 = vunpack.c.l.b16 %v3312
      %v3379 = vunpack.c.l.b16 %v3313
      %v3380 = vunpack.c.l.b16 %v3314
      %v3381 = vpack.c.b16 %v3350, %v3349
      %v3382 = vpack.c.b16 %v3352, %v3351
      %v3383 = vpack.c.b16 %v3354, %v3353
      %v3384 = vpack.c.b16 %v3356, %v3355
      %v3385 = vpack.c.b16 %v3358, %v3357
      %v3386 = vpack.c.b16 %v3360, %v3359
      %v3387 = vpack.c.b16 %v3362, %v3361
      %v3388 = vpack.c.b16 %v3364, %v3363
      %v3389 = vpack.c.b16 %v3366, %v3365
      %v3390 = vpack.c.b16 %v3368, %v3367
      %v3391 = vpack.c.b16 %v3370, %v3369
      %v3392 = vpack.c.b16 %v3372, %v3371
      %v3393 = vpack.c.b16 %v3374, %v3373
      %v3394 = vpack.c.b16 %v3376, %v3375
      %v3395 = vpack.c.b16 %v3378, %v3377
      %v3396 = vpack.c.b16 %v3380, %v3379
      %v3398 = vsel %vm1886, %v3381, 0
      %v3401 = vsel %vm1886, %v3382, 0
      %v3404 = vsel %vm1886, %v3383, 0
      %v3407 = vsel %vm1886, %v3384, 0
      %v3410 = vsel %vm1886, %v3385, 0
      %v3413 = vsel %vm1886, %v3386, 0
      %v3416 = vsel %vm1886, %v3387, 0
      %v3419 = vsel %vm1886, %v3388, 0
      %v3422 = vsel %vm1886, %v3389, 0
      %v3425 = vsel %vm1886, %v3390, 0
      %v3428 = vsel %vm1886, %v3391, 0
      %v3431 = vsel %vm1886, %v3392, 0
      %v3434 = vsel %vm1886, %v3393, 0
      %v3437 = vsel %vm1886, %v3394, 0
      %v3440 = vsel %vm1886, %v3395, 0
      %v3443 = vsel %vm1886, %v3396, 0
      %v3446 = vsel %vm1935, %v3316, 0
      %3448 = vmatpush.bf16.msra.mxu0 0
      %3449 = vmatpush.bf16.msra.mxu0 0
      %3450 = vmatpush.bf16.msra.mxu0 0
      %3451 = vmatpush.bf16.msra.mxu0 0
      %3452 = vmatpush.bf16.msra.mxu0 0
      %3453 = vmatpush.bf16.msra.mxu0 0
      %3454 = vmatpush.bf16.msra.mxu0 0
      %3455 = vmatpush.bf16.msra.mxu0 %v3446
      %3456 = vmatmul.bf16.gmra.mxu0 %v3398
      %v3457 = vpop.f32.mrf.mxu0
      %v3458 = vadd.f32 0.0, %v3457
      %v3459 = vpop.f32.mrf.mxu0
      %v3460 = vadd.f32 0.0, %v3459
      %3461 = vmatmul.bf16.gmra.mxu0 %v3401
      %v3462 = vpop.f32.mrf.mxu0
      %v3463 = vadd.f32 0.0, %v3462
      %v3464 = vpop.f32.mrf.mxu0
      %v3465 = vadd.f32 0.0, %v3464
      %3466 = vmatmul.bf16.gmra.mxu0 %v3404
      %v3467 = vpop.f32.mrf.mxu0
      %v3468 = vadd.f32 0.0, %v3467
      %v3469 = vpop.f32.mrf.mxu0
      %v3470 = vadd.f32 0.0, %v3469
      %3471 = vmatmul.bf16.gmra.mxu0 %v3407
      %v3472 = vpop.f32.mrf.mxu0
      %v3473 = vadd.f32 0.0, %v3472
      %v3474 = vpop.f32.mrf.mxu0
      %v3475 = vadd.f32 0.0, %v3474
      %3476 = vmatmul.bf16.gmra.mxu0 %v3410
      %v3477 = vpop.f32.mrf.mxu0
      %v3478 = vadd.f32 0.0, %v3477
      %v3479 = vpop.f32.mrf.mxu0
      %v3480 = vadd.f32 0.0, %v3479
      %3481 = vmatmul.bf16.gmra.mxu0 %v3413
      %v3482 = vpop.f32.mrf.mxu0
      %v3483 = vadd.f32 0.0, %v3482
      %v3484 = vpop.f32.mrf.mxu0
      %v3485 = vadd.f32 0.0, %v3484
      %3486 = vmatmul.bf16.gmra.mxu0 %v3416
      %v3487 = vpop.f32.mrf.mxu0
      %v3488 = vadd.f32 0.0, %v3487
      %v3489 = vpop.f32.mrf.mxu0
      %v3490 = vadd.f32 0.0, %v3489
      %3491 = vmatmul.bf16.gmra.mxu0 %v3419
      %v3492 = vpop.f32.mrf.mxu0
      %v3493 = vadd.f32 0.0, %v3492
      %v3494 = vpop.f32.mrf.mxu0
      %v3495 = vadd.f32 0.0, %v3494
      %3496 = vmatmul.bf16.gmra.mxu0 %v3422
      %v3497 = vpop.f32.mrf.mxu0
      %v3498 = vadd.f32 0.0, %v3497
      %v3499 = vpop.f32.mrf.mxu0
      %v3500 = vadd.f32 0.0, %v3499
      %3501 = vmatmul.bf16.gmra.mxu0 %v3425
      %v3502 = vpop.f32.mrf.mxu0
      %v3503 = vadd.f32 0.0, %v3502
      %v3504 = vpop.f32.mrf.mxu0
      %v3505 = vadd.f32 0.0, %v3504
      %3506 = vmatmul.bf16.gmra.mxu0 %v3428
      %v3507 = vpop.f32.mrf.mxu0
      %v3508 = vadd.f32 0.0, %v3507
      %v3509 = vpop.f32.mrf.mxu0
      %v3510 = vadd.f32 0.0, %v3509
      %3511 = vmatmul.bf16.gmra.mxu0 %v3431
      %v3512 = vpop.f32.mrf.mxu0
      %v3513 = vadd.f32 0.0, %v3512
      %v3514 = vpop.f32.mrf.mxu0
      %v3515 = vadd.f32 0.0, %v3514
      %3516 = vmatmul.bf16.gmra.mxu0 %v3434
      %v3517 = vpop.f32.mrf.mxu0
      %v3518 = vadd.f32 0.0, %v3517
      %v3519 = vpop.f32.mrf.mxu0
      %v3520 = vadd.f32 0.0, %v3519
      %3521 = vmatmul.bf16.gmra.mxu0 %v3437
      %v3522 = vpop.f32.mrf.mxu0
      %v3523 = vadd.f32 0.0, %v3522
      %v3524 = vpop.f32.mrf.mxu0
      %v3525 = vadd.f32 0.0, %v3524
      %3526 = vmatmul.bf16.gmra.mxu0 %v3440
      %v3527 = vpop.f32.mrf.mxu0
      %v3528 = vadd.f32 0.0, %v3527
      %v3529 = vpop.f32.mrf.mxu0
      %v3530 = vadd.f32 0.0, %v3529
      %3531 = vmatmul.bf16.gmra.mxu0 %v3443
      %v3532 = vpop.f32.mrf.mxu0
      %v3533 = vadd.f32 0.0, %v3532
      %v3534 = vpop.f32.mrf.mxu0
      %v3535 = vadd.f32 0.0, %v3534
      %3536 = vdwg.mxu0
      %v3537 = vadd.f32 %v3251, %v3458
      %v3538 = vadd.f32 %v3252, %v3460
      %v3539 = vadd.f32 %v3253, %v3463
      %v3540 = vadd.f32 %v3254, %v3465
      %v3541 = vadd.f32 %v3255, %v3468
      %v3542 = vadd.f32 %v3256, %v3470
      %v3543 = vadd.f32 %v3257, %v3473
      %v3544 = vadd.f32 %v3258, %v3475
      %v3545 = vadd.f32 %v3259, %v3478
      %v3546 = vadd.f32 %v3260, %v3480
      %v3547 = vadd.f32 %v3261, %v3483
      %v3548 = vadd.f32 %v3262, %v3485
      %v3549 = vadd.f32 %v3263, %v3488
      %v3550 = vadd.f32 %v3264, %v3490
      %v3551 = vadd.f32 %v3265, %v3493
      %v3552 = vadd.f32 %v3266, %v3495
      %v3553 = vadd.f32 %v3267, %v3498
      %v3554 = vadd.f32 %v3268, %v3500
      %v3555 = vadd.f32 %v3269, %v3503
      %v3556 = vadd.f32 %v3270, %v3505
      %v3557 = vadd.f32 %v3271, %v3508
      %v3558 = vadd.f32 %v3272, %v3510
      %v3559 = vadd.f32 %v3273, %v3513
      %v3560 = vadd.f32 %v3274, %v3515
      %v3561 = vadd.f32 %v3275, %v3518
      %v3562 = vadd.f32 %v3276, %v3520
      %v3563 = vadd.f32 %v3277, %v3523
      %v3564 = vadd.f32 %v3278, %v3525
      %v3565 = vadd.f32 %v3279, %v3528
      %v3566 = vadd.f32 %v3280, %v3530
      %v3567 = vadd.f32 %v3281, %v3533
      %v3568 = vadd.f32 %v3282, %v3535
      %v3569 = vld [vmem:[#allocation2 + $0x18] sm:$0xf]
      %v3570 = vld [vmem:[#allocation2 + $0x1c] sm:$0xf]
      %v3571 = vld [vmem:[#allocation2 + $0x20] sm:$0xf]
      %v3572 = vld [vmem:[#allocation2 + $0x24] sm:$0xf]
      %v3573 = vld [vmem:[#allocation2 + $0x28] sm:$0xf]
      %v3574 = vld [vmem:[#allocation2 + $0x2c] sm:$0xf]
      %v3575 = vld [vmem:[#allocation2 + $0x30] sm:$0xf]
      %v3576 = vld [vmem:[#allocation2 + $0x34] sm:$0xf]
      %v3577 = vld [vmem:[#allocation2 + $0x38] sm:$0xf]
      %v3578 = vld [vmem:[#allocation2 + $0x3c] sm:$0xf]
      %v3579 = vld [vmem:[#allocation2 + $0x40] sm:$0xf]
      %v3580 = vld [vmem:[#allocation2 + $0x44] sm:$0xf]
      %v3581 = vld [vmem:[#allocation2 + $0x48] sm:$0xf]
      %v3582 = vld [vmem:[#allocation2 + $0x4c] sm:$0xf]
      %v3583 = vld [vmem:[#allocation2 + $0x50] sm:$0xf]
      %v3584 = vld [vmem:[#allocation2 + $0x54] sm:$0xf]
      %v3585 = vld [vmem:[#allocation2 + $0x58] sm:$0xf]
      %v3586 = vld [vmem:[#allocation2 + $0x5c] sm:$0xf]
      %v3587 = vld [vmem:[#allocation2 + $0x60] sm:$0xf]
      %v3588 = vld [vmem:[#allocation2 + $0x64] sm:$0xf]
      %v3589 = vld [vmem:[#allocation2 + $0x68] sm:$0xf]
      %v3590 = vld [vmem:[#allocation2 + $0x6c] sm:$0xf]
      %v3591 = vld [vmem:[#allocation2 + $0x70] sm:$0xf]
      %v3592 = vld [vmem:[#allocation2 + $0x74] sm:$0xf]
      %v3593 = vld [vmem:[#allocation2 + $0x78] sm:$0xf]
      %v3594 = vld [vmem:[#allocation2 + $0x7c] sm:$0xf]
      %v3595 = vld [vmem:[#allocation2 + $0x80] sm:$0xf]
      %v3596 = vld [vmem:[#allocation2 + $0x84] sm:$0xf]
      %v3597 = vld [vmem:[#allocation2 + $0x88] sm:$0xf]
      %v3598 = vld [vmem:[#allocation2 + $0x8c] sm:$0xf]
      %v3599 = vld [vmem:[#allocation2 + $0x90] sm:$0xf]
      %v3600 = vld [vmem:[#allocation2 + $0x94] sm:$0xf]
      %v3601 = vld [vmem:[#allocation2 + $0x98] sm:$0x1]
      %s3602 = scalar_lea.vmem %s2, 14
      %v3603 = vld [vmem:[%s3602] sm:$0x3]
      %v3637 = vunpack.c.l.b16 %v3569
      %v3638 = vunpack.c.l.b16 %v3570
      %v3639 = vunpack.c.l.b16 %v3571
      %v3640 = vunpack.c.l.b16 %v3572
      %v3641 = vunpack.c.l.b16 %v3573
      %v3642 = vunpack.c.l.b16 %v3574
      %v3643 = vunpack.c.l.b16 %v3575
      %v3644 = vunpack.c.l.b16 %v3576
      %v3645 = vunpack.c.l.b16 %v3577
      %v3646 = vunpack.c.l.b16 %v3578
      %v3647 = vunpack.c.l.b16 %v3579
      %v3648 = vunpack.c.l.b16 %v3580
      %v3649 = vunpack.c.l.b16 %v3581
      %v3650 = vunpack.c.l.b16 %v3582
      %v3651 = vunpack.c.l.b16 %v3583
      %v3652 = vunpack.c.l.b16 %v3584
      %v3653 = vunpack.c.l.b16 %v3585
      %v3654 = vunpack.c.l.b16 %v3586
      %v3655 = vunpack.c.l.b16 %v3587
      %v3656 = vunpack.c.l.b16 %v3588
      %v3657 = vunpack.c.l.b16 %v3589
      %v3658 = vunpack.c.l.b16 %v3590
      %v3659 = vunpack.c.l.b16 %v3591
      %v3660 = vunpack.c.l.b16 %v3592
      %v3661 = vunpack.c.l.b16 %v3593
      %v3662 = vunpack.c.l.b16 %v3594
      %v3663 = vunpack.c.l.b16 %v3595
      %v3664 = vunpack.c.l.b16 %v3596
      %v3665 = vunpack.c.l.b16 %v3597
      %v3666 = vunpack.c.l.b16 %v3598
      %v3667 = vunpack.c.l.b16 %v3599
      %v3668 = vunpack.c.l.b16 %v3600
      %v3669 = vunpack.c.l.b16 %v3601
      %v3670 = vpack.c.b16 %v3638, %v3637
      %v3671 = vpack.c.b16 %v3640, %v3639
      %v3672 = vpack.c.b16 %v3642, %v3641
      %v3673 = vpack.c.b16 %v3644, %v3643
      %v3674 = vpack.c.b16 %v3646, %v3645
      %v3675 = vpack.c.b16 %v3648, %v3647
      %v3676 = vpack.c.b16 %v3650, %v3649
      %v3677 = vpack.c.b16 %v3652, %v3651
      %v3678 = vpack.c.b16 %v3654, %v3653
      %v3679 = vpack.c.b16 %v3656, %v3655
      %v3680 = vpack.c.b16 %v3658, %v3657
      %v3681 = vpack.c.b16 %v3660, %v3659
      %v3682 = vpack.c.b16 %v3662, %v3661
      %v3683 = vpack.c.b16 %v3664, %v3663
      %v3684 = vpack.c.b16 %v3666, %v3665
      %v3685 = vpack.c.b16 %v3668, %v3667
      %v3686 = vpack.c.b16 %v3669, %v3669
      %v3688 = vshrl.u32 %v3670, 16
      %v3690 = vshll.u32 %v3670, 16
      %v3692 = vrot.slane %v3690, 1
      %v3693 = vor.u32 %v3688, %v3692
      %v3695 = vshll.u32 %v3671, 16
      %v3697 = vrot.slane %v3695, 1
      %v3698 = vsel %vm1753, %v3693, %v3697
      %v3699 = vshrl.u32 %v3671, 16
      %v3701 = vor.u32 %v3699, %v3697
      %v3703 = vshll.u32 %v3672, 16
      %v3705 = vrot.slane %v3703, 1
      %v3706 = vsel %vm1753, %v3701, %v3705
      %v3707 = vshrl.u32 %v3672, 16
      %v3709 = vor.u32 %v3707, %v3705
      %v3711 = vshll.u32 %v3673, 16
      %v3713 = vrot.slane %v3711, 1
      %v3714 = vsel %vm1753, %v3709, %v3713
      %v3715 = vshrl.u32 %v3673, 16
      %v3717 = vor.u32 %v3715, %v3713
      %v3719 = vshll.u32 %v3674, 16
      %v3721 = vrot.slane %v3719, 1
      %v3722 = vsel %vm1753, %v3717, %v3721
      %v3723 = vshrl.u32 %v3674, 16
      %v3725 = vor.u32 %v3723, %v3721
      %v3727 = vshll.u32 %v3675, 16
      %v3729 = vrot.slane %v3727, 1
      %v3730 = vsel %vm1753, %v3725, %v3729
      %v3731 = vshrl.u32 %v3675, 16
      %v3733 = vor.u32 %v3731, %v3729
      %v3735 = vshll.u32 %v3676, 16
      %v3737 = vrot.slane %v3735, 1
      %v3738 = vsel %vm1753, %v3733, %v3737
      %v3739 = vshrl.u32 %v3676, 16
      %v3741 = vor.u32 %v3739, %v3737
      %v3743 = vshll.u32 %v3677, 16
      %v3745 = vrot.slane %v3743, 1
      %v3746 = vsel %vm1753, %v3741, %v3745
      %v3747 = vshrl.u32 %v3677, 16
      %v3749 = vor.u32 %v3747, %v3745
      %v3751 = vshll.u32 %v3678, 16
      %v3753 = vrot.slane %v3751, 1
      %v3754 = vsel %vm1753, %v3749, %v3753
      %v3755 = vshrl.u32 %v3678, 16
      %v3757 = vor.u32 %v3755, %v3753
      %v3759 = vshll.u32 %v3679, 16
      %v3761 = vrot.slane %v3759, 1
      %v3762 = vsel %vm1753, %v3757, %v3761
      %v3763 = vshrl.u32 %v3679, 16
      %v3765 = vor.u32 %v3763, %v3761
      %v3767 = vshll.u32 %v3680, 16
      %v3769 = vrot.slane %v3767, 1
      %v3770 = vsel %vm1753, %v3765, %v3769
      %v3771 = vshrl.u32 %v3680, 16
      %v3773 = vor.u32 %v3771, %v3769
      %v3775 = vshll.u32 %v3681, 16
      %v3777 = vrot.slane %v3775, 1
      %v3778 = vsel %vm1753, %v3773, %v3777
      %v3779 = vshrl.u32 %v3681, 16
      %v3781 = vor.u32 %v3779, %v3777
      %v3783 = vshll.u32 %v3682, 16
      %v3785 = vrot.slane %v3783, 1
      %v3786 = vsel %vm1753, %v3781, %v3785
      %v3787 = vshrl.u32 %v3682, 16
      %v3789 = vor.u32 %v3787, %v3785
      %v3791 = vshll.u32 %v3683, 16
      %v3793 = vrot.slane %v3791, 1
      %v3794 = vsel %vm1753, %v3789, %v3793
      %v3795 = vshrl.u32 %v3683, 16
      %v3797 = vor.u32 %v3795, %v3793
      %v3799 = vshll.u32 %v3684, 16
      %v3801 = vrot.slane %v3799, 1
      %v3802 = vsel %vm1753, %v3797, %v3801
      %v3803 = vshrl.u32 %v3684, 16
      %v3805 = vor.u32 %v3803, %v3801
      %v3807 = vshll.u32 %v3685, 16
      %v3809 = vrot.slane %v3807, 1
      %v3810 = vsel %vm1753, %v3805, %v3809
      %v3811 = vshrl.u32 %v3685, 16
      %v3813 = vor.u32 %v3811, %v3809
      %v3815 = vshll.u32 %v3686, 16
      %v3817 = vrot.slane %v3815, 1
      %v3818 = vsel %vm1753, %v3813, %v3817
      %v3820 = vsel %vm1886, %v3698, 0
      %v3823 = vsel %vm1886, %v3706, 0
      %v3826 = vsel %vm1886, %v3714, 0
      %v3829 = vsel %vm1886, %v3722, 0
      %v3832 = vsel %vm1886, %v3730, 0
      %v3835 = vsel %vm1886, %v3738, 0
      %v3838 = vsel %vm1886, %v3746, 0
      %v3841 = vsel %vm1886, %v3754, 0
      %v3844 = vsel %vm1886, %v3762, 0
      %v3847 = vsel %vm1886, %v3770, 0
      %v3850 = vsel %vm1886, %v3778, 0
      %v3853 = vsel %vm1886, %v3786, 0
      %v3856 = vsel %vm1886, %v3794, 0
      %v3859 = vsel %vm1886, %v3802, 0
      %v3862 = vsel %vm1886, %v3810, 0
      %v3865 = vsel %vm1886, %v3818, 0
      %v3868 = vsel %vm1935, %v3603, 0
      %3870 = vmatpush.bf16.msra.mxu0 0
      %3871 = vmatpush.bf16.msra.mxu0 0
      %3872 = vmatpush.bf16.msra.mxu0 0
      %3873 = vmatpush.bf16.msra.mxu0 0
      %3874 = vmatpush.bf16.msra.mxu0 0
      %3875 = vmatpush.bf16.msra.mxu0 0
      %3876 = vmatpush.bf16.msra.mxu0 0
      %3877 = vmatpush.bf16.msra.mxu0 %v3868
      %3878 = vmatmul.bf16.gmra.mxu0 %v3820
      %v3879 = vpop.f32.mrf.mxu0
      %v3880 = vadd.f32 0.0, %v3879
      %v3881 = vpop.f32.mrf.mxu0
      %v3882 = vadd.f32 0.0, %v3881
      %3883 = vmatmul.bf16.gmra.mxu0 %v3823
      %v3884 = vpop.f32.mrf.mxu0
      %v3885 = vadd.f32 0.0, %v3884
      %v3886 = vpop.f32.mrf.mxu0
      %v3887 = vadd.f32 0.0, %v3886
      %3888 = vmatmul.bf16.gmra.mxu0 %v3826
      %v3889 = vpop.f32.mrf.mxu0
      %v3890 = vadd.f32 0.0, %v3889
      %v3891 = vpop.f32.mrf.mxu0
      %v3892 = vadd.f32 0.0, %v3891
      %3893 = vmatmul.bf16.gmra.mxu0 %v3829
      %v3894 = vpop.f32.mrf.mxu0
      %v3895 = vadd.f32 0.0, %v3894
      %v3896 = vpop.f32.mrf.mxu0
      %v3897 = vadd.f32 0.0, %v3896
      %3898 = vmatmul.bf16.gmra.mxu0 %v3832
      %v3899 = vpop.f32.mrf.mxu0
      %v3900 = vadd.f32 0.0, %v3899
      %v3901 = vpop.f32.mrf.mxu0
      %v3902 = vadd.f32 0.0, %v3901
      %3903 = vmatmul.bf16.gmra.mxu0 %v3835
      %v3904 = vpop.f32.mrf.mxu0
      %v3905 = vadd.f32 0.0, %v3904
      %v3906 = vpop.f32.mrf.mxu0
      %v3907 = vadd.f32 0.0, %v3906
      %3908 = vmatmul.bf16.gmra.mxu0 %v3838
      %v3909 = vpop.f32.mrf.mxu0
      %v3910 = vadd.f32 0.0, %v3909
      %v3911 = vpop.f32.mrf.mxu0
      %v3912 = vadd.f32 0.0, %v3911
      %3913 = vmatmul.bf16.gmra.mxu0 %v3841
      %v3914 = vpop.f32.mrf.mxu0
      %v3915 = vadd.f32 0.0, %v3914
      %v3916 = vpop.f32.mrf.mxu0
      %v3917 = vadd.f32 0.0, %v3916
      %3918 = vmatmul.bf16.gmra.mxu0 %v3844
      %v3919 = vpop.f32.mrf.mxu0
      %v3920 = vadd.f32 0.0, %v3919
      %v3921 = vpop.f32.mrf.mxu0
      %v3922 = vadd.f32 0.0, %v3921
      %3923 = vmatmul.bf16.gmra.mxu0 %v3847
      %v3924 = vpop.f32.mrf.mxu0
      %v3925 = vadd.f32 0.0, %v3924
      %v3926 = vpop.f32.mrf.mxu0
      %v3927 = vadd.f32 0.0, %v3926
      %3928 = vmatmul.bf16.gmra.mxu0 %v3850
      %v3929 = vpop.f32.mrf.mxu0
      %v3930 = vadd.f32 0.0, %v3929
      %v3931 = vpop.f32.mrf.mxu0
      %v3932 = vadd.f32 0.0, %v3931
      %3933 = vmatmul.bf16.gmra.mxu0 %v3853
      %v3934 = vpop.f32.mrf.mxu0
      %v3935 = vadd.f32 0.0, %v3934
      %v3936 = vpop.f32.mrf.mxu0
      %v3937 = vadd.f32 0.0, %v3936
      %3938 = vmatmul.bf16.gmra.mxu0 %v3856
      %v3939 = vpop.f32.mrf.mxu0
      %v3940 = vadd.f32 0.0, %v3939
      %v3941 = vpop.f32.mrf.mxu0
      %v3942 = vadd.f32 0.0, %v3941
      %3943 = vmatmul.bf16.gmra.mxu0 %v3859
      %v3944 = vpop.f32.mrf.mxu0
      %v3945 = vadd.f32 0.0, %v3944
      %v3946 = vpop.f32.mrf.mxu0
      %v3947 = vadd.f32 0.0, %v3946
      %3948 = vmatmul.bf16.gmra.mxu0 %v3862
      %v3949 = vpop.f32.mrf.mxu0
      %v3950 = vadd.f32 0.0, %v3949
      %v3951 = vpop.f32.mrf.mxu0
      %v3952 = vadd.f32 0.0, %v3951
      %3953 = vmatmul.bf16.gmra.mxu0 %v3865
      %v3954 = vpop.f32.mrf.mxu0
      %v3955 = vadd.f32 0.0, %v3954
      %v3956 = vpop.f32.mrf.mxu0
      %v3957 = vadd.f32 0.0, %v3956
      %3958 = vdwg.mxu0
      %v3959 = vadd.f32 %v3537, %v3880
      %v3960 = vadd.f32 %v3538, %v3882
      %v3961 = vadd.f32 %v3539, %v3885
      %v3962 = vadd.f32 %v3540, %v3887
      %v3963 = vadd.f32 %v3541, %v3890
      %v3964 = vadd.f32 %v3542, %v3892
      %v3965 = vadd.f32 %v3543, %v3895
      %v3966 = vadd.f32 %v3544, %v3897
      %v3967 = vadd.f32 %v3545, %v3900
      %v3968 = vadd.f32 %v3546, %v3902
      %v3969 = vadd.f32 %v3547, %v3905
      %v3970 = vadd.f32 %v3548, %v3907
      %v3971 = vadd.f32 %v3549, %v3910
      %v3972 = vadd.f32 %v3550, %v3912
      %v3973 = vadd.f32 %v3551, %v3915
      %v3974 = vadd.f32 %v3552, %v3917
      %v3975 = vadd.f32 %v3553, %v3920
      %v3976 = vadd.f32 %v3554, %v3922
      %v3977 = vadd.f32 %v3555, %v3925
      %v3978 = vadd.f32 %v3556, %v3927
      %v3979 = vadd.f32 %v3557, %v3930
      %v3980 = vadd.f32 %v3558, %v3932
      %v3981 = vadd.f32 %v3559, %v3935
      %v3982 = vadd.f32 %v3560, %v3937
      %v3983 = vadd.f32 %v3561, %v3940
      %v3984 = vadd.f32 %v3562, %v3942
      %v3985 = vadd.f32 %v3563, %v3945
      %v3986 = vadd.f32 %v3564, %v3947
      %v3987 = vadd.f32 %v3565, %v3950
      %v3988 = vadd.f32 %v3566, %v3952
      %v3989 = vadd.f32 %v3567, %v3955
      %v3990 = vadd.f32 %v3568, %v3957
      %v3991 = vld [vmem:[#allocation2 + $0x18] sm:$0xe]
      %s3992 = scalar_lea.vmem %s2, 16
      %v3993 = vld [vmem:[%s3992] sm:$0x3]
      %v3995 = vunpack.c.l.b16 %v3991
      %v3996 = vpack.c.b16 %v3638, %v3995
      %v3997 = vrot.slane %v3996, 1
      %v3998 = vrot.slane %v3671, 1
      %v3999 = vsel %vm2158, %v3997, %v3998
      %v4000 = vrot.slane %v3672, 1
      %v4001 = vsel %vm2158, %v3998, %v4000
      %v4002 = vrot.slane %v3673, 1
      %v4003 = vsel %vm2158, %v4000, %v4002
      %v4004 = vrot.slane %v3674, 1
      %v4005 = vsel %vm2158, %v4002, %v4004
      %v4006 = vrot.slane %v3675, 1
      %v4007 = vsel %vm2158, %v4004, %v4006
      %v4008 = vrot.slane %v3676, 1
      %v4009 = vsel %vm2158, %v4006, %v4008
      %v4010 = vrot.slane %v3677, 1
      %v4011 = vsel %vm2158, %v4008, %v4010
      %v4012 = vrot.slane %v3678, 1
      %v4013 = vsel %vm2158, %v4010, %v4012
      %v4014 = vrot.slane %v3679, 1
      %v4015 = vsel %vm2158, %v4012, %v4014
      %v4016 = vrot.slane %v3680, 1
      %v4017 = vsel %vm2158, %v4014, %v4016
      %v4018 = vrot.slane %v3681, 1
      %v4019 = vsel %vm2158, %v4016, %v4018
      %v4020 = vrot.slane %v3682, 1
      %v4021 = vsel %vm2158, %v4018, %v4020
      %v4022 = vrot.slane %v3683, 1
      %v4023 = vsel %vm2158, %v4020, %v4022
      %v4024 = vrot.slane %v3684, 1
      %v4025 = vsel %vm2158, %v4022, %v4024
      %v4026 = vrot.slane %v3685, 1
      %v4027 = vsel %vm2158, %v4024, %v4026
      %v4028 = vrot.slane %v3686, 1
      %v4029 = vsel %vm2158, %v4026, %v4028
      %v4031 = vsel %vm1886, %v3999, 0
      %v4034 = vsel %vm1886, %v4001, 0
      %v4037 = vsel %vm1886, %v4003, 0
      %v4040 = vsel %vm1886, %v4005, 0
      %v4043 = vsel %vm1886, %v4007, 0
      %v4046 = vsel %vm1886, %v4009, 0
      %v4049 = vsel %vm1886, %v4011, 0
      %v4052 = vsel %vm1886, %v4013, 0
      %v4055 = vsel %vm1886, %v4015, 0
      %v4058 = vsel %vm1886, %v4017, 0
      %v4061 = vsel %vm1886, %v4019, 0
      %v4064 = vsel %vm1886, %v4021, 0
      %v4067 = vsel %vm1886, %v4023, 0
      %v4070 = vsel %vm1886, %v4025, 0
      %v4073 = vsel %vm1886, %v4027, 0
      %v4076 = vsel %vm1886, %v4029, 0
      %v4079 = vsel %vm1935, %v3993, 0
      %4081 = vmatpush.bf16.msra.mxu0 0
      %4082 = vmatpush.bf16.msra.mxu0 0
      %4083 = vmatpush.bf16.msra.mxu0 0
      %4084 = vmatpush.bf16.msra.mxu0 0
      %4085 = vmatpush.bf16.msra.mxu0 0
      %4086 = vmatpush.bf16.msra.mxu0 0
      %4087 = vmatpush.bf16.msra.mxu0 0
      %4088 = vmatpush.bf16.msra.mxu0 %v4079
      %4089 = vmatmul.bf16.gmra.mxu0 %v4031
      %v4090 = vpop.f32.mrf.mxu0
      %v4091 = vadd.f32 0.0, %v4090
      %v4092 = vpop.f32.mrf.mxu0
      %v4093 = vadd.f32 0.0, %v4092
      %4094 = vmatmul.bf16.gmra.mxu0 %v4034
      %v4095 = vpop.f32.mrf.mxu0
      %v4096 = vadd.f32 0.0, %v4095
      %v4097 = vpop.f32.mrf.mxu0
      %v4098 = vadd.f32 0.0, %v4097
      %4099 = vmatmul.bf16.gmra.mxu0 %v4037
      %v4100 = vpop.f32.mrf.mxu0
      %v4101 = vadd.f32 0.0, %v4100
      %v4102 = vpop.f32.mrf.mxu0
      %v4103 = vadd.f32 0.0, %v4102
      %4104 = vmatmul.bf16.gmra.mxu0 %v4040
      %v4105 = vpop.f32.mrf.mxu0
      %v4106 = vadd.f32 0.0, %v4105
      %v4107 = vpop.f32.mrf.mxu0
      %v4108 = vadd.f32 0.0, %v4107
      %4109 = vmatmul.bf16.gmra.mxu0 %v4043
      %v4110 = vpop.f32.mrf.mxu0
      %v4111 = vadd.f32 0.0, %v4110
      %v4112 = vpop.f32.mrf.mxu0
      %v4113 = vadd.f32 0.0, %v4112
      %4114 = vmatmul.bf16.gmra.mxu0 %v4046
      %v4115 = vpop.f32.mrf.mxu0
      %v4116 = vadd.f32 0.0, %v4115
      %v4117 = vpop.f32.mrf.mxu0
      %v4118 = vadd.f32 0.0, %v4117
      %4119 = vmatmul.bf16.gmra.mxu0 %v4049
      %v4120 = vpop.f32.mrf.mxu0
      %v4121 = vadd.f32 0.0, %v4120
      %v4122 = vpop.f32.mrf.mxu0
      %v4123 = vadd.f32 0.0, %v4122
      %4124 = vmatmul.bf16.gmra.mxu0 %v4052
      %v4125 = vpop.f32.mrf.mxu0
      %v4126 = vadd.f32 0.0, %v4125
      %v4127 = vpop.f32.mrf.mxu0
      %v4128 = vadd.f32 0.0, %v4127
      %4129 = vmatmul.bf16.gmra.mxu0 %v4055
      %v4130 = vpop.f32.mrf.mxu0
      %v4131 = vadd.f32 0.0, %v4130
      %v4132 = vpop.f32.mrf.mxu0
      %v4133 = vadd.f32 0.0, %v4132
      %4134 = vmatmul.bf16.gmra.mxu0 %v4058
      %v4135 = vpop.f32.mrf.mxu0
      %v4136 = vadd.f32 0.0, %v4135
      %v4137 = vpop.f32.mrf.mxu0
      %v4138 = vadd.f32 0.0, %v4137
      %4139 = vmatmul.bf16.gmra.mxu0 %v4061
      %v4140 = vpop.f32.mrf.mxu0
      %v4141 = vadd.f32 0.0, %v4140
      %v4142 = vpop.f32.mrf.mxu0
      %v4143 = vadd.f32 0.0, %v4142
      %4144 = vmatmul.bf16.gmra.mxu0 %v4064
      %v4145 = vpop.f32.mrf.mxu0
      %v4146 = vadd.f32 0.0, %v4145
      %v4147 = vpop.f32.mrf.mxu0
      %v4148 = vadd.f32 0.0, %v4147
      %4149 = vmatmul.bf16.gmra.mxu0 %v4067
      %v4150 = vpop.f32.mrf.mxu0
      %v4151 = vadd.f32 0.0, %v4150
      %v4152 = vpop.f32.mrf.mxu0
      %v4153 = vadd.f32 0.0, %v4152
      %4154 = vmatmul.bf16.gmra.mxu0 %v4070
      %v4155 = vpop.f32.mrf.mxu0
      %v4156 = vadd.f32 0.0, %v4155
      %v4157 = vpop.f32.mrf.mxu0
      %v4158 = vadd.f32 0.0, %v4157
      %4159 = vmatmul.bf16.gmra.mxu0 %v4073
      %v4160 = vpop.f32.mrf.mxu0
      %v4161 = vadd.f32 0.0, %v4160
      %v4162 = vpop.f32.mrf.mxu0
      %v4163 = vadd.f32 0.0, %v4162
      %4164 = vmatmul.bf16.gmra.mxu0 %v4076
      %v4165 = vpop.f32.mrf.mxu0
      %v4166 = vadd.f32 0.0, %v4165
      %v4167 = vpop.f32.mrf.mxu0
      %v4168 = vadd.f32 0.0, %v4167
      %4169 = vdwg.mxu0
      %v4170 = vadd.f32 %v3959, %v4091
      %v4171 = vadd.f32 %v3960, %v4093
      %v4172 = vadd.f32 %v3961, %v4096
      %v4173 = vadd.f32 %v3962, %v4098
      %v4174 = vadd.f32 %v3963, %v4101
      %v4175 = vadd.f32 %v3964, %v4103
      %v4176 = vadd.f32 %v3965, %v4106
      %v4177 = vadd.f32 %v3966, %v4108
      %v4178 = vadd.f32 %v3967, %v4111
      %v4179 = vadd.f32 %v3968, %v4113
      %v4180 = vadd.f32 %v3969, %v4116
      %v4181 = vadd.f32 %v3970, %v4118
      %v4182 = vadd.f32 %v3971, %v4121
      %v4183 = vadd.f32 %v3972, %v4123
      %v4184 = vadd.f32 %v3973, %v4126
      %v4185 = vadd.f32 %v3974, %v4128
      %v4186 = vadd.f32 %v3975, %v4131
      %v4187 = vadd.f32 %v3976, %v4133
      %v4188 = vadd.f32 %v3977, %v4136
      %v4189 = vadd.f32 %v3978, %v4138
      %v4190 = vadd.f32 %v3979, %v4141
      %v4191 = vadd.f32 %v3980, %v4143
      %v4192 = vadd.f32 %v3981, %v4146
      %v4193 = vadd.f32 %v3982, %v4148
      %v4194 = vadd.f32 %v3983, %v4151
      %v4195 = vadd.f32 %v3984, %v4153
      %v4196 = vadd.f32 %v3985, %v4156
      %v4197 = vadd.f32 %v3986, %v4158
      %v4198 = vadd.f32 %v3987, %v4161
      %v4199 = vadd.f32 %v3988, %v4163
      %v4200 = vadd.f32 %v3989, %v4166
      %v4201 = vadd.f32 %v3990, %v4168
      %v4202 = vld [vmem:[%s3] sm:$0x1]
      %v4204 = vperm.slane %v4202, 0
      %v4206 = vmul.f32 %v4170, %v4204
      %v4207 = vmul.f32 %v4171, %v4204
      %v4208 = vmul.f32 %v4172, %v4204
      %v4209 = vmul.f32 %v4173, %v4204
      %v4210 = vmul.f32 %v4174, %v4204
      %v4211 = vmul.f32 %v4175, %v4204
      %v4212 = vmul.f32 %v4176, %v4204
      %v4213 = vmul.f32 %v4177, %v4204
      %v4214 = vmul.f32 %v4178, %v4204
      %v4215 = vmul.f32 %v4179, %v4204
      %v4216 = vmul.f32 %v4180, %v4204
      %v4217 = vmul.f32 %v4181, %v4204
      %v4218 = vmul.f32 %v4182, %v4204
      %v4219 = vmul.f32 %v4183, %v4204
      %v4220 = vmul.f32 %v4184, %v4204
      %v4221 = vmul.f32 %v4185, %v4204
      %v4222 = vmul.f32 %v4186, %v4204
      %v4223 = vmul.f32 %v4187, %v4204
      %v4224 = vmul.f32 %v4188, %v4204
      %v4225 = vmul.f32 %v4189, %v4204
      %v4226 = vmul.f32 %v4190, %v4204
      %v4227 = vmul.f32 %v4191, %v4204
      %v4228 = vmul.f32 %v4192, %v4204
      %v4229 = vmul.f32 %v4193, %v4204
      %v4230 = vmul.f32 %v4194, %v4204
      %v4231 = vmul.f32 %v4195, %v4204
      %v4232 = vmul.f32 %v4196, %v4204
      %v4233 = vmul.f32 %v4197, %v4204
      %v4234 = vmul.f32 %v4198, %v4204
      %v4235 = vmul.f32 %v4199, %v4204
      %v4236 = vmul.f32 %v4200, %v4204
      %v4237 = vmul.f32 %v4201, %v4204
      %v4238 = vld [vmem:[%s4] sm:$0x1]
      %v4240 = vperm.slane %v4238, 0
      %v4242 = vadd.f32 %v4206, %v4240
      %v4243 = vadd.f32 %v4207, %v4240
      %v4244 = vadd.f32 %v4208, %v4240
      %v4245 = vadd.f32 %v4209, %v4240
      %v4246 = vadd.f32 %v4210, %v4240
      %v4247 = vadd.f32 %v4211, %v4240
      %v4248 = vadd.f32 %v4212, %v4240
      %v4249 = vadd.f32 %v4213, %v4240
      %v4250 = vadd.f32 %v4214, %v4240
      %v4251 = vadd.f32 %v4215, %v4240
      %v4252 = vadd.f32 %v4216, %v4240
      %v4253 = vadd.f32 %v4217, %v4240
      %v4254 = vadd.f32 %v4218, %v4240
      %v4255 = vadd.f32 %v4219, %v4240
      %v4256 = vadd.f32 %v4220, %v4240
      %v4257 = vadd.f32 %v4221, %v4240
      %v4258 = vadd.f32 %v4222, %v4240
      %v4259 = vadd.f32 %v4223, %v4240
      %v4260 = vadd.f32 %v4224, %v4240
      %v4261 = vadd.f32 %v4225, %v4240
      %v4262 = vadd.f32 %v4226, %v4240
      %v4263 = vadd.f32 %v4227, %v4240
      %v4264 = vadd.f32 %v4228, %v4240
      %v4265 = vadd.f32 %v4229, %v4240
      %v4266 = vadd.f32 %v4230, %v4240
      %v4267 = vadd.f32 %v4231, %v4240
      %v4268 = vadd.f32 %v4232, %v4240
      %v4269 = vadd.f32 %v4233, %v4240
      %v4270 = vadd.f32 %v4234, %v4240
      %v4271 = vadd.f32 %v4235, %v4240
      %v4272 = vadd.f32 %v4236, %v4240
      %v4273 = vadd.f32 %v4237, %v4240
      %v4274 = vmax.f32 %v4242, 0.0
      %v4275 = vmax.f32 %v4243, 0.0
      %v4276 = vmax.f32 %v4244, 0.0
      %v4277 = vmax.f32 %v4245, 0.0
      %v4278 = vmax.f32 %v4246, 0.0
      %v4279 = vmax.f32 %v4247, 0.0
      %v4280 = vmax.f32 %v4248, 0.0
      %v4281 = vmax.f32 %v4249, 0.0
      %v4282 = vmax.f32 %v4250, 0.0
      %v4283 = vmax.f32 %v4251, 0.0
      %v4284 = vmax.f32 %v4252, 0.0
      %v4285 = vmax.f32 %v4253, 0.0
      %v4286 = vmax.f32 %v4254, 0.0
      %v4287 = vmax.f32 %v4255, 0.0
      %v4288 = vmax.f32 %v4256, 0.0
      %v4289 = vmax.f32 %v4257, 0.0
      %v4290 = vmax.f32 %v4258, 0.0
      %v4291 = vmax.f32 %v4259, 0.0
      %v4292 = vmax.f32 %v4260, 0.0
      %v4293 = vmax.f32 %v4261, 0.0
      %v4294 = vmax.f32 %v4262, 0.0
      %v4295 = vmax.f32 %v4263, 0.0
      %v4296 = vmax.f32 %v4264, 0.0
      %v4297 = vmax.f32 %v4265, 0.0
      %v4298 = vmax.f32 %v4266, 0.0
      %v4299 = vmax.f32 %v4267, 0.0
      %v4300 = vmax.f32 %v4268, 0.0
      %v4301 = vmax.f32 %v4269, 0.0
      %v4302 = vmax.f32 %v4270, 0.0
      %v4303 = vmax.f32 %v4271, 0.0
      %v4304 = vmax.f32 %v4272, 0.0
      %v4305 = vmax.f32 %v4273, 0.0
      %v4306 = vlaneseq
      %v4307 = vshrl.u32 %v4306, 7
      %v4308 = vadd.s32 %v4307, 8
      %v4309 = vadd.s32 %v4307, 16
      %v4310 = vadd.s32 %v4307, 24
      %v4311 = vadd.s32 %v4307, 32
      %v4312 = vadd.s32 %v4307, 40
      %v4313 = vadd.s32 %v4307, 48
      %v4314 = vadd.s32 %v4307, 56
      %v4315 = vadd.s32 %v4307, 64
      %v4316 = vadd.s32 %v4307, 72
      %v4317 = vadd.s32 %v4307, 80
      %v4318 = vadd.s32 %v4307, 88
      %v4319 = vadd.s32 %v4307, 96
      %v4320 = vadd.s32 %v4307, 104
      %v4321 = vadd.s32 %v4307, 112
      %v4322 = vadd.s32 %v4307, 120
      %v4323 = vadd.s32 %v4307, 128
      %v4324 = vadd.s32 %v4307, 136
      %v4325 = vadd.s32 %v4307, 144
      %v4326 = vadd.s32 %v4307, 152
      %v4327 = vadd.s32 %v4307, 160
      %v4328 = vadd.s32 %v4307, 168
      %v4329 = vadd.s32 %v4307, 176
      %v4330 = vadd.s32 %v4307, 184
      %v4331 = vadd.s32 %v4307, 192
      %v4332 = vadd.s32 %v4307, 200
      %v4333 = vadd.s32 %v4307, 208
      %v4334 = vadd.s32 %v4307, 216
      %v4335 = vadd.s32 %v4307, 224
      %v4336 = vadd.s32 %v4307, 232
      %v4337 = vadd.s32 %v4307, 240
      %v4338 = vadd.s32 %v4307, 248
      %vm4339 = vcmp.lt.s32.totalorder %v4307, 0
      %v4340 = vsub.s32 0, %v4307
      %v4341 = vsel %vm4339, %v4340, %v4307
      %v4342 = vand.u32 %v4341, 65535
      %v4343 = vshrl.u32 %v4341, 16
      %v4345 = vmul.u32 %v4342, 43691
      %v4346 = vmul.u32 %v4342, 43690
      %v4347 = vmul.u32 %v4343, 43691
      %v4348 = vmul.u32 %v4343, 43690
      %v4349 = vshll.u32 %v4346, 16
      %v4350 = vshrl.u32 %v4346, 16
      %v4351 = vshll.u32 %v4347, 16
      %v4352 = vshrl.u32 %v4347, 16
      %vm4353 = vc.u32 %v4345, %v4349
      %v4354 = vsel %vm4353, 1, 0
      %v4355 = vadd.s32 %v4345, %v4349
      %v4356 = vadd.s32 %v4348, %v4354
      %vm4357 = vc.u32 %v4355, %v4351
      %v4358 = vsel %vm4357, 1, 0
      %v4359 = vadd.s32 %v4355, %v4351
      %v4360 = vadd.s32 %v4356, %v4358
      %v4361 = vadd.s32 %v4360, %v4350
      %v4362 = vadd.s32 %v4361, %v4352
      %v4363 = vshrl.u32 %v4362, 4
      %v4364 = vmul.u32 %v4363, 24
      %v4365 = vsub.s32 %v4341, %v4364
      %v4366 = vsub.s32 0, %v4365
      %v4367 = vsel %vm4339, %v4366, %v4365
      %vm4368 = vcmp.lt.s32.totalorder %v4308, 0
      %v4369 = vsub.s32 0, %v4308
      %v4370 = vsel %vm4368, %v4369, %v4308
      %v4371 = vand.u32 %v4370, 65535
      %v4372 = vshrl.u32 %v4370, 16
      %v4374 = vmul.u32 %v4371, 43691
      %v4375 = vmul.u32 %v4371, 43690
      %v4376 = vmul.u32 %v4372, 43691
      %v4377 = vmul.u32 %v4372, 43690
      %v4378 = vshll.u32 %v4375, 16
      %v4379 = vshrl.u32 %v4375, 16
      %v4380 = vshll.u32 %v4376, 16
      %v4381 = vshrl.u32 %v4376, 16
      %vm4382 = vc.u32 %v4374, %v4378
      %v4383 = vsel %vm4382, 1, 0
      %v4384 = vadd.s32 %v4374, %v4378
      %v4385 = vadd.s32 %v4377, %v4383
      %vm4386 = vc.u32 %v4384, %v4380
      %v4387 = vsel %vm4386, 1, 0
      %v4388 = vadd.s32 %v4384, %v4380
      %v4389 = vadd.s32 %v4385, %v4387
      %v4390 = vadd.s32 %v4389, %v4379
      %v4391 = vadd.s32 %v4390, %v4381
      %v4392 = vshrl.u32 %v4391, 4
      %v4393 = vmul.u32 %v4392, 24
      %v4394 = vsub.s32 %v4370, %v4393
      %v4395 = vsub.s32 0, %v4394
      %v4396 = vsel %vm4368, %v4395, %v4394
      %vm4397 = vcmp.lt.s32.totalorder %v4309, 0
      %v4398 = vsub.s32 0, %v4309
      %v4399 = vsel %vm4397, %v4398, %v4309
      %v4400 = vand.u32 %v4399, 65535
      %v4401 = vshrl.u32 %v4399, 16
      %v4403 = vmul.u32 %v4400, 43691
      %v4404 = vmul.u32 %v4400, 43690
      %v4405 = vmul.u32 %v4401, 43691
      %v4406 = vmul.u32 %v4401, 43690
      %v4407 = vshll.u32 %v4404, 16
      %v4408 = vshrl.u32 %v4404, 16
      %v4409 = vshll.u32 %v4405, 16
      %v4410 = vshrl.u32 %v4405, 16
      %vm4411 = vc.u32 %v4403, %v4407
      %v4412 = vsel %vm4411, 1, 0
      %v4413 = vadd.s32 %v4403, %v4407
      %v4414 = vadd.s32 %v4406, %v4412
      %vm4415 = vc.u32 %v4413, %v4409
      %v4416 = vsel %vm4415, 1, 0
      %v4417 = vadd.s32 %v4413, %v4409
      %v4418 = vadd.s32 %v4414, %v4416
      %v4419 = vadd.s32 %v4418, %v4408
      %v4420 = vadd.s32 %v4419, %v4410
      %v4421 = vshrl.u32 %v4420, 4
      %v4422 = vmul.u32 %v4421, 24
      %v4423 = vsub.s32 %v4399, %v4422
      %v4424 = vsub.s32 0, %v4423
      %v4425 = vsel %vm4397, %v4424, %v4423
      %vm4426 = vcmp.lt.s32.totalorder %v4310, 0
      %v4427 = vsub.s32 0, %v4310
      %v4428 = vsel %vm4426, %v4427, %v4310
      %v4429 = vand.u32 %v4428, 65535
      %v4430 = vshrl.u32 %v4428, 16
      %v4432 = vmul.u32 %v4429, 43691
      %v4433 = vmul.u32 %v4429, 43690
      %v4434 = vmul.u32 %v4430, 43691
      %v4435 = vmul.u32 %v4430, 43690
      %v4436 = vshll.u32 %v4433, 16
      %v4437 = vshrl.u32 %v4433, 16
      %v4438 = vshll.u32 %v4434, 16
      %v4439 = vshrl.u32 %v4434, 16
      %vm4440 = vc.u32 %v4432, %v4436
      %v4441 = vsel %vm4440, 1, 0
      %v4442 = vadd.s32 %v4432, %v4436
      %v4443 = vadd.s32 %v4435, %v4441
      %vm4444 = vc.u32 %v4442, %v4438
      %v4445 = vsel %vm4444, 1, 0
      %v4446 = vadd.s32 %v4442, %v4438
      %v4447 = vadd.s32 %v4443, %v4445
      %v4448 = vadd.s32 %v4447, %v4437
      %v4449 = vadd.s32 %v4448, %v4439
      %v4450 = vshrl.u32 %v4449, 4
      %v4451 = vmul.u32 %v4450, 24
      %v4452 = vsub.s32 %v4428, %v4451
      %v4453 = vsub.s32 0, %v4452
      %v4454 = vsel %vm4426, %v4453, %v4452
      %vm4455 = vcmp.lt.s32.totalorder %v4311, 0
      %v4456 = vsub.s32 0, %v4311
      %v4457 = vsel %vm4455, %v4456, %v4311
      %v4458 = vand.u32 %v4457, 65535
      %v4459 = vshrl.u32 %v4457, 16
      %v4461 = vmul.u32 %v4458, 43691
      %v4462 = vmul.u32 %v4458, 43690
      %v4463 = vmul.u32 %v4459, 43691
      %v4464 = vmul.u32 %v4459, 43690
      %v4465 = vshll.u32 %v4462, 16
      %v4466 = vshrl.u32 %v4462, 16
      %v4467 = vshll.u32 %v4463, 16
      %v4468 = vshrl.u32 %v4463, 16
      %vm4469 = vc.u32 %v4461, %v4465
      %v4470 = vsel %vm4469, 1, 0
      %v4471 = vadd.s32 %v4461, %v4465
      %v4472 = vadd.s32 %v4464, %v4470
      %vm4473 = vc.u32 %v4471, %v4467
      %v4474 = vsel %vm4473, 1, 0
      %v4475 = vadd.s32 %v4471, %v4467
      %v4476 = vadd.s32 %v4472, %v4474
      %v4477 = vadd.s32 %v4476, %v4466
      %v4478 = vadd.s32 %v4477, %v4468
      %v4479 = vshrl.u32 %v4478, 4
      %v4480 = vmul.u32 %v4479, 24
      %v4481 = vsub.s32 %v4457, %v4480
      %v4482 = vsub.s32 0, %v4481
      %v4483 = vsel %vm4455, %v4482, %v4481
      %vm4484 = vcmp.lt.s32.totalorder %v4312, 0
      %v4485 = vsub.s32 0, %v4312
      %v4486 = vsel %vm4484, %v4485, %v4312
      %v4487 = vand.u32 %v4486, 65535
      %v4488 = vshrl.u32 %v4486, 16
      %v4490 = vmul.u32 %v4487, 43691
      %v4491 = vmul.u32 %v4487, 43690
      %v4492 = vmul.u32 %v4488, 43691
      %v4493 = vmul.u32 %v4488, 43690
      %v4494 = vshll.u32 %v4491, 16
      %v4495 = vshrl.u32 %v4491, 16
      %v4496 = vshll.u32 %v4492, 16
      %v4497 = vshrl.u32 %v4492, 16
      %vm4498 = vc.u32 %v4490, %v4494
      %v4499 = vsel %vm4498, 1, 0
      %v4500 = vadd.s32 %v4490, %v4494
      %v4501 = vadd.s32 %v4493, %v4499
      %vm4502 = vc.u32 %v4500, %v4496
      %v4503 = vsel %vm4502, 1, 0
      %v4504 = vadd.s32 %v4500, %v4496
      %v4505 = vadd.s32 %v4501, %v4503
      %v4506 = vadd.s32 %v4505, %v4495
      %v4507 = vadd.s32 %v4506, %v4497
      %v4508 = vshrl.u32 %v4507, 4
      %v4509 = vmul.u32 %v4508, 24
      %v4510 = vsub.s32 %v4486, %v4509
      %v4511 = vsub.s32 0, %v4510
      %v4512 = vsel %vm4484, %v4511, %v4510
      %vm4513 = vcmp.lt.s32.totalorder %v4313, 0
      %v4514 = vsub.s32 0, %v4313
      %v4515 = vsel %vm4513, %v4514, %v4313
      %v4516 = vand.u32 %v4515, 65535
      %v4517 = vshrl.u32 %v4515, 16
      %v4519 = vmul.u32 %v4516, 43691
      %v4520 = vmul.u32 %v4516, 43690
      %v4521 = vmul.u32 %v4517, 43691
      %v4522 = vmul.u32 %v4517, 43690
      %v4523 = vshll.u32 %v4520, 16
      %v4524 = vshrl.u32 %v4520, 16
      %v4525 = vshll.u32 %v4521, 16
      %v4526 = vshrl.u32 %v4521, 16
      %vm4527 = vc.u32 %v4519, %v4523
      %v4528 = vsel %vm4527, 1, 0
      %v4529 = vadd.s32 %v4519, %v4523
      %v4530 = vadd.s32 %v4522, %v4528
      %vm4531 = vc.u32 %v4529, %v4525
      %v4532 = vsel %vm4531, 1, 0
      %v4533 = vadd.s32 %v4529, %v4525
      %v4534 = vadd.s32 %v4530, %v4532
      %v4535 = vadd.s32 %v4534, %v4524
      %v4536 = vadd.s32 %v4535, %v4526
      %v4537 = vshrl.u32 %v4536, 4
      %v4538 = vmul.u32 %v4537, 24
      %v4539 = vsub.s32 %v4515, %v4538
      %v4540 = vsub.s32 0, %v4539
      %v4541 = vsel %vm4513, %v4540, %v4539
      %vm4542 = vcmp.lt.s32.totalorder %v4314, 0
      %v4543 = vsub.s32 0, %v4314
      %v4544 = vsel %vm4542, %v4543, %v4314
      %v4545 = vand.u32 %v4544, 65535
      %v4546 = vshrl.u32 %v4544, 16
      %v4548 = vmul.u32 %v4545, 43691
      %v4549 = vmul.u32 %v4545, 43690
      %v4550 = vmul.u32 %v4546, 43691
      %v4551 = vmul.u32 %v4546, 43690
      %v4552 = vshll.u32 %v4549, 16
      %v4553 = vshrl.u32 %v4549, 16
      %v4554 = vshll.u32 %v4550, 16
      %v4555 = vshrl.u32 %v4550, 16
      %vm4556 = vc.u32 %v4548, %v4552
      %v4557 = vsel %vm4556, 1, 0
      %v4558 = vadd.s32 %v4548, %v4552
      %v4559 = vadd.s32 %v4551, %v4557
      %vm4560 = vc.u32 %v4558, %v4554
      %v4561 = vsel %vm4560, 1, 0
      %v4562 = vadd.s32 %v4558, %v4554
      %v4563 = vadd.s32 %v4559, %v4561
      %v4564 = vadd.s32 %v4563, %v4553
      %v4565 = vadd.s32 %v4564, %v4555
      %v4566 = vshrl.u32 %v4565, 4
      %v4567 = vmul.u32 %v4566, 24
      %v4568 = vsub.s32 %v4544, %v4567
      %v4569 = vsub.s32 0, %v4568
      %v4570 = vsel %vm4542, %v4569, %v4568
      %vm4571 = vcmp.lt.s32.totalorder %v4315, 0
      %v4572 = vsub.s32 0, %v4315
      %v4573 = vsel %vm4571, %v4572, %v4315
      %v4574 = vand.u32 %v4573, 65535
      %v4575 = vshrl.u32 %v4573, 16
      %v4577 = vmul.u32 %v4574, 43691
      %v4578 = vmul.u32 %v4574, 43690
      %v4579 = vmul.u32 %v4575, 43691
      %v4580 = vmul.u32 %v4575, 43690
      %v4581 = vshll.u32 %v4578, 16
      %v4582 = vshrl.u32 %v4578, 16
      %v4583 = vshll.u32 %v4579, 16
      %v4584 = vshrl.u32 %v4579, 16
      %vm4585 = vc.u32 %v4577, %v4581
      %v4586 = vsel %vm4585, 1, 0
      %v4587 = vadd.s32 %v4577, %v4581
      %v4588 = vadd.s32 %v4580, %v4586
      %vm4589 = vc.u32 %v4587, %v4583
      %v4590 = vsel %vm4589, 1, 0
      %v4591 = vadd.s32 %v4587, %v4583
      %v4592 = vadd.s32 %v4588, %v4590
      %v4593 = vadd.s32 %v4592, %v4582
      %v4594 = vadd.s32 %v4593, %v4584
      %v4595 = vshrl.u32 %v4594, 4
      %v4596 = vmul.u32 %v4595, 24
      %v4597 = vsub.s32 %v4573, %v4596
      %v4598 = vsub.s32 0, %v4597
      %v4599 = vsel %vm4571, %v4598, %v4597
      %vm4600 = vcmp.lt.s32.totalorder %v4316, 0
      %v4601 = vsub.s32 0, %v4316
      %v4602 = vsel %vm4600, %v4601, %v4316
      %v4603 = vand.u32 %v4602, 65535
      %v4604 = vshrl.u32 %v4602, 16
      %v4606 = vmul.u32 %v4603, 43691
      %v4607 = vmul.u32 %v4603, 43690
      %v4608 = vmul.u32 %v4604, 43691
      %v4609 = vmul.u32 %v4604, 43690
      %v4610 = vshll.u32 %v4607, 16
      %v4611 = vshrl.u32 %v4607, 16
      %v4612 = vshll.u32 %v4608, 16
      %v4613 = vshrl.u32 %v4608, 16
      %vm4614 = vc.u32 %v4606, %v4610
      %v4615 = vsel %vm4614, 1, 0
      %v4616 = vadd.s32 %v4606, %v4610
      %v4617 = vadd.s32 %v4609, %v4615
      %vm4618 = vc.u32 %v4616, %v4612
      %v4619 = vsel %vm4618, 1, 0
      %v4620 = vadd.s32 %v4616, %v4612
      %v4621 = vadd.s32 %v4617, %v4619
      %v4622 = vadd.s32 %v4621, %v4611
      %v4623 = vadd.s32 %v4622, %v4613
      %v4624 = vshrl.u32 %v4623, 4
      %v4625 = vmul.u32 %v4624, 24
      %v4626 = vsub.s32 %v4602, %v4625
      %v4627 = vsub.s32 0, %v4626
      %v4628 = vsel %vm4600, %v4627, %v4626
      %vm4629 = vcmp.lt.s32.totalorder %v4317, 0
      %v4630 = vsub.s32 0, %v4317
      %v4631 = vsel %vm4629, %v4630, %v4317
      %v4632 = vand.u32 %v4631, 65535
      %v4633 = vshrl.u32 %v4631, 16
      %v4635 = vmul.u32 %v4632, 43691
      %v4636 = vmul.u32 %v4632, 43690
      %v4637 = vmul.u32 %v4633, 43691
      %v4638 = vmul.u32 %v4633, 43690
      %v4639 = vshll.u32 %v4636, 16
      %v4640 = vshrl.u32 %v4636, 16
      %v4641 = vshll.u32 %v4637, 16
      %v4642 = vshrl.u32 %v4637, 16
      %vm4643 = vc.u32 %v4635, %v4639
      %v4644 = vsel %vm4643, 1, 0
      %v4645 = vadd.s32 %v4635, %v4639
      %v4646 = vadd.s32 %v4638, %v4644
      %vm4647 = vc.u32 %v4645, %v4641
      %v4648 = vsel %vm4647, 1, 0
      %v4649 = vadd.s32 %v4645, %v4641
      %v4650 = vadd.s32 %v4646, %v4648
      %v4651 = vadd.s32 %v4650, %v4640
      %v4652 = vadd.s32 %v4651, %v4642
      %v4653 = vshrl.u32 %v4652, 4
      %v4654 = vmul.u32 %v4653, 24
      %v4655 = vsub.s32 %v4631, %v4654
      %v4656 = vsub.s32 0, %v4655
      %v4657 = vsel %vm4629, %v4656, %v4655
      %vm4658 = vcmp.lt.s32.totalorder %v4318, 0
      %v4659 = vsub.s32 0, %v4318
      %v4660 = vsel %vm4658, %v4659, %v4318
      %v4661 = vand.u32 %v4660, 65535
      %v4662 = vshrl.u32 %v4660, 16
      %v4664 = vmul.u32 %v4661, 43691
      %v4665 = vmul.u32 %v4661, 43690
      %v4666 = vmul.u32 %v4662, 43691
      %v4667 = vmul.u32 %v4662, 43690
      %v4668 = vshll.u32 %v4665, 16
      %v4669 = vshrl.u32 %v4665, 16
      %v4670 = vshll.u32 %v4666, 16
      %v4671 = vshrl.u32 %v4666, 16
      %vm4672 = vc.u32 %v4664, %v4668
      %v4673 = vsel %vm4672, 1, 0
      %v4674 = vadd.s32 %v4664, %v4668
      %v4675 = vadd.s32 %v4667, %v4673
      %vm4676 = vc.u32 %v4674, %v4670
      %v4677 = vsel %vm4676, 1, 0
      %v4678 = vadd.s32 %v4674, %v4670
      %v4679 = vadd.s32 %v4675, %v4677
      %v4680 = vadd.s32 %v4679, %v4669
      %v4681 = vadd.s32 %v4680, %v4671
      %v4682 = vshrl.u32 %v4681, 4
      %v4683 = vmul.u32 %v4682, 24
      %v4684 = vsub.s32 %v4660, %v4683
      %v4685 = vsub.s32 0, %v4684
      %v4686 = vsel %vm4658, %v4685, %v4684
      %vm4687 = vcmp.lt.s32.totalorder %v4319, 0
      %v4688 = vsub.s32 0, %v4319
      %v4689 = vsel %vm4687, %v4688, %v4319
      %v4690 = vand.u32 %v4689, 65535
      %v4691 = vshrl.u32 %v4689, 16
      %v4693 = vmul.u32 %v4690, 43691
      %v4694 = vmul.u32 %v4690, 43690
      %v4695 = vmul.u32 %v4691, 43691
      %v4696 = vmul.u32 %v4691, 43690
      %v4697 = vshll.u32 %v4694, 16
      %v4698 = vshrl.u32 %v4694, 16
      %v4699 = vshll.u32 %v4695, 16
      %v4700 = vshrl.u32 %v4695, 16
      %vm4701 = vc.u32 %v4693, %v4697
      %v4702 = vsel %vm4701, 1, 0
      %v4703 = vadd.s32 %v4693, %v4697
      %v4704 = vadd.s32 %v4696, %v4702
      %vm4705 = vc.u32 %v4703, %v4699
      %v4706 = vsel %vm4705, 1, 0
      %v4707 = vadd.s32 %v4703, %v4699
      %v4708 = vadd.s32 %v4704, %v4706
      %v4709 = vadd.s32 %v4708, %v4698
      %v4710 = vadd.s32 %v4709, %v4700
      %v4711 = vshrl.u32 %v4710, 4
      %v4712 = vmul.u32 %v4711, 24
      %v4713 = vsub.s32 %v4689, %v4712
      %v4714 = vsub.s32 0, %v4713
      %v4715 = vsel %vm4687, %v4714, %v4713
      %vm4716 = vcmp.lt.s32.totalorder %v4320, 0
      %v4717 = vsub.s32 0, %v4320
      %v4718 = vsel %vm4716, %v4717, %v4320
      %v4719 = vand.u32 %v4718, 65535
      %v4720 = vshrl.u32 %v4718, 16
      %v4722 = vmul.u32 %v4719, 43691
      %v4723 = vmul.u32 %v4719, 43690
      %v4724 = vmul.u32 %v4720, 43691
      %v4725 = vmul.u32 %v4720, 43690
      %v4726 = vshll.u32 %v4723, 16
      %v4727 = vshrl.u32 %v4723, 16
      %v4728 = vshll.u32 %v4724, 16
      %v4729 = vshrl.u32 %v4724, 16
      %vm4730 = vc.u32 %v4722, %v4726
      %v4731 = vsel %vm4730, 1, 0
      %v4732 = vadd.s32 %v4722, %v4726
      %v4733 = vadd.s32 %v4725, %v4731
      %vm4734 = vc.u32 %v4732, %v4728
      %v4735 = vsel %vm4734, 1, 0
      %v4736 = vadd.s32 %v4732, %v4728
      %v4737 = vadd.s32 %v4733, %v4735
      %v4738 = vadd.s32 %v4737, %v4727
      %v4739 = vadd.s32 %v4738, %v4729
      %v4740 = vshrl.u32 %v4739, 4
      %v4741 = vmul.u32 %v4740, 24
      %v4742 = vsub.s32 %v4718, %v4741
      %v4743 = vsub.s32 0, %v4742
      %v4744 = vsel %vm4716, %v4743, %v4742
      %vm4745 = vcmp.lt.s32.totalorder %v4321, 0
      %v4746 = vsub.s32 0, %v4321
      %v4747 = vsel %vm4745, %v4746, %v4321
      %v4748 = vand.u32 %v4747, 65535
      %v4749 = vshrl.u32 %v4747, 16
      %v4751 = vmul.u32 %v4748, 43691
      %v4752 = vmul.u32 %v4748, 43690
      %v4753 = vmul.u32 %v4749, 43691
      %v4754 = vmul.u32 %v4749, 43690
      %v4755 = vshll.u32 %v4752, 16
      %v4756 = vshrl.u32 %v4752, 16
      %v4757 = vshll.u32 %v4753, 16
      %v4758 = vshrl.u32 %v4753, 16
      %vm4759 = vc.u32 %v4751, %v4755
      %v4760 = vsel %vm4759, 1, 0
      %v4761 = vadd.s32 %v4751, %v4755
      %v4762 = vadd.s32 %v4754, %v4760
      %vm4763 = vc.u32 %v4761, %v4757
      %v4764 = vsel %vm4763, 1, 0
      %v4765 = vadd.s32 %v4761, %v4757
      %v4766 = vadd.s32 %v4762, %v4764
      %v4767 = vadd.s32 %v4766, %v4756
      %v4768 = vadd.s32 %v4767, %v4758
      %v4769 = vshrl.u32 %v4768, 4
      %v4770 = vmul.u32 %v4769, 24
      %v4771 = vsub.s32 %v4747, %v4770
      %v4772 = vsub.s32 0, %v4771
      %v4773 = vsel %vm4745, %v4772, %v4771
      %vm4774 = vcmp.lt.s32.totalorder %v4322, 0
      %v4775 = vsub.s32 0, %v4322
      %v4776 = vsel %vm4774, %v4775, %v4322
      %v4777 = vand.u32 %v4776, 65535
      %v4778 = vshrl.u32 %v4776, 16
      %v4780 = vmul.u32 %v4777, 43691
      %v4781 = vmul.u32 %v4777, 43690
      %v4782 = vmul.u32 %v4778, 43691
      %v4783 = vmul.u32 %v4778, 43690
      %v4784 = vshll.u32 %v4781, 16
      %v4785 = vshrl.u32 %v4781, 16
      %v4786 = vshll.u32 %v4782, 16
      %v4787 = vshrl.u32 %v4782, 16
      %vm4788 = vc.u32 %v4780, %v4784
      %v4789 = vsel %vm4788, 1, 0
      %v4790 = vadd.s32 %v4780, %v4784
      %v4791 = vadd.s32 %v4783, %v4789
      %vm4792 = vc.u32 %v4790, %v4786
      %v4793 = vsel %vm4792, 1, 0
      %v4794 = vadd.s32 %v4790, %v4786
      %v4795 = vadd.s32 %v4791, %v4793
      %v4796 = vadd.s32 %v4795, %v4785
      %v4797 = vadd.s32 %v4796, %v4787
      %v4798 = vshrl.u32 %v4797, 4
      %v4799 = vmul.u32 %v4798, 24
      %v4800 = vsub.s32 %v4776, %v4799
      %v4801 = vsub.s32 0, %v4800
      %v4802 = vsel %vm4774, %v4801, %v4800
      %vm4803 = vcmp.lt.s32.totalorder %v4323, 0
      %v4804 = vsub.s32 0, %v4323
      %v4805 = vsel %vm4803, %v4804, %v4323
      %v4806 = vand.u32 %v4805, 65535
      %v4807 = vshrl.u32 %v4805, 16
      %v4809 = vmul.u32 %v4806, 43691
      %v4810 = vmul.u32 %v4806, 43690
      %v4811 = vmul.u32 %v4807, 43691
      %v4812 = vmul.u32 %v4807, 43690
      %v4813 = vshll.u32 %v4810, 16
      %v4814 = vshrl.u32 %v4810, 16
      %v4815 = vshll.u32 %v4811, 16
      %v4816 = vshrl.u32 %v4811, 16
      %vm4817 = vc.u32 %v4809, %v4813
      %v4818 = vsel %vm4817, 1, 0
      %v4819 = vadd.s32 %v4809, %v4813
      %v4820 = vadd.s32 %v4812, %v4818
      %vm4821 = vc.u32 %v4819, %v4815
      %v4822 = vsel %vm4821, 1, 0
      %v4823 = vadd.s32 %v4819, %v4815
      %v4824 = vadd.s32 %v4820, %v4822
      %v4825 = vadd.s32 %v4824, %v4814
      %v4826 = vadd.s32 %v4825, %v4816
      %v4827 = vshrl.u32 %v4826, 4
      %v4828 = vmul.u32 %v4827, 24
      %v4829 = vsub.s32 %v4805, %v4828
      %v4830 = vsub.s32 0, %v4829
      %v4831 = vsel %vm4803, %v4830, %v4829
      %vm4832 = vcmp.lt.s32.totalorder %v4324, 0
      %v4833 = vsub.s32 0, %v4324
      %v4834 = vsel %vm4832, %v4833, %v4324
      %v4835 = vand.u32 %v4834, 65535
      %v4836 = vshrl.u32 %v4834, 16
      %v4838 = vmul.u32 %v4835, 43691
      %v4839 = vmul.u32 %v4835, 43690
      %v4840 = vmul.u32 %v4836, 43691
      %v4841 = vmul.u32 %v4836, 43690
      %v4842 = vshll.u32 %v4839, 16
      %v4843 = vshrl.u32 %v4839, 16
      %v4844 = vshll.u32 %v4840, 16
      %v4845 = vshrl.u32 %v4840, 16
      %vm4846 = vc.u32 %v4838, %v4842
      %v4847 = vsel %vm4846, 1, 0
      %v4848 = vadd.s32 %v4838, %v4842
      %v4849 = vadd.s32 %v4841, %v4847
      %vm4850 = vc.u32 %v4848, %v4844
      %v4851 = vsel %vm4850, 1, 0
      %v4852 = vadd.s32 %v4848, %v4844
      %v4853 = vadd.s32 %v4849, %v4851
      %v4854 = vadd.s32 %v4853, %v4843
      %v4855 = vadd.s32 %v4854, %v4845
      %v4856 = vshrl.u32 %v4855, 4
      %v4857 = vmul.u32 %v4856, 24
      %v4858 = vsub.s32 %v4834, %v4857
      %v4859 = vsub.s32 0, %v4858
      %v4860 = vsel %vm4832, %v4859, %v4858
      %vm4861 = vcmp.lt.s32.totalorder %v4325, 0
      %v4862 = vsub.s32 0, %v4325
      %v4863 = vsel %vm4861, %v4862, %v4325
      %v4864 = vand.u32 %v4863, 65535
      %v4865 = vshrl.u32 %v4863, 16
      %v4867 = vmul.u32 %v4864, 43691
      %v4868 = vmul.u32 %v4864, 43690
      %v4869 = vmul.u32 %v4865, 43691
      %v4870 = vmul.u32 %v4865, 43690
      %v4871 = vshll.u32 %v4868, 16
      %v4872 = vshrl.u32 %v4868, 16
      %v4873 = vshll.u32 %v4869, 16
      %v4874 = vshrl.u32 %v4869, 16
      %vm4875 = vc.u32 %v4867, %v4871
      %v4876 = vsel %vm4875, 1, 0
      %v4877 = vadd.s32 %v4867, %v4871
      %v4878 = vadd.s32 %v4870, %v4876
      %vm4879 = vc.u32 %v4877, %v4873
      %v4880 = vsel %vm4879, 1, 0
      %v4881 = vadd.s32 %v4877, %v4873
      %v4882 = vadd.s32 %v4878, %v4880
      %v4883 = vadd.s32 %v4882, %v4872
      %v4884 = vadd.s32 %v4883, %v4874
      %v4885 = vshrl.u32 %v4884, 4
      %v4886 = vmul.u32 %v4885, 24
      %v4887 = vsub.s32 %v4863, %v4886
      %v4888 = vsub.s32 0, %v4887
      %v4889 = vsel %vm4861, %v4888, %v4887
      %vm4890 = vcmp.lt.s32.totalorder %v4326, 0
      %v4891 = vsub.s32 0, %v4326
      %v4892 = vsel %vm4890, %v4891, %v4326
      %v4893 = vand.u32 %v4892, 65535
      %v4894 = vshrl.u32 %v4892, 16
      %v4896 = vmul.u32 %v4893, 43691
      %v4897 = vmul.u32 %v4893, 43690
      %v4898 = vmul.u32 %v4894, 43691
      %v4899 = vmul.u32 %v4894, 43690
      %v4900 = vshll.u32 %v4897, 16
      %v4901 = vshrl.u32 %v4897, 16
      %v4902 = vshll.u32 %v4898, 16
      %v4903 = vshrl.u32 %v4898, 16
      %vm4904 = vc.u32 %v4896, %v4900
      %v4905 = vsel %vm4904, 1, 0
      %v4906 = vadd.s32 %v4896, %v4900
      %v4907 = vadd.s32 %v4899, %v4905
      %vm4908 = vc.u32 %v4906, %v4902
      %v4909 = vsel %vm4908, 1, 0
      %v4910 = vadd.s32 %v4906, %v4902
      %v4911 = vadd.s32 %v4907, %v4909
      %v4912 = vadd.s32 %v4911, %v4901
      %v4913 = vadd.s32 %v4912, %v4903
      %v4914 = vshrl.u32 %v4913, 4
      %v4915 = vmul.u32 %v4914, 24
      %v4916 = vsub.s32 %v4892, %v4915
      %v4917 = vsub.s32 0, %v4916
      %v4918 = vsel %vm4890, %v4917, %v4916
      %vm4919 = vcmp.lt.s32.totalorder %v4327, 0
      %v4920 = vsub.s32 0, %v4327
      %v4921 = vsel %vm4919, %v4920, %v4327
      %v4922 = vand.u32 %v4921, 65535
      %v4923 = vshrl.u32 %v4921, 16
      %v4925 = vmul.u32 %v4922, 43691
      %v4926 = vmul.u32 %v4922, 43690
      %v4927 = vmul.u32 %v4923, 43691
      %v4928 = vmul.u32 %v4923, 43690
      %v4929 = vshll.u32 %v4926, 16
      %v4930 = vshrl.u32 %v4926, 16
      %v4931 = vshll.u32 %v4927, 16
      %v4932 = vshrl.u32 %v4927, 16
      %vm4933 = vc.u32 %v4925, %v4929
      %v4934 = vsel %vm4933, 1, 0
      %v4935 = vadd.s32 %v4925, %v4929
      %v4936 = vadd.s32 %v4928, %v4934
      %vm4937 = vc.u32 %v4935, %v4931
      %v4938 = vsel %vm4937, 1, 0
      %v4939 = vadd.s32 %v4935, %v4931
      %v4940 = vadd.s32 %v4936, %v4938
      %v4941 = vadd.s32 %v4940, %v4930
      %v4942 = vadd.s32 %v4941, %v4932
      %v4943 = vshrl.u32 %v4942, 4
      %v4944 = vmul.u32 %v4943, 24
      %v4945 = vsub.s32 %v4921, %v4944
      %v4946 = vsub.s32 0, %v4945
      %v4947 = vsel %vm4919, %v4946, %v4945
      %vm4948 = vcmp.lt.s32.totalorder %v4328, 0
      %v4949 = vsub.s32 0, %v4328
      %v4950 = vsel %vm4948, %v4949, %v4328
      %v4951 = vand.u32 %v4950, 65535
      %v4952 = vshrl.u32 %v4950, 16
      %v4954 = vmul.u32 %v4951, 43691
      %v4955 = vmul.u32 %v4951, 43690
      %v4956 = vmul.u32 %v4952, 43691
      %v4957 = vmul.u32 %v4952, 43690
      %v4958 = vshll.u32 %v4955, 16
      %v4959 = vshrl.u32 %v4955, 16
      %v4960 = vshll.u32 %v4956, 16
      %v4961 = vshrl.u32 %v4956, 16
      %vm4962 = vc.u32 %v4954, %v4958
      %v4963 = vsel %vm4962, 1, 0
      %v4964 = vadd.s32 %v4954, %v4958
      %v4965 = vadd.s32 %v4957, %v4963
      %vm4966 = vc.u32 %v4964, %v4960
      %v4967 = vsel %vm4966, 1, 0
      %v4968 = vadd.s32 %v4964, %v4960
      %v4969 = vadd.s32 %v4965, %v4967
      %v4970 = vadd.s32 %v4969, %v4959
      %v4971 = vadd.s32 %v4970, %v4961
      %v4972 = vshrl.u32 %v4971, 4
      %v4973 = vmul.u32 %v4972, 24
      %v4974 = vsub.s32 %v4950, %v4973
      %v4975 = vsub.s32 0, %v4974
      %v4976 = vsel %vm4948, %v4975, %v4974
      %vm4977 = vcmp.lt.s32.totalorder %v4329, 0
      %v4978 = vsub.s32 0, %v4329
      %v4979 = vsel %vm4977, %v4978, %v4329
      %v4980 = vand.u32 %v4979, 65535
      %v4981 = vshrl.u32 %v4979, 16
      %v4983 = vmul.u32 %v4980, 43691
      %v4984 = vmul.u32 %v4980, 43690
      %v4985 = vmul.u32 %v4981, 43691
      %v4986 = vmul.u32 %v4981, 43690
      %v4987 = vshll.u32 %v4984, 16
      %v4988 = vshrl.u32 %v4984, 16
      %v4989 = vshll.u32 %v4985, 16
      %v4990 = vshrl.u32 %v4985, 16
      %vm4991 = vc.u32 %v4983, %v4987
      %v4992 = vsel %vm4991, 1, 0
      %v4993 = vadd.s32 %v4983, %v4987
      %v4994 = vadd.s32 %v4986, %v4992
      %vm4995 = vc.u32 %v4993, %v4989
      %v4996 = vsel %vm4995, 1, 0
      %v4997 = vadd.s32 %v4993, %v4989
      %v4998 = vadd.s32 %v4994, %v4996
      %v4999 = vadd.s32 %v4998, %v4988
      %v5000 = vadd.s32 %v4999, %v4990
      %v5001 = vshrl.u32 %v5000, 4
      %v5002 = vmul.u32 %v5001, 24
      %v5003 = vsub.s32 %v4979, %v5002
      %v5004 = vsub.s32 0, %v5003
      %v5005 = vsel %vm4977, %v5004, %v5003
      %vm5006 = vcmp.lt.s32.totalorder %v4330, 0
      %v5007 = vsub.s32 0, %v4330
      %v5008 = vsel %vm5006, %v5007, %v4330
      %v5009 = vand.u32 %v5008, 65535
      %v5010 = vshrl.u32 %v5008, 16
      %v5012 = vmul.u32 %v5009, 43691
      %v5013 = vmul.u32 %v5009, 43690
      %v5014 = vmul.u32 %v5010, 43691
      %v5015 = vmul.u32 %v5010, 43690
      %v5016 = vshll.u32 %v5013, 16
      %v5017 = vshrl.u32 %v5013, 16
      %v5018 = vshll.u32 %v5014, 16
      %v5019 = vshrl.u32 %v5014, 16
      %vm5020 = vc.u32 %v5012, %v5016
      %v5021 = vsel %vm5020, 1, 0
      %v5022 = vadd.s32 %v5012, %v5016
      %v5023 = vadd.s32 %v5015, %v5021
      %vm5024 = vc.u32 %v5022, %v5018
      %v5025 = vsel %vm5024, 1, 0
      %v5026 = vadd.s32 %v5022, %v5018
      %v5027 = vadd.s32 %v5023, %v5025
      %v5028 = vadd.s32 %v5027, %v5017
      %v5029 = vadd.s32 %v5028, %v5019
      %v5030 = vshrl.u32 %v5029, 4
      %v5031 = vmul.u32 %v5030, 24
      %v5032 = vsub.s32 %v5008, %v5031
      %v5033 = vsub.s32 0, %v5032
      %v5034 = vsel %vm5006, %v5033, %v5032
      %vm5035 = vcmp.lt.s32.totalorder %v4331, 0
      %v5036 = vsub.s32 0, %v4331
      %v5037 = vsel %vm5035, %v5036, %v4331
      %v5038 = vand.u32 %v5037, 65535
      %v5039 = vshrl.u32 %v5037, 16
      %v5041 = vmul.u32 %v5038, 43691
      %v5042 = vmul.u32 %v5038, 43690
      %v5043 = vmul.u32 %v5039, 43691
      %v5044 = vmul.u32 %v5039, 43690
      %v5045 = vshll.u32 %v5042, 16
      %v5046 = vshrl.u32 %v5042, 16
      %v5047 = vshll.u32 %v5043, 16
      %v5048 = vshrl.u32 %v5043, 16
      %vm5049 = vc.u32 %v5041, %v5045
      %v5050 = vsel %vm5049, 1, 0
      %v5051 = vadd.s32 %v5041, %v5045
      %v5052 = vadd.s32 %v5044, %v5050
      %vm5053 = vc.u32 %v5051, %v5047
      %v5054 = vsel %vm5053, 1, 0
      %v5055 = vadd.s32 %v5051, %v5047
      %v5056 = vadd.s32 %v5052, %v5054
      %v5057 = vadd.s32 %v5056, %v5046
      %v5058 = vadd.s32 %v5057, %v5048
      %v5059 = vshrl.u32 %v5058, 4
      %v5060 = vmul.u32 %v5059, 24
      %v5061 = vsub.s32 %v5037, %v5060
      %v5062 = vsub.s32 0, %v5061
      %v5063 = vsel %vm5035, %v5062, %v5061
      %vm5064 = vcmp.lt.s32.totalorder %v4332, 0
      %v5065 = vsub.s32 0, %v4332
      %v5066 = vsel %vm5064, %v5065, %v4332
      %v5067 = vand.u32 %v5066, 65535
      %v5068 = vshrl.u32 %v5066, 16
      %v5070 = vmul.u32 %v5067, 43691
      %v5071 = vmul.u32 %v5067, 43690
      %v5072 = vmul.u32 %v5068, 43691
      %v5073 = vmul.u32 %v5068, 43690
      %v5074 = vshll.u32 %v5071, 16
      %v5075 = vshrl.u32 %v5071, 16
      %v5076 = vshll.u32 %v5072, 16
      %v5077 = vshrl.u32 %v5072, 16
      %vm5078 = vc.u32 %v5070, %v5074
      %v5079 = vsel %vm5078, 1, 0
      %v5080 = vadd.s32 %v5070, %v5074
      %v5081 = vadd.s32 %v5073, %v5079
      %vm5082 = vc.u32 %v5080, %v5076
      %v5083 = vsel %vm5082, 1, 0
      %v5084 = vadd.s32 %v5080, %v5076
      %v5085 = vadd.s32 %v5081, %v5083
      %v5086 = vadd.s32 %v5085, %v5075
      %v5087 = vadd.s32 %v5086, %v5077
      %v5088 = vshrl.u32 %v5087, 4
      %v5089 = vmul.u32 %v5088, 24
      %v5090 = vsub.s32 %v5066, %v5089
      %v5091 = vsub.s32 0, %v5090
      %v5092 = vsel %vm5064, %v5091, %v5090
      %vm5093 = vcmp.lt.s32.totalorder %v4333, 0
      %v5094 = vsub.s32 0, %v4333
      %v5095 = vsel %vm5093, %v5094, %v4333
      %v5096 = vand.u32 %v5095, 65535
      %v5097 = vshrl.u32 %v5095, 16
      %v5099 = vmul.u32 %v5096, 43691
      %v5100 = vmul.u32 %v5096, 43690
      %v5101 = vmul.u32 %v5097, 43691
      %v5102 = vmul.u32 %v5097, 43690
      %v5103 = vshll.u32 %v5100, 16
      %v5104 = vshrl.u32 %v5100, 16
      %v5105 = vshll.u32 %v5101, 16
      %v5106 = vshrl.u32 %v5101, 16
      %vm5107 = vc.u32 %v5099, %v5103
      %v5108 = vsel %vm5107, 1, 0
      %v5109 = vadd.s32 %v5099, %v5103
      %v5110 = vadd.s32 %v5102, %v5108
      %vm5111 = vc.u32 %v5109, %v5105
      %v5112 = vsel %vm5111, 1, 0
      %v5113 = vadd.s32 %v5109, %v5105
      %v5114 = vadd.s32 %v5110, %v5112
      %v5115 = vadd.s32 %v5114, %v5104
      %v5116 = vadd.s32 %v5115, %v5106
      %v5117 = vshrl.u32 %v5116, 4
      %v5118 = vmul.u32 %v5117, 24
      %v5119 = vsub.s32 %v5095, %v5118
      %v5120 = vsub.s32 0, %v5119
      %v5121 = vsel %vm5093, %v5120, %v5119
      %vm5122 = vcmp.lt.s32.totalorder %v4334, 0
      %v5123 = vsub.s32 0, %v4334
      %v5124 = vsel %vm5122, %v5123, %v4334
      %v5125 = vand.u32 %v5124, 65535
      %v5126 = vshrl.u32 %v5124, 16
      %v5128 = vmul.u32 %v5125, 43691
      %v5129 = vmul.u32 %v5125, 43690
      %v5130 = vmul.u32 %v5126, 43691
      %v5131 = vmul.u32 %v5126, 43690
      %v5132 = vshll.u32 %v5129, 16
      %v5133 = vshrl.u32 %v5129, 16
      %v5134 = vshll.u32 %v5130, 16
      %v5135 = vshrl.u32 %v5130, 16
      %vm5136 = vc.u32 %v5128, %v5132
      %v5137 = vsel %vm5136, 1, 0
      %v5138 = vadd.s32 %v5128, %v5132
      %v5139 = vadd.s32 %v5131, %v5137
      %vm5140 = vc.u32 %v5138, %v5134
      %v5141 = vsel %vm5140, 1, 0
      %v5142 = vadd.s32 %v5138, %v5134
      %v5143 = vadd.s32 %v5139, %v5141
      %v5144 = vadd.s32 %v5143, %v5133
      %v5145 = vadd.s32 %v5144, %v5135
      %v5146 = vshrl.u32 %v5145, 4
      %v5147 = vmul.u32 %v5146, 24
      %v5148 = vsub.s32 %v5124, %v5147
      %v5149 = vsub.s32 0, %v5148
      %v5150 = vsel %vm5122, %v5149, %v5148
      %vm5151 = vcmp.lt.s32.totalorder %v4335, 0
      %v5152 = vsub.s32 0, %v4335
      %v5153 = vsel %vm5151, %v5152, %v4335
      %v5154 = vand.u32 %v5153, 65535
      %v5155 = vshrl.u32 %v5153, 16
      %v5157 = vmul.u32 %v5154, 43691
      %v5158 = vmul.u32 %v5154, 43690
      %v5159 = vmul.u32 %v5155, 43691
      %v5160 = vmul.u32 %v5155, 43690
      %v5161 = vshll.u32 %v5158, 16
      %v5162 = vshrl.u32 %v5158, 16
      %v5163 = vshll.u32 %v5159, 16
      %v5164 = vshrl.u32 %v5159, 16
      %vm5165 = vc.u32 %v5157, %v5161
      %v5166 = vsel %vm5165, 1, 0
      %v5167 = vadd.s32 %v5157, %v5161
      %v5168 = vadd.s32 %v5160, %v5166
      %vm5169 = vc.u32 %v5167, %v5163
      %v5170 = vsel %vm5169, 1, 0
      %v5171 = vadd.s32 %v5167, %v5163
      %v5172 = vadd.s32 %v5168, %v5170
      %v5173 = vadd.s32 %v5172, %v5162
      %v5174 = vadd.s32 %v5173, %v5164
      %v5175 = vshrl.u32 %v5174, 4
      %v5176 = vmul.u32 %v5175, 24
      %v5177 = vsub.s32 %v5153, %v5176
      %v5178 = vsub.s32 0, %v5177
      %v5179 = vsel %vm5151, %v5178, %v5177
      %vm5180 = vcmp.lt.s32.totalorder %v4336, 0
      %v5181 = vsub.s32 0, %v4336
      %v5182 = vsel %vm5180, %v5181, %v4336
      %v5183 = vand.u32 %v5182, 65535
      %v5184 = vshrl.u32 %v5182, 16
      %v5186 = vmul.u32 %v5183, 43691
      %v5187 = vmul.u32 %v5183, 43690
      %v5188 = vmul.u32 %v5184, 43691
      %v5189 = vmul.u32 %v5184, 43690
      %v5190 = vshll.u32 %v5187, 16
      %v5191 = vshrl.u32 %v5187, 16
      %v5192 = vshll.u32 %v5188, 16
      %v5193 = vshrl.u32 %v5188, 16
      %vm5194 = vc.u32 %v5186, %v5190
      %v5195 = vsel %vm5194, 1, 0
      %v5196 = vadd.s32 %v5186, %v5190
      %v5197 = vadd.s32 %v5189, %v5195
      %vm5198 = vc.u32 %v5196, %v5192
      %v5199 = vsel %vm5198, 1, 0
      %v5200 = vadd.s32 %v5196, %v5192
      %v5201 = vadd.s32 %v5197, %v5199
      %v5202 = vadd.s32 %v5201, %v5191
      %v5203 = vadd.s32 %v5202, %v5193
      %v5204 = vshrl.u32 %v5203, 4
      %v5205 = vmul.u32 %v5204, 24
      %v5206 = vsub.s32 %v5182, %v5205
      %v5207 = vsub.s32 0, %v5206
      %v5208 = vsel %vm5180, %v5207, %v5206
      %vm5209 = vcmp.lt.s32.totalorder %v4337, 0
      %v5210 = vsub.s32 0, %v4337
      %v5211 = vsel %vm5209, %v5210, %v4337
      %v5212 = vand.u32 %v5211, 65535
      %v5213 = vshrl.u32 %v5211, 16
      %v5215 = vmul.u32 %v5212, 43691
      %v5216 = vmul.u32 %v5212, 43690
      %v5217 = vmul.u32 %v5213, 43691
      %v5218 = vmul.u32 %v5213, 43690
      %v5219 = vshll.u32 %v5216, 16
      %v5220 = vshrl.u32 %v5216, 16
      %v5221 = vshll.u32 %v5217, 16
      %v5222 = vshrl.u32 %v5217, 16
      %vm5223 = vc.u32 %v5215, %v5219
      %v5224 = vsel %vm5223, 1, 0
      %v5225 = vadd.s32 %v5215, %v5219
      %v5226 = vadd.s32 %v5218, %v5224
      %vm5227 = vc.u32 %v5225, %v5221
      %v5228 = vsel %vm5227, 1, 0
      %v5229 = vadd.s32 %v5225, %v5221
      %v5230 = vadd.s32 %v5226, %v5228
      %v5231 = vadd.s32 %v5230, %v5220
      %v5232 = vadd.s32 %v5231, %v5222
      %v5233 = vshrl.u32 %v5232, 4
      %v5234 = vmul.u32 %v5233, 24
      %v5235 = vsub.s32 %v5211, %v5234
      %v5236 = vsub.s32 0, %v5235
      %v5237 = vsel %vm5209, %v5236, %v5235
      %vm5238 = vcmp.lt.s32.totalorder %v4338, 0
      %v5239 = vsub.s32 0, %v4338
      %v5240 = vsel %vm5238, %v5239, %v4338
      %v5241 = vand.u32 %v5240, 65535
      %v5242 = vshrl.u32 %v5240, 16
      %v5244 = vmul.u32 %v5241, 43691
      %v5245 = vmul.u32 %v5241, 43690
      %v5246 = vmul.u32 %v5242, 43691
      %v5247 = vmul.u32 %v5242, 43690
      %v5248 = vshll.u32 %v5245, 16
      %v5249 = vshrl.u32 %v5245, 16
      %v5250 = vshll.u32 %v5246, 16
      %v5251 = vshrl.u32 %v5246, 16
      %vm5252 = vc.u32 %v5244, %v5248
      %v5253 = vsel %vm5252, 1, 0
      %v5254 = vadd.s32 %v5244, %v5248
      %v5255 = vadd.s32 %v5247, %v5253
      %vm5256 = vc.u32 %v5254, %v5250
      %v5257 = vsel %vm5256, 1, 0
      %v5258 = vadd.s32 %v5254, %v5250
      %v5259 = vadd.s32 %v5255, %v5257
      %v5260 = vadd.s32 %v5259, %v5249
      %v5261 = vadd.s32 %v5260, %v5251
      %v5262 = vshrl.u32 %v5261, 4
      %v5263 = vmul.u32 %v5262, 24
      %v5264 = vsub.s32 %v5240, %v5263
      %v5265 = vsub.s32 0, %v5264
      %v5266 = vsel %vm5238, %v5265, %v5264
      %vm5267 = vcmp.ne.s32.totalorder %v4367, 0
      %vm5268 = vcmp.ne.s32.totalorder %v4396, 0
      %vm5269 = vcmp.ne.s32.totalorder %v4425, 0
      %vm5270 = vcmp.ne.s32.totalorder %v4454, 0
      %vm5271 = vcmp.ne.s32.totalorder %v4483, 0
      %vm5272 = vcmp.ne.s32.totalorder %v4512, 0
      %vm5273 = vcmp.ne.s32.totalorder %v4541, 0
      %vm5274 = vcmp.ne.s32.totalorder %v4570, 0
      %vm5275 = vcmp.ne.s32.totalorder %v4599, 0
      %vm5276 = vcmp.ne.s32.totalorder %v4628, 0
      %vm5277 = vcmp.ne.s32.totalorder %v4657, 0
      %vm5278 = vcmp.ne.s32.totalorder %v4686, 0
      %vm5279 = vcmp.ne.s32.totalorder %v4715, 0
      %vm5280 = vcmp.ne.s32.totalorder %v4744, 0
      %vm5281 = vcmp.ne.s32.totalorder %v4773, 0
      %vm5282 = vcmp.ne.s32.totalorder %v4802, 0
      %vm5283 = vcmp.ne.s32.totalorder %v4831, 0
      %vm5284 = vcmp.ne.s32.totalorder %v4860, 0
      %vm5285 = vcmp.ne.s32.totalorder %v4889, 0
      %vm5286 = vcmp.ne.s32.totalorder %v4918, 0
      %vm5287 = vcmp.ne.s32.totalorder %v4947, 0
      %vm5288 = vcmp.ne.s32.totalorder %v4976, 0
      %vm5289 = vcmp.ne.s32.totalorder %v5005, 0
      %vm5290 = vcmp.ne.s32.totalorder %v5034, 0
      %vm5291 = vcmp.ne.s32.totalorder %v5063, 0
      %vm5292 = vcmp.ne.s32.totalorder %v5092, 0
      %vm5293 = vcmp.ne.s32.totalorder %v5121, 0
      %vm5294 = vcmp.ne.s32.totalorder %v5150, 0
      %vm5295 = vcmp.ne.s32.totalorder %v5179, 0
      %vm5296 = vcmp.ne.s32.totalorder %v5208, 0
      %vm5297 = vcmp.ne.s32.totalorder %v5237, 0
      %vm5298 = vcmp.ne.s32.totalorder %v5266, 0
      %vm5299 = vcmp.lt.s32.totalorder %v4367, 0
      %vm5300 = vcmp.lt.s32.totalorder %v4396, 0
      %vm5301 = vcmp.lt.s32.totalorder %v4425, 0
      %vm5302 = vcmp.lt.s32.totalorder %v4454, 0
      %vm5303 = vcmp.lt.s32.totalorder %v4483, 0
      %vm5304 = vcmp.lt.s32.totalorder %v4512, 0
      %vm5305 = vcmp.lt.s32.totalorder %v4541, 0
      %vm5306 = vcmp.lt.s32.totalorder %v4570, 0
      %vm5307 = vcmp.lt.s32.totalorder %v4599, 0
      %vm5308 = vcmp.lt.s32.totalorder %v4628, 0
      %vm5309 = vcmp.lt.s32.totalorder %v4657, 0
      %vm5310 = vcmp.lt.s32.totalorder %v4686, 0
      %vm5311 = vcmp.lt.s32.totalorder %v4715, 0
      %vm5312 = vcmp.lt.s32.totalorder %v4744, 0
      %vm5313 = vcmp.lt.s32.totalorder %v4773, 0
      %vm5314 = vcmp.lt.s32.totalorder %v4802, 0
      %vm5315 = vcmp.lt.s32.totalorder %v4831, 0
      %vm5316 = vcmp.lt.s32.totalorder %v4860, 0
      %vm5317 = vcmp.lt.s32.totalorder %v4889, 0
      %vm5318 = vcmp.lt.s32.totalorder %v4918, 0
      %vm5319 = vcmp.lt.s32.totalorder %v4947, 0
      %vm5320 = vcmp.lt.s32.totalorder %v4976, 0
      %vm5321 = vcmp.lt.s32.totalorder %v5005, 0
      %vm5322 = vcmp.lt.s32.totalorder %v5034, 0
      %vm5323 = vcmp.lt.s32.totalorder %v5063, 0
      %vm5324 = vcmp.lt.s32.totalorder %v5092, 0
      %vm5325 = vcmp.lt.s32.totalorder %v5121, 0
      %vm5326 = vcmp.lt.s32.totalorder %v5150, 0
      %vm5327 = vcmp.lt.s32.totalorder %v5179, 0
      %vm5328 = vcmp.lt.s32.totalorder %v5208, 0
      %vm5329 = vcmp.lt.s32.totalorder %v5237, 0
      %vm5330 = vcmp.lt.s32.totalorder %v5266, 0
      %vm5331 = vmand %vm5299, %vm5267
      %vm5332 = vmand %vm5300, %vm5268
      %vm5333 = vmand %vm5301, %vm5269
      %vm5334 = vmand %vm5302, %vm5270
      %vm5335 = vmand %vm5303, %vm5271
      %vm5336 = vmand %vm5304, %vm5272
      %vm5337 = vmand %vm5305, %vm5273
      %vm5338 = vmand %vm5306, %vm5274
      %vm5339 = vmand %vm5307, %vm5275
      %vm5340 = vmand %vm5308, %vm5276
      %vm5341 = vmand %vm5309, %vm5277
      %vm5342 = vmand %vm5310, %vm5278
      %vm5343 = vmand %vm5311, %vm5279
      %vm5344 = vmand %vm5312, %vm5280
      %vm5345 = vmand %vm5313, %vm5281
      %vm5346 = vmand %vm5314, %vm5282
      %vm5347 = vmand %vm5315, %vm5283
      %vm5348 = vmand %vm5316, %vm5284
      %vm5349 = vmand %vm5317, %vm5285
      %vm5350 = vmand %vm5318, %vm5286
      %vm5351 = vmand %vm5319, %vm5287
      %vm5352 = vmand %vm5320, %vm5288
      %vm5353 = vmand %vm5321, %vm5289
      %vm5354 = vmand %vm5322, %vm5290
      %vm5355 = vmand %vm5323, %vm5291
      %vm5356 = vmand %vm5324, %vm5292
      %vm5357 = vmand %vm5325, %vm5293
      %vm5358 = vmand %vm5326, %vm5294
      %vm5359 = vmand %vm5327, %vm5295
      %vm5360 = vmand %vm5328, %vm5296
      %vm5361 = vmand %vm5329, %vm5297
      %vm5362 = vmand %vm5330, %vm5298
      %v5363 = vadd.s32 %v4367, 24
      %v5364 = vadd.s32 %v4396, 24
      %v5365 = vadd.s32 %v4425, 24
      %v5366 = vadd.s32 %v4454, 24
      %v5367 = vadd.s32 %v4483, 24
      %v5368 = vadd.s32 %v4512, 24
      %v5369 = vadd.s32 %v4541, 24
      %v5370 = vadd.s32 %v4570, 24
      %v5371 = vadd.s32 %v4599, 24
      %v5372 = vadd.s32 %v4628, 24
      %v5373 = vadd.s32 %v4657, 24
      %v5374 = vadd.s32 %v4686, 24
      %v5375 = vadd.s32 %v4715, 24
      %v5376 = vadd.s32 %v4744, 24
      %v5377 = vadd.s32 %v4773, 24
      %v5378 = vadd.s32 %v4802, 24
      %v5379 = vadd.s32 %v4831, 24
      %v5380 = vadd.s32 %v4860, 24
      %v5381 = vadd.s32 %v4889, 24
      %v5382 = vadd.s32 %v4918, 24
      %v5383 = vadd.s32 %v4947, 24
      %v5384 = vadd.s32 %v4976, 24
      %v5385 = vadd.s32 %v5005, 24
      %v5386 = vadd.s32 %v5034, 24
      %v5387 = vadd.s32 %v5063, 24
      %v5388 = vadd.s32 %v5092, 24
      %v5389 = vadd.s32 %v5121, 24
      %v5390 = vadd.s32 %v5150, 24
      %v5391 = vadd.s32 %v5179, 24
      %v5392 = vadd.s32 %v5208, 24
      %v5393 = vadd.s32 %v5237, 24
      %v5394 = vadd.s32 %v5266, 24
      %v5395 = vsel %vm5331, %v5363, %v4367
      %v5396 = vsel %vm5332, %v5364, %v4396
      %v5397 = vsel %vm5333, %v5365, %v4425
      %v5398 = vsel %vm5334, %v5366, %v4454
      %v5399 = vsel %vm5335, %v5367, %v4483
      %v5400 = vsel %vm5336, %v5368, %v4512
      %v5401 = vsel %vm5337, %v5369, %v4541
      %v5402 = vsel %vm5338, %v5370, %v4570
      %v5403 = vsel %vm5339, %v5371, %v4599
      %v5404 = vsel %vm5340, %v5372, %v4628
      %v5405 = vsel %vm5341, %v5373, %v4657
      %v5406 = vsel %vm5342, %v5374, %v4686
      %v5407 = vsel %vm5343, %v5375, %v4715
      %v5408 = vsel %vm5344, %v5376, %v4744
      %v5409 = vsel %vm5345, %v5377, %v4773
      %v5410 = vsel %vm5346, %v5378, %v4802
      %v5411 = vsel %vm5347, %v5379, %v4831
      %v5412 = vsel %vm5348, %v5380, %v4860
      %v5413 = vsel %vm5349, %v5381, %v4889
      %v5414 = vsel %vm5350, %v5382, %v4918
      %v5415 = vsel %vm5351, %v5383, %v4947
      %v5416 = vsel %vm5352, %v5384, %v4976
      %v5417 = vsel %vm5353, %v5385, %v5005
      %v5418 = vsel %vm5354, %v5386, %v5034
      %v5419 = vsel %vm5355, %v5387, %v5063
      %v5420 = vsel %vm5356, %v5388, %v5092
      %v5421 = vsel %vm5357, %v5389, %v5121
      %v5422 = vsel %vm5358, %v5390, %v5150
      %v5423 = vsel %vm5359, %v5391, %v5179
      %v5424 = vsel %vm5360, %v5392, %v5208
      %v5425 = vsel %vm5361, %v5393, %v5237
      %v5426 = vsel %vm5362, %v5394, %v5266
      %vm5427 = vcmp.lt.s32.totalorder %v5395, 16
      %vm5428 = vcmp.lt.s32.totalorder %v5396, 16
      %vm5429 = vcmp.lt.s32.totalorder %v5397, 16
      %vm5430 = vcmp.lt.s32.totalorder %v5398, 16
      %vm5431 = vcmp.lt.s32.totalorder %v5399, 16
      %vm5432 = vcmp.lt.s32.totalorder %v5400, 16
      %vm5433 = vcmp.lt.s32.totalorder %v5401, 16
      %vm5434 = vcmp.lt.s32.totalorder %v5402, 16
      %vm5435 = vcmp.lt.s32.totalorder %v5403, 16
      %vm5436 = vcmp.lt.s32.totalorder %v5404, 16
      %vm5437 = vcmp.lt.s32.totalorder %v5405, 16
      %vm5438 = vcmp.lt.s32.totalorder %v5406, 16
      %vm5439 = vcmp.lt.s32.totalorder %v5407, 16
      %vm5440 = vcmp.lt.s32.totalorder %v5408, 16
      %vm5441 = vcmp.lt.s32.totalorder %v5409, 16
      %vm5442 = vcmp.lt.s32.totalorder %v5410, 16
      %vm5443 = vcmp.lt.s32.totalorder %v5411, 16
      %vm5444 = vcmp.lt.s32.totalorder %v5412, 16
      %vm5445 = vcmp.lt.s32.totalorder %v5413, 16
      %vm5446 = vcmp.lt.s32.totalorder %v5414, 16
      %vm5447 = vcmp.lt.s32.totalorder %v5415, 16
      %vm5448 = vcmp.lt.s32.totalorder %v5416, 16
      %vm5449 = vcmp.lt.s32.totalorder %v5417, 16
      %vm5450 = vcmp.lt.s32.totalorder %v5418, 16
      %vm5451 = vcmp.lt.s32.totalorder %v5419, 16
      %vm5452 = vcmp.lt.s32.totalorder %v5420, 16
      %vm5453 = vcmp.lt.s32.totalorder %v5421, 16
      %vm5454 = vcmp.lt.s32.totalorder %v5422, 16
      %vm5455 = vcmp.lt.s32.totalorder %v5423, 16
      %vm5456 = vcmp.lt.s32.totalorder %v5424, 16
      %vm5457 = vcmp.lt.s32.totalorder %v5425, 16
      %vm5458 = vcmp.lt.s32.totalorder %v5426, 16
      %v5459 = vsel %vm5427, 1, 0
      %v5460 = vsel %vm5428, 1, 0
      %v5461 = vsel %vm5429, 1, 0
      %v5462 = vsel %vm5430, 1, 0
      %v5463 = vsel %vm5431, 1, 0
      %v5464 = vsel %vm5432, 1, 0
      %v5465 = vsel %vm5433, 1, 0
      %v5466 = vsel %vm5434, 1, 0
      %v5467 = vsel %vm5435, 1, 0
      %v5468 = vsel %vm5436, 1, 0
      %v5469 = vsel %vm5437, 1, 0
      %v5470 = vsel %vm5438, 1, 0
      %v5471 = vsel %vm5439, 1, 0
      %v5472 = vsel %vm5440, 1, 0
      %v5473 = vsel %vm5441, 1, 0
      %v5474 = vsel %vm5442, 1, 0
      %v5475 = vsel %vm5443, 1, 0
      %v5476 = vsel %vm5444, 1, 0
      %v5477 = vsel %vm5445, 1, 0
      %v5478 = vsel %vm5446, 1, 0
      %v5479 = vsel %vm5447, 1, 0
      %v5480 = vsel %vm5448, 1, 0
      %v5481 = vsel %vm5449, 1, 0
      %v5482 = vsel %vm5450, 1, 0
      %v5483 = vsel %vm5451, 1, 0
      %v5484 = vsel %vm5452, 1, 0
      %v5485 = vsel %vm5453, 1, 0
      %v5486 = vsel %vm5454, 1, 0
      %v5487 = vsel %vm5455, 1, 0
      %v5488 = vsel %vm5456, 1, 0
      %v5489 = vsel %vm5457, 1, 0
      %v5490 = vsel %vm5458, 1, 0
      %v5491 = vcvt.s32.f32 %v5459
      %v5492 = vcvt.s32.f32 %v5460
      %v5493 = vcvt.s32.f32 %v5461
      %v5494 = vcvt.s32.f32 %v5462
      %v5495 = vcvt.s32.f32 %v5463
      %v5496 = vcvt.s32.f32 %v5464
      %v5497 = vcvt.s32.f32 %v5465
      %v5498 = vcvt.s32.f32 %v5466
      %v5499 = vcvt.s32.f32 %v5467
      %v5500 = vcvt.s32.f32 %v5468
      %v5501 = vcvt.s32.f32 %v5469
      %v5502 = vcvt.s32.f32 %v5470
      %v5503 = vcvt.s32.f32 %v5471
      %v5504 = vcvt.s32.f32 %v5472
      %v5505 = vcvt.s32.f32 %v5473
      %v5506 = vcvt.s32.f32 %v5474
      %v5507 = vcvt.s32.f32 %v5475
      %v5508 = vcvt.s32.f32 %v5476
      %v5509 = vcvt.s32.f32 %v5477
      %v5510 = vcvt.s32.f32 %v5478
      %v5511 = vcvt.s32.f32 %v5479
      %v5512 = vcvt.s32.f32 %v5480
      %v5513 = vcvt.s32.f32 %v5481
      %v5514 = vcvt.s32.f32 %v5482
      %v5515 = vcvt.s32.f32 %v5483
      %v5516 = vcvt.s32.f32 %v5484
      %v5517 = vcvt.s32.f32 %v5485
      %v5518 = vcvt.s32.f32 %v5486
      %v5519 = vcvt.s32.f32 %v5487
      %v5520 = vcvt.s32.f32 %v5488
      %v5521 = vcvt.s32.f32 %v5489
      %v5522 = vcvt.s32.f32 %v5490
      %v5523 = vmul.f32 %v4274, %v5491
      %v5524 = vmul.f32 %v4275, %v5492
      %v5525 = vmul.f32 %v4276, %v5493
      %v5526 = vmul.f32 %v4277, %v5494
      %v5527 = vmul.f32 %v4278, %v5495
      %v5528 = vmul.f32 %v4279, %v5496
      %v5529 = vmul.f32 %v4280, %v5497
      %v5530 = vmul.f32 %v4281, %v5498
      %v5531 = vmul.f32 %v4282, %v5499
      %v5532 = vmul.f32 %v4283, %v5500
      %v5533 = vmul.f32 %v4284, %v5501
      %v5534 = vmul.f32 %v4285, %v5502
      %v5535 = vmul.f32 %v4286, %v5503
      %v5536 = vmul.f32 %v4287, %v5504
      %v5537 = vmul.f32 %v4288, %v5505
      %v5538 = vmul.f32 %v4289, %v5506
      %v5539 = vmul.f32 %v4290, %v5507
      %v5540 = vmul.f32 %v4291, %v5508
      %v5541 = vmul.f32 %v4292, %v5509
      %v5542 = vmul.f32 %v4293, %v5510
      %v5543 = vmul.f32 %v4294, %v5511
      %v5544 = vmul.f32 %v4295, %v5512
      %v5545 = vmul.f32 %v4296, %v5513
      %v5546 = vmul.f32 %v4297, %v5514
      %v5547 = vmul.f32 %v4298, %v5515
      %v5548 = vmul.f32 %v4299, %v5516
      %v5549 = vmul.f32 %v4300, %v5517
      %v5550 = vmul.f32 %v4301, %v5518
      %v5551 = vmul.f32 %v4302, %v5519
      %v5552 = vmul.f32 %v4303, %v5520
      %v5553 = vmul.f32 %v4304, %v5521
      %v5554 = vmul.f32 %v4305, %v5522
      %v5555 = vpack.c.bf16 %v5523, %v5523
      %v5556 = vpack.c.bf16 %v5524, %v5524
      %v5557 = vpack.c.bf16 %v5525, %v5525
      %v5558 = vpack.c.bf16 %v5526, %v5526
      %v5559 = vpack.c.bf16 %v5527, %v5527
      %v5560 = vpack.c.bf16 %v5528, %v5528
      %v5561 = vpack.c.bf16 %v5529, %v5529
      %v5562 = vpack.c.bf16 %v5530, %v5530
      %v5563 = vpack.c.bf16 %v5531, %v5531
      %v5564 = vpack.c.bf16 %v5532, %v5532
      %v5565 = vpack.c.bf16 %v5533, %v5533
      %v5566 = vpack.c.bf16 %v5534, %v5534
      %v5567 = vpack.c.bf16 %v5535, %v5535
      %v5568 = vpack.c.bf16 %v5536, %v5536
      %v5569 = vpack.c.bf16 %v5537, %v5537
      %v5570 = vpack.c.bf16 %v5538, %v5538
      %v5571 = vpack.c.bf16 %v5539, %v5539
      %v5572 = vpack.c.bf16 %v5540, %v5540
      %v5573 = vpack.c.bf16 %v5541, %v5541
      %v5574 = vpack.c.bf16 %v5542, %v5542
      %v5575 = vpack.c.bf16 %v5543, %v5543
      %v5576 = vpack.c.bf16 %v5544, %v5544
      %v5577 = vpack.c.bf16 %v5545, %v5545
      %v5578 = vpack.c.bf16 %v5546, %v5546
      %v5579 = vpack.c.bf16 %v5547, %v5547
      %v5580 = vpack.c.bf16 %v5548, %v5548
      %v5581 = vpack.c.bf16 %v5549, %v5549
      %v5582 = vpack.c.bf16 %v5550, %v5550
      %v5583 = vpack.c.bf16 %v5551, %v5551
      %v5584 = vpack.c.bf16 %v5552, %v5552
      %v5585 = vpack.c.bf16 %v5553, %v5553
      %v5586 = vpack.c.bf16 %v5554, %v5554
      %v5588 = vshrl.u32 %v5555, 16
      %v5590 = vrot.slane %v5588, 7
      %v5591 = vshll.u32 %v5555, 16
      %v5593 = vor.u32 %v5590, %v5591
      %v5594 = vrot.slane %v5590, 4
      %v5596 = vshrl.u32 %v5556, 16
      %v5598 = vrot.slane %v5596, 7
      %v5599 = vshll.u32 %v5556, 16
      %v5601 = vor.u32 %v5598, %v5599
      %v5602 = vsel %vm395, %v5594, %v5601
      %v5603 = vrot.slane %v5598, 4
      %v5605 = vshrl.u32 %v5557, 16
      %v5607 = vrot.slane %v5605, 7
      %v5608 = vshll.u32 %v5557, 16
      %v5610 = vor.u32 %v5607, %v5608
      %v5611 = vsel %vm395, %v5603, %v5610
      %v5612 = vrot.slane %v5607, 4
      %v5614 = vshrl.u32 %v5558, 16
      %v5616 = vrot.slane %v5614, 7
      %v5617 = vshll.u32 %v5558, 16
      %v5619 = vor.u32 %v5616, %v5617
      %v5620 = vsel %vm395, %v5612, %v5619
      %v5621 = vrot.slane %v5616, 4
      %v5623 = vshrl.u32 %v5559, 16
      %v5625 = vrot.slane %v5623, 7
      %v5626 = vshll.u32 %v5559, 16
      %v5628 = vor.u32 %v5625, %v5626
      %v5629 = vsel %vm395, %v5621, %v5628
      %v5630 = vrot.slane %v5625, 4
      %v5632 = vshrl.u32 %v5560, 16
      %v5634 = vrot.slane %v5632, 7
      %v5635 = vshll.u32 %v5560, 16
      %v5637 = vor.u32 %v5634, %v5635
      %v5638 = vsel %vm395, %v5630, %v5637
      %v5639 = vrot.slane %v5634, 4
      %v5641 = vshrl.u32 %v5561, 16
      %v5643 = vrot.slane %v5641, 7
      %v5644 = vshll.u32 %v5561, 16
      %v5646 = vor.u32 %v5643, %v5644
      %v5647 = vsel %vm395, %v5639, %v5646
      %v5648 = vrot.slane %v5643, 4
      %v5650 = vshrl.u32 %v5562, 16
      %v5652 = vrot.slane %v5650, 7
      %v5653 = vshll.u32 %v5562, 16
      %v5655 = vor.u32 %v5652, %v5653
      %v5656 = vsel %vm395, %v5648, %v5655
      %v5657 = vrot.slane %v5652, 4
      %v5659 = vshrl.u32 %v5563, 16
      %v5661 = vrot.slane %v5659, 7
      %v5662 = vshll.u32 %v5563, 16
      %v5664 = vor.u32 %v5661, %v5662
      %v5665 = vsel %vm395, %v5657, %v5664
      %v5666 = vrot.slane %v5661, 4
      %v5668 = vshrl.u32 %v5564, 16
      %v5670 = vrot.slane %v5668, 7
      %v5671 = vshll.u32 %v5564, 16
      %v5673 = vor.u32 %v5670, %v5671
      %v5674 = vsel %vm395, %v5666, %v5673
      %v5675 = vrot.slane %v5670, 4
      %v5677 = vshrl.u32 %v5565, 16
      %v5679 = vrot.slane %v5677, 7
      %v5680 = vshll.u32 %v5565, 16
      %v5682 = vor.u32 %v5679, %v5680
      %v5683 = vsel %vm395, %v5675, %v5682
      %v5684 = vrot.slane %v5679, 4
      %v5686 = vshrl.u32 %v5566, 16
      %v5688 = vrot.slane %v5686, 7
      %v5689 = vshll.u32 %v5566, 16
      %v5691 = vor.u32 %v5688, %v5689
      %v5692 = vsel %vm395, %v5684, %v5691
      %v5693 = vrot.slane %v5688, 4
      %v5695 = vshrl.u32 %v5567, 16
      %v5697 = vrot.slane %v5695, 7
      %v5698 = vshll.u32 %v5567, 16
      %v5700 = vor.u32 %v5697, %v5698
      %v5701 = vsel %vm395, %v5693, %v5700
      %v5702 = vrot.slane %v5697, 4
      %v5704 = vshrl.u32 %v5568, 16
      %v5706 = vrot.slane %v5704, 7
      %v5707 = vshll.u32 %v5568, 16
      %v5709 = vor.u32 %v5706, %v5707
      %v5710 = vsel %vm395, %v5702, %v5709
      %v5711 = vrot.slane %v5706, 4
      %v5713 = vshrl.u32 %v5569, 16
      %v5715 = vrot.slane %v5713, 7
      %v5716 = vshll.u32 %v5569, 16
      %v5718 = vor.u32 %v5715, %v5716
      %v5719 = vsel %vm395, %v5711, %v5718
      %v5720 = vrot.slane %v5715, 4
      %v5722 = vshrl.u32 %v5570, 16
      %v5724 = vrot.slane %v5722, 7
      %v5725 = vshll.u32 %v5570, 16
      %v5727 = vor.u32 %v5724, %v5725
      %v5728 = vsel %vm395, %v5720, %v5727
      %v5729 = vrot.slane %v5724, 4
      %v5731 = vshrl.u32 %v5571, 16
      %v5733 = vrot.slane %v5731, 7
      %v5734 = vshll.u32 %v5571, 16
      %v5736 = vor.u32 %v5733, %v5734
      %v5737 = vsel %vm395, %v5729, %v5736
      %v5738 = vrot.slane %v5733, 4
      %v5740 = vshrl.u32 %v5572, 16
      %v5742 = vrot.slane %v5740, 7
      %v5743 = vshll.u32 %v5572, 16
      %v5745 = vor.u32 %v5742, %v5743
      %v5746 = vsel %vm395, %v5738, %v5745
      %v5747 = vrot.slane %v5742, 4
      %v5749 = vshrl.u32 %v5573, 16
      %v5751 = vrot.slane %v5749, 7
      %v5752 = vshll.u32 %v5573, 16
      %v5754 = vor.u32 %v5751, %v5752
      %v5755 = vsel %vm395, %v5747, %v5754
      %v5756 = vrot.slane %v5751, 4
      %v5758 = vshrl.u32 %v5574, 16
      %v5760 = vrot.slane %v5758, 7
      %v5761 = vshll.u32 %v5574, 16
      %v5763 = vor.u32 %v5760, %v5761
      %v5764 = vsel %vm395, %v5756, %v5763
      %v5765 = vrot.slane %v5760, 4
      %v5767 = vshrl.u32 %v5575, 16
      %v5769 = vrot.slane %v5767, 7
      %v5770 = vshll.u32 %v5575, 16
      %v5772 = vor.u32 %v5769, %v5770
      %v5773 = vsel %vm395, %v5765, %v5772
      %v5774 = vrot.slane %v5769, 4
      %v5776 = vshrl.u32 %v5576, 16
      %v5778 = vrot.slane %v5776, 7
      %v5779 = vshll.u32 %v5576, 16
      %v5781 = vor.u32 %v5778, %v5779
      %v5782 = vsel %vm395, %v5774, %v5781
      %v5783 = vrot.slane %v5778, 4
      %v5785 = vshrl.u32 %v5577, 16
      %v5787 = vrot.slane %v5785, 7
      %v5788 = vshll.u32 %v5577, 16
      %v5790 = vor.u32 %v5787, %v5788
      %v5791 = vsel %vm395, %v5783, %v5790
      %v5792 = vrot.slane %v5787, 4
      %v5794 = vshrl.u32 %v5578, 16
      %v5796 = vrot.slane %v5794, 7
      %v5797 = vshll.u32 %v5578, 16
      %v5799 = vor.u32 %v5796, %v5797
      %v5800 = vsel %vm395, %v5792, %v5799
      %v5801 = vrot.slane %v5796, 4
      %v5803 = vshrl.u32 %v5579, 16
      %v5805 = vrot.slane %v5803, 7
      %v5806 = vshll.u32 %v5579, 16
      %v5808 = vor.u32 %v5805, %v5806
      %v5809 = vsel %vm395, %v5801, %v5808
      %v5810 = vrot.slane %v5805, 4
      %v5812 = vshrl.u32 %v5580, 16
      %v5814 = vrot.slane %v5812, 7
      %v5815 = vshll.u32 %v5580, 16
      %v5817 = vor.u32 %v5814, %v5815
      %v5818 = vsel %vm395, %v5810, %v5817
      %v5819 = vrot.slane %v5814, 4
      %v5821 = vshrl.u32 %v5581, 16
      %v5823 = vrot.slane %v5821, 7
      %v5824 = vshll.u32 %v5581, 16
      %v5826 = vor.u32 %v5823, %v5824
      %v5827 = vsel %vm395, %v5819, %v5826
      %v5828 = vrot.slane %v5823, 4
      %v5830 = vshrl.u32 %v5582, 16
      %v5832 = vrot.slane %v5830, 7
      %v5833 = vshll.u32 %v5582, 16
      %v5835 = vor.u32 %v5832, %v5833
      %v5836 = vsel %vm395, %v5828, %v5835
      %v5837 = vrot.slane %v5832, 4
      %v5839 = vshrl.u32 %v5583, 16
      %v5841 = vrot.slane %v5839, 7
      %v5842 = vshll.u32 %v5583, 16
      %v5844 = vor.u32 %v5841, %v5842
      %v5845 = vsel %vm395, %v5837, %v5844
      %v5846 = vrot.slane %v5841, 4
      %v5848 = vshrl.u32 %v5584, 16
      %v5850 = vrot.slane %v5848, 7
      %v5851 = vshll.u32 %v5584, 16
      %v5853 = vor.u32 %v5850, %v5851
      %v5854 = vsel %vm395, %v5846, %v5853
      %v5855 = vrot.slane %v5850, 4
      %v5857 = vshrl.u32 %v5585, 16
      %v5859 = vrot.slane %v5857, 7
      %v5860 = vshll.u32 %v5585, 16
      %v5862 = vor.u32 %v5859, %v5860
      %v5863 = vsel %vm395, %v5855, %v5862
      %v5864 = vrot.slane %v5859, 4
      %v5866 = vshrl.u32 %v5586, 16
      %v5868 = vrot.slane %v5866, 7
      %v5869 = vshll.u32 %v5586, 16
      %v5871 = vor.u32 %v5868, %v5869
      %v5872 = vsel %vm395, %v5864, %v5871
      %v5873 = vrot.slane %v5868, 4
      %v5907 = vld [vmem:[#allocation3 + $0xc] sm:$0xf]
      %v5908 = vsel %vm1627, %v5593, %v5907
      %5909 = vst [vmem:[#allocation3 + $0xc] sm:$0xf] %v5908
      %5910 = vst [vmem:[#allocation3 + $0x10] sm:$0xf] %v5602
      %5911 = vst [vmem:[#allocation3 + $0x14] sm:$0xf] %v5611
      %5912 = vst [vmem:[#allocation3 + $0x18] sm:$0xf] %v5620
      %5913 = vst [vmem:[#allocation3 + $0x1c] sm:$0xf] %v5629
      %5914 = vst [vmem:[#allocation3 + $0x20] sm:$0xf] %v5638
      %5915 = vst [vmem:[#allocation3 + $0x24] sm:$0xf] %v5647
      %5916 = vst [vmem:[#allocation3 + $0x28] sm:$0xf] %v5656
      %5917 = vst [vmem:[#allocation3 + $0x2c] sm:$0xf] %v5665
      %5918 = vst [vmem:[#allocation3 + $0x30] sm:$0xf] %v5674
      %5919 = vst [vmem:[#allocation3 + $0x34] sm:$0xf] %v5683
      %5920 = vst [vmem:[#allocation3 + $0x38] sm:$0xf] %v5692
      %5921 = vst [vmem:[#allocation3 + $0x3c] sm:$0xf] %v5701
      %5922 = vst [vmem:[#allocation3 + $0x40] sm:$0xf] %v5710
      %5923 = vst [vmem:[#allocation3 + $0x44] sm:$0xf] %v5719
      %5924 = vst [vmem:[#allocation3 + $0x48] sm:$0xf] %v5728
      %5925 = vst [vmem:[#allocation3 + $0x4c] sm:$0xf] %v5737
      %5926 = vst [vmem:[#allocation3 + $0x50] sm:$0xf] %v5746
      %5927 = vst [vmem:[#allocation3 + $0x54] sm:$0xf] %v5755
      %5928 = vst [vmem:[#allocation3 + $0x58] sm:$0xf] %v5764
      %5929 = vst [vmem:[#allocation3 + $0x5c] sm:$0xf] %v5773
      %5930 = vst [vmem:[#allocation3 + $0x60] sm:$0xf] %v5782
      %5931 = vst [vmem:[#allocation3 + $0x64] sm:$0xf] %v5791
      %5932 = vst [vmem:[#allocation3 + $0x68] sm:$0xf] %v5800
      %5933 = vst [vmem:[#allocation3 + $0x6c] sm:$0xf] %v5809
      %5934 = vst [vmem:[#allocation3 + $0x70] sm:$0xf] %v5818
      %5935 = vst [vmem:[#allocation3 + $0x74] sm:$0xf] %v5827
      %5936 = vst [vmem:[#allocation3 + $0x78] sm:$0xf] %v5836
      %5937 = vst [vmem:[#allocation3 + $0x7c] sm:$0xf] %v5845
      %5938 = vst [vmem:[#allocation3 + $0x80] sm:$0xf] %v5854
      %5939 = vst [vmem:[#allocation3 + $0x84] sm:$0xf] %v5863
      %5940 = vst [vmem:[#allocation3 + $0x88] sm:$0xf] %v5872
      %v5941 = vld [vmem:[#allocation3 + $0x8c] sm:$0x1]
      %v5942 = vsel %vm1622, %v5873, %v5941
      %5943 = vst [vmem:[#allocation3 + $0x8c] sm:$0x1] %v5942
      %v5944 = vld [vmem:[#allocation2 + $0x80] sm:$0xf]
      %v5945 = vld [vmem:[#allocation2 + $0x84] sm:$0xf]
      %v5946 = vld [vmem:[#allocation2 + $0x88] sm:$0xf]
      %v5947 = vld [vmem:[#allocation2 + $0x8c] sm:$0xf]
      %v5948 = vld [vmem:[#allocation2 + $0x90] sm:$0xf]
      %v5949 = vld [vmem:[#allocation2 + $0x94] sm:$0xf]
      %v5950 = vld [vmem:[#allocation2 + $0x98] sm:$0xf]
      %v5951 = vld [vmem:[#allocation2 + $0x9c] sm:$0xf]
      %v5952 = vld [vmem:[#allocation2 + $0xa0] sm:$0xf]
      %v5953 = vld [vmem:[#allocation2 + $0xa4] sm:$0xf]
      %v5954 = vld [vmem:[#allocation2 + $0xa8] sm:$0xf]
      %v5955 = vld [vmem:[#allocation2 + $0xac] sm:$0xf]
      %v5956 = vld [vmem:[#allocation2 + $0xb0] sm:$0xf]
      %v5957 = vld [vmem:[#allocation2 + $0xb4] sm:$0xf]
      %v5958 = vld [vmem:[#allocation2 + $0xb8] sm:$0xf]
      %v5959 = vld [vmem:[#allocation2 + $0xbc] sm:$0xf]
      %v5960 = vld [vmem:[%s2] sm:$0x3]
      %v5961 = vld [vmem:[#allocation2 + $0xc0] sm:$0x1]
      %v5962 = vld [vmem:[%s1668] sm:$0x3]
      %v5980 = vunpack.c.l.b16 %v5944
      %v5981 = vunpack.c.l.b16 %v5945
      %v5982 = vunpack.c.l.b16 %v5946
      %v5983 = vunpack.c.l.b16 %v5947
      %v5984 = vunpack.c.l.b16 %v5948
      %v5985 = vunpack.c.l.b16 %v5949
      %v5986 = vunpack.c.l.b16 %v5950
      %v5987 = vunpack.c.l.b16 %v5951
      %v5988 = vunpack.c.l.b16 %v5952
      %v5989 = vunpack.c.l.b16 %v5953
      %v5990 = vunpack.c.l.b16 %v5954
      %v5991 = vunpack.c.l.b16 %v5955
      %v5992 = vunpack.c.l.b16 %v5956
      %v5993 = vunpack.c.l.b16 %v5957
      %v5994 = vunpack.c.l.b16 %v5958
      %v5995 = vunpack.c.l.b16 %v5959
      %v5996 = vunpack.c.l.b16 %v5961
      %v5997 = vpack.c.b16 %v5981, %v5980
      %v5998 = vpack.c.b16 %v5983, %v5982
      %v5999 = vpack.c.b16 %v5985, %v5984
      %v6000 = vpack.c.b16 %v5987, %v5986
      %v6001 = vpack.c.b16 %v5989, %v5988
      %v6002 = vpack.c.b16 %v5991, %v5990
      %v6003 = vpack.c.b16 %v5993, %v5992
      %v6004 = vpack.c.b16 %v5995, %v5994
      %v6005 = vpack.c.b16 %v5996, %v5996
      %v6007 = vshrl.u32 %v5997, 16
      %v6009 = vshll.u32 %v5997, 16
      %v6011 = vrot.slane %v6009, 1
      %v6012 = vor.u32 %v6007, %v6011
      %v6014 = vshll.u32 %v5998, 16
      %v6016 = vrot.slane %v6014, 1
      %v6017 = vsel %vm1753, %v6012, %v6016
      %v6018 = vshrl.u32 %v5998, 16
      %v6020 = vor.u32 %v6018, %v6016
      %v6022 = vshll.u32 %v5999, 16
      %v6024 = vrot.slane %v6022, 1
      %v6025 = vsel %vm1753, %v6020, %v6024
      %v6026 = vshrl.u32 %v5999, 16
      %v6028 = vor.u32 %v6026, %v6024
      %v6030 = vshll.u32 %v6000, 16
      %v6032 = vrot.slane %v6030, 1
      %v6033 = vsel %vm1753, %v6028, %v6032
      %v6034 = vshrl.u32 %v6000, 16
      %v6036 = vor.u32 %v6034, %v6032
      %v6038 = vshll.u32 %v6001, 16
      %v6040 = vrot.slane %v6038, 1
      %v6041 = vsel %vm1753, %v6036, %v6040
      %v6042 = vshrl.u32 %v6001, 16
      %v6044 = vor.u32 %v6042, %v6040
      %v6046 = vshll.u32 %v6002, 16
      %v6048 = vrot.slane %v6046, 1
      %v6049 = vsel %vm1753, %v6044, %v6048
      %v6050 = vshrl.u32 %v6002, 16
      %v6052 = vor.u32 %v6050, %v6048
      %v6054 = vshll.u32 %v6003, 16
      %v6056 = vrot.slane %v6054, 1
      %v6057 = vsel %vm1753, %v6052, %v6056
      %v6058 = vshrl.u32 %v6003, 16
      %v6060 = vor.u32 %v6058, %v6056
      %v6062 = vshll.u32 %v6004, 16
      %v6064 = vrot.slane %v6062, 1
      %v6065 = vsel %vm1753, %v6060, %v6064
      %v6066 = vshrl.u32 %v6004, 16
      %v6068 = vor.u32 %v6066, %v6064
      %v6070 = vshll.u32 %v6005, 16
      %v6072 = vrot.slane %v6070, 1
      %v6073 = vsel %vm1753, %v6068, %v6072
      %v6075 = vsel %vm1886, %v6017, 0
      %v6078 = vsel %vm1886, %v6025, 0
      %v6081 = vsel %vm1886, %v6033, 0
      %v6084 = vsel %vm1886, %v6041, 0
      %v6087 = vsel %vm1886, %v6049, 0
      %v6090 = vsel %vm1886, %v6057, 0
      %v6093 = vsel %vm1886, %v6065, 0
      %v6096 = vsel %vm1886, %v6073, 0
      %v6099 = vsel %vm1935, %v5962, 0
      %6101 = vmatpush.bf16.msra.mxu0 0
      %6102 = vmatpush.bf16.msra.mxu0 0
      %6103 = vmatpush.bf16.msra.mxu0 0
      %6104 = vmatpush.bf16.msra.mxu0 0
      %6105 = vmatpush.bf16.msra.mxu0 0
      %6106 = vmatpush.bf16.msra.mxu0 0
      %6107 = vmatpush.bf16.msra.mxu0 0
      %6108 = vmatpush.bf16.msra.mxu0 %v6099
      %6109 = vmatmul.bf16.gmra.mxu0 %v6075
      %v6110 = vpop.f32.mrf.mxu0
      %v6111 = vadd.f32 0.0, %v6110
      %v6112 = vpop.f32.mrf.mxu0
      %v6113 = vadd.f32 0.0, %v6112
      %6114 = vmatmul.bf16.gmra.mxu0 %v6078
      %v6115 = vpop.f32.mrf.mxu0
      %v6116 = vadd.f32 0.0, %v6115
      %v6117 = vpop.f32.mrf.mxu0
      %v6118 = vadd.f32 0.0, %v6117
      %6119 = vmatmul.bf16.gmra.mxu0 %v6081
      %v6120 = vpop.f32.mrf.mxu0
      %v6121 = vadd.f32 0.0, %v6120
      %v6122 = vpop.f32.mrf.mxu0
      %v6123 = vadd.f32 0.0, %v6122
      %6124 = vmatmul.bf16.gmra.mxu0 %v6084
      %v6125 = vpop.f32.mrf.mxu0
      %v6126 = vadd.f32 0.0, %v6125
      %v6127 = vpop.f32.mrf.mxu0
      %v6128 = vadd.f32 0.0, %v6127
      %6129 = vmatmul.bf16.gmra.mxu0 %v6087
      %v6130 = vpop.f32.mrf.mxu0
      %v6131 = vadd.f32 0.0, %v6130
      %v6132 = vpop.f32.mrf.mxu0
      %v6133 = vadd.f32 0.0, %v6132
      %6134 = vmatmul.bf16.gmra.mxu0 %v6090
      %v6135 = vpop.f32.mrf.mxu0
      %v6136 = vadd.f32 0.0, %v6135
      %v6137 = vpop.f32.mrf.mxu0
      %v6138 = vadd.f32 0.0, %v6137
      %6139 = vmatmul.bf16.gmra.mxu0 %v6093
      %v6140 = vpop.f32.mrf.mxu0
      %v6141 = vadd.f32 0.0, %v6140
      %v6142 = vpop.f32.mrf.mxu0
      %v6143 = vadd.f32 0.0, %v6142
      %6144 = vmatmul.bf16.gmra.mxu0 %v6096
      %v6145 = vpop.f32.mrf.mxu0
      %v6146 = vadd.f32 0.0, %v6145
      %v6147 = vpop.f32.mrf.mxu0
      %v6148 = vadd.f32 0.0, %v6147
      %6149 = vdwg.mxu0
      %v6150 = vsel %vm1886, %v5997, 0
      %v6152 = vsel %vm1886, %v5998, 0
      %v6154 = vsel %vm1886, %v5999, 0
      %v6156 = vsel %vm1886, %v6000, 0
      %v6158 = vsel %vm1886, %v6001, 0
      %v6160 = vsel %vm1886, %v6002, 0
      %v6162 = vsel %vm1886, %v6003, 0
      %v6164 = vsel %vm1886, %v6004, 0
      %v6167 = vsel %vm1935, %v5960, 0
      %6169 = vmatpush.bf16.msra.mxu0 0
      %6170 = vmatpush.bf16.msra.mxu0 0
      %6171 = vmatpush.bf16.msra.mxu0 0
      %6172 = vmatpush.bf16.msra.mxu0 0
      %6173 = vmatpush.bf16.msra.mxu0 0
      %6174 = vmatpush.bf16.msra.mxu0 0
      %6175 = vmatpush.bf16.msra.mxu0 0
      %6176 = vmatpush.bf16.msra.mxu0 %v6167
      %6177 = vmatmul.bf16.gmra.mxu0 %v6150
      %v6178 = vpop.f32.mrf.mxu0
      %v6179 = vadd.f32 %v6111, %v6178
      %v6180 = vpop.f32.mrf.mxu0
      %v6181 = vadd.f32 %v6113, %v6180
      %6182 = vmatmul.bf16.gmra.mxu0 %v6152
      %v6183 = vpop.f32.mrf.mxu0
      %v6184 = vadd.f32 %v6116, %v6183
      %v6185 = vpop.f32.mrf.mxu0
      %v6186 = vadd.f32 %v6118, %v6185
      %6187 = vmatmul.bf16.gmra.mxu0 %v6154
      %v6188 = vpop.f32.mrf.mxu0
      %v6189 = vadd.f32 %v6121, %v6188
      %v6190 = vpop.f32.mrf.mxu0
      %v6191 = vadd.f32 %v6123, %v6190
      %6192 = vmatmul.bf16.gmra.mxu0 %v6156
      %v6193 = vpop.f32.mrf.mxu0
      %v6194 = vadd.f32 %v6126, %v6193
      %v6195 = vpop.f32.mrf.mxu0
      %v6196 = vadd.f32 %v6128, %v6195
      %6197 = vmatmul.bf16.gmra.mxu0 %v6158
      %v6198 = vpop.f32.mrf.mxu0
      %v6199 = vadd.f32 %v6131, %v6198
      %v6200 = vpop.f32.mrf.mxu0
      %v6201 = vadd.f32 %v6133, %v6200
      %6202 = vmatmul.bf16.gmra.mxu0 %v6160
      %v6203 = vpop.f32.mrf.mxu0
      %v6204 = vadd.f32 %v6136, %v6203
      %v6205 = vpop.f32.mrf.mxu0
      %v6206 = vadd.f32 %v6138, %v6205
      %6207 = vmatmul.bf16.gmra.mxu0 %v6162
      %v6208 = vpop.f32.mrf.mxu0
      %v6209 = vadd.f32 %v6141, %v6208
      %v6210 = vpop.f32.mrf.mxu0
      %v6211 = vadd.f32 %v6143, %v6210
      %6212 = vmatmul.bf16.gmra.mxu0 %v6164
      %v6213 = vpop.f32.mrf.mxu0
      %v6214 = vadd.f32 %v6146, %v6213
      %v6215 = vpop.f32.mrf.mxu0
      %v6216 = vadd.f32 %v6148, %v6215
      %6217 = vdwg.mxu0
      %v6218 = vld [vmem:[#allocation2 + $0x80] sm:$0xe]
      %v6219 = vld [vmem:[%s2153] sm:$0x3]
      %v6221 = vunpack.c.l.b16 %v6218
      %v6222 = vpack.c.b16 %v5981, %v6221
      %v6223 = vrot.slane %v6222, 1
      %v6224 = vrot.slane %v5998, 1
      %v6225 = vsel %vm2158, %v6223, %v6224
      %v6226 = vrot.slane %v5999, 1
      %v6227 = vsel %vm2158, %v6224, %v6226
      %v6228 = vrot.slane %v6000, 1
      %v6229 = vsel %vm2158, %v6226, %v6228
      %v6230 = vrot.slane %v6001, 1
      %v6231 = vsel %vm2158, %v6228, %v6230
      %v6232 = vrot.slane %v6002, 1
      %v6233 = vsel %vm2158, %v6230, %v6232
      %v6234 = vrot.slane %v6003, 1
      %v6235 = vsel %vm2158, %v6232, %v6234
      %v6236 = vrot.slane %v6004, 1
      %v6237 = vsel %vm2158, %v6234, %v6236
      %v6238 = vrot.slane %v6005, 1
      %v6239 = vsel %vm2158, %v6236, %v6238
      %v6241 = vsel %vm1886, %v6225, 0
      %v6244 = vsel %vm1886, %v6227, 0
      %v6247 = vsel %vm1886, %v6229, 0
      %v6250 = vsel %vm1886, %v6231, 0
      %v6253 = vsel %vm1886, %v6233, 0
      %v6256 = vsel %vm1886, %v6235, 0
      %v6259 = vsel %vm1886, %v6237, 0
      %v6262 = vsel %vm1886, %v6239, 0
      %v6265 = vsel %vm1935, %v6219, 0
      %6267 = vmatpush.bf16.msra.mxu0 0
      %6268 = vmatpush.bf16.msra.mxu0 0
      %6269 = vmatpush.bf16.msra.mxu0 0
      %6270 = vmatpush.bf16.msra.mxu0 0
      %6271 = vmatpush.bf16.msra.mxu0 0
      %6272 = vmatpush.bf16.msra.mxu0 0
      %6273 = vmatpush.bf16.msra.mxu0 0
      %6274 = vmatpush.bf16.msra.mxu0 %v6265
      %6275 = vmatmul.bf16.gmra.mxu0 %v6241
      %v6276 = vpop.f32.mrf.mxu0
      %v6277 = vadd.f32 0.0, %v6276
      %v6278 = vpop.f32.mrf.mxu0
      %v6279 = vadd.f32 0.0, %v6278
      %6280 = vmatmul.bf16.gmra.mxu0 %v6244
      %v6281 = vpop.f32.mrf.mxu0
      %v6282 = vadd.f32 0.0, %v6281
      %v6283 = vpop.f32.mrf.mxu0
      %v6284 = vadd.f32 0.0, %v6283
      %6285 = vmatmul.bf16.gmra.mxu0 %v6247
      %v6286 = vpop.f32.mrf.mxu0
      %v6287 = vadd.f32 0.0, %v6286
      %v6288 = vpop.f32.mrf.mxu0
      %v6289 = vadd.f32 0.0, %v6288
      %6290 = vmatmul.bf16.gmra.mxu0 %v6250
      %v6291 = vpop.f32.mrf.mxu0
      %v6292 = vadd.f32 0.0, %v6291
      %v6293 = vpop.f32.mrf.mxu0
      %v6294 = vadd.f32 0.0, %v6293
      %6295 = vmatmul.bf16.gmra.mxu0 %v6253
      %v6296 = vpop.f32.mrf.mxu0
      %v6297 = vadd.f32 0.0, %v6296
      %v6298 = vpop.f32.mrf.mxu0
      %v6299 = vadd.f32 0.0, %v6298
      %6300 = vmatmul.bf16.gmra.mxu0 %v6256
      %v6301 = vpop.f32.mrf.mxu0
      %v6302 = vadd.f32 0.0, %v6301
      %v6303 = vpop.f32.mrf.mxu0
      %v6304 = vadd.f32 0.0, %v6303
      %6305 = vmatmul.bf16.gmra.mxu0 %v6259
      %v6306 = vpop.f32.mrf.mxu0
      %v6307 = vadd.f32 0.0, %v6306
      %v6308 = vpop.f32.mrf.mxu0
      %v6309 = vadd.f32 0.0, %v6308
      %6310 = vmatmul.bf16.gmra.mxu0 %v6262
      %v6311 = vpop.f32.mrf.mxu0
      %v6312 = vadd.f32 0.0, %v6311
      %v6313 = vpop.f32.mrf.mxu0
      %v6314 = vadd.f32 0.0, %v6313
      %6315 = vdwg.mxu0
      %v6316 = vadd.f32 %v6179, %v6277
      %v6317 = vadd.f32 %v6181, %v6279
      %v6318 = vadd.f32 %v6184, %v6282
      %v6319 = vadd.f32 %v6186, %v6284
      %v6320 = vadd.f32 %v6189, %v6287
      %v6321 = vadd.f32 %v6191, %v6289
      %v6322 = vadd.f32 %v6194, %v6292
      %v6323 = vadd.f32 %v6196, %v6294
      %v6324 = vadd.f32 %v6199, %v6297
      %v6325 = vadd.f32 %v6201, %v6299
      %v6326 = vadd.f32 %v6204, %v6302
      %v6327 = vadd.f32 %v6206, %v6304
      %v6328 = vadd.f32 %v6209, %v6307
      %v6329 = vadd.f32 %v6211, %v6309
      %v6330 = vadd.f32 %v6214, %v6312
      %v6331 = vadd.f32 %v6216, %v6314
      %v6332 = vld [vmem:[#allocation2 + $0x8c] sm:$0xf]
      %v6333 = vld [vmem:[#allocation2 + $0x90] sm:$0xf]
      %v6334 = vld [vmem:[#allocation2 + $0x94] sm:$0xf]
      %v6335 = vld [vmem:[#allocation2 + $0x98] sm:$0xf]
      %v6336 = vld [vmem:[#allocation2 + $0x9c] sm:$0xf]
      %v6337 = vld [vmem:[#allocation2 + $0xa0] sm:$0xf]
      %v6338 = vld [vmem:[#allocation2 + $0xa4] sm:$0xf]
      %v6339 = vld [vmem:[#allocation2 + $0xa8] sm:$0xf]
      %v6340 = vld [vmem:[#allocation2 + $0xac] sm:$0xf]
      %v6341 = vld [vmem:[#allocation2 + $0xb0] sm:$0xf]
      %v6342 = vld [vmem:[#allocation2 + $0xb4] sm:$0xf]
      %v6343 = vld [vmem:[#allocation2 + $0xb8] sm:$0xf]
      %v6344 = vld [vmem:[#allocation2 + $0xbc] sm:$0xf]
      %v6345 = vld [vmem:[#allocation2 + $0xc0] sm:$0xf]
      %v6346 = vld [vmem:[#allocation2 + $0xc4] sm:$0xf]
      %v6347 = vld [vmem:[#allocation2 + $0xc8] sm:$0xf]
      %v6348 = vld [vmem:[%s2396] sm:$0x3]
      %v6365 = vunpack.c.l.b16 %v6332
      %v6366 = vunpack.c.l.b16 %v6333
      %v6367 = vunpack.c.l.b16 %v6334
      %v6368 = vunpack.c.l.b16 %v6335
      %v6369 = vunpack.c.l.b16 %v6336
      %v6370 = vunpack.c.l.b16 %v6337
      %v6371 = vunpack.c.l.b16 %v6338
      %v6372 = vunpack.c.l.b16 %v6339
      %v6373 = vunpack.c.l.b16 %v6340
      %v6374 = vunpack.c.l.b16 %v6341
      %v6375 = vunpack.c.l.b16 %v6342
      %v6376 = vunpack.c.l.b16 %v6343
      %v6377 = vunpack.c.l.b16 %v6344
      %v6378 = vunpack.c.l.b16 %v6345
      %v6379 = vunpack.c.l.b16 %v6346
      %v6380 = vunpack.c.l.b16 %v6347
      %v6381 = vpack.c.b16 %v6366, %v6365
      %v6382 = vpack.c.b16 %v6368, %v6367
      %v6383 = vpack.c.b16 %v6370, %v6369
      %v6384 = vpack.c.b16 %v6372, %v6371
      %v6385 = vpack.c.b16 %v6374, %v6373
      %v6386 = vpack.c.b16 %v6376, %v6375
      %v6387 = vpack.c.b16 %v6378, %v6377
      %v6388 = vpack.c.b16 %v6380, %v6379
      %v6390 = vsel %vm1886, %v6381, 0
      %v6393 = vsel %vm1886, %v6382, 0
      %v6396 = vsel %vm1886, %v6383, 0
      %v6399 = vsel %vm1886, %v6384, 0
      %v6402 = vsel %vm1886, %v6385, 0
      %v6405 = vsel %vm1886, %v6386, 0
      %v6408 = vsel %vm1886, %v6387, 0
      %v6411 = vsel %vm1886, %v6388, 0
      %v6414 = vsel %vm1935, %v6348, 0
      %6416 = vmatpush.bf16.msra.mxu0 0
      %6417 = vmatpush.bf16.msra.mxu0 0
      %6418 = vmatpush.bf16.msra.mxu0 0
      %6419 = vmatpush.bf16.msra.mxu0 0
      %6420 = vmatpush.bf16.msra.mxu0 0
      %6421 = vmatpush.bf16.msra.mxu0 0
      %6422 = vmatpush.bf16.msra.mxu0 0
      %6423 = vmatpush.bf16.msra.mxu0 %v6414
      %6424 = vmatmul.bf16.gmra.mxu0 %v6390
      %v6425 = vpop.f32.mrf.mxu0
      %v6426 = vadd.f32 0.0, %v6425
      %v6427 = vpop.f32.mrf.mxu0
      %v6428 = vadd.f32 0.0, %v6427
      %6429 = vmatmul.bf16.gmra.mxu0 %v6393
      %v6430 = vpop.f32.mrf.mxu0
      %v6431 = vadd.f32 0.0, %v6430
      %v6432 = vpop.f32.mrf.mxu0
      %v6433 = vadd.f32 0.0, %v6432
      %6434 = vmatmul.bf16.gmra.mxu0 %v6396
      %v6435 = vpop.f32.mrf.mxu0
      %v6436 = vadd.f32 0.0, %v6435
      %v6437 = vpop.f32.mrf.mxu0
      %v6438 = vadd.f32 0.0, %v6437
      %6439 = vmatmul.bf16.gmra.mxu0 %v6399
      %v6440 = vpop.f32.mrf.mxu0
      %v6441 = vadd.f32 0.0, %v6440
      %v6442 = vpop.f32.mrf.mxu0
      %v6443 = vadd.f32 0.0, %v6442
      %6444 = vmatmul.bf16.gmra.mxu0 %v6402
      %v6445 = vpop.f32.mrf.mxu0
      %v6446 = vadd.f32 0.0, %v6445
      %v6447 = vpop.f32.mrf.mxu0
      %v6448 = vadd.f32 0.0, %v6447
      %6449 = vmatmul.bf16.gmra.mxu0 %v6405
      %v6450 = vpop.f32.mrf.mxu0
      %v6451 = vadd.f32 0.0, %v6450
      %v6452 = vpop.f32.mrf.mxu0
      %v6453 = vadd.f32 0.0, %v6452
      %6454 = vmatmul.bf16.gmra.mxu0 %v6408
      %v6455 = vpop.f32.mrf.mxu0
      %v6456 = vadd.f32 0.0, %v6455
      %v6457 = vpop.f32.mrf.mxu0
      %v6458 = vadd.f32 0.0, %v6457
      %6459 = vmatmul.bf16.gmra.mxu0 %v6411
      %v6460 = vpop.f32.mrf.mxu0
      %v6461 = vadd.f32 0.0, %v6460
      %v6462 = vpop.f32.mrf.mxu0
      %v6463 = vadd.f32 0.0, %v6462
      %6464 = vdwg.mxu0
      %v6465 = vadd.f32 %v6316, %v6426
      %v6466 = vadd.f32 %v6317, %v6428
      %v6467 = vadd.f32 %v6318, %v6431
      %v6468 = vadd.f32 %v6319, %v6433
      %v6469 = vadd.f32 %v6320, %v6436
      %v6470 = vadd.f32 %v6321, %v6438
      %v6471 = vadd.f32 %v6322, %v6441
      %v6472 = vadd.f32 %v6323, %v6443
      %v6473 = vadd.f32 %v6324, %v6446
      %v6474 = vadd.f32 %v6325, %v6448
      %v6475 = vadd.f32 %v6326, %v6451
      %v6476 = vadd.f32 %v6327, %v6453
      %v6477 = vadd.f32 %v6328, %v6456
      %v6478 = vadd.f32 %v6329, %v6458
      %v6479 = vadd.f32 %v6330, %v6461
      %v6480 = vadd.f32 %v6331, %v6463
      %v6481 = vld [vmem:[#allocation2 + $0x8c] sm:$0xf]
      %v6482 = vld [vmem:[#allocation2 + $0x90] sm:$0xf]
      %v6483 = vld [vmem:[#allocation2 + $0x94] sm:$0xf]
      %v6484 = vld [vmem:[#allocation2 + $0x98] sm:$0xf]
      %v6485 = vld [vmem:[#allocation2 + $0x9c] sm:$0xf]
      %v6486 = vld [vmem:[#allocation2 + $0xa0] sm:$0xf]
      %v6487 = vld [vmem:[#allocation2 + $0xa4] sm:$0xf]
      %v6488 = vld [vmem:[#allocation2 + $0xa8] sm:$0xf]
      %v6489 = vld [vmem:[#allocation2 + $0xac] sm:$0xf]
      %v6490 = vld [vmem:[#allocation2 + $0xb0] sm:$0xf]
      %v6491 = vld [vmem:[#allocation2 + $0xb4] sm:$0xf]
      %v6492 = vld [vmem:[#allocation2 + $0xb8] sm:$0xf]
      %v6493 = vld [vmem:[#allocation2 + $0xbc] sm:$0xf]
      %v6494 = vld [vmem:[#allocation2 + $0xc0] sm:$0xf]
      %v6495 = vld [vmem:[#allocation2 + $0xc4] sm:$0xf]
      %v6496 = vld [vmem:[#allocation2 + $0xc8] sm:$0xf]
      %v6497 = vld [vmem:[#allocation2 + $0xcc] sm:$0x1]
      %v6498 = vld [vmem:[%s2683] sm:$0x3]
      %v6516 = vunpack.c.l.b16 %v6481
      %v6517 = vunpack.c.l.b16 %v6482
      %v6518 = vunpack.c.l.b16 %v6483
      %v6519 = vunpack.c.l.b16 %v6484
      %v6520 = vunpack.c.l.b16 %v6485
      %v6521 = vunpack.c.l.b16 %v6486
      %v6522 = vunpack.c.l.b16 %v6487
      %v6523 = vunpack.c.l.b16 %v6488
      %v6524 = vunpack.c.l.b16 %v6489
      %v6525 = vunpack.c.l.b16 %v6490
      %v6526 = vunpack.c.l.b16 %v6491
      %v6527 = vunpack.c.l.b16 %v6492
      %v6528 = vunpack.c.l.b16 %v6493
      %v6529 = vunpack.c.l.b16 %v6494
      %v6530 = vunpack.c.l.b16 %v6495
      %v6531 = vunpack.c.l.b16 %v6496
      %v6532 = vunpack.c.l.b16 %v6497
      %v6533 = vpack.c.b16 %v6517, %v6516
      %v6534 = vpack.c.b16 %v6519, %v6518
      %v6535 = vpack.c.b16 %v6521, %v6520
      %v6536 = vpack.c.b16 %v6523, %v6522
      %v6537 = vpack.c.b16 %v6525, %v6524
      %v6538 = vpack.c.b16 %v6527, %v6526
      %v6539 = vpack.c.b16 %v6529, %v6528
      %v6540 = vpack.c.b16 %v6531, %v6530
      %v6541 = vpack.c.b16 %v6532, %v6532
      %v6543 = vshrl.u32 %v6533, 16
      %v6545 = vshll.u32 %v6533, 16
      %v6547 = vrot.slane %v6545, 1
      %v6548 = vor.u32 %v6543, %v6547
      %v6550 = vshll.u32 %v6534, 16
      %v6552 = vrot.slane %v6550, 1
      %v6553 = vsel %vm1753, %v6548, %v6552
      %v6554 = vshrl.u32 %v6534, 16
      %v6556 = vor.u32 %v6554, %v6552
      %v6558 = vshll.u32 %v6535, 16
      %v6560 = vrot.slane %v6558, 1
      %v6561 = vsel %vm1753, %v6556, %v6560
      %v6562 = vshrl.u32 %v6535, 16
      %v6564 = vor.u32 %v6562, %v6560
      %v6566 = vshll.u32 %v6536, 16
      %v6568 = vrot.slane %v6566, 1
      %v6569 = vsel %vm1753, %v6564, %v6568
      %v6570 = vshrl.u32 %v6536, 16
      %v6572 = vor.u32 %v6570, %v6568
      %v6574 = vshll.u32 %v6537, 16
      %v6576 = vrot.slane %v6574, 1
      %v6577 = vsel %vm1753, %v6572, %v6576
      %v6578 = vshrl.u32 %v6537, 16
      %v6580 = vor.u32 %v6578, %v6576
      %v6582 = vshll.u32 %v6538, 16
      %v6584 = vrot.slane %v6582, 1
      %v6585 = vsel %vm1753, %v6580, %v6584
      %v6586 = vshrl.u32 %v6538, 16
      %v6588 = vor.u32 %v6586, %v6584
      %v6590 = vshll.u32 %v6539, 16
      %v6592 = vrot.slane %v6590, 1
      %v6593 = vsel %vm1753, %v6588, %v6592
      %v6594 = vshrl.u32 %v6539, 16
      %v6596 = vor.u32 %v6594, %v6592
      %v6598 = vshll.u32 %v6540, 16
      %v6600 = vrot.slane %v6598, 1
      %v6601 = vsel %vm1753, %v6596, %v6600
      %v6602 = vshrl.u32 %v6540, 16
      %v6604 = vor.u32 %v6602, %v6600
      %v6606 = vshll.u32 %v6541, 16
      %v6608 = vrot.slane %v6606, 1
      %v6609 = vsel %vm1753, %v6604, %v6608
      %v6611 = vsel %vm1886, %v6553, 0
      %v6614 = vsel %vm1886, %v6561, 0
      %v6617 = vsel %vm1886, %v6569, 0
      %v6620 = vsel %vm1886, %v6577, 0
      %v6623 = vsel %vm1886, %v6585, 0
      %v6626 = vsel %vm1886, %v6593, 0
      %v6629 = vsel %vm1886, %v6601, 0
      %v6632 = vsel %vm1886, %v6609, 0
      %v6635 = vsel %vm1935, %v6498, 0
      %6637 = vmatpush.bf16.msra.mxu0 0
      %6638 = vmatpush.bf16.msra.mxu0 0
      %6639 = vmatpush.bf16.msra.mxu0 0
      %6640 = vmatpush.bf16.msra.mxu0 0
      %6641 = vmatpush.bf16.msra.mxu0 0
      %6642 = vmatpush.bf16.msra.mxu0 0
      %6643 = vmatpush.bf16.msra.mxu0 0
      %6644 = vmatpush.bf16.msra.mxu0 %v6635
      %6645 = vmatmul.bf16.gmra.mxu0 %v6611
      %v6646 = vpop.f32.mrf.mxu0
      %v6647 = vadd.f32 0.0, %v6646
      %v6648 = vpop.f32.mrf.mxu0
      %v6649 = vadd.f32 0.0, %v6648
      %6650 = vmatmul.bf16.gmra.mxu0 %v6614
      %v6651 = vpop.f32.mrf.mxu0
      %v6652 = vadd.f32 0.0, %v6651
      %v6653 = vpop.f32.mrf.mxu0
      %v6654 = vadd.f32 0.0, %v6653
      %6655 = vmatmul.bf16.gmra.mxu0 %v6617
      %v6656 = vpop.f32.mrf.mxu0
      %v6657 = vadd.f32 0.0, %v6656
      %v6658 = vpop.f32.mrf.mxu0
      %v6659 = vadd.f32 0.0, %v6658
      %6660 = vmatmul.bf16.gmra.mxu0 %v6620
      %v6661 = vpop.f32.mrf.mxu0
      %v6662 = vadd.f32 0.0, %v6661
      %v6663 = vpop.f32.mrf.mxu0
      %v6664 = vadd.f32 0.0, %v6663
      %6665 = vmatmul.bf16.gmra.mxu0 %v6623
      %v6666 = vpop.f32.mrf.mxu0
      %v6667 = vadd.f32 0.0, %v6666
      %v6668 = vpop.f32.mrf.mxu0
      %v6669 = vadd.f32 0.0, %v6668
      %6670 = vmatmul.bf16.gmra.mxu0 %v6626
      %v6671 = vpop.f32.mrf.mxu0
      %v6672 = vadd.f32 0.0, %v6671
      %v6673 = vpop.f32.mrf.mxu0
      %v6674 = vadd.f32 0.0, %v6673
      %6675 = vmatmul.bf16.gmra.mxu0 %v6629
      %v6676 = vpop.f32.mrf.mxu0
      %v6677 = vadd.f32 0.0, %v6676
      %v6678 = vpop.f32.mrf.mxu0
      %v6679 = vadd.f32 0.0, %v6678
      %6680 = vmatmul.bf16.gmra.mxu0 %v6632
      %v6681 = vpop.f32.mrf.mxu0
      %v6682 = vadd.f32 0.0, %v6681
      %v6683 = vpop.f32.mrf.mxu0
      %v6684 = vadd.f32 0.0, %v6683
      %6685 = vdwg.mxu0
      %v6686 = vadd.f32 %v6465, %v6647
      %v6687 = vadd.f32 %v6466, %v6649
      %v6688 = vadd.f32 %v6467, %v6652
      %v6689 = vadd.f32 %v6468, %v6654
      %v6690 = vadd.f32 %v6469, %v6657
      %v6691 = vadd.f32 %v6470, %v6659
      %v6692 = vadd.f32 %v6471, %v6662
      %v6693 = vadd.f32 %v6472, %v6664
      %v6694 = vadd.f32 %v6473, %v6667
      %v6695 = vadd.f32 %v6474, %v6669
      %v6696 = vadd.f32 %v6475, %v6672
      %v6697 = vadd.f32 %v6476, %v6674
      %v6698 = vadd.f32 %v6477, %v6677
      %v6699 = vadd.f32 %v6478, %v6679
      %v6700 = vadd.f32 %v6479, %v6682
      %v6701 = vadd.f32 %v6480, %v6684
      %v6702 = vld [vmem:[#allocation2 + $0x8c] sm:$0xe]
      %v6703 = vld [vmem:[%s3073] sm:$0x3]
      %v6705 = vunpack.c.l.b16 %v6702
      %v6706 = vpack.c.b16 %v6517, %v6705
      %v6707 = vrot.slane %v6706, 1
      %v6708 = vrot.slane %v6534, 1
      %v6709 = vsel %vm2158, %v6707, %v6708
      %v6710 = vrot.slane %v6535, 1
      %v6711 = vsel %vm2158, %v6708, %v6710
      %v6712 = vrot.slane %v6536, 1
      %v6713 = vsel %vm2158, %v6710, %v6712
      %v6714 = vrot.slane %v6537, 1
      %v6715 = vsel %vm2158, %v6712, %v6714
      %v6716 = vrot.slane %v6538, 1
      %v6717 = vsel %vm2158, %v6714, %v6716
      %v6718 = vrot.slane %v6539, 1
      %v6719 = vsel %vm2158, %v6716, %v6718
      %v6720 = vrot.slane %v6540, 1
      %v6721 = vsel %vm2158, %v6718, %v6720
      %v6722 = vrot.slane %v6541, 1
      %v6723 = vsel %vm2158, %v6720, %v6722
      %v6725 = vsel %vm1886, %v6709, 0
      %v6728 = vsel %vm1886, %v6711, 0
      %v6731 = vsel %vm1886, %v6713, 0
      %v6734 = vsel %vm1886, %v6715, 0
      %v6737 = vsel %vm1886, %v6717, 0
      %v6740 = vsel %vm1886, %v6719, 0
      %v6743 = vsel %vm1886, %v6721, 0
      %v6746 = vsel %vm1886, %v6723, 0
      %v6749 = vsel %vm1935, %v6703, 0
      %6751 = vmatpush.bf16.msra.mxu0 0
      %6752 = vmatpush.bf16.msra.mxu0 0
      %6753 = vmatpush.bf16.msra.mxu0 0
      %6754 = vmatpush.bf16.msra.mxu0 0
      %6755 = vmatpush.bf16.msra.mxu0 0
      %6756 = vmatpush.bf16.msra.mxu0 0
      %6757 = vmatpush.bf16.msra.mxu0 0
      %6758 = vmatpush.bf16.msra.mxu0 %v6749
      %6759 = vmatmul.bf16.gmra.mxu0 %v6725
      %v6760 = vpop.f32.mrf.mxu0
      %v6761 = vadd.f32 0.0, %v6760
      %v6762 = vpop.f32.mrf.mxu0
      %v6763 = vadd.f32 0.0, %v6762
      %6764 = vmatmul.bf16.gmra.mxu0 %v6728
      %v6765 = vpop.f32.mrf.mxu0
      %v6766 = vadd.f32 0.0, %v6765
      %v6767 = vpop.f32.mrf.mxu0
      %v6768 = vadd.f32 0.0, %v6767
      %6769 = vmatmul.bf16.gmra.mxu0 %v6731
      %v6770 = vpop.f32.mrf.mxu0
      %v6771 = vadd.f32 0.0, %v6770
      %v6772 = vpop.f32.mrf.mxu0
      %v6773 = vadd.f32 0.0, %v6772
      %6774 = vmatmul.bf16.gmra.mxu0 %v6734
      %v6775 = vpop.f32.mrf.mxu0
      %v6776 = vadd.f32 0.0, %v6775
      %v6777 = vpop.f32.mrf.mxu0
      %v6778 = vadd.f32 0.0, %v6777
      %6779 = vmatmul.bf16.gmra.mxu0 %v6737
      %v6780 = vpop.f32.mrf.mxu0
      %v6781 = vadd.f32 0.0, %v6780
      %v6782 = vpop.f32.mrf.mxu0
      %v6783 = vadd.f32 0.0, %v6782
      %6784 = vmatmul.bf16.gmra.mxu0 %v6740
      %v6785 = vpop.f32.mrf.mxu0
      %v6786 = vadd.f32 0.0, %v6785
      %v6787 = vpop.f32.mrf.mxu0
      %v6788 = vadd.f32 0.0, %v6787
      %6789 = vmatmul.bf16.gmra.mxu0 %v6743
      %v6790 = vpop.f32.mrf.mxu0
      %v6791 = vadd.f32 0.0, %v6790
      %v6792 = vpop.f32.mrf.mxu0
      %v6793 = vadd.f32 0.0, %v6792
      %6794 = vmatmul.bf16.gmra.mxu0 %v6746
      %v6795 = vpop.f32.mrf.mxu0
      %v6796 = vadd.f32 0.0, %v6795
      %v6797 = vpop.f32.mrf.mxu0
      %v6798 = vadd.f32 0.0, %v6797
      %6799 = vdwg.mxu0
      %v6800 = vadd.f32 %v6686, %v6761
      %v6801 = vadd.f32 %v6687, %v6763
      %v6802 = vadd.f32 %v6688, %v6766
      %v6803 = vadd.f32 %v6689, %v6768
      %v6804 = vadd.f32 %v6690, %v6771
      %v6805 = vadd.f32 %v6691, %v6773
      %v6806 = vadd.f32 %v6692, %v6776
      %v6807 = vadd.f32 %v6693, %v6778
      %v6808 = vadd.f32 %v6694, %v6781
      %v6809 = vadd.f32 %v6695, %v6783
      %v6810 = vadd.f32 %v6696, %v6786
      %v6811 = vadd.f32 %v6697, %v6788
      %v6812 = vadd.f32 %v6698, %v6791
      %v6813 = vadd.f32 %v6699, %v6793
      %v6814 = vadd.f32 %v6700, %v6796
      %v6815 = vadd.f32 %v6701, %v6798
      %v6816 = vld [vmem:[#allocation2 + $0x98] sm:$0xf]
      %v6817 = vld [vmem:[#allocation2 + $0x9c] sm:$0xf]
      %v6818 = vld [vmem:[#allocation2 + $0xa0] sm:$0xf]
      %v6819 = vld [vmem:[#allocation2 + $0xa4] sm:$0xf]
      %v6820 = vld [vmem:[#allocation2 + $0xa8] sm:$0xf]
      %v6821 = vld [vmem:[#allocation2 + $0xac] sm:$0xf]
      %v6822 = vld [vmem:[#allocation2 + $0xb0] sm:$0xf]
      %v6823 = vld [vmem:[#allocation2 + $0xb4] sm:$0xf]
      %v6824 = vld [vmem:[#allocation2 + $0xb8] sm:$0xf]
      %v6825 = vld [vmem:[#allocation2 + $0xbc] sm:$0xf]
      %v6826 = vld [vmem:[#allocation2 + $0xc0] sm:$0xf]
      %v6827 = vld [vmem:[#allocation2 + $0xc4] sm:$0xf]
      %v6828 = vld [vmem:[#allocation2 + $0xc8] sm:$0xf]
      %v6829 = vld [vmem:[#allocation2 + $0xcc] sm:$0xf]
      %v6830 = vld [vmem:[#allocation2 + $0xd0] sm:$0xf]
      %v6831 = vld [vmem:[#allocation2 + $0xd4] sm:$0xf]
      %v6832 = vld [vmem:[%s3315] sm:$0x3]
      %v6849 = vunpack.c.l.b16 %v6816
      %v6850 = vunpack.c.l.b16 %v6817
      %v6851 = vunpack.c.l.b16 %v6818
      %v6852 = vunpack.c.l.b16 %v6819
      %v6853 = vunpack.c.l.b16 %v6820
      %v6854 = vunpack.c.l.b16 %v6821
      %v6855 = vunpack.c.l.b16 %v6822
      %v6856 = vunpack.c.l.b16 %v6823
      %v6857 = vunpack.c.l.b16 %v6824
      %v6858 = vunpack.c.l.b16 %v6825
      %v6859 = vunpack.c.l.b16 %v6826
      %v6860 = vunpack.c.l.b16 %v6827
      %v6861 = vunpack.c.l.b16 %v6828
      %v6862 = vunpack.c.l.b16 %v6829
      %v6863 = vunpack.c.l.b16 %v6830
      %v6864 = vunpack.c.l.b16 %v6831
      %v6865 = vpack.c.b16 %v6850, %v6849
      %v6866 = vpack.c.b16 %v6852, %v6851
      %v6867 = vpack.c.b16 %v6854, %v6853
      %v6868 = vpack.c.b16 %v6856, %v6855
      %v6869 = vpack.c.b16 %v6858, %v6857
      %v6870 = vpack.c.b16 %v6860, %v6859
      %v6871 = vpack.c.b16 %v6862, %v6861
      %v6872 = vpack.c.b16 %v6864, %v6863
      %v6874 = vsel %vm1886, %v6865, 0
      %v6877 = vsel %vm1886, %v6866, 0
      %v6880 = vsel %vm1886, %v6867, 0
      %v6883 = vsel %vm1886, %v6868, 0
      %v6886 = vsel %vm1886, %v6869, 0
      %v6889 = vsel %vm1886, %v6870, 0
      %v6892 = vsel %vm1886, %v6871, 0
      %v6895 = vsel %vm1886, %v6872, 0
      %v6898 = vsel %vm1935, %v6832, 0
      %6900 = vmatpush.bf16.msra.mxu0 0
      %6901 = vmatpush.bf16.msra.mxu0 0
      %6902 = vmatpush.bf16.msra.mxu0 0
      %6903 = vmatpush.bf16.msra.mxu0 0
      %6904 = vmatpush.bf16.msra.mxu0 0
      %6905 = vmatpush.bf16.msra.mxu0 0
      %6906 = vmatpush.bf16.msra.mxu0 0
      %6907 = vmatpush.bf16.msra.mxu0 %v6898
      %6908 = vmatmul.bf16.gmra.mxu0 %v6874
      %v6909 = vpop.f32.mrf.mxu0
      %v6910 = vadd.f32 0.0, %v6909
      %v6911 = vpop.f32.mrf.mxu0
      %v6912 = vadd.f32 0.0, %v6911
      %6913 = vmatmul.bf16.gmra.mxu0 %v6877
      %v6914 = vpop.f32.mrf.mxu0
      %v6915 = vadd.f32 0.0, %v6914
      %v6916 = vpop.f32.mrf.mxu0
      %v6917 = vadd.f32 0.0, %v6916
      %6918 = vmatmul.bf16.gmra.mxu0 %v6880
      %v6919 = vpop.f32.mrf.mxu0
      %v6920 = vadd.f32 0.0, %v6919
      %v6921 = vpop.f32.mrf.mxu0
      %v6922 = vadd.f32 0.0, %v6921
      %6923 = vmatmul.bf16.gmra.mxu0 %v6883
      %v6924 = vpop.f32.mrf.mxu0
      %v6925 = vadd.f32 0.0, %v6924
      %v6926 = vpop.f32.mrf.mxu0
      %v6927 = vadd.f32 0.0, %v6926
      %6928 = vmatmul.bf16.gmra.mxu0 %v6886
      %v6929 = vpop.f32.mrf.mxu0
      %v6930 = vadd.f32 0.0, %v6929
      %v6931 = vpop.f32.mrf.mxu0
      %v6932 = vadd.f32 0.0, %v6931
      %6933 = vmatmul.bf16.gmra.mxu0 %v6889
      %v6934 = vpop.f32.mrf.mxu0
      %v6935 = vadd.f32 0.0, %v6934
      %v6936 = vpop.f32.mrf.mxu0
      %v6937 = vadd.f32 0.0, %v6936
      %6938 = vmatmul.bf16.gmra.mxu0 %v6892
      %v6939 = vpop.f32.mrf.mxu0
      %v6940 = vadd.f32 0.0, %v6939
      %v6941 = vpop.f32.mrf.mxu0
      %v6942 = vadd.f32 0.0, %v6941
      %6943 = vmatmul.bf16.gmra.mxu0 %v6895
      %v6944 = vpop.f32.mrf.mxu0
      %v6945 = vadd.f32 0.0, %v6944
      %v6946 = vpop.f32.mrf.mxu0
      %v6947 = vadd.f32 0.0, %v6946
      %6948 = vdwg.mxu0
      %v6949 = vadd.f32 %v6800, %v6910
      %v6950 = vadd.f32 %v6801, %v6912
      %v6951 = vadd.f32 %v6802, %v6915
      %v6952 = vadd.f32 %v6803, %v6917
      %v6953 = vadd.f32 %v6804, %v6920
      %v6954 = vadd.f32 %v6805, %v6922
      %v6955 = vadd.f32 %v6806, %v6925
      %v6956 = vadd.f32 %v6807, %v6927
      %v6957 = vadd.f32 %v6808, %v6930
      %v6958 = vadd.f32 %v6809, %v6932
      %v6959 = vadd.f32 %v6810, %v6935
      %v6960 = vadd.f32 %v6811, %v6937
      %v6961 = vadd.f32 %v6812, %v6940
      %v6962 = vadd.f32 %v6813, %v6942
      %v6963 = vadd.f32 %v6814, %v6945
      %v6964 = vadd.f32 %v6815, %v6947
      %v6965 = vld [vmem:[#allocation2 + $0x98] sm:$0xf]
      %v6966 = vld [vmem:[#allocation2 + $0x9c] sm:$0xf]
      %v6967 = vld [vmem:[#allocation2 + $0xa0] sm:$0xf]
      %v6968 = vld [vmem:[#allocation2 + $0xa4] sm:$0xf]
      %v6969 = vld [vmem:[#allocation2 + $0xa8] sm:$0xf]
      %v6970 = vld [vmem:[#allocation2 + $0xac] sm:$0xf]
      %v6971 = vld [vmem:[#allocation2 + $0xb0] sm:$0xf]
      %v6972 = vld [vmem:[#allocation2 + $0xb4] sm:$0xf]
      %v6973 = vld [vmem:[#allocation2 + $0xb8] sm:$0xf]
      %v6974 = vld [vmem:[#allocation2 + $0xbc] sm:$0xf]
      %v6975 = vld [vmem:[#allocation2 + $0xc0] sm:$0xf]
      %v6976 = vld [vmem:[#allocation2 + $0xc4] sm:$0xf]
      %v6977 = vld [vmem:[#allocation2 + $0xc8] sm:$0xf]
      %v6978 = vld [vmem:[#allocation2 + $0xcc] sm:$0xf]
      %v6979 = vld [vmem:[#allocation2 + $0xd0] sm:$0xf]
      %v6980 = vld [vmem:[#allocation2 + $0xd4] sm:$0xf]
      %v6981 = vld [vmem:[#allocation2 + $0xd8] sm:$0x1]
      %v6982 = vld [vmem:[%s3602] sm:$0x3]
      %v7000 = vunpack.c.l.b16 %v6965
      %v7001 = vunpack.c.l.b16 %v6966
      %v7002 = vunpack.c.l.b16 %v6967
      %v7003 = vunpack.c.l.b16 %v6968
      %v7004 = vunpack.c.l.b16 %v6969
      %v7005 = vunpack.c.l.b16 %v6970
      %v7006 = vunpack.c.l.b16 %v6971
      %v7007 = vunpack.c.l.b16 %v6972
      %v7008 = vunpack.c.l.b16 %v6973
      %v7009 = vunpack.c.l.b16 %v6974
      %v7010 = vunpack.c.l.b16 %v6975
      %v7011 = vunpack.c.l.b16 %v6976
      %v7012 = vunpack.c.l.b16 %v6977
      %v7013 = vunpack.c.l.b16 %v6978
      %v7014 = vunpack.c.l.b16 %v6979
      %v7015 = vunpack.c.l.b16 %v6980
      %v7016 = vunpack.c.l.b16 %v6981
      %v7017 = vpack.c.b16 %v7001, %v7000
      %v7018 = vpack.c.b16 %v7003, %v7002
      %v7019 = vpack.c.b16 %v7005, %v7004
      %v7020 = vpack.c.b16 %v7007, %v7006
      %v7021 = vpack.c.b16 %v7009, %v7008
      %v7022 = vpack.c.b16 %v7011, %v7010
      %v7023 = vpack.c.b16 %v7013, %v7012
      %v7024 = vpack.c.b16 %v7015, %v7014
      %v7025 = vpack.c.b16 %v7016, %v7016
      %v7027 = vshrl.u32 %v7017, 16
      %v7029 = vshll.u32 %v7017, 16
      %v7031 = vrot.slane %v7029, 1
      %v7032 = vor.u32 %v7027, %v7031
      %v7034 = vshll.u32 %v7018, 16
      %v7036 = vrot.slane %v7034, 1
      %v7037 = vsel %vm1753, %v7032, %v7036
      %v7038 = vshrl.u32 %v7018, 16
      %v7040 = vor.u32 %v7038, %v7036
      %v7042 = vshll.u32 %v7019, 16
      %v7044 = vrot.slane %v7042, 1
      %v7045 = vsel %vm1753, %v7040, %v7044
      %v7046 = vshrl.u32 %v7019, 16
      %v7048 = vor.u32 %v7046, %v7044
      %v7050 = vshll.u32 %v7020, 16
      %v7052 = vrot.slane %v7050, 1
      %v7053 = vsel %vm1753, %v7048, %v7052
      %v7054 = vshrl.u32 %v7020, 16
      %v7056 = vor.u32 %v7054, %v7052
      %v7058 = vshll.u32 %v7021, 16
      %v7060 = vrot.slane %v7058, 1
      %v7061 = vsel %vm1753, %v7056, %v7060
      %v7062 = vshrl.u32 %v7021, 16
      %v7064 = vor.u32 %v7062, %v7060
      %v7066 = vshll.u32 %v7022, 16
      %v7068 = vrot.slane %v7066, 1
      %v7069 = vsel %vm1753, %v7064, %v7068
      %v7070 = vshrl.u32 %v7022, 16
      %v7072 = vor.u32 %v7070, %v7068
      %v7074 = vshll.u32 %v7023, 16
      %v7076 = vrot.slane %v7074, 1
      %v7077 = vsel %vm1753, %v7072, %v7076
      %v7078 = vshrl.u32 %v7023, 16
      %v7080 = vor.u32 %v7078, %v7076
      %v7082 = vshll.u32 %v7024, 16
      %v7084 = vrot.slane %v7082, 1
      %v7085 = vsel %vm1753, %v7080, %v7084
      %v7086 = vshrl.u32 %v7024, 16
      %v7088 = vor.u32 %v7086, %v7084
      %v7090 = vshll.u32 %v7025, 16
      %v7092 = vrot.slane %v7090, 1
      %v7093 = vsel %vm1753, %v7088, %v7092
      %v7095 = vsel %vm1886, %v7037, 0
      %v7098 = vsel %vm1886, %v7045, 0
      %v7101 = vsel %vm1886, %v7053, 0
      %v7104 = vsel %vm1886, %v7061, 0
      %v7107 = vsel %vm1886, %v7069, 0
      %v7110 = vsel %vm1886, %v7077, 0
      %v7113 = vsel %vm1886, %v7085, 0
      %v7116 = vsel %vm1886, %v7093, 0
      %v7119 = vsel %vm1935, %v6982, 0
      %7121 = vmatpush.bf16.msra.mxu0 0
      %7122 = vmatpush.bf16.msra.mxu0 0
      %7123 = vmatpush.bf16.msra.mxu0 0
      %7124 = vmatpush.bf16.msra.mxu0 0
      %7125 = vmatpush.bf16.msra.mxu0 0
      %7126 = vmatpush.bf16.msra.mxu0 0
      %7127 = vmatpush.bf16.msra.mxu0 0
      %7128 = vmatpush.bf16.msra.mxu0 %v7119
      %7129 = vmatmul.bf16.gmra.mxu0 %v7095
      %v7130 = vpop.f32.mrf.mxu0
      %v7131 = vadd.f32 0.0, %v7130
      %v7132 = vpop.f32.mrf.mxu0
      %v7133 = vadd.f32 0.0, %v7132
      %7134 = vmatmul.bf16.gmra.mxu0 %v7098
      %v7135 = vpop.f32.mrf.mxu0
      %v7136 = vadd.f32 0.0, %v7135
      %v7137 = vpop.f32.mrf.mxu0
      %v7138 = vadd.f32 0.0, %v7137
      %7139 = vmatmul.bf16.gmra.mxu0 %v7101
      %v7140 = vpop.f32.mrf.mxu0
      %v7141 = vadd.f32 0.0, %v7140
      %v7142 = vpop.f32.mrf.mxu0
      %v7143 = vadd.f32 0.0, %v7142
      %7144 = vmatmul.bf16.gmra.mxu0 %v7104
      %v7145 = vpop.f32.mrf.mxu0
      %v7146 = vadd.f32 0.0, %v7145
      %v7147 = vpop.f32.mrf.mxu0
      %v7148 = vadd.f32 0.0, %v7147
      %7149 = vmatmul.bf16.gmra.mxu0 %v7107
      %v7150 = vpop.f32.mrf.mxu0
      %v7151 = vadd.f32 0.0, %v7150
      %v7152 = vpop.f32.mrf.mxu0
      %v7153 = vadd.f32 0.0, %v7152
      %7154 = vmatmul.bf16.gmra.mxu0 %v7110
      %v7155 = vpop.f32.mrf.mxu0
      %v7156 = vadd.f32 0.0, %v7155
      %v7157 = vpop.f32.mrf.mxu0
      %v7158 = vadd.f32 0.0, %v7157
      %7159 = vmatmul.bf16.gmra.mxu0 %v7113
      %v7160 = vpop.f32.mrf.mxu0
      %v7161 = vadd.f32 0.0, %v7160
      %v7162 = vpop.f32.mrf.mxu0
      %v7163 = vadd.f32 0.0, %v7162
      %7164 = vmatmul.bf16.gmra.mxu0 %v7116
      %v7165 = vpop.f32.mrf.mxu0
      %v7166 = vadd.f32 0.0, %v7165
      %v7167 = vpop.f32.mrf.mxu0
      %v7168 = vadd.f32 0.0, %v7167
      %7169 = vdwg.mxu0
      %v7170 = vadd.f32 %v6949, %v7131
      %v7171 = vadd.f32 %v6950, %v7133
      %v7172 = vadd.f32 %v6951, %v7136
      %v7173 = vadd.f32 %v6952, %v7138
      %v7174 = vadd.f32 %v6953, %v7141
      %v7175 = vadd.f32 %v6954, %v7143
      %v7176 = vadd.f32 %v6955, %v7146
      %v7177 = vadd.f32 %v6956, %v7148
      %v7178 = vadd.f32 %v6957, %v7151
      %v7179 = vadd.f32 %v6958, %v7153
      %v7180 = vadd.f32 %v6959, %v7156
      %v7181 = vadd.f32 %v6960, %v7158
      %v7182 = vadd.f32 %v6961, %v7161
      %v7183 = vadd.f32 %v6962, %v7163
      %v7184 = vadd.f32 %v6963, %v7166
      %v7185 = vadd.f32 %v6964, %v7168
      %v7186 = vld [vmem:[#allocation2 + $0x98] sm:$0xe]
      %v7187 = vld [vmem:[%s3992] sm:$0x3]
      %v7189 = vunpack.c.l.b16 %v7186
      %v7190 = vpack.c.b16 %v7001, %v7189
      %v7191 = vrot.slane %v7190, 1
      %v7192 = vrot.slane %v7018, 1
      %v7193 = vsel %vm2158, %v7191, %v7192
      %v7194 = vrot.slane %v7019, 1
      %v7195 = vsel %vm2158, %v7192, %v7194
      %v7196 = vrot.slane %v7020, 1
      %v7197 = vsel %vm2158, %v7194, %v7196
      %v7198 = vrot.slane %v7021, 1
      %v7199 = vsel %vm2158, %v7196, %v7198
      %v7200 = vrot.slane %v7022, 1
      %v7201 = vsel %vm2158, %v7198, %v7200
      %v7202 = vrot.slane %v7023, 1
      %v7203 = vsel %vm2158, %v7200, %v7202
      %v7204 = vrot.slane %v7024, 1
      %v7205 = vsel %vm2158, %v7202, %v7204
      %v7206 = vrot.slane %v7025, 1
      %v7207 = vsel %vm2158, %v7204, %v7206
      %v7209 = vsel %vm1886, %v7193, 0
      %v7212 = vsel %vm1886, %v7195, 0
      %v7215 = vsel %vm1886, %v7197, 0
      %v7218 = vsel %vm1886, %v7199, 0
      %v7221 = vsel %vm1886, %v7201, 0
      %v7224 = vsel %vm1886, %v7203, 0
      %v7227 = vsel %vm1886, %v7205, 0
      %v7230 = vsel %vm1886, %v7207, 0
      %v7233 = vsel %vm1935, %v7187, 0
      %7235 = vmatpush.bf16.msra.mxu0 0
      %7236 = vmatpush.bf16.msra.mxu0 0
      %7237 = vmatpush.bf16.msra.mxu0 0
      %7238 = vmatpush.bf16.msra.mxu0 0
      %7239 = vmatpush.bf16.msra.mxu0 0
      %7240 = vmatpush.bf16.msra.mxu0 0
      %7241 = vmatpush.bf16.msra.mxu0 0
      %7242 = vmatpush.bf16.msra.mxu0 %v7233
      %7243 = vmatmul.bf16.gmra.mxu0 %v7209
      %v7244 = vpop.f32.mrf.mxu0
      %v7245 = vadd.f32 0.0, %v7244
      %v7246 = vpop.f32.mrf.mxu0
      %v7247 = vadd.f32 0.0, %v7246
      %7248 = vmatmul.bf16.gmra.mxu0 %v7212
      %v7249 = vpop.f32.mrf.mxu0
      %v7250 = vadd.f32 0.0, %v7249
      %v7251 = vpop.f32.mrf.mxu0
      %v7252 = vadd.f32 0.0, %v7251
      %7253 = vmatmul.bf16.gmra.mxu0 %v7215
      %v7254 = vpop.f32.mrf.mxu0
      %v7255 = vadd.f32 0.0, %v7254
      %v7256 = vpop.f32.mrf.mxu0
      %v7257 = vadd.f32 0.0, %v7256
      %7258 = vmatmul.bf16.gmra.mxu0 %v7218
      %v7259 = vpop.f32.mrf.mxu0
      %v7260 = vadd.f32 0.0, %v7259
      %v7261 = vpop.f32.mrf.mxu0
      %v7262 = vadd.f32 0.0, %v7261
      %7263 = vmatmul.bf16.gmra.mxu0 %v7221
      %v7264 = vpop.f32.mrf.mxu0
      %v7265 = vadd.f32 0.0, %v7264
      %v7266 = vpop.f32.mrf.mxu0
      %v7267 = vadd.f32 0.0, %v7266
      %7268 = vmatmul.bf16.gmra.mxu0 %v7224
      %v7269 = vpop.f32.mrf.mxu0
      %v7270 = vadd.f32 0.0, %v7269
      %v7271 = vpop.f32.mrf.mxu0
      %v7272 = vadd.f32 0.0, %v7271
      %7273 = vmatmul.bf16.gmra.mxu0 %v7227
      %v7274 = vpop.f32.mrf.mxu0
      %v7275 = vadd.f32 0.0, %v7274
      %v7276 = vpop.f32.mrf.mxu0
      %v7277 = vadd.f32 0.0, %v7276
      %7278 = vmatmul.bf16.gmra.mxu0 %v7230
      %v7279 = vpop.f32.mrf.mxu0
      %v7280 = vadd.f32 0.0, %v7279
      %v7281 = vpop.f32.mrf.mxu0
      %v7282 = vadd.f32 0.0, %v7281
      %7283 = vdwg.mxu0
      %v7284 = vadd.f32 %v7170, %v7245
      %v7285 = vadd.f32 %v7171, %v7247
      %v7286 = vadd.f32 %v7172, %v7250
      %v7287 = vadd.f32 %v7173, %v7252
      %v7288 = vadd.f32 %v7174, %v7255
      %v7289 = vadd.f32 %v7175, %v7257
      %v7290 = vadd.f32 %v7176, %v7260
      %v7291 = vadd.f32 %v7177, %v7262
      %v7292 = vadd.f32 %v7178, %v7265
      %v7293 = vadd.f32 %v7179, %v7267
      %v7294 = vadd.f32 %v7180, %v7270
      %v7295 = vadd.f32 %v7181, %v7272
      %v7296 = vadd.f32 %v7182, %v7275
      %v7297 = vadd.f32 %v7183, %v7277
      %v7298 = vadd.f32 %v7184, %v7280
      %v7299 = vadd.f32 %v7185, %v7282
      %v7300 = vld [vmem:[%s3] sm:$0x1]
      %v7302 = vperm.slane %v7300, 0
      %v7304 = vmul.f32 %v7284, %v7302
      %v7305 = vmul.f32 %v7285, %v7302
      %v7306 = vmul.f32 %v7286, %v7302
      %v7307 = vmul.f32 %v7287, %v7302
      %v7308 = vmul.f32 %v7288, %v7302
      %v7309 = vmul.f32 %v7289, %v7302
      %v7310 = vmul.f32 %v7290, %v7302
      %v7311 = vmul.f32 %v7291, %v7302
      %v7312 = vmul.f32 %v7292, %v7302
      %v7313 = vmul.f32 %v7293, %v7302
      %v7314 = vmul.f32 %v7294, %v7302
      %v7315 = vmul.f32 %v7295, %v7302
      %v7316 = vmul.f32 %v7296, %v7302
      %v7317 = vmul.f32 %v7297, %v7302
      %v7318 = vmul.f32 %v7298, %v7302
      %v7319 = vmul.f32 %v7299, %v7302
      %v7320 = vld [vmem:[%s4] sm:$0x1]
      %v7322 = vperm.slane %v7320, 0
      %v7324 = vadd.f32 %v7304, %v7322
      %v7325 = vadd.f32 %v7305, %v7322
      %v7326 = vadd.f32 %v7306, %v7322
      %v7327 = vadd.f32 %v7307, %v7322
      %v7328 = vadd.f32 %v7308, %v7322
      %v7329 = vadd.f32 %v7309, %v7322
      %v7330 = vadd.f32 %v7310, %v7322
      %v7331 = vadd.f32 %v7311, %v7322
      %v7332 = vadd.f32 %v7312, %v7322
      %v7333 = vadd.f32 %v7313, %v7322
      %v7334 = vadd.f32 %v7314, %v7322
      %v7335 = vadd.f32 %v7315, %v7322
      %v7336 = vadd.f32 %v7316, %v7322
      %v7337 = vadd.f32 %v7317, %v7322
      %v7338 = vadd.f32 %v7318, %v7322
      %v7339 = vadd.f32 %v7319, %v7322
      %v7340 = vmax.f32 %v7324, 0.0
      %v7341 = vmax.f32 %v7325, 0.0
      %v7342 = vmax.f32 %v7326, 0.0
      %v7343 = vmax.f32 %v7327, 0.0
      %v7344 = vmax.f32 %v7328, 0.0
      %v7345 = vmax.f32 %v7329, 0.0
      %v7346 = vmax.f32 %v7330, 0.0
      %v7347 = vmax.f32 %v7331, 0.0
      %v7348 = vmax.f32 %v7332, 0.0
      %v7349 = vmax.f32 %v7333, 0.0
      %v7350 = vmax.f32 %v7334, 0.0
      %v7351 = vmax.f32 %v7335, 0.0
      %v7352 = vmax.f32 %v7336, 0.0
      %v7353 = vmax.f32 %v7337, 0.0
      %v7354 = vmax.f32 %v7338, 0.0
      %v7355 = vmax.f32 %v7339, 0.0
      %v7356 = vadd.s32 %v4307, 256
      %v7357 = vadd.s32 %v4308, 256
      %v7358 = vadd.s32 %v4309, 256
      %v7359 = vadd.s32 %v4310, 256
      %v7360 = vadd.s32 %v4311, 256
      %v7361 = vadd.s32 %v4312, 256
      %v7362 = vadd.s32 %v4313, 256
      %v7363 = vadd.s32 %v4314, 256
      %v7364 = vadd.s32 %v4315, 256
      %v7365 = vadd.s32 %v4316, 256
      %v7366 = vadd.s32 %v4317, 256
      %v7367 = vadd.s32 %v4318, 256
      %v7368 = vadd.s32 %v4319, 256
      %v7369 = vadd.s32 %v4320, 256
      %v7370 = vadd.s32 %v4321, 256
      %v7371 = vadd.s32 %v4322, 256
      %vm7372 = vcmp.lt.s32.totalorder %v7356, 0
      %v7373 = vsub.s32 0, %v7356
      %v7374 = vsel %vm7372, %v7373, %v7356
      %v7375 = vand.u32 %v7374, 65535
      %v7376 = vshrl.u32 %v7374, 16
      %v7378 = vmul.u32 %v7375, 43691
      %v7379 = vmul.u32 %v7375, 43690
      %v7380 = vmul.u32 %v7376, 43691
      %v7381 = vmul.u32 %v7376, 43690
      %v7382 = vshll.u32 %v7379, 16
      %v7383 = vshrl.u32 %v7379, 16
      %v7384 = vshll.u32 %v7380, 16
      %v7385 = vshrl.u32 %v7380, 16
      %vm7386 = vc.u32 %v7378, %v7382
      %v7387 = vsel %vm7386, 1, 0
      %v7388 = vadd.s32 %v7378, %v7382
      %v7389 = vadd.s32 %v7381, %v7387
      %vm7390 = vc.u32 %v7388, %v7384
      %v7391 = vsel %vm7390, 1, 0
      %v7392 = vadd.s32 %v7388, %v7384
      %v7393 = vadd.s32 %v7389, %v7391
      %v7394 = vadd.s32 %v7393, %v7383
      %v7395 = vadd.s32 %v7394, %v7385
      %v7396 = vshrl.u32 %v7395, 4
      %v7397 = vmul.u32 %v7396, 24
      %v7398 = vsub.s32 %v7374, %v7397
      %v7399 = vsub.s32 0, %v7398
      %v7400 = vsel %vm7372, %v7399, %v7398
      %vm7401 = vcmp.lt.s32.totalorder %v7357, 0
      %v7402 = vsub.s32 0, %v7357
      %v7403 = vsel %vm7401, %v7402, %v7357
      %v7404 = vand.u32 %v7403, 65535
      %v7405 = vshrl.u32 %v7403, 16
      %v7407 = vmul.u32 %v7404, 43691
      %v7408 = vmul.u32 %v7404, 43690
      %v7409 = vmul.u32 %v7405, 43691
      %v7410 = vmul.u32 %v7405, 43690
      %v7411 = vshll.u32 %v7408, 16
      %v7412 = vshrl.u32 %v7408, 16
      %v7413 = vshll.u32 %v7409, 16
      %v7414 = vshrl.u32 %v7409, 16
      %vm7415 = vc.u32 %v7407, %v7411
      %v7416 = vsel %vm7415, 1, 0
      %v7417 = vadd.s32 %v7407, %v7411
      %v7418 = vadd.s32 %v7410, %v7416
      %vm7419 = vc.u32 %v7417, %v7413
      %v7420 = vsel %vm7419, 1, 0
      %v7421 = vadd.s32 %v7417, %v7413
      %v7422 = vadd.s32 %v7418, %v7420
      %v7423 = vadd.s32 %v7422, %v7412
      %v7424 = vadd.s32 %v7423, %v7414
      %v7425 = vshrl.u32 %v7424, 4
      %v7426 = vmul.u32 %v7425, 24
      %v7427 = vsub.s32 %v7403, %v7426
      %v7428 = vsub.s32 0, %v7427
      %v7429 = vsel %vm7401, %v7428, %v7427
      %vm7430 = vcmp.lt.s32.totalorder %v7358, 0
      %v7431 = vsub.s32 0, %v7358
      %v7432 = vsel %vm7430, %v7431, %v7358
      %v7433 = vand.u32 %v7432, 65535
      %v7434 = vshrl.u32 %v7432, 16
      %v7436 = vmul.u32 %v7433, 43691
      %v7437 = vmul.u32 %v7433, 43690
      %v7438 = vmul.u32 %v7434, 43691
      %v7439 = vmul.u32 %v7434, 43690
      %v7440 = vshll.u32 %v7437, 16
      %v7441 = vshrl.u32 %v7437, 16
      %v7442 = vshll.u32 %v7438, 16
      %v7443 = vshrl.u32 %v7438, 16
      %vm7444 = vc.u32 %v7436, %v7440
      %v7445 = vsel %vm7444, 1, 0
      %v7446 = vadd.s32 %v7436, %v7440
      %v7447 = vadd.s32 %v7439, %v7445
      %vm7448 = vc.u32 %v7446, %v7442
      %v7449 = vsel %vm7448, 1, 0
      %v7450 = vadd.s32 %v7446, %v7442
      %v7451 = vadd.s32 %v7447, %v7449
      %v7452 = vadd.s32 %v7451, %v7441
      %v7453 = vadd.s32 %v7452, %v7443
      %v7454 = vshrl.u32 %v7453, 4
      %v7455 = vmul.u32 %v7454, 24
      %v7456 = vsub.s32 %v7432, %v7455
      %v7457 = vsub.s32 0, %v7456
      %v7458 = vsel %vm7430, %v7457, %v7456
      %vm7459 = vcmp.lt.s32.totalorder %v7359, 0
      %v7460 = vsub.s32 0, %v7359
      %v7461 = vsel %vm7459, %v7460, %v7359
      %v7462 = vand.u32 %v7461, 65535
      %v7463 = vshrl.u32 %v7461, 16
      %v7465 = vmul.u32 %v7462, 43691
      %v7466 = vmul.u32 %v7462, 43690
      %v7467 = vmul.u32 %v7463, 43691
      %v7468 = vmul.u32 %v7463, 43690
      %v7469 = vshll.u32 %v7466, 16
      %v7470 = vshrl.u32 %v7466, 16
      %v7471 = vshll.u32 %v7467, 16
      %v7472 = vshrl.u32 %v7467, 16
      %vm7473 = vc.u32 %v7465, %v7469
      %v7474 = vsel %vm7473, 1, 0
      %v7475 = vadd.s32 %v7465, %v7469
      %v7476 = vadd.s32 %v7468, %v7474
      %vm7477 = vc.u32 %v7475, %v7471
      %v7478 = vsel %vm7477, 1, 0
      %v7479 = vadd.s32 %v7475, %v7471
      %v7480 = vadd.s32 %v7476, %v7478
      %v7481 = vadd.s32 %v7480, %v7470
      %v7482 = vadd.s32 %v7481, %v7472
      %v7483 = vshrl.u32 %v7482, 4
      %v7484 = vmul.u32 %v7483, 24
      %v7485 = vsub.s32 %v7461, %v7484
      %v7486 = vsub.s32 0, %v7485
      %v7487 = vsel %vm7459, %v7486, %v7485
      %vm7488 = vcmp.lt.s32.totalorder %v7360, 0
      %v7489 = vsub.s32 0, %v7360
      %v7490 = vsel %vm7488, %v7489, %v7360
      %v7491 = vand.u32 %v7490, 65535
      %v7492 = vshrl.u32 %v7490, 16
      %v7494 = vmul.u32 %v7491, 43691
      %v7495 = vmul.u32 %v7491, 43690
      %v7496 = vmul.u32 %v7492, 43691
      %v7497 = vmul.u32 %v7492, 43690
      %v7498 = vshll.u32 %v7495, 16
      %v7499 = vshrl.u32 %v7495, 16
      %v7500 = vshll.u32 %v7496, 16
      %v7501 = vshrl.u32 %v7496, 16
      %vm7502 = vc.u32 %v7494, %v7498
      %v7503 = vsel %vm7502, 1, 0
      %v7504 = vadd.s32 %v7494, %v7498
      %v7505 = vadd.s32 %v7497, %v7503
      %vm7506 = vc.u32 %v7504, %v7500
      %v7507 = vsel %vm7506, 1, 0
      %v7508 = vadd.s32 %v7504, %v7500
      %v7509 = vadd.s32 %v7505, %v7507
      %v7510 = vadd.s32 %v7509, %v7499
      %v7511 = vadd.s32 %v7510, %v7501
      %v7512 = vshrl.u32 %v7511, 4
      %v7513 = vmul.u32 %v7512, 24
      %v7514 = vsub.s32 %v7490, %v7513
      %v7515 = vsub.s32 0, %v7514
      %v7516 = vsel %vm7488, %v7515, %v7514
      %vm7517 = vcmp.lt.s32.totalorder %v7361, 0
      %v7518 = vsub.s32 0, %v7361
      %v7519 = vsel %vm7517, %v7518, %v7361
      %v7520 = vand.u32 %v7519, 65535
      %v7521 = vshrl.u32 %v7519, 16
      %v7523 = vmul.u32 %v7520, 43691
      %v7524 = vmul.u32 %v7520, 43690
      %v7525 = vmul.u32 %v7521, 43691
      %v7526 = vmul.u32 %v7521, 43690
      %v7527 = vshll.u32 %v7524, 16
      %v7528 = vshrl.u32 %v7524, 16
      %v7529 = vshll.u32 %v7525, 16
      %v7530 = vshrl.u32 %v7525, 16
      %vm7531 = vc.u32 %v7523, %v7527
      %v7532 = vsel %vm7531, 1, 0
      %v7533 = vadd.s32 %v7523, %v7527
      %v7534 = vadd.s32 %v7526, %v7532
      %vm7535 = vc.u32 %v7533, %v7529
      %v7536 = vsel %vm7535, 1, 0
      %v7537 = vadd.s32 %v7533, %v7529
      %v7538 = vadd.s32 %v7534, %v7536
      %v7539 = vadd.s32 %v7538, %v7528
      %v7540 = vadd.s32 %v7539, %v7530
      %v7541 = vshrl.u32 %v7540, 4
      %v7542 = vmul.u32 %v7541, 24
      %v7543 = vsub.s32 %v7519, %v7542
      %v7544 = vsub.s32 0, %v7543
      %v7545 = vsel %vm7517, %v7544, %v7543
      %vm7546 = vcmp.lt.s32.totalorder %v7362, 0
      %v7547 = vsub.s32 0, %v7362
      %v7548 = vsel %vm7546, %v7547, %v7362
      %v7549 = vand.u32 %v7548, 65535
      %v7550 = vshrl.u32 %v7548, 16
      %v7552 = vmul.u32 %v7549, 43691
      %v7553 = vmul.u32 %v7549, 43690
      %v7554 = vmul.u32 %v7550, 43691
      %v7555 = vmul.u32 %v7550, 43690
      %v7556 = vshll.u32 %v7553, 16
      %v7557 = vshrl.u32 %v7553, 16
      %v7558 = vshll.u32 %v7554, 16
      %v7559 = vshrl.u32 %v7554, 16
      %vm7560 = vc.u32 %v7552, %v7556
      %v7561 = vsel %vm7560, 1, 0
      %v7562 = vadd.s32 %v7552, %v7556
      %v7563 = vadd.s32 %v7555, %v7561
      %vm7564 = vc.u32 %v7562, %v7558
      %v7565 = vsel %vm7564, 1, 0
      %v7566 = vadd.s32 %v7562, %v7558
      %v7567 = vadd.s32 %v7563, %v7565
      %v7568 = vadd.s32 %v7567, %v7557
      %v7569 = vadd.s32 %v7568, %v7559
      %v7570 = vshrl.u32 %v7569, 4
      %v7571 = vmul.u32 %v7570, 24
      %v7572 = vsub.s32 %v7548, %v7571
      %v7573 = vsub.s32 0, %v7572
      %v7574 = vsel %vm7546, %v7573, %v7572
      %vm7575 = vcmp.lt.s32.totalorder %v7363, 0
      %v7576 = vsub.s32 0, %v7363
      %v7577 = vsel %vm7575, %v7576, %v7363
      %v7578 = vand.u32 %v7577, 65535
      %v7579 = vshrl.u32 %v7577, 16
      %v7581 = vmul.u32 %v7578, 43691
      %v7582 = vmul.u32 %v7578, 43690
      %v7583 = vmul.u32 %v7579, 43691
      %v7584 = vmul.u32 %v7579, 43690
      %v7585 = vshll.u32 %v7582, 16
      %v7586 = vshrl.u32 %v7582, 16
      %v7587 = vshll.u32 %v7583, 16
      %v7588 = vshrl.u32 %v7583, 16
      %vm7589 = vc.u32 %v7581, %v7585
      %v7590 = vsel %vm7589, 1, 0
      %v7591 = vadd.s32 %v7581, %v7585
      %v7592 = vadd.s32 %v7584, %v7590
      %vm7593 = vc.u32 %v7591, %v7587
      %v7594 = vsel %vm7593, 1, 0
      %v7595 = vadd.s32 %v7591, %v7587
      %v7596 = vadd.s32 %v7592, %v7594
      %v7597 = vadd.s32 %v7596, %v7586
      %v7598 = vadd.s32 %v7597, %v7588
      %v7599 = vshrl.u32 %v7598, 4
      %v7600 = vmul.u32 %v7599, 24
      %v7601 = vsub.s32 %v7577, %v7600
      %v7602 = vsub.s32 0, %v7601
      %v7603 = vsel %vm7575, %v7602, %v7601
      %vm7604 = vcmp.lt.s32.totalorder %v7364, 0
      %v7605 = vsub.s32 0, %v7364
      %v7606 = vsel %vm7604, %v7605, %v7364
      %v7607 = vand.u32 %v7606, 65535
      %v7608 = vshrl.u32 %v7606, 16
      %v7610 = vmul.u32 %v7607, 43691
      %v7611 = vmul.u32 %v7607, 43690
      %v7612 = vmul.u32 %v7608, 43691
      %v7613 = vmul.u32 %v7608, 43690
      %v7614 = vshll.u32 %v7611, 16
      %v7615 = vshrl.u32 %v7611, 16
      %v7616 = vshll.u32 %v7612, 16
      %v7617 = vshrl.u32 %v7612, 16
      %vm7618 = vc.u32 %v7610, %v7614
      %v7619 = vsel %vm7618, 1, 0
      %v7620 = vadd.s32 %v7610, %v7614
      %v7621 = vadd.s32 %v7613, %v7619
      %vm7622 = vc.u32 %v7620, %v7616
      %v7623 = vsel %vm7622, 1, 0
      %v7624 = vadd.s32 %v7620, %v7616
      %v7625 = vadd.s32 %v7621, %v7623
      %v7626 = vadd.s32 %v7625, %v7615
      %v7627 = vadd.s32 %v7626, %v7617
      %v7628 = vshrl.u32 %v7627, 4
      %v7629 = vmul.u32 %v7628, 24
      %v7630 = vsub.s32 %v7606, %v7629
      %v7631 = vsub.s32 0, %v7630
      %v7632 = vsel %vm7604, %v7631, %v7630
      %vm7633 = vcmp.lt.s32.totalorder %v7365, 0
      %v7634 = vsub.s32 0, %v7365
      %v7635 = vsel %vm7633, %v7634, %v7365
      %v7636 = vand.u32 %v7635, 65535
      %v7637 = vshrl.u32 %v7635, 16
      %v7639 = vmul.u32 %v7636, 43691
      %v7640 = vmul.u32 %v7636, 43690
      %v7641 = vmul.u32 %v7637, 43691
      %v7642 = vmul.u32 %v7637, 43690
      %v7643 = vshll.u32 %v7640, 16
      %v7644 = vshrl.u32 %v7640, 16
      %v7645 = vshll.u32 %v7641, 16
      %v7646 = vshrl.u32 %v7641, 16
      %vm7647 = vc.u32 %v7639, %v7643
      %v7648 = vsel %vm7647, 1, 0
      %v7649 = vadd.s32 %v7639, %v7643
      %v7650 = vadd.s32 %v7642, %v7648
      %vm7651 = vc.u32 %v7649, %v7645
      %v7652 = vsel %vm7651, 1, 0
      %v7653 = vadd.s32 %v7649, %v7645
      %v7654 = vadd.s32 %v7650, %v7652
      %v7655 = vadd.s32 %v7654, %v7644
      %v7656 = vadd.s32 %v7655, %v7646
      %v7657 = vshrl.u32 %v7656, 4
      %v7658 = vmul.u32 %v7657, 24
      %v7659 = vsub.s32 %v7635, %v7658
      %v7660 = vsub.s32 0, %v7659
      %v7661 = vsel %vm7633, %v7660, %v7659
      %vm7662 = vcmp.lt.s32.totalorder %v7366, 0
      %v7663 = vsub.s32 0, %v7366
      %v7664 = vsel %vm7662, %v7663, %v7366
      %v7665 = vand.u32 %v7664, 65535
      %v7666 = vshrl.u32 %v7664, 16
      %v7668 = vmul.u32 %v7665, 43691
      %v7669 = vmul.u32 %v7665, 43690
      %v7670 = vmul.u32 %v7666, 43691
      %v7671 = vmul.u32 %v7666, 43690
      %v7672 = vshll.u32 %v7669, 16
      %v7673 = vshrl.u32 %v7669, 16
      %v7674 = vshll.u32 %v7670, 16
      %v7675 = vshrl.u32 %v7670, 16
      %vm7676 = vc.u32 %v7668, %v7672
      %v7677 = vsel %vm7676, 1, 0
      %v7678 = vadd.s32 %v7668, %v7672
      %v7679 = vadd.s32 %v7671, %v7677
      %vm7680 = vc.u32 %v7678, %v7674
      %v7681 = vsel %vm7680, 1, 0
      %v7682 = vadd.s32 %v7678, %v7674
      %v7683 = vadd.s32 %v7679, %v7681
      %v7684 = vadd.s32 %v7683, %v7673
      %v7685 = vadd.s32 %v7684, %v7675
      %v7686 = vshrl.u32 %v7685, 4
      %v7687 = vmul.u32 %v7686, 24
      %v7688 = vsub.s32 %v7664, %v7687
      %v7689 = vsub.s32 0, %v7688
      %v7690 = vsel %vm7662, %v7689, %v7688
      %vm7691 = vcmp.lt.s32.totalorder %v7367, 0
      %v7692 = vsub.s32 0, %v7367
      %v7693 = vsel %vm7691, %v7692, %v7367
      %v7694 = vand.u32 %v7693, 65535
      %v7695 = vshrl.u32 %v7693, 16
      %v7697 = vmul.u32 %v7694, 43691
      %v7698 = vmul.u32 %v7694, 43690
      %v7699 = vmul.u32 %v7695, 43691
      %v7700 = vmul.u32 %v7695, 43690
      %v7701 = vshll.u32 %v7698, 16
      %v7702 = vshrl.u32 %v7698, 16
      %v7703 = vshll.u32 %v7699, 16
      %v7704 = vshrl.u32 %v7699, 16
      %vm7705 = vc.u32 %v7697, %v7701
      %v7706 = vsel %vm7705, 1, 0
      %v7707 = vadd.s32 %v7697, %v7701
      %v7708 = vadd.s32 %v7700, %v7706
      %vm7709 = vc.u32 %v7707, %v7703
      %v7710 = vsel %vm7709, 1, 0
      %v7711 = vadd.s32 %v7707, %v7703
      %v7712 = vadd.s32 %v7708, %v7710
      %v7713 = vadd.s32 %v7712, %v7702
      %v7714 = vadd.s32 %v7713, %v7704
      %v7715 = vshrl.u32 %v7714, 4
      %v7716 = vmul.u32 %v7715, 24
      %v7717 = vsub.s32 %v7693, %v7716
      %v7718 = vsub.s32 0, %v7717
      %v7719 = vsel %vm7691, %v7718, %v7717
      %vm7720 = vcmp.lt.s32.totalorder %v7368, 0
      %v7721 = vsub.s32 0, %v7368
      %v7722 = vsel %vm7720, %v7721, %v7368
      %v7723 = vand.u32 %v7722, 65535
      %v7724 = vshrl.u32 %v7722, 16
      %v7726 = vmul.u32 %v7723, 43691
      %v7727 = vmul.u32 %v7723, 43690
      %v7728 = vmul.u32 %v7724, 43691
      %v7729 = vmul.u32 %v7724, 43690
      %v7730 = vshll.u32 %v7727, 16
      %v7731 = vshrl.u32 %v7727, 16
      %v7732 = vshll.u32 %v7728, 16
      %v7733 = vshrl.u32 %v7728, 16
      %vm7734 = vc.u32 %v7726, %v7730
      %v7735 = vsel %vm7734, 1, 0
      %v7736 = vadd.s32 %v7726, %v7730
      %v7737 = vadd.s32 %v7729, %v7735
      %vm7738 = vc.u32 %v7736, %v7732
      %v7739 = vsel %vm7738, 1, 0
      %v7740 = vadd.s32 %v7736, %v7732
      %v7741 = vadd.s32 %v7737, %v7739
      %v7742 = vadd.s32 %v7741, %v7731
      %v7743 = vadd.s32 %v7742, %v7733
      %v7744 = vshrl.u32 %v7743, 4
      %v7745 = vmul.u32 %v7744, 24
      %v7746 = vsub.s32 %v7722, %v7745
      %v7747 = vsub.s32 0, %v7746
      %v7748 = vsel %vm7720, %v7747, %v7746
      %vm7749 = vcmp.lt.s32.totalorder %v7369, 0
      %v7750 = vsub.s32 0, %v7369
      %v7751 = vsel %vm7749, %v7750, %v7369
      %v7752 = vand.u32 %v7751, 65535
      %v7753 = vshrl.u32 %v7751, 16
      %v7755 = vmul.u32 %v7752, 43691
      %v7756 = vmul.u32 %v7752, 43690
      %v7757 = vmul.u32 %v7753, 43691
      %v7758 = vmul.u32 %v7753, 43690
      %v7759 = vshll.u32 %v7756, 16
      %v7760 = vshrl.u32 %v7756, 16
      %v7761 = vshll.u32 %v7757, 16
      %v7762 = vshrl.u32 %v7757, 16
      %vm7763 = vc.u32 %v7755, %v7759
      %v7764 = vsel %vm7763, 1, 0
      %v7765 = vadd.s32 %v7755, %v7759
      %v7766 = vadd.s32 %v7758, %v7764
      %vm7767 = vc.u32 %v7765, %v7761
      %v7768 = vsel %vm7767, 1, 0
      %v7769 = vadd.s32 %v7765, %v7761
      %v7770 = vadd.s32 %v7766, %v7768
      %v7771 = vadd.s32 %v7770, %v7760
      %v7772 = vadd.s32 %v7771, %v7762
      %v7773 = vshrl.u32 %v7772, 4
      %v7774 = vmul.u32 %v7773, 24
      %v7775 = vsub.s32 %v7751, %v7774
      %v7776 = vsub.s32 0, %v7775
      %v7777 = vsel %vm7749, %v7776, %v7775
      %vm7778 = vcmp.lt.s32.totalorder %v7370, 0
      %v7779 = vsub.s32 0, %v7370
      %v7780 = vsel %vm7778, %v7779, %v7370
      %v7781 = vand.u32 %v7780, 65535
      %v7782 = vshrl.u32 %v7780, 16
      %v7784 = vmul.u32 %v7781, 43691
      %v7785 = vmul.u32 %v7781, 43690
      %v7786 = vmul.u32 %v7782, 43691
      %v7787 = vmul.u32 %v7782, 43690
      %v7788 = vshll.u32 %v7785, 16
      %v7789 = vshrl.u32 %v7785, 16
      %v7790 = vshll.u32 %v7786, 16
      %v7791 = vshrl.u32 %v7786, 16
      %vm7792 = vc.u32 %v7784, %v7788
      %v7793 = vsel %vm7792, 1, 0
      %v7794 = vadd.s32 %v7784, %v7788
      %v7795 = vadd.s32 %v7787, %v7793
      %vm7796 = vc.u32 %v7794, %v7790
      %v7797 = vsel %vm7796, 1, 0
      %v7798 = vadd.s32 %v7794, %v7790
      %v7799 = vadd.s32 %v7795, %v7797
      %v7800 = vadd.s32 %v7799, %v7789
      %v7801 = vadd.s32 %v7800, %v7791
      %v7802 = vshrl.u32 %v7801, 4
      %v7803 = vmul.u32 %v7802, 24
      %v7804 = vsub.s32 %v7780, %v7803
      %v7805 = vsub.s32 0, %v7804
      %v7806 = vsel %vm7778, %v7805, %v7804
      %vm7807 = vcmp.lt.s32.totalorder %v7371, 0
      %v7808 = vsub.s32 0, %v7371
      %v7809 = vsel %vm7807, %v7808, %v7371
      %v7810 = vand.u32 %v7809, 65535
      %v7811 = vshrl.u32 %v7809, 16
      %v7813 = vmul.u32 %v7810, 43691
      %v7814 = vmul.u32 %v7810, 43690
      %v7815 = vmul.u32 %v7811, 43691
      %v7816 = vmul.u32 %v7811, 43690
      %v7817 = vshll.u32 %v7814, 16
      %v7818 = vshrl.u32 %v7814, 16
      %v7819 = vshll.u32 %v7815, 16
      %v7820 = vshrl.u32 %v7815, 16
      %vm7821 = vc.u32 %v7813, %v7817
      %v7822 = vsel %vm7821, 1, 0
      %v7823 = vadd.s32 %v7813, %v7817
      %v7824 = vadd.s32 %v7816, %v7822
      %vm7825 = vc.u32 %v7823, %v7819
      %v7826 = vsel %vm7825, 1, 0
      %v7827 = vadd.s32 %v7823, %v7819
      %v7828 = vadd.s32 %v7824, %v7826
      %v7829 = vadd.s32 %v7828, %v7818
      %v7830 = vadd.s32 %v7829, %v7820
      %v7831 = vshrl.u32 %v7830, 4
      %v7832 = vmul.u32 %v7831, 24
      %v7833 = vsub.s32 %v7809, %v7832
      %v7834 = vsub.s32 0, %v7833
      %v7835 = vsel %vm7807, %v7834, %v7833
      %vm7836 = vcmp.ne.s32.totalorder %v7400, 0
      %vm7837 = vcmp.ne.s32.totalorder %v7429, 0
      %vm7838 = vcmp.ne.s32.totalorder %v7458, 0
      %vm7839 = vcmp.ne.s32.totalorder %v7487, 0
      %vm7840 = vcmp.ne.s32.totalorder %v7516, 0
      %vm7841 = vcmp.ne.s32.totalorder %v7545, 0
      %vm7842 = vcmp.ne.s32.totalorder %v7574, 0
      %vm7843 = vcmp.ne.s32.totalorder %v7603, 0
      %vm7844 = vcmp.ne.s32.totalorder %v7632, 0
      %vm7845 = vcmp.ne.s32.totalorder %v7661, 0
      %vm7846 = vcmp.ne.s32.totalorder %v7690, 0
      %vm7847 = vcmp.ne.s32.totalorder %v7719, 0
      %vm7848 = vcmp.ne.s32.totalorder %v7748, 0
      %vm7849 = vcmp.ne.s32.totalorder %v7777, 0
      %vm7850 = vcmp.ne.s32.totalorder %v7806, 0
      %vm7851 = vcmp.ne.s32.totalorder %v7835, 0
      %vm7852 = vcmp.lt.s32.totalorder %v7400, 0
      %vm7853 = vcmp.lt.s32.totalorder %v7429, 0
      %vm7854 = vcmp.lt.s32.totalorder %v7458, 0
      %vm7855 = vcmp.lt.s32.totalorder %v7487, 0
      %vm7856 = vcmp.lt.s32.totalorder %v7516, 0
      %vm7857 = vcmp.lt.s32.totalorder %v7545, 0
      %vm7858 = vcmp.lt.s32.totalorder %v7574, 0
      %vm7859 = vcmp.lt.s32.totalorder %v7603, 0
      %vm7860 = vcmp.lt.s32.totalorder %v7632, 0
      %vm7861 = vcmp.lt.s32.totalorder %v7661, 0
      %vm7862 = vcmp.lt.s32.totalorder %v7690, 0
      %vm7863 = vcmp.lt.s32.totalorder %v7719, 0
      %vm7864 = vcmp.lt.s32.totalorder %v7748, 0
      %vm7865 = vcmp.lt.s32.totalorder %v7777, 0
      %vm7866 = vcmp.lt.s32.totalorder %v7806, 0
      %vm7867 = vcmp.lt.s32.totalorder %v7835, 0
      %vm7868 = vmand %vm7852, %vm7836
      %vm7869 = vmand %vm7853, %vm7837
      %vm7870 = vmand %vm7854, %vm7838
      %vm7871 = vmand %vm7855, %vm7839
      %vm7872 = vmand %vm7856, %vm7840
      %vm7873 = vmand %vm7857, %vm7841
      %vm7874 = vmand %vm7858, %vm7842
      %vm7875 = vmand %vm7859, %vm7843
      %vm7876 = vmand %vm7860, %vm7844
      %vm7877 = vmand %vm7861, %vm7845
      %vm7878 = vmand %vm7862, %vm7846
      %vm7879 = vmand %vm7863, %vm7847
      %vm7880 = vmand %vm7864, %vm7848
      %vm7881 = vmand %vm7865, %vm7849
      %vm7882 = vmand %vm7866, %vm7850
      %vm7883 = vmand %vm7867, %vm7851
      %v7884 = vadd.s32 %v7400, 24
      %v7885 = vadd.s32 %v7429, 24
      %v7886 = vadd.s32 %v7458, 24
      %v7887 = vadd.s32 %v7487, 24
      %v7888 = vadd.s32 %v7516, 24
      %v7889 = vadd.s32 %v7545, 24
      %v7890 = vadd.s32 %v7574, 24
      %v7891 = vadd.s32 %v7603, 24
      %v7892 = vadd.s32 %v7632, 24
      %v7893 = vadd.s32 %v7661, 24
      %v7894 = vadd.s32 %v7690, 24
      %v7895 = vadd.s32 %v7719, 24
      %v7896 = vadd.s32 %v7748, 24
      %v7897 = vadd.s32 %v7777, 24
      %v7898 = vadd.s32 %v7806, 24
      %v7899 = vadd.s32 %v7835, 24
      %v7900 = vsel %vm7868, %v7884, %v7400
      %v7901 = vsel %vm7869, %v7885, %v7429
      %v7902 = vsel %vm7870, %v7886, %v7458
      %v7903 = vsel %vm7871, %v7887, %v7487
      %v7904 = vsel %vm7872, %v7888, %v7516
      %v7905 = vsel %vm7873, %v7889, %v7545
      %v7906 = vsel %vm7874, %v7890, %v7574
      %v7907 = vsel %vm7875, %v7891, %v7603
      %v7908 = vsel %vm7876, %v7892, %v7632
      %v7909 = vsel %vm7877, %v7893, %v7661
      %v7910 = vsel %vm7878, %v7894, %v7690
      %v7911 = vsel %vm7879, %v7895, %v7719
      %v7912 = vsel %vm7880, %v7896, %v7748
      %v7913 = vsel %vm7881, %v7897, %v7777
      %v7914 = vsel %vm7882, %v7898, %v7806
      %v7915 = vsel %vm7883, %v7899, %v7835
      %vm7916 = vcmp.lt.s32.totalorder %v7900, 16
      %vm7917 = vcmp.lt.s32.totalorder %v7901, 16
      %vm7918 = vcmp.lt.s32.totalorder %v7902, 16
      %vm7919 = vcmp.lt.s32.totalorder %v7903, 16
      %vm7920 = vcmp.lt.s32.totalorder %v7904, 16
      %vm7921 = vcmp.lt.s32.totalorder %v7905, 16
      %vm7922 = vcmp.lt.s32.totalorder %v7906, 16
      %vm7923 = vcmp.lt.s32.totalorder %v7907, 16
      %vm7924 = vcmp.lt.s32.totalorder %v7908, 16
      %vm7925 = vcmp.lt.s32.totalorder %v7909, 16
      %vm7926 = vcmp.lt.s32.totalorder %v7910, 16
      %vm7927 = vcmp.lt.s32.totalorder %v7911, 16
      %vm7928 = vcmp.lt.s32.totalorder %v7912, 16
      %vm7929 = vcmp.lt.s32.totalorder %v7913, 16
      %vm7930 = vcmp.lt.s32.totalorder %v7914, 16
      %vm7931 = vcmp.lt.s32.totalorder %v7915, 16
      %v7932 = vsel %vm7916, 1, 0
      %v7933 = vsel %vm7917, 1, 0
      %v7934 = vsel %vm7918, 1, 0
      %v7935 = vsel %vm7919, 1, 0
      %v7936 = vsel %vm7920, 1, 0
      %v7937 = vsel %vm7921, 1, 0
      %v7938 = vsel %vm7922, 1, 0
      %v7939 = vsel %vm7923, 1, 0
      %v7940 = vsel %vm7924, 1, 0
      %v7941 = vsel %vm7925, 1, 0
      %v7942 = vsel %vm7926, 1, 0
      %v7943 = vsel %vm7927, 1, 0
      %v7944 = vsel %vm7928, 1, 0
      %v7945 = vsel %vm7929, 1, 0
      %v7946 = vsel %vm7930, 1, 0
      %v7947 = vsel %vm7931, 1, 0
      %v7948 = vcvt.s32.f32 %v7932
      %v7949 = vcvt.s32.f32 %v7933
      %v7950 = vcvt.s32.f32 %v7934
      %v7951 = vcvt.s32.f32 %v7935
      %v7952 = vcvt.s32.f32 %v7936
      %v7953 = vcvt.s32.f32 %v7937
      %v7954 = vcvt.s32.f32 %v7938
      %v7955 = vcvt.s32.f32 %v7939
      %v7956 = vcvt.s32.f32 %v7940
      %v7957 = vcvt.s32.f32 %v7941
      %v7958 = vcvt.s32.f32 %v7942
      %v7959 = vcvt.s32.f32 %v7943
      %v7960 = vcvt.s32.f32 %v7944
      %v7961 = vcvt.s32.f32 %v7945
      %v7962 = vcvt.s32.f32 %v7946
      %v7963 = vcvt.s32.f32 %v7947
      %v7964 = vmul.f32 %v7340, %v7948
      %v7965 = vmul.f32 %v7341, %v7949
      %v7966 = vmul.f32 %v7342, %v7950
      %v7967 = vmul.f32 %v7343, %v7951
      %v7968 = vmul.f32 %v7344, %v7952
      %v7969 = vmul.f32 %v7345, %v7953
      %v7970 = vmul.f32 %v7346, %v7954
      %v7971 = vmul.f32 %v7347, %v7955
      %v7972 = vmul.f32 %v7348, %v7956
      %v7973 = vmul.f32 %v7349, %v7957
      %v7974 = vmul.f32 %v7350, %v7958
      %v7975 = vmul.f32 %v7351, %v7959
      %v7976 = vmul.f32 %v7352, %v7960
      %v7977 = vmul.f32 %v7353, %v7961
      %v7978 = vmul.f32 %v7354, %v7962
      %v7979 = vmul.f32 %v7355, %v7963
      %v7980 = vpack.c.bf16 %v7964, %v7964
      %v7981 = vpack.c.bf16 %v7965, %v7965
      %v7982 = vpack.c.bf16 %v7966, %v7966
      %v7983 = vpack.c.bf16 %v7967, %v7967
      %v7984 = vpack.c.bf16 %v7968, %v7968
      %v7985 = vpack.c.bf16 %v7969, %v7969
      %v7986 = vpack.c.bf16 %v7970, %v7970
      %v7987 = vpack.c.bf16 %v7971, %v7971
      %v7988 = vpack.c.bf16 %v7972, %v7972
      %v7989 = vpack.c.bf16 %v7973, %v7973
      %v7990 = vpack.c.bf16 %v7974, %v7974
      %v7991 = vpack.c.bf16 %v7975, %v7975
      %v7992 = vpack.c.bf16 %v7976, %v7976
      %v7993 = vpack.c.bf16 %v7977, %v7977
      %v7994 = vpack.c.bf16 %v7978, %v7978
      %v7995 = vpack.c.bf16 %v7979, %v7979
      %v7997 = vshrl.u32 %v7980, 16
      %v7999 = vrot.slane %v7997, 7
      %v8000 = vshll.u32 %v7980, 16
      %v8002 = vor.u32 %v7999, %v8000
      %v8003 = vrot.slane %v7999, 4
      %v8005 = vshrl.u32 %v7981, 16
      %v8007 = vrot.slane %v8005, 7
      %v8008 = vshll.u32 %v7981, 16
      %v8010 = vor.u32 %v8007, %v8008
      %v8011 = vsel %vm395, %v8003, %v8010
      %v8012 = vrot.slane %v8007, 4
      %v8014 = vshrl.u32 %v7982, 16
      %v8016 = vrot.slane %v8014, 7
      %v8017 = vshll.u32 %v7982, 16
      %v8019 = vor.u32 %v8016, %v8017
      %v8020 = vsel %vm395, %v8012, %v8019
      %v8021 = vrot.slane %v8016, 4
      %v8023 = vshrl.u32 %v7983, 16
      %v8025 = vrot.slane %v8023, 7
      %v8026 = vshll.u32 %v7983, 16
      %v8028 = vor.u32 %v8025, %v8026
      %v8029 = vsel %vm395, %v8021, %v8028
      %v8030 = vrot.slane %v8025, 4
      %v8032 = vshrl.u32 %v7984, 16
      %v8034 = vrot.slane %v8032, 7
      %v8035 = vshll.u32 %v7984, 16
      %v8037 = vor.u32 %v8034, %v8035
      %v8038 = vsel %vm395, %v8030, %v8037
      %v8039 = vrot.slane %v8034, 4
      %v8041 = vshrl.u32 %v7985, 16
      %v8043 = vrot.slane %v8041, 7
      %v8044 = vshll.u32 %v7985, 16
      %v8046 = vor.u32 %v8043, %v8044
      %v8047 = vsel %vm395, %v8039, %v8046
      %v8048 = vrot.slane %v8043, 4
      %v8050 = vshrl.u32 %v7986, 16
      %v8052 = vrot.slane %v8050, 7
      %v8053 = vshll.u32 %v7986, 16
      %v8055 = vor.u32 %v8052, %v8053
      %v8056 = vsel %vm395, %v8048, %v8055
      %v8057 = vrot.slane %v8052, 4
      %v8059 = vshrl.u32 %v7987, 16
      %v8061 = vrot.slane %v8059, 7
      %v8062 = vshll.u32 %v7987, 16
      %v8064 = vor.u32 %v8061, %v8062
      %v8065 = vsel %vm395, %v8057, %v8064
      %v8066 = vrot.slane %v8061, 4
      %v8068 = vshrl.u32 %v7988, 16
      %v8070 = vrot.slane %v8068, 7
      %v8071 = vshll.u32 %v7988, 16
      %v8073 = vor.u32 %v8070, %v8071
      %v8074 = vsel %vm395, %v8066, %v8073
      %v8075 = vrot.slane %v8070, 4
      %v8077 = vshrl.u32 %v7989, 16
      %v8079 = vrot.slane %v8077, 7
      %v8080 = vshll.u32 %v7989, 16
      %v8082 = vor.u32 %v8079, %v8080
      %v8083 = vsel %vm395, %v8075, %v8082
      %v8084 = vrot.slane %v8079, 4
      %v8086 = vshrl.u32 %v7990, 16
      %v8088 = vrot.slane %v8086, 7
      %v8089 = vshll.u32 %v7990, 16
      %v8091 = vor.u32 %v8088, %v8089
      %v8092 = vsel %vm395, %v8084, %v8091
      %v8093 = vrot.slane %v8088, 4
      %v8095 = vshrl.u32 %v7991, 16
      %v8097 = vrot.slane %v8095, 7
      %v8098 = vshll.u32 %v7991, 16
      %v8100 = vor.u32 %v8097, %v8098
      %v8101 = vsel %vm395, %v8093, %v8100
      %v8102 = vrot.slane %v8097, 4
      %v8104 = vshrl.u32 %v7992, 16
      %v8106 = vrot.slane %v8104, 7
      %v8107 = vshll.u32 %v7992, 16
      %v8109 = vor.u32 %v8106, %v8107
      %v8110 = vsel %vm395, %v8102, %v8109
      %v8111 = vrot.slane %v8106, 4
      %v8113 = vshrl.u32 %v7993, 16
      %v8115 = vrot.slane %v8113, 7
      %v8116 = vshll.u32 %v7993, 16
      %v8118 = vor.u32 %v8115, %v8116
      %v8119 = vsel %vm395, %v8111, %v8118
      %v8120 = vrot.slane %v8115, 4
      %v8122 = vshrl.u32 %v7994, 16
      %v8124 = vrot.slane %v8122, 7
      %v8125 = vshll.u32 %v7994, 16
      %v8127 = vor.u32 %v8124, %v8125
      %v8128 = vsel %vm395, %v8120, %v8127
      %v8129 = vrot.slane %v8124, 4
      %v8131 = vshrl.u32 %v7995, 16
      %v8133 = vrot.slane %v8131, 7
      %v8134 = vshll.u32 %v7995, 16
      %v8136 = vor.u32 %v8133, %v8134
      %v8137 = vsel %vm395, %v8129, %v8136
      %v8138 = vrot.slane %v8133, 4
      %v8156 = vld [vmem:[#allocation3 + $0x8c] sm:$0xf]
      %v8157 = vsel %vm1627, %v8002, %v8156
      %8158 = vst [vmem:[#allocation3 + $0x8c] sm:$0xf] %v8157
      %8159 = vst [vmem:[#allocation3 + $0x90] sm:$0xf] %v8011
      %8160 = vst [vmem:[#allocation3 + $0x94] sm:$0xf] %v8020
      %8161 = vst [vmem:[#allocation3 + $0x98] sm:$0xf] %v8029
      %8162 = vst [vmem:[#allocation3 + $0x9c] sm:$0xf] %v8038
      %8163 = vst [vmem:[#allocation3 + $0xa0] sm:$0xf] %v8047
      %8164 = vst [vmem:[#allocation3 + $0xa4] sm:$0xf] %v8056
      %8165 = vst [vmem:[#allocation3 + $0xa8] sm:$0xf] %v8065
      %8166 = vst [vmem:[#allocation3 + $0xac] sm:$0xf] %v8074
      %8167 = vst [vmem:[#allocation3 + $0xb0] sm:$0xf] %v8083
      %8168 = vst [vmem:[#allocation3 + $0xb4] sm:$0xf] %v8092
      %8169 = vst [vmem:[#allocation3 + $0xb8] sm:$0xf] %v8101
      %8170 = vst [vmem:[#allocation3 + $0xbc] sm:$0xf] %v8110
      %8171 = vst [vmem:[#allocation3 + $0xc0] sm:$0xf] %v8119
      %8172 = vst [vmem:[#allocation3 + $0xc4] sm:$0xf] %v8128
      %8173 = vst [vmem:[#allocation3 + $0xc8] sm:$0xf] %v8137
      %v8174 = vld [vmem:[#allocation3 + $0xcc] sm:$0x1]
      %v8175 = vsel %vm1622, %v8138, %v8174
      %8176 = vst [vmem:[#allocation3 + $0xcc] sm:$0x1] %v8175
      %v8177 = vld [vmem:[#allocation3] sm:$0xf]
      %v8178 = vld [vmem:[#allocation3 + $0x4] sm:$0xf]
      %v8179 = vld [vmem:[#allocation3 + $0x8] sm:$0xf]
      %v8180 = vld [vmem:[#allocation3 + $0xc] sm:$0xf]
      %v8181 = vld [vmem:[#allocation3 + $0x10] sm:$0xf]
      %v8182 = vld [vmem:[#allocation3 + $0x14] sm:$0xf]
      %v8183 = vld [vmem:[#allocation3 + $0x18] sm:$0xf]
      %v8184 = vld [vmem:[#allocation3 + $0x1c] sm:$0xf]
      %v8185 = vld [vmem:[#allocation3 + $0x20] sm:$0xf]
      %v8186 = vld [vmem:[#allocation3 + $0x24] sm:$0xf]
      %v8187 = vld [vmem:[#allocation3 + $0x28] sm:$0xf]
      %v8188 = vld [vmem:[#allocation3 + $0x2c] sm:$0xf]
      %v8189 = vld [vmem:[#allocation3 + $0x30] sm:$0xf]
      %v8190 = vld [vmem:[#allocation3 + $0x34] sm:$0xf]
      %v8191 = vld [vmem:[#allocation3 + $0x38] sm:$0xf]
      %v8192 = vld [vmem:[#allocation3 + $0x3c] sm:$0xf]
      %v8193 = vld [vmem:[#allocation3 + $0x40] sm:$0xf]
      %v8194 = vld [vmem:[#allocation3 + $0x44] sm:$0xf]
      %v8195 = vld [vmem:[#allocation3 + $0x48] sm:$0xf]
      %v8196 = vld [vmem:[#allocation3 + $0x4c] sm:$0xf]
      %v8197 = vld [vmem:[#allocation3 + $0x50] sm:$0xf]
      %v8198 = vld [vmem:[#allocation3 + $0x54] sm:$0xf]
      %v8199 = vld [vmem:[#allocation3 + $0x58] sm:$0xf]
      %v8200 = vld [vmem:[#allocation3 + $0x5c] sm:$0xf]
      %v8201 = vld [vmem:[#allocation3 + $0x60] sm:$0xf]
      %v8202 = vld [vmem:[#allocation3 + $0x64] sm:$0xf]
      %v8203 = vld [vmem:[#allocation3 + $0x68] sm:$0xf]
      %v8204 = vld [vmem:[#allocation3 + $0x6c] sm:$0xf]
      %v8205 = vld [vmem:[#allocation3 + $0x70] sm:$0xf]
      %v8206 = vld [vmem:[#allocation3 + $0x74] sm:$0xf]
      %v8207 = vld [vmem:[#allocation3 + $0x78] sm:$0xf]
      %v8208 = vld [vmem:[#allocation3 + $0x7c] sm:$0xf]
      %v8209 = vld [vmem:[%s5] sm:$0xf]
      %v8210 = vld [vmem:[%s5 + $0x4] sm:$0xf]
      %v8211 = vld [vmem:[%s5 + $0x8] sm:$0xf]
      %v8212 = vld [vmem:[%s5 + $0xc] sm:$0xf]
      %v8213 = vld [vmem:[%s5 + $0x10] sm:$0xf]
      %v8214 = vld [vmem:[%s5 + $0x14] sm:$0xf]
      %v8215 = vld [vmem:[%s5 + $0x18] sm:$0xf]
      %v8216 = vld [vmem:[%s5 + $0x1c] sm:$0xf]
      %v8217 = vld [vmem:[%s5 + $0x20] sm:$0xf]
      %v8218 = vld [vmem:[%s5 + $0x24] sm:$0xf]
      %v8219 = vld [vmem:[%s5 + $0x28] sm:$0xf]
      %v8220 = vld [vmem:[%s5 + $0x2c] sm:$0xf]
      %v8221 = vld [vmem:[%s5 + $0x30] sm:$0xf]
      %v8222 = vld [vmem:[%s5 + $0x34] sm:$0xf]
      %v8223 = vld [vmem:[%s5 + $0x38] sm:$0xf]
      %v8224 = vld [vmem:[%s5 + $0x3c] sm:$0xf]
      %v8225 = vld [vmem:[#allocation3 + $0x80] sm:$0x1]
      %s8226 = scalar_lea.vmem %s5, 64
      %v8227 = vld [vmem:[%s8226] sm:$0xf]
      %v8228 = vld [vmem:[%s8226 + $0x4] sm:$0xf]
      %v8229 = vld [vmem:[%s8226 + $0x8] sm:$0xf]
      %v8230 = vld [vmem:[%s8226 + $0xc] sm:$0xf]
      %v8231 = vld [vmem:[%s8226 + $0x10] sm:$0xf]
      %v8232 = vld [vmem:[%s8226 + $0x14] sm:$0xf]
      %v8233 = vld [vmem:[%s8226 + $0x18] sm:$0xf]
      %v8234 = vld [vmem:[%s8226 + $0x1c] sm:$0xf]
      %v8235 = vld [vmem:[%s8226 + $0x20] sm:$0xf]
      %v8236 = vld [vmem:[%s8226 + $0x24] sm:$0xf]
      %v8237 = vld [vmem:[%s8226 + $0x28] sm:$0xf]
      %v8238 = vld [vmem:[%s8226 + $0x2c] sm:$0xf]
      %v8239 = vld [vmem:[%s8226 + $0x30] sm:$0xf]
      %v8240 = vld [vmem:[%s8226 + $0x34] sm:$0xf]
      %v8241 = vld [vmem:[%s8226 + $0x38] sm:$0xf]
      %v8242 = vld [vmem:[%s8226 + $0x3c] sm:$0xf]
      %v8276 = vunpack.c.l.b16 %v8177
      %v8277 = vunpack.c.l.b16 %v8178
      %v8278 = vunpack.c.l.b16 %v8179
      %v8279 = vunpack.c.l.b16 %v8180
      %v8280 = vunpack.c.l.b16 %v8181
      %v8281 = vunpack.c.l.b16 %v8182
      %v8282 = vunpack.c.l.b16 %v8183
      %v8283 = vunpack.c.l.b16 %v8184
      %v8284 = vunpack.c.l.b16 %v8185
      %v8285 = vunpack.c.l.b16 %v8186
      %v8286 = vunpack.c.l.b16 %v8187
      %v8287 = vunpack.c.l.b16 %v8188
      %v8288 = vunpack.c.l.b16 %v8189
      %v8289 = vunpack.c.l.b16 %v8190
      %v8290 = vunpack.c.l.b16 %v8191
      %v8291 = vunpack.c.l.b16 %v8192
      %v8292 = vunpack.c.l.b16 %v8193
      %v8293 = vunpack.c.l.b16 %v8194
      %v8294 = vunpack.c.l.b16 %v8195
      %v8295 = vunpack.c.l.b16 %v8196
      %v8296 = vunpack.c.l.b16 %v8197
      %v8297 = vunpack.c.l.b16 %v8198
      %v8298 = vunpack.c.l.b16 %v8199
      %v8299 = vunpack.c.l.b16 %v8200
      %v8300 = vunpack.c.l.b16 %v8201
      %v8301 = vunpack.c.l.b16 %v8202
      %v8302 = vunpack.c.l.b16 %v8203
      %v8303 = vunpack.c.l.b16 %v8204
      %v8304 = vunpack.c.l.b16 %v8205
      %v8305 = vunpack.c.l.b16 %v8206
      %v8306 = vunpack.c.l.b16 %v8207
      %v8307 = vunpack.c.l.b16 %v8208
      %v8308 = vunpack.c.l.b16 %v8225
      %v8309 = vpack.c.b16 %v8277, %v8276
      %v8310 = vpack.c.b16 %v8279, %v8278
      %v8311 = vpack.c.b16 %v8281, %v8280
      %v8312 = vpack.c.b16 %v8283, %v8282
      %v8313 = vpack.c.b16 %v8285, %v8284
      %v8314 = vpack.c.b16 %v8287, %v8286
      %v8315 = vpack.c.b16 %v8289, %v8288
      %v8316 = vpack.c.b16 %v8291, %v8290
      %v8317 = vpack.c.b16 %v8293, %v8292
      %v8318 = vpack.c.b16 %v8295, %v8294
      %v8319 = vpack.c.b16 %v8297, %v8296
      %v8320 = vpack.c.b16 %v8299, %v8298
      %v8321 = vpack.c.b16 %v8301, %v8300
      %v8322 = vpack.c.b16 %v8303, %v8302
      %v8323 = vpack.c.b16 %v8305, %v8304
      %v8324 = vpack.c.b16 %v8307, %v8306
      %v8325 = vpack.c.b16 %v8308, %v8308
      %v8327 = vshrl.u32 %v8309, 16
      %v8329 = vshll.u32 %v8309, 16
      %v8331 = vrot.slane %v8329, 1
      %v8332 = vor.u32 %v8327, %v8331
      %v8334 = vshll.u32 %v8310, 16
      %v8336 = vrot.slane %v8334, 1
      %v8337 = vsel %vm1753, %v8332, %v8336
      %v8338 = vshrl.u32 %v8310, 16
      %v8340 = vor.u32 %v8338, %v8336
      %v8342 = vshll.u32 %v8311, 16
      %v8344 = vrot.slane %v8342, 1
      %v8345 = vsel %vm1753, %v8340, %v8344
      %v8346 = vshrl.u32 %v8311, 16
      %v8348 = vor.u32 %v8346, %v8344
      %v8350 = vshll.u32 %v8312, 16
      %v8352 = vrot.slane %v8350, 1
      %v8353 = vsel %vm1753, %v8348, %v8352
      %v8354 = vshrl.u32 %v8312, 16
      %v8356 = vor.u32 %v8354, %v8352
      %v8358 = vshll.u32 %v8313, 16
      %v8360 = vrot.slane %v8358, 1
      %v8361 = vsel %vm1753, %v8356, %v8360
      %v8362 = vshrl.u32 %v8313, 16
      %v8364 = vor.u32 %v8362, %v8360
      %v8366 = vshll.u32 %v8314, 16
      %v8368 = vrot.slane %v8366, 1
      %v8369 = vsel %vm1753, %v8364, %v8368
      %v8370 = vshrl.u32 %v8314, 16
      %v8372 = vor.u32 %v8370, %v8368
      %v8374 = vshll.u32 %v8315, 16
      %v8376 = vrot.slane %v8374, 1
      %v8377 = vsel %vm1753, %v8372, %v8376
      %v8378 = vshrl.u32 %v8315, 16
      %v8380 = vor.u32 %v8378, %v8376
      %v8382 = vshll.u32 %v8316, 16
      %v8384 = vrot.slane %v8382, 1
      %v8385 = vsel %vm1753, %v8380, %v8384
      %v8386 = vshrl.u32 %v8316, 16
      %v8388 = vor.u32 %v8386, %v8384
      %v8390 = vshll.u32 %v8317, 16
      %v8392 = vrot.slane %v8390, 1
      %v8393 = vsel %vm1753, %v8388, %v8392
      %v8394 = vshrl.u32 %v8317, 16
      %v8396 = vor.u32 %v8394, %v8392
      %v8398 = vshll.u32 %v8318, 16
      %v8400 = vrot.slane %v8398, 1
      %v8401 = vsel %vm1753, %v8396, %v8400
      %v8402 = vshrl.u32 %v8318, 16
      %v8404 = vor.u32 %v8402, %v8400
      %v8406 = vshll.u32 %v8319, 16
      %v8408 = vrot.slane %v8406, 1
      %v8409 = vsel %vm1753, %v8404, %v8408
      %v8410 = vshrl.u32 %v8319, 16
      %v8412 = vor.u32 %v8410, %v8408
      %v8414 = vshll.u32 %v8320, 16
      %v8416 = vrot.slane %v8414, 1
      %v8417 = vsel %vm1753, %v8412, %v8416
      %v8418 = vshrl.u32 %v8320, 16
      %v8420 = vor.u32 %v8418, %v8416
      %v8422 = vshll.u32 %v8321, 16
      %v8424 = vrot.slane %v8422, 1
      %v8425 = vsel %vm1753, %v8420, %v8424
      %v8426 = vshrl.u32 %v8321, 16
      %v8428 = vor.u32 %v8426, %v8424
      %v8430 = vshll.u32 %v8322, 16
      %v8432 = vrot.slane %v8430, 1
      %v8433 = vsel %vm1753, %v8428, %v8432
      %v8434 = vshrl.u32 %v8322, 16
      %v8436 = vor.u32 %v8434, %v8432
      %v8438 = vshll.u32 %v8323, 16
      %v8440 = vrot.slane %v8438, 1
      %v8441 = vsel %vm1753, %v8436, %v8440
      %v8442 = vshrl.u32 %v8323, 16
      %v8444 = vor.u32 %v8442, %v8440
      %v8446 = vshll.u32 %v8324, 16
      %v8448 = vrot.slane %v8446, 1
      %v8449 = vsel %vm1753, %v8444, %v8448
      %v8450 = vshrl.u32 %v8324, 16
      %v8452 = vor.u32 %v8450, %v8448
      %v8454 = vshll.u32 %v8325, 16
      %v8456 = vrot.slane %v8454, 1
      %v8457 = vsel %vm1753, %v8452, %v8456
      %v8490 = vunpack.c.l.b16 %v8227
      %v8491 = vunpack.c.l.b16 %v8228
      %v8492 = vunpack.c.l.b16 %v8229
      %v8493 = vunpack.c.l.b16 %v8230
      %v8494 = vunpack.c.l.b16 %v8231
      %v8495 = vunpack.c.l.b16 %v8232
      %v8496 = vunpack.c.l.b16 %v8233
      %v8497 = vunpack.c.l.b16 %v8234
      %v8498 = vunpack.c.l.b16 %v8235
      %v8499 = vunpack.c.l.b16 %v8236
      %v8500 = vunpack.c.l.b16 %v8237
      %v8501 = vunpack.c.l.b16 %v8238
      %v8502 = vunpack.c.l.b16 %v8239
      %v8503 = vunpack.c.l.b16 %v8240
      %v8504 = vunpack.c.l.b16 %v8241
      %v8505 = vunpack.c.l.b16 %v8242
      %v8506 = vpack.c.b16 %v8491, %v8490
      %v8507 = vpack.c.b16 %v8493, %v8492
      %v8508 = vpack.c.b16 %v8495, %v8494
      %v8509 = vpack.c.b16 %v8497, %v8496
      %v8510 = vpack.c.b16 %v8499, %v8498
      %v8511 = vpack.c.b16 %v8501, %v8500
      %v8512 = vpack.c.b16 %v8503, %v8502
      %v8513 = vpack.c.b16 %v8505, %v8504
      %8522 = vmatpush.bf16.msra.mxu0 %v8513
      %8523 = vmatpush.bf16.msra.mxu0 %v8512
      %8524 = vmatpush.bf16.msra.mxu0 %v8511
      %8525 = vmatpush.bf16.msra.mxu0 %v8510
      %8526 = vmatpush.bf16.msra.mxu0 %v8509
      %8527 = vmatpush.bf16.msra.mxu0 %v8508
      %8528 = vmatpush.bf16.msra.mxu0 %v8507
      %8529 = vmatpush.bf16.msra.mxu0 %v8506
      %8530 = vmatmul.bf16.gmra.mxu0 %v8337
      %v8531 = vpop.f32.mrf.mxu0
      %v8532 = vadd.f32 0.0, %v8531
      %v8533 = vpop.f32.mrf.mxu0
      %v8534 = vadd.f32 0.0, %v8533
      %8535 = vmatmul.bf16.gmra.mxu0 %v8345
      %v8536 = vpop.f32.mrf.mxu0
      %v8537 = vadd.f32 0.0, %v8536
      %v8538 = vpop.f32.mrf.mxu0
      %v8539 = vadd.f32 0.0, %v8538
      %8540 = vmatmul.bf16.gmra.mxu0 %v8353
      %v8541 = vpop.f32.mrf.mxu0
      %v8542 = vadd.f32 0.0, %v8541
      %v8543 = vpop.f32.mrf.mxu0
      %v8544 = vadd.f32 0.0, %v8543
      %8545 = vmatmul.bf16.gmra.mxu0 %v8361
      %v8546 = vpop.f32.mrf.mxu0
      %v8547 = vadd.f32 0.0, %v8546
      %v8548 = vpop.f32.mrf.mxu0
      %v8549 = vadd.f32 0.0, %v8548
      %8550 = vmatmul.bf16.gmra.mxu0 %v8369
      %v8551 = vpop.f32.mrf.mxu0
      %v8552 = vadd.f32 0.0, %v8551
      %v8553 = vpop.f32.mrf.mxu0
      %v8554 = vadd.f32 0.0, %v8553
      %8555 = vmatmul.bf16.gmra.mxu0 %v8377
      %v8556 = vpop.f32.mrf.mxu0
      %v8557 = vadd.f32 0.0, %v8556
      %v8558 = vpop.f32.mrf.mxu0
      %v8559 = vadd.f32 0.0, %v8558
      %8560 = vmatmul.bf16.gmra.mxu0 %v8385
      %v8561 = vpop.f32.mrf.mxu0
      %v8562 = vadd.f32 0.0, %v8561
      %v8563 = vpop.f32.mrf.mxu0
      %v8564 = vadd.f32 0.0, %v8563
      %8565 = vmatmul.bf16.gmra.mxu0 %v8393
      %v8566 = vpop.f32.mrf.mxu0
      %v8567 = vadd.f32 0.0, %v8566
      %v8568 = vpop.f32.mrf.mxu0
      %v8569 = vadd.f32 0.0, %v8568
      %8570 = vmatmul.bf16.gmra.mxu0 %v8401
      %v8571 = vpop.f32.mrf.mxu0
      %v8572 = vadd.f32 0.0, %v8571
      %v8573 = vpop.f32.mrf.mxu0
      %v8574 = vadd.f32 0.0, %v8573
      %8575 = vmatmul.bf16.gmra.mxu0 %v8409
      %v8576 = vpop.f32.mrf.mxu0
      %v8577 = vadd.f32 0.0, %v8576
      %v8578 = vpop.f32.mrf.mxu0
      %v8579 = vadd.f32 0.0, %v8578
      %8580 = vmatmul.bf16.gmra.mxu0 %v8417
      %v8581 = vpop.f32.mrf.mxu0
      %v8582 = vadd.f32 0.0, %v8581
      %v8583 = vpop.f32.mrf.mxu0
      %v8584 = vadd.f32 0.0, %v8583
      %8585 = vmatmul.bf16.gmra.mxu0 %v8425
      %v8586 = vpop.f32.mrf.mxu0
      %v8587 = vadd.f32 0.0, %v8586
      %v8588 = vpop.f32.mrf.mxu0
      %v8589 = vadd.f32 0.0, %v8588
      %8590 = vmatmul.bf16.gmra.mxu0 %v8433
      %v8591 = vpop.f32.mrf.mxu0
      %v8592 = vadd.f32 0.0, %v8591
      %v8593 = vpop.f32.mrf.mxu0
      %v8594 = vadd.f32 0.0, %v8593
      %8595 = vmatmul.bf16.gmra.mxu0 %v8441
      %v8596 = vpop.f32.mrf.mxu0
      %v8597 = vadd.f32 0.0, %v8596
      %v8598 = vpop.f32.mrf.mxu0
      %v8599 = vadd.f32 0.0, %v8598
      %8600 = vmatmul.bf16.gmra.mxu0 %v8449
      %v8601 = vpop.f32.mrf.mxu0
      %v8602 = vadd.f32 0.0, %v8601
      %v8603 = vpop.f32.mrf.mxu0
      %v8604 = vadd.f32 0.0, %v8603
      %8605 = vmatmul.bf16.gmra.mxu0 %v8457
      %v8606 = vpop.f32.mrf.mxu0
      %v8607 = vadd.f32 0.0, %v8606
      %v8608 = vpop.f32.mrf.mxu0
      %v8609 = vadd.f32 0.0, %v8608
      %8610 = vdwg.mxu0
      %v8643 = vunpack.c.l.b16 %v8209
      %v8644 = vunpack.c.l.b16 %v8210
      %v8645 = vunpack.c.l.b16 %v8211
      %v8646 = vunpack.c.l.b16 %v8212
      %v8647 = vunpack.c.l.b16 %v8213
      %v8648 = vunpack.c.l.b16 %v8214
      %v8649 = vunpack.c.l.b16 %v8215
      %v8650 = vunpack.c.l.b16 %v8216
      %v8651 = vunpack.c.l.b16 %v8217
      %v8652 = vunpack.c.l.b16 %v8218
      %v8653 = vunpack.c.l.b16 %v8219
      %v8654 = vunpack.c.l.b16 %v8220
      %v8655 = vunpack.c.l.b16 %v8221
      %v8656 = vunpack.c.l.b16 %v8222
      %v8657 = vunpack.c.l.b16 %v8223
      %v8658 = vunpack.c.l.b16 %v8224
      %v8659 = vpack.c.b16 %v8644, %v8643
      %v8660 = vpack.c.b16 %v8646, %v8645
      %v8661 = vpack.c.b16 %v8648, %v8647
      %v8662 = vpack.c.b16 %v8650, %v8649
      %v8663 = vpack.c.b16 %v8652, %v8651
      %v8664 = vpack.c.b16 %v8654, %v8653
      %v8665 = vpack.c.b16 %v8656, %v8655
      %v8666 = vpack.c.b16 %v8658, %v8657
      %8675 = vmatpush.bf16.msra.mxu0 %v8666
      %8676 = vmatpush.bf16.msra.mxu0 %v8665
      %8677 = vmatpush.bf16.msra.mxu0 %v8664
      %8678 = vmatpush.bf16.msra.mxu0 %v8663
      %8679 = vmatpush.bf16.msra.mxu0 %v8662
      %8680 = vmatpush.bf16.msra.mxu0 %v8661
      %8681 = vmatpush.bf16.msra.mxu0 %v8660
      %8682 = vmatpush.bf16.msra.mxu0 %v8659
      %8683 = vmatmul.bf16.gmra.mxu0 %v8309
      %v8684 = vpop.f32.mrf.mxu0
      %v8685 = vadd.f32 %v8532, %v8684
      %v8686 = vpop.f32.mrf.mxu0
      %v8687 = vadd.f32 %v8534, %v8686
      %8688 = vmatmul.bf16.gmra.mxu0 %v8310
      %v8689 = vpop.f32.mrf.mxu0
      %v8690 = vadd.f32 %v8537, %v8689
      %v8691 = vpop.f32.mrf.mxu0
      %v8692 = vadd.f32 %v8539, %v8691
      %8693 = vmatmul.bf16.gmra.mxu0 %v8311
      %v8694 = vpop.f32.mrf.mxu0
      %v8695 = vadd.f32 %v8542, %v8694
      %v8696 = vpop.f32.mrf.mxu0
      %v8697 = vadd.f32 %v8544, %v8696
      %8698 = vmatmul.bf16.gmra.mxu0 %v8312
      %v8699 = vpop.f32.mrf.mxu0
      %v8700 = vadd.f32 %v8547, %v8699
      %v8701 = vpop.f32.mrf.mxu0
      %v8702 = vadd.f32 %v8549, %v8701
      %8703 = vmatmul.bf16.gmra.mxu0 %v8313
      %v8704 = vpop.f32.mrf.mxu0
      %v8705 = vadd.f32 %v8552, %v8704
      %v8706 = vpop.f32.mrf.mxu0
      %v8707 = vadd.f32 %v8554, %v8706
      %8708 = vmatmul.bf16.gmra.mxu0 %v8314
      %v8709 = vpop.f32.mrf.mxu0
      %v8710 = vadd.f32 %v8557, %v8709
      %v8711 = vpop.f32.mrf.mxu0
      %v8712 = vadd.f32 %v8559, %v8711
      %8713 = vmatmul.bf16.gmra.mxu0 %v8315
      %v8714 = vpop.f32.mrf.mxu0
      %v8715 = vadd.f32 %v8562, %v8714
      %v8716 = vpop.f32.mrf.mxu0
      %v8717 = vadd.f32 %v8564, %v8716
      %8718 = vmatmul.bf16.gmra.mxu0 %v8316
      %v8719 = vpop.f32.mrf.mxu0
      %v8720 = vadd.f32 %v8567, %v8719
      %v8721 = vpop.f32.mrf.mxu0
      %v8722 = vadd.f32 %v8569, %v8721
      %8723 = vmatmul.bf16.gmra.mxu0 %v8317
      %v8724 = vpop.f32.mrf.mxu0
      %v8725 = vadd.f32 %v8572, %v8724
      %v8726 = vpop.f32.mrf.mxu0
      %v8727 = vadd.f32 %v8574, %v8726
      %8728 = vmatmul.bf16.gmra.mxu0 %v8318
      %v8729 = vpop.f32.mrf.mxu0
      %v8730 = vadd.f32 %v8577, %v8729
      %v8731 = vpop.f32.mrf.mxu0
      %v8732 = vadd.f32 %v8579, %v8731
      %8733 = vmatmul.bf16.gmra.mxu0 %v8319
      %v8734 = vpop.f32.mrf.mxu0
      %v8735 = vadd.f32 %v8582, %v8734
      %v8736 = vpop.f32.mrf.mxu0
      %v8737 = vadd.f32 %v8584, %v8736
      %8738 = vmatmul.bf16.gmra.mxu0 %v8320
      %v8739 = vpop.f32.mrf.mxu0
      %v8740 = vadd.f32 %v8587, %v8739
      %v8741 = vpop.f32.mrf.mxu0
      %v8742 = vadd.f32 %v8589, %v8741
      %8743 = vmatmul.bf16.gmra.mxu0 %v8321
      %v8744 = vpop.f32.mrf.mxu0
      %v8745 = vadd.f32 %v8592, %v8744
      %v8746 = vpop.f32.mrf.mxu0
      %v8747 = vadd.f32 %v8594, %v8746
      %8748 = vmatmul.bf16.gmra.mxu0 %v8322
      %v8749 = vpop.f32.mrf.mxu0
      %v8750 = vadd.f32 %v8597, %v8749
      %v8751 = vpop.f32.mrf.mxu0
      %v8752 = vadd.f32 %v8599, %v8751
      %8753 = vmatmul.bf16.gmra.mxu0 %v8323
      %v8754 = vpop.f32.mrf.mxu0
      %v8755 = vadd.f32 %v8602, %v8754
      %v8756 = vpop.f32.mrf.mxu0
      %v8757 = vadd.f32 %v8604, %v8756
      %8758 = vmatmul.bf16.gmra.mxu0 %v8324
      %v8759 = vpop.f32.mrf.mxu0
      %v8760 = vadd.f32 %v8607, %v8759
      %v8761 = vpop.f32.mrf.mxu0
      %v8762 = vadd.f32 %v8609, %v8761
      %8763 = vdwg.mxu0
      %v8764 = vld [vmem:[#allocation3] sm:$0xe]
      %s8765 = scalar_lea.vmem %s5, 128
      %v8766 = vld [vmem:[%s8765] sm:$0xf]
      %v8767 = vld [vmem:[%s8765 + $0x4] sm:$0xf]
      %v8768 = vld [vmem:[%s8765 + $0x8] sm:$0xf]
      %v8769 = vld [vmem:[%s8765 + $0xc] sm:$0xf]
      %v8770 = vld [vmem:[%s8765 + $0x10] sm:$0xf]
      %v8771 = vld [vmem:[%s8765 + $0x14] sm:$0xf]
      %v8772 = vld [vmem:[%s8765 + $0x18] sm:$0xf]
      %v8773 = vld [vmem:[%s8765 + $0x1c] sm:$0xf]
      %v8774 = vld [vmem:[%s8765 + $0x20] sm:$0xf]
      %v8775 = vld [vmem:[%s8765 + $0x24] sm:$0xf]
      %v8776 = vld [vmem:[%s8765 + $0x28] sm:$0xf]
      %v8777 = vld [vmem:[%s8765 + $0x2c] sm:$0xf]
      %v8778 = vld [vmem:[%s8765 + $0x30] sm:$0xf]
      %v8779 = vld [vmem:[%s8765 + $0x34] sm:$0xf]
      %v8780 = vld [vmem:[%s8765 + $0x38] sm:$0xf]
      %v8781 = vld [vmem:[%s8765 + $0x3c] sm:$0xf]
      %v8783 = vunpack.c.l.b16 %v8764
      %v8784 = vpack.c.b16 %v8277, %v8783
      %v8785 = vrot.slane %v8784, 1
      %v8786 = vrot.slane %v8310, 1
      %v8787 = vsel %vm2158, %v8785, %v8786
      %v8788 = vrot.slane %v8311, 1
      %v8789 = vsel %vm2158, %v8786, %v8788
      %v8790 = vrot.slane %v8312, 1
      %v8791 = vsel %vm2158, %v8788, %v8790
      %v8792 = vrot.slane %v8313, 1
      %v8793 = vsel %vm2158, %v8790, %v8792
      %v8794 = vrot.slane %v8314, 1
      %v8795 = vsel %vm2158, %v8792, %v8794
      %v8796 = vrot.slane %v8315, 1
      %v8797 = vsel %vm2158, %v8794, %v8796
      %v8798 = vrot.slane %v8316, 1
      %v8799 = vsel %vm2158, %v8796, %v8798
      %v8800 = vrot.slane %v8317, 1
      %v8801 = vsel %vm2158, %v8798, %v8800
      %v8802 = vrot.slane %v8318, 1
      %v8803 = vsel %vm2158, %v8800, %v8802
      %v8804 = vrot.slane %v8319, 1
      %v8805 = vsel %vm2158, %v8802, %v8804
      %v8806 = vrot.slane %v8320, 1
      %v8807 = vsel %vm2158, %v8804, %v8806
      %v8808 = vrot.slane %v8321, 1
      %v8809 = vsel %vm2158, %v8806, %v8808
      %v8810 = vrot.slane %v8322, 1
      %v8811 = vsel %vm2158, %v8808, %v8810
      %v8812 = vrot.slane %v8323, 1
      %v8813 = vsel %vm2158, %v8810, %v8812
      %v8814 = vrot.slane %v8324, 1
      %v8815 = vsel %vm2158, %v8812, %v8814
      %v8816 = vrot.slane %v8325, 1
      %v8817 = vsel %vm2158, %v8814, %v8816
      %v8850 = vunpack.c.l.b16 %v8766
      %v8851 = vunpack.c.l.b16 %v8767
      %v8852 = vunpack.c.l.b16 %v8768
      %v8853 = vunpack.c.l.b16 %v8769
      %v8854 = vunpack.c.l.b16 %v8770
      %v8855 = vunpack.c.l.b16 %v8771
      %v8856 = vunpack.c.l.b16 %v8772
      %v8857 = vunpack.c.l.b16 %v8773
      %v8858 = vunpack.c.l.b16 %v8774
      %v8859 = vunpack.c.l.b16 %v8775
      %v8860 = vunpack.c.l.b16 %v8776
      %v8861 = vunpack.c.l.b16 %v8777
      %v8862 = vunpack.c.l.b16 %v8778
      %v8863 = vunpack.c.l.b16 %v8779
      %v8864 = vunpack.c.l.b16 %v8780
      %v8865 = vunpack.c.l.b16 %v8781
      %v8866 = vpack.c.b16 %v8851, %v8850
      %v8867 = vpack.c.b16 %v8853, %v8852
      %v8868 = vpack.c.b16 %v8855, %v8854
      %v8869 = vpack.c.b16 %v8857, %v8856
      %v8870 = vpack.c.b16 %v8859, %v8858
      %v8871 = vpack.c.b16 %v8861, %v8860
      %v8872 = vpack.c.b16 %v8863, %v8862
      %v8873 = vpack.c.b16 %v8865, %v8864
      %8882 = vmatpush.bf16.msra.mxu0 %v8873
      %8883 = vmatpush.bf16.msra.mxu0 %v8872
      %8884 = vmatpush.bf16.msra.mxu0 %v8871
      %8885 = vmatpush.bf16.msra.mxu0 %v8870
      %8886 = vmatpush.bf16.msra.mxu0 %v8869
      %8887 = vmatpush.bf16.msra.mxu0 %v8868
      %8888 = vmatpush.bf16.msra.mxu0 %v8867
      %8889 = vmatpush.bf16.msra.mxu0 %v8866
      %8890 = vmatmul.bf16.gmra.mxu0 %v8787
      %v8891 = vpop.f32.mrf.mxu0
      %v8892 = vadd.f32 0.0, %v8891
      %v8893 = vpop.f32.mrf.mxu0
      %v8894 = vadd.f32 0.0, %v8893
      %8895 = vmatmul.bf16.gmra.mxu0 %v8789
      %v8896 = vpop.f32.mrf.mxu0
      %v8897 = vadd.f32 0.0, %v8896
      %v8898 = vpop.f32.mrf.mxu0
      %v8899 = vadd.f32 0.0, %v8898
      %8900 = vmatmul.bf16.gmra.mxu0 %v8791
      %v8901 = vpop.f32.mrf.mxu0
      %v8902 = vadd.f32 0.0, %v8901
      %v8903 = vpop.f32.mrf.mxu0
      %v8904 = vadd.f32 0.0, %v8903
      %8905 = vmatmul.bf16.gmra.mxu0 %v8793
      %v8906 = vpop.f32.mrf.mxu0
      %v8907 = vadd.f32 0.0, %v8906
      %v8908 = vpop.f32.mrf.mxu0
      %v8909 = vadd.f32 0.0, %v8908
      %8910 = vmatmul.bf16.gmra.mxu0 %v8795
      %v8911 = vpop.f32.mrf.mxu0
      %v8912 = vadd.f32 0.0, %v8911
      %v8913 = vpop.f32.mrf.mxu0
      %v8914 = vadd.f32 0.0, %v8913
      %8915 = vmatmul.bf16.gmra.mxu0 %v8797
      %v8916 = vpop.f32.mrf.mxu0
      %v8917 = vadd.f32 0.0, %v8916
      %v8918 = vpop.f32.mrf.mxu0
      %v8919 = vadd.f32 0.0, %v8918
      %8920 = vmatmul.bf16.gmra.mxu0 %v8799
      %v8921 = vpop.f32.mrf.mxu0
      %v8922 = vadd.f32 0.0, %v8921
      %v8923 = vpop.f32.mrf.mxu0
      %v8924 = vadd.f32 0.0, %v8923
      %8925 = vmatmul.bf16.gmra.mxu0 %v8801
      %v8926 = vpop.f32.mrf.mxu0
      %v8927 = vadd.f32 0.0, %v8926
      %v8928 = vpop.f32.mrf.mxu0
      %v8929 = vadd.f32 0.0, %v8928
      %8930 = vmatmul.bf16.gmra.mxu0 %v8803
      %v8931 = vpop.f32.mrf.mxu0
      %v8932 = vadd.f32 0.0, %v8931
      %v8933 = vpop.f32.mrf.mxu0
      %v8934 = vadd.f32 0.0, %v8933
      %8935 = vmatmul.bf16.gmra.mxu0 %v8805
      %v8936 = vpop.f32.mrf.mxu0
      %v8937 = vadd.f32 0.0, %v8936
      %v8938 = vpop.f32.mrf.mxu0
      %v8939 = vadd.f32 0.0, %v8938
      %8940 = vmatmul.bf16.gmra.mxu0 %v8807
      %v8941 = vpop.f32.mrf.mxu0
      %v8942 = vadd.f32 0.0, %v8941
      %v8943 = vpop.f32.mrf.mxu0
      %v8944 = vadd.f32 0.0, %v8943
      %8945 = vmatmul.bf16.gmra.mxu0 %v8809
      %v8946 = vpop.f32.mrf.mxu0
      %v8947 = vadd.f32 0.0, %v8946
      %v8948 = vpop.f32.mrf.mxu0
      %v8949 = vadd.f32 0.0, %v8948
      %8950 = vmatmul.bf16.gmra.mxu0 %v8811
      %v8951 = vpop.f32.mrf.mxu0
      %v8952 = vadd.f32 0.0, %v8951
      %v8953 = vpop.f32.mrf.mxu0
      %v8954 = vadd.f32 0.0, %v8953
      %8955 = vmatmul.bf16.gmra.mxu0 %v8813
      %v8956 = vpop.f32.mrf.mxu0
      %v8957 = vadd.f32 0.0, %v8956
      %v8958 = vpop.f32.mrf.mxu0
      %v8959 = vadd.f32 0.0, %v8958
      %8960 = vmatmul.bf16.gmra.mxu0 %v8815
      %v8961 = vpop.f32.mrf.mxu0
      %v8962 = vadd.f32 0.0, %v8961
      %v8963 = vpop.f32.mrf.mxu0
      %v8964 = vadd.f32 0.0, %v8963
      %8965 = vmatmul.bf16.gmra.mxu0 %v8817
      %v8966 = vpop.f32.mrf.mxu0
      %v8967 = vadd.f32 0.0, %v8966
      %v8968 = vpop.f32.mrf.mxu0
      %v8969 = vadd.f32 0.0, %v8968
      %8970 = vdwg.mxu0
      %v8971 = vadd.f32 %v8685, %v8892
      %v8972 = vadd.f32 %v8687, %v8894
      %v8973 = vadd.f32 %v8690, %v8897
      %v8974 = vadd.f32 %v8692, %v8899
      %v8975 = vadd.f32 %v8695, %v8902
      %v8976 = vadd.f32 %v8697, %v8904
      %v8977 = vadd.f32 %v8700, %v8907
      %v8978 = vadd.f32 %v8702, %v8909
      %v8979 = vadd.f32 %v8705, %v8912
      %v8980 = vadd.f32 %v8707, %v8914
      %v8981 = vadd.f32 %v8710, %v8917
      %v8982 = vadd.f32 %v8712, %v8919
      %v8983 = vadd.f32 %v8715, %v8922
      %v8984 = vadd.f32 %v8717, %v8924
      %v8985 = vadd.f32 %v8720, %v8927
      %v8986 = vadd.f32 %v8722, %v8929
      %v8987 = vadd.f32 %v8725, %v8932
      %v8988 = vadd.f32 %v8727, %v8934
      %v8989 = vadd.f32 %v8730, %v8937
      %v8990 = vadd.f32 %v8732, %v8939
      %v8991 = vadd.f32 %v8735, %v8942
      %v8992 = vadd.f32 %v8737, %v8944
      %v8993 = vadd.f32 %v8740, %v8947
      %v8994 = vadd.f32 %v8742, %v8949
      %v8995 = vadd.f32 %v8745, %v8952
      %v8996 = vadd.f32 %v8747, %v8954
      %v8997 = vadd.f32 %v8750, %v8957
      %v8998 = vadd.f32 %v8752, %v8959
      %v8999 = vadd.f32 %v8755, %v8962
      %v9000 = vadd.f32 %v8757, %v8964
      %v9001 = vadd.f32 %v8760, %v8967
      %v9002 = vadd.f32 %v8762, %v8969
      %v9003 = vld [vmem:[#allocation3 + $0xc] sm:$0xf]
      %v9004 = vld [vmem:[#allocation3 + $0x10] sm:$0xf]
      %v9005 = vld [vmem:[#allocation3 + $0x14] sm:$0xf]
      %v9006 = vld [vmem:[#allocation3 + $0x18] sm:$0xf]
      %v9007 = vld [vmem:[#allocation3 + $0x1c] sm:$0xf]
      %v9008 = vld [vmem:[#allocation3 + $0x20] sm:$0xf]
      %v9009 = vld [vmem:[#allocation3 + $0x24] sm:$0xf]
      %v9010 = vld [vmem:[#allocation3 + $0x28] sm:$0xf]
      %v9011 = vld [vmem:[#allocation3 + $0x2c] sm:$0xf]
      %v9012 = vld [vmem:[#allocation3 + $0x30] sm:$0xf]
      %v9013 = vld [vmem:[#allocation3 + $0x34] sm:$0xf]
      %v9014 = vld [vmem:[#allocation3 + $0x38] sm:$0xf]
      %v9015 = vld [vmem:[#allocation3 + $0x3c] sm:$0xf]
      %v9016 = vld [vmem:[#allocation3 + $0x40] sm:$0xf]
      %v9017 = vld [vmem:[#allocation3 + $0x44] sm:$0xf]
      %v9018 = vld [vmem:[#allocation3 + $0x48] sm:$0xf]
      %v9019 = vld [vmem:[#allocation3 + $0x4c] sm:$0xf]
      %v9020 = vld [vmem:[#allocation3 + $0x50] sm:$0xf]
      %v9021 = vld [vmem:[#allocation3 + $0x54] sm:$0xf]
      %v9022 = vld [vmem:[#allocation3 + $0x58] sm:$0xf]
      %v9023 = vld [vmem:[#allocation3 + $0x5c] sm:$0xf]
      %v9024 = vld [vmem:[#allocation3 + $0x60] sm:$0xf]
      %v9025 = vld [vmem:[#allocation3 + $0x64] sm:$0xf]
      %v9026 = vld [vmem:[#allocation3 + $0x68] sm:$0xf]
      %v9027 = vld [vmem:[#allocation3 + $0x6c] sm:$0xf]
      %v9028 = vld [vmem:[#allocation3 + $0x70] sm:$0xf]
      %v9029 = vld [vmem:[#allocation3 + $0x74] sm:$0xf]
      %v9030 = vld [vmem:[#allocation3 + $0x78] sm:$0xf]
      %v9031 = vld [vmem:[#allocation3 + $0x7c] sm:$0xf]
      %v9032 = vld [vmem:[#allocation3 + $0x80] sm:$0xf]
      %v9033 = vld [vmem:[#allocation3 + $0x84] sm:$0xf]
      %v9034 = vld [vmem:[#allocation3 + $0x88] sm:$0xf]
      %s9035 = scalar_lea.vmem %s5, 192
      %v9036 = vld [vmem:[%s9035] sm:$0xf]
      %v9037 = vld [vmem:[%s9035 + $0x4] sm:$0xf]
      %v9038 = vld [vmem:[%s9035 + $0x8] sm:$0xf]
      %v9039 = vld [vmem:[%s9035 + $0xc] sm:$0xf]
      %v9040 = vld [vmem:[%s9035 + $0x10] sm:$0xf]
      %v9041 = vld [vmem:[%s9035 + $0x14] sm:$0xf]
      %v9042 = vld [vmem:[%s9035 + $0x18] sm:$0xf]
      %v9043 = vld [vmem:[%s9035 + $0x1c] sm:$0xf]
      %v9044 = vld [vmem:[%s9035 + $0x20] sm:$0xf]
      %v9045 = vld [vmem:[%s9035 + $0x24] sm:$0xf]
      %v9046 = vld [vmem:[%s9035 + $0x28] sm:$0xf]
      %v9047 = vld [vmem:[%s9035 + $0x2c] sm:$0xf]
      %v9048 = vld [vmem:[%s9035 + $0x30] sm:$0xf]
      %v9049 = vld [vmem:[%s9035 + $0x34] sm:$0xf]
      %v9050 = vld [vmem:[%s9035 + $0x38] sm:$0xf]
      %v9051 = vld [vmem:[%s9035 + $0x3c] sm:$0xf]
      %v9084 = vunpack.c.l.b16 %v9003
      %v9085 = vunpack.c.l.b16 %v9004
      %v9086 = vunpack.c.l.b16 %v9005
      %v9087 = vunpack.c.l.b16 %v9006
      %v9088 = vunpack.c.l.b16 %v9007
      %v9089 = vunpack.c.l.b16 %v9008
      %v9090 = vunpack.c.l.b16 %v9009
      %v9091 = vunpack.c.l.b16 %v9010
      %v9092 = vunpack.c.l.b16 %v9011
      %v9093 = vunpack.c.l.b16 %v9012
      %v9094 = vunpack.c.l.b16 %v9013
      %v9095 = vunpack.c.l.b16 %v9014
      %v9096 = vunpack.c.l.b16 %v9015
      %v9097 = vunpack.c.l.b16 %v9016
      %v9098 = vunpack.c.l.b16 %v9017
      %v9099 = vunpack.c.l.b16 %v9018
      %v9100 = vunpack.c.l.b16 %v9019
      %v9101 = vunpack.c.l.b16 %v9020
      %v9102 = vunpack.c.l.b16 %v9021
      %v9103 = vunpack.c.l.b16 %v9022
      %v9104 = vunpack.c.l.b16 %v9023
      %v9105 = vunpack.c.l.b16 %v9024
      %v9106 = vunpack.c.l.b16 %v9025
      %v9107 = vunpack.c.l.b16 %v9026
      %v9108 = vunpack.c.l.b16 %v9027
      %v9109 = vunpack.c.l.b16 %v9028
      %v9110 = vunpack.c.l.b16 %v9029
      %v9111 = vunpack.c.l.b16 %v9030
      %v9112 = vunpack.c.l.b16 %v9031
      %v9113 = vunpack.c.l.b16 %v9032
      %v9114 = vunpack.c.l.b16 %v9033
      %v9115 = vunpack.c.l.b16 %v9034
      %v9116 = vpack.c.b16 %v9085, %v9084
      %v9117 = vpack.c.b16 %v9087, %v9086
      %v9118 = vpack.c.b16 %v9089, %v9088
      %v9119 = vpack.c.b16 %v9091, %v9090
      %v9120 = vpack.c.b16 %v9093, %v9092
      %v9121 = vpack.c.b16 %v9095, %v9094
      %v9122 = vpack.c.b16 %v9097, %v9096
      %v9123 = vpack.c.b16 %v9099, %v9098
      %v9124 = vpack.c.b16 %v9101, %v9100
      %v9125 = vpack.c.b16 %v9103, %v9102
      %v9126 = vpack.c.b16 %v9105, %v9104
      %v9127 = vpack.c.b16 %v9107, %v9106
      %v9128 = vpack.c.b16 %v9109, %v9108
      %v9129 = vpack.c.b16 %v9111, %v9110
      %v9130 = vpack.c.b16 %v9113, %v9112
      %v9131 = vpack.c.b16 %v9115, %v9114
      %v9164 = vunpack.c.l.b16 %v9036
      %v9165 = vunpack.c.l.b16 %v9037
      %v9166 = vunpack.c.l.b16 %v9038
      %v9167 = vunpack.c.l.b16 %v9039
      %v9168 = vunpack.c.l.b16 %v9040
      %v9169 = vunpack.c.l.b16 %v9041
      %v9170 = vunpack.c.l.b16 %v9042
      %v9171 = vunpack.c.l.b16 %v9043
      %v9172 = vunpack.c.l.b16 %v9044
      %v9173 = vunpack.c.l.b16 %v9045
      %v9174 = vunpack.c.l.b16 %v9046
      %v9175 = vunpack.c.l.b16 %v9047
      %v9176 = vunpack.c.l.b16 %v9048
      %v9177 = vunpack.c.l.b16 %v9049
      %v9178 = vunpack.c.l.b16 %v9050
      %v9179 = vunpack.c.l.b16 %v9051
      %v9180 = vpack.c.b16 %v9165, %v9164
      %v9181 = vpack.c.b16 %v9167, %v9166
      %v9182 = vpack.c.b16 %v9169, %v9168
      %v9183 = vpack.c.b16 %v9171, %v9170
      %v9184 = vpack.c.b16 %v9173, %v9172
      %v9185 = vpack.c.b16 %v9175, %v9174
      %v9186 = vpack.c.b16 %v9177, %v9176
      %v9187 = vpack.c.b16 %v9179, %v9178
      %9196 = vmatpush.bf16.msra.mxu0 %v9187
      %9197 = vmatpush.bf16.msra.mxu0 %v9186
      %9198 = vmatpush.bf16.msra.mxu0 %v9185
      %9199 = vmatpush.bf16.msra.mxu0 %v9184
      %9200 = vmatpush.bf16.msra.mxu0 %v9183
      %9201 = vmatpush.bf16.msra.mxu0 %v9182
      %9202 = vmatpush.bf16.msra.mxu0 %v9181
      %9203 = vmatpush.bf16.msra.mxu0 %v9180
      %9204 = vmatmul.bf16.gmra.mxu0 %v9116
      %v9205 = vpop.f32.mrf.mxu0
      %v9206 = vadd.f32 0.0, %v9205
      %v9207 = vpop.f32.mrf.mxu0
      %v9208 = vadd.f32 0.0, %v9207
      %9209 = vmatmul.bf16.gmra.mxu0 %v9117
      %v9210 = vpop.f32.mrf.mxu0
      %v9211 = vadd.f32 0.0, %v9210
      %v9212 = vpop.f32.mrf.mxu0
      %v9213 = vadd.f32 0.0, %v9212
      %9214 = vmatmul.bf16.gmra.mxu0 %v9118
      %v9215 = vpop.f32.mrf.mxu0
      %v9216 = vadd.f32 0.0, %v9215
      %v9217 = vpop.f32.mrf.mxu0
      %v9218 = vadd.f32 0.0, %v9217
      %9219 = vmatmul.bf16.gmra.mxu0 %v9119
      %v9220 = vpop.f32.mrf.mxu0
      %v9221 = vadd.f32 0.0, %v9220
      %v9222 = vpop.f32.mrf.mxu0
      %v9223 = vadd.f32 0.0, %v9222
      %9224 = vmatmul.bf16.gmra.mxu0 %v9120
      %v9225 = vpop.f32.mrf.mxu0
      %v9226 = vadd.f32 0.0, %v9225
      %v9227 = vpop.f32.mrf.mxu0
      %v9228 = vadd.f32 0.0, %v9227
      %9229 = vmatmul.bf16.gmra.mxu0 %v9121
      %v9230 = vpop.f32.mrf.mxu0
      %v9231 = vadd.f32 0.0, %v9230
      %v9232 = vpop.f32.mrf.mxu0
      %v9233 = vadd.f32 0.0, %v9232
      %9234 = vmatmul.bf16.gmra.mxu0 %v9122
      %v9235 = vpop.f32.mrf.mxu0
      %v9236 = vadd.f32 0.0, %v9235
      %v9237 = vpop.f32.mrf.mxu0
      %v9238 = vadd.f32 0.0, %v9237
      %9239 = vmatmul.bf16.gmra.mxu0 %v9123
      %v9240 = vpop.f32.mrf.mxu0
      %v9241 = vadd.f32 0.0, %v9240
      %v9242 = vpop.f32.mrf.mxu0
      %v9243 = vadd.f32 0.0, %v9242
      %9244 = vmatmul.bf16.gmra.mxu0 %v9124
      %v9245 = vpop.f32.mrf.mxu0
      %v9246 = vadd.f32 0.0, %v9245
      %v9247 = vpop.f32.mrf.mxu0
      %v9248 = vadd.f32 0.0, %v9247
      %9249 = vmatmul.bf16.gmra.mxu0 %v9125
      %v9250 = vpop.f32.mrf.mxu0
      %v9251 = vadd.f32 0.0, %v9250
      %v9252 = vpop.f32.mrf.mxu0
      %v9253 = vadd.f32 0.0, %v9252
      %9254 = vmatmul.bf16.gmra.mxu0 %v9126
      %v9255 = vpop.f32.mrf.mxu0
      %v9256 = vadd.f32 0.0, %v9255
      %v9257 = vpop.f32.mrf.mxu0
      %v9258 = vadd.f32 0.0, %v9257
      %9259 = vmatmul.bf16.gmra.mxu0 %v9127
      %v9260 = vpop.f32.mrf.mxu0
      %v9261 = vadd.f32 0.0, %v9260
      %v9262 = vpop.f32.mrf.mxu0
      %v9263 = vadd.f32 0.0, %v9262
      %9264 = vmatmul.bf16.gmra.mxu0 %v9128
      %v9265 = vpop.f32.mrf.mxu0
      %v9266 = vadd.f32 0.0, %v9265
      %v9267 = vpop.f32.mrf.mxu0
      %v9268 = vadd.f32 0.0, %v9267
      %9269 = vmatmul.bf16.gmra.mxu0 %v9129
      %v9270 = vpop.f32.mrf.mxu0
      %v9271 = vadd.f32 0.0, %v9270
      %v9272 = vpop.f32.mrf.mxu0
      %v9273 = vadd.f32 0.0, %v9272
      %9274 = vmatmul.bf16.gmra.mxu0 %v9130
      %v9275 = vpop.f32.mrf.mxu0
      %v9276 = vadd.f32 0.0, %v9275
      %v9277 = vpop.f32.mrf.mxu0
      %v9278 = vadd.f32 0.0, %v9277
      %9279 = vmatmul.bf16.gmra.mxu0 %v9131
      %v9280 = vpop.f32.mrf.mxu0
      %v9281 = vadd.f32 0.0, %v9280
      %v9282 = vpop.f32.mrf.mxu0
      %v9283 = vadd.f32 0.0, %v9282
      %9284 = vdwg.mxu0
      %v9285 = vadd.f32 %v8971, %v9206
      %v9286 = vadd.f32 %v8972, %v9208
      %v9287 = vadd.f32 %v8973, %v9211
      %v9288 = vadd.f32 %v8974, %v9213
      %v9289 = vadd.f32 %v8975, %v9216
      %v9290 = vadd.f32 %v8976, %v9218
      %v9291 = vadd.f32 %v8977, %v9221
      %v9292 = vadd.f32 %v8978, %v9223
      %v9293 = vadd.f32 %v8979, %v9226
      %v9294 = vadd.f32 %v8980, %v9228
      %v9295 = vadd.f32 %v8981, %v9231
      %v9296 = vadd.f32 %v8982, %v9233
      %v9297 = vadd.f32 %v8983, %v9236
      %v9298 = vadd.f32 %v8984, %v9238
      %v9299 = vadd.f32 %v8985, %v9241
      %v9300 = vadd.f32 %v8986, %v9243
      %v9301 = vadd.f32 %v8987, %v9246
      %v9302 = vadd.f32 %v8988, %v9248
      %v9303 = vadd.f32 %v8989, %v9251
      %v9304 = vadd.f32 %v8990, %v9253
      %v9305 = vadd.f32 %v8991, %v9256
      %v9306 = vadd.f32 %v8992, %v9258
      %v9307 = vadd.f32 %v8993, %v9261
      %v9308 = vadd.f32 %v8994, %v9263
      %v9309 = vadd.f32 %v8995, %v9266
      %v9310 = vadd.f32 %v8996, %v9268
      %v9311 = vadd.f32 %v8997, %v9271
      %v9312 = vadd.f32 %v8998, %v9273
      %v9313 = vadd.f32 %v8999, %v9276
      %v9314 = vadd.f32 %v9000, %v9278
      %v9315 = vadd.f32 %v9001, %v9281
      %v9316 = vadd.f32 %v9002, %v9283
      %v9317 = vld [vmem:[#allocation3 + $0xc] sm:$0xf]
      %v9318 = vld [vmem:[#allocation3 + $0x10] sm:$0xf]
      %v9319 = vld [vmem:[#allocation3 + $0x14] sm:$0xf]
      %v9320 = vld [vmem:[#allocation3 + $0x18] sm:$0xf]
      %v9321 = vld [vmem:[#allocation3 + $0x1c] sm:$0xf]
      %v9322 = vld [vmem:[#allocation3 + $0x20] sm:$0xf]
      %v9323 = vld [vmem:[#allocation3 + $0x24] sm:$0xf]
      %v9324 = vld [vmem:[#allocation3 + $0x28] sm:$0xf]
      %v9325 = vld [vmem:[#allocation3 + $0x2c] sm:$0xf]
      %v9326 = vld [vmem:[#allocation3 + $0x30] sm:$0xf]
      %v9327 = vld [vmem:[#allocation3 + $0x34] sm:$0xf]
      %v9328 = vld [vmem:[#allocation3 + $0x38] sm:$0xf]
      %v9329 = vld [vmem:[#allocation3 + $0x3c] sm:$0xf]
      %v9330 = vld [vmem:[#allocation3 + $0x40] sm:$0xf]
      %v9331 = vld [vmem:[#allocation3 + $0x44] sm:$0xf]
      %v9332 = vld [vmem:[#allocation3 + $0x48] sm:$0xf]
      %v9333 = vld [vmem:[#allocation3 + $0x4c] sm:$0xf]
      %v9334 = vld [vmem:[#allocation3 + $0x50] sm:$0xf]
      %v9335 = vld [vmem:[#allocation3 + $0x54] sm:$0xf]
      %v9336 = vld [vmem:[#allocation3 + $0x58] sm:$0xf]
      %v9337 = vld [vmem:[#allocation3 + $0x5c] sm:$0xf]
      %v9338 = vld [vmem:[#allocation3 + $0x60] sm:$0xf]
      %v9339 = vld [vmem:[#allocation3 + $0x64] sm:$0xf]
      %v9340 = vld [vmem:[#allocation3 + $0x68] sm:$0xf]
      %v9341 = vld [vmem:[#allocation3 + $0x6c] sm:$0xf]
      %v9342 = vld [vmem:[#allocation3 + $0x70] sm:$0xf]
      %v9343 = vld [vmem:[#allocation3 + $0x74] sm:$0xf]
      %v9344 = vld [vmem:[#allocation3 + $0x78] sm:$0xf]
      %v9345 = vld [vmem:[#allocation3 + $0x7c] sm:$0xf]
      %v9346 = vld [vmem:[#allocation3 + $0x80] sm:$0xf]
      %v9347 = vld [vmem:[#allocation3 + $0x84] sm:$0xf]
      %v9348 = vld [vmem:[#allocation3 + $0x88] sm:$0xf]
      %v9349 = vld [vmem:[#allocation3 + $0x8c] sm:$0x1]
      %s9350 = scalar_lea.vmem %s5, 256
      %v9351 = vld [vmem:[%s9350] sm:$0xf]
      %v9352 = vld [vmem:[%s9350 + $0x4] sm:$0xf]
      %v9353 = vld [vmem:[%s9350 + $0x8] sm:$0xf]
      %v9354 = vld [vmem:[%s9350 + $0xc] sm:$0xf]
      %v9355 = vld [vmem:[%s9350 + $0x10] sm:$0xf]
      %v9356 = vld [vmem:[%s9350 + $0x14] sm:$0xf]
      %v9357 = vld [vmem:[%s9350 + $0x18] sm:$0xf]
      %v9358 = vld [vmem:[%s9350 + $0x1c] sm:$0xf]
      %v9359 = vld [vmem:[%s9350 + $0x20] sm:$0xf]
      %v9360 = vld [vmem:[%s9350 + $0x24] sm:$0xf]
      %v9361 = vld [vmem:[%s9350 + $0x28] sm:$0xf]
      %v9362 = vld [vmem:[%s9350 + $0x2c] sm:$0xf]
      %v9363 = vld [vmem:[%s9350 + $0x30] sm:$0xf]
      %v9364 = vld [vmem:[%s9350 + $0x34] sm:$0xf]
      %v9365 = vld [vmem:[%s9350 + $0x38] sm:$0xf]
      %v9366 = vld [vmem:[%s9350 + $0x3c] sm:$0xf]
      %v9400 = vunpack.c.l.b16 %v9317
      %v9401 = vunpack.c.l.b16 %v9318
      %v9402 = vunpack.c.l.b16 %v9319
      %v9403 = vunpack.c.l.b16 %v9320
      %v9404 = vunpack.c.l.b16 %v9321
      %v9405 = vunpack.c.l.b16 %v9322
      %v9406 = vunpack.c.l.b16 %v9323
      %v9407 = vunpack.c.l.b16 %v9324
      %v9408 = vunpack.c.l.b16 %v9325
      %v9409 = vunpack.c.l.b16 %v9326
      %v9410 = vunpack.c.l.b16 %v9327
      %v9411 = vunpack.c.l.b16 %v9328
      %v9412 = vunpack.c.l.b16 %v9329
      %v9413 = vunpack.c.l.b16 %v9330
      %v9414 = vunpack.c.l.b16 %v9331
      %v9415 = vunpack.c.l.b16 %v9332
      %v9416 = vunpack.c.l.b16 %v9333
      %v9417 = vunpack.c.l.b16 %v9334
      %v9418 = vunpack.c.l.b16 %v9335
      %v9419 = vunpack.c.l.b16 %v9336
      %v9420 = vunpack.c.l.b16 %v9337
      %v9421 = vunpack.c.l.b16 %v9338
      %v9422 = vunpack.c.l.b16 %v9339
      %v9423 = vunpack.c.l.b16 %v9340
      %v9424 = vunpack.c.l.b16 %v9341
      %v9425 = vunpack.c.l.b16 %v9342
      %v9426 = vunpack.c.l.b16 %v9343
      %v9427 = vunpack.c.l.b16 %v9344
      %v9428 = vunpack.c.l.b16 %v9345
      %v9429 = vunpack.c.l.b16 %v9346
      %v9430 = vunpack.c.l.b16 %v9347
      %v9431 = vunpack.c.l.b16 %v9348
      %v9432 = vunpack.c.l.b16 %v9349
      %v9433 = vpack.c.b16 %v9401, %v9400
      %v9434 = vpack.c.b16 %v9403, %v9402
      %v9435 = vpack.c.b16 %v9405, %v9404
      %v9436 = vpack.c.b16 %v9407, %v9406
      %v9437 = vpack.c.b16 %v9409, %v9408
      %v9438 = vpack.c.b16 %v9411, %v9410
      %v9439 = vpack.c.b16 %v9413, %v9412
      %v9440 = vpack.c.b16 %v9415, %v9414
      %v9441 = vpack.c.b16 %v9417, %v9416
      %v9442 = vpack.c.b16 %v9419, %v9418
      %v9443 = vpack.c.b16 %v9421, %v9420
      %v9444 = vpack.c.b16 %v9423, %v9422
      %v9445 = vpack.c.b16 %v9425, %v9424
      %v9446 = vpack.c.b16 %v9427, %v9426
      %v9447 = vpack.c.b16 %v9429, %v9428
      %v9448 = vpack.c.b16 %v9431, %v9430
      %v9449 = vpack.c.b16 %v9432, %v9432
      %v9451 = vshrl.u32 %v9433, 16
      %v9453 = vshll.u32 %v9433, 16
      %v9455 = vrot.slane %v9453, 1
      %v9456 = vor.u32 %v9451, %v9455
      %v9458 = vshll.u32 %v9434, 16
      %v9460 = vrot.slane %v9458, 1
      %v9461 = vsel %vm1753, %v9456, %v9460
      %v9462 = vshrl.u32 %v9434, 16
      %v9464 = vor.u32 %v9462, %v9460
      %v9466 = vshll.u32 %v9435, 16
      %v9468 = vrot.slane %v9466, 1
      %v9469 = vsel %vm1753, %v9464, %v9468
      %v9470 = vshrl.u32 %v9435, 16
      %v9472 = vor.u32 %v9470, %v9468
      %v9474 = vshll.u32 %v9436, 16
      %v9476 = vrot.slane %v9474, 1
      %v9477 = vsel %vm1753, %v9472, %v9476
      %v9478 = vshrl.u32 %v9436, 16
      %v9480 = vor.u32 %v9478, %v9476
      %v9482 = vshll.u32 %v9437, 16
      %v9484 = vrot.slane %v9482, 1
      %v9485 = vsel %vm1753, %v9480, %v9484
      %v9486 = vshrl.u32 %v9437, 16
      %v9488 = vor.u32 %v9486, %v9484
      %v9490 = vshll.u32 %v9438, 16
      %v9492 = vrot.slane %v9490, 1
      %v9493 = vsel %vm1753, %v9488, %v9492
      %v9494 = vshrl.u32 %v9438, 16
      %v9496 = vor.u32 %v9494, %v9492
      %v9498 = vshll.u32 %v9439, 16
      %v9500 = vrot.slane %v9498, 1
      %v9501 = vsel %vm1753, %v9496, %v9500
      %v9502 = vshrl.u32 %v9439, 16
      %v9504 = vor.u32 %v9502, %v9500
      %v9506 = vshll.u32 %v9440, 16
      %v9508 = vrot.slane %v9506, 1
      %v9509 = vsel %vm1753, %v9504, %v9508
      %v9510 = vshrl.u32 %v9440, 16
      %v9512 = vor.u32 %v9510, %v9508
      %v9514 = vshll.u32 %v9441, 16
      %v9516 = vrot.slane %v9514, 1
      %v9517 = vsel %vm1753, %v9512, %v9516
      %v9518 = vshrl.u32 %v9441, 16
      %v9520 = vor.u32 %v9518, %v9516
      %v9522 = vshll.u32 %v9442, 16
      %v9524 = vrot.slane %v9522, 1
      %v9525 = vsel %vm1753, %v9520, %v9524
      %v9526 = vshrl.u32 %v9442, 16
      %v9528 = vor.u32 %v9526, %v9524
      %v9530 = vshll.u32 %v9443, 16
      %v9532 = vrot.slane %v9530, 1
      %v9533 = vsel %vm1753, %v9528, %v9532
      %v9534 = vshrl.u32 %v9443, 16
      %v9536 = vor.u32 %v9534, %v9532
      %v9538 = vshll.u32 %v9444, 16
      %v9540 = vrot.slane %v9538, 1
      %v9541 = vsel %vm1753, %v9536, %v9540
      %v9542 = vshrl.u32 %v9444, 16
      %v9544 = vor.u32 %v9542, %v9540
      %v9546 = vshll.u32 %v9445, 16
      %v9548 = vrot.slane %v9546, 1
      %v9549 = vsel %vm1753, %v9544, %v9548
      %v9550 = vshrl.u32 %v9445, 16
      %v9552 = vor.u32 %v9550, %v9548
      %v9554 = vshll.u32 %v9446, 16
      %v9556 = vrot.slane %v9554, 1
      %v9557 = vsel %vm1753, %v9552, %v9556
      %v9558 = vshrl.u32 %v9446, 16
      %v9560 = vor.u32 %v9558, %v9556
      %v9562 = vshll.u32 %v9447, 16
      %v9564 = vrot.slane %v9562, 1
      %v9565 = vsel %vm1753, %v9560, %v9564
      %v9566 = vshrl.u32 %v9447, 16
      %v9568 = vor.u32 %v9566, %v9564
      %v9570 = vshll.u32 %v9448, 16
      %v9572 = vrot.slane %v9570, 1
      %v9573 = vsel %vm1753, %v9568, %v9572
      %v9574 = vshrl.u32 %v9448, 16
      %v9576 = vor.u32 %v9574, %v9572
      %v9578 = vshll.u32 %v9449, 16
      %v9580 = vrot.slane %v9578, 1
      %v9581 = vsel %vm1753, %v9576, %v9580
      %v9614 = vunpack.c.l.b16 %v9351
      %v9615 = vunpack.c.l.b16 %v9352
      %v9616 = vunpack.c.l.b16 %v9353
      %v9617 = vunpack.c.l.b16 %v9354
      %v9618 = vunpack.c.l.b16 %v9355
      %v9619 = vunpack.c.l.b16 %v9356
      %v9620 = vunpack.c.l.b16 %v9357
      %v9621 = vunpack.c.l.b16 %v9358
      %v9622 = vunpack.c.l.b16 %v9359
      %v9623 = vunpack.c.l.b16 %v9360
      %v9624 = vunpack.c.l.b16 %v9361
      %v9625 = vunpack.c.l.b16 %v9362
      %v9626 = vunpack.c.l.b16 %v9363
      %v9627 = vunpack.c.l.b16 %v9364
      %v9628 = vunpack.c.l.b16 %v9365
      %v9629 = vunpack.c.l.b16 %v9366
      %v9630 = vpack.c.b16 %v9615, %v9614
      %v9631 = vpack.c.b16 %v9617, %v9616
      %v9632 = vpack.c.b16 %v9619, %v9618
      %v9633 = vpack.c.b16 %v9621, %v9620
      %v9634 = vpack.c.b16 %v9623, %v9622
      %v9635 = vpack.c.b16 %v9625, %v9624
      %v9636 = vpack.c.b16 %v9627, %v9626
      %v9637 = vpack.c.b16 %v9629, %v9628
      %9646 = vmatpush.bf16.msra.mxu0 %v9637
      %9647 = vmatpush.bf16.msra.mxu0 %v9636
      %9648 = vmatpush.bf16.msra.mxu0 %v9635
      %9649 = vmatpush.bf16.msra.mxu0 %v9634
      %9650 = vmatpush.bf16.msra.mxu0 %v9633
      %9651 = vmatpush.bf16.msra.mxu0 %v9632
      %9652 = vmatpush.bf16.msra.mxu0 %v9631
      %9653 = vmatpush.bf16.msra.mxu0 %v9630
      %9654 = vmatmul.bf16.gmra.mxu0 %v9461
      %v9655 = vpop.f32.mrf.mxu0
      %v9656 = vadd.f32 0.0, %v9655
      %v9657 = vpop.f32.mrf.mxu0
      %v9658 = vadd.f32 0.0, %v9657
      %9659 = vmatmul.bf16.gmra.mxu0 %v9469
      %v9660 = vpop.f32.mrf.mxu0
      %v9661 = vadd.f32 0.0, %v9660
      %v9662 = vpop.f32.mrf.mxu0
      %v9663 = vadd.f32 0.0, %v9662
      %9664 = vmatmul.bf16.gmra.mxu0 %v9477
      %v9665 = vpop.f32.mrf.mxu0
      %v9666 = vadd.f32 0.0, %v9665
      %v9667 = vpop.f32.mrf.mxu0
      %v9668 = vadd.f32 0.0, %v9667
      %9669 = vmatmul.bf16.gmra.mxu0 %v9485
      %v9670 = vpop.f32.mrf.mxu0
      %v9671 = vadd.f32 0.0, %v9670
      %v9672 = vpop.f32.mrf.mxu0
      %v9673 = vadd.f32 0.0, %v9672
      %9674 = vmatmul.bf16.gmra.mxu0 %v9493
      %v9675 = vpop.f32.mrf.mxu0
      %v9676 = vadd.f32 0.0, %v9675
      %v9677 = vpop.f32.mrf.mxu0
      %v9678 = vadd.f32 0.0, %v9677
      %9679 = vmatmul.bf16.gmra.mxu0 %v9501
      %v9680 = vpop.f32.mrf.mxu0
      %v9681 = vadd.f32 0.0, %v9680
      %v9682 = vpop.f32.mrf.mxu0
      %v9683 = vadd.f32 0.0, %v9682
      %9684 = vmatmul.bf16.gmra.mxu0 %v9509
      %v9685 = vpop.f32.mrf.mxu0
      %v9686 = vadd.f32 0.0, %v9685
      %v9687 = vpop.f32.mrf.mxu0
      %v9688 = vadd.f32 0.0, %v9687
      %9689 = vmatmul.bf16.gmra.mxu0 %v9517
      %v9690 = vpop.f32.mrf.mxu0
      %v9691 = vadd.f32 0.0, %v9690
      %v9692 = vpop.f32.mrf.mxu0
      %v9693 = vadd.f32 0.0, %v9692
      %9694 = vmatmul.bf16.gmra.mxu0 %v9525
      %v9695 = vpop.f32.mrf.mxu0
      %v9696 = vadd.f32 0.0, %v9695
      %v9697 = vpop.f32.mrf.mxu0
      %v9698 = vadd.f32 0.0, %v9697
      %9699 = vmatmul.bf16.gmra.mxu0 %v9533
      %v9700 = vpop.f32.mrf.mxu0
      %v9701 = vadd.f32 0.0, %v9700
      %v9702 = vpop.f32.mrf.mxu0
      %v9703 = vadd.f32 0.0, %v9702
      %9704 = vmatmul.bf16.gmra.mxu0 %v9541
      %v9705 = vpop.f32.mrf.mxu0
      %v9706 = vadd.f32 0.0, %v9705
      %v9707 = vpop.f32.mrf.mxu0
      %v9708 = vadd.f32 0.0, %v9707
      %9709 = vmatmul.bf16.gmra.mxu0 %v9549
      %v9710 = vpop.f32.mrf.mxu0
      %v9711 = vadd.f32 0.0, %v9710
      %v9712 = vpop.f32.mrf.mxu0
      %v9713 = vadd.f32 0.0, %v9712
      %9714 = vmatmul.bf16.gmra.mxu0 %v9557
      %v9715 = vpop.f32.mrf.mxu0
      %v9716 = vadd.f32 0.0, %v9715
      %v9717 = vpop.f32.mrf.mxu0
      %v9718 = vadd.f32 0.0, %v9717
      %9719 = vmatmul.bf16.gmra.mxu0 %v9565
      %v9720 = vpop.f32.mrf.mxu0
      %v9721 = vadd.f32 0.0, %v9720
      %v9722 = vpop.f32.mrf.mxu0
      %v9723 = vadd.f32 0.0, %v9722
      %9724 = vmatmul.bf16.gmra.mxu0 %v9573
      %v9725 = vpop.f32.mrf.mxu0
      %v9726 = vadd.f32 0.0, %v9725
      %v9727 = vpop.f32.mrf.mxu0
      %v9728 = vadd.f32 0.0, %v9727
      %9729 = vmatmul.bf16.gmra.mxu0 %v9581
      %v9730 = vpop.f32.mrf.mxu0
      %v9731 = vadd.f32 0.0, %v9730
      %v9732 = vpop.f32.mrf.mxu0
      %v9733 = vadd.f32 0.0, %v9732
      %9734 = vdwg.mxu0
      %v9735 = vadd.f32 %v9285, %v9656
      %v9736 = vadd.f32 %v9286, %v9658
      %v9737 = vadd.f32 %v9287, %v9661
      %v9738 = vadd.f32 %v9288, %v9663
      %v9739 = vadd.f32 %v9289, %v9666
      %v9740 = vadd.f32 %v9290, %v9668
      %v9741 = vadd.f32 %v9291, %v9671
      %v9742 = vadd.f32 %v9292, %v9673
      %v9743 = vadd.f32 %v9293, %v9676
      %v9744 = vadd.f32 %v9294, %v9678
      %v9745 = vadd.f32 %v9295, %v9681
      %v9746 = vadd.f32 %v9296, %v9683
      %v9747 = vadd.f32 %v9297, %v9686
      %v9748 = vadd.f32 %v9298, %v9688
      %v9749 = vadd.f32 %v9299, %v9691
      %v9750 = vadd.f32 %v9300, %v9693
      %v9751 = vadd.f32 %v9301, %v9696
      %v9752 = vadd.f32 %v9302, %v9698
      %v9753 = vadd.f32 %v9303, %v9701
      %v9754 = vadd.f32 %v9304, %v9703
      %v9755 = vadd.f32 %v9305, %v9706
      %v9756 = vadd.f32 %v9306, %v9708
      %v9757 = vadd.f32 %v9307, %v9711
      %v9758 = vadd.f32 %v9308, %v9713
      %v9759 = vadd.f32 %v9309, %v9716
      %v9760 = vadd.f32 %v9310, %v9718
      %v9761 = vadd.f32 %v9311, %v9721
      %v9762 = vadd.f32 %v9312, %v9723
      %v9763 = vadd.f32 %v9313, %v9726
      %v9764 = vadd.f32 %v9314, %v9728
      %v9765 = vadd.f32 %v9315, %v9731
      %v9766 = vadd.f32 %v9316, %v9733
      %v9767 = vld [vmem:[#allocation3 + $0xc] sm:$0xe]
      %s9768 = scalar_lea.vmem %s5, 320
      %v9769 = vld [vmem:[%s9768] sm:$0xf]
      %v9770 = vld [vmem:[%s9768 + $0x4] sm:$0xf]
      %v9771 = vld [vmem:[%s9768 + $0x8] sm:$0xf]
      %v9772 = vld [vmem:[%s9768 + $0xc] sm:$0xf]
      %v9773 = vld [vmem:[%s9768 + $0x10] sm:$0xf]
      %v9774 = vld [vmem:[%s9768 + $0x14] sm:$0xf]
      %v9775 = vld [vmem:[%s9768 + $0x18] sm:$0xf]
      %v9776 = vld [vmem:[%s9768 + $0x1c] sm:$0xf]
      %v9777 = vld [vmem:[%s9768 + $0x20] sm:$0xf]
      %v9778 = vld [vmem:[%s9768 + $0x24] sm:$0xf]
      %v9779 = vld [vmem:[%s9768 + $0x28] sm:$0xf]
      %v9780 = vld [vmem:[%s9768 + $0x2c] sm:$0xf]
      %v9781 = vld [vmem:[%s9768 + $0x30] sm:$0xf]
      %v9782 = vld [vmem:[%s9768 + $0x34] sm:$0xf]
      %v9783 = vld [vmem:[%s9768 + $0x38] sm:$0xf]
      %v9784 = vld [vmem:[%s9768 + $0x3c] sm:$0xf]
      %v9786 = vunpack.c.l.b16 %v9767
      %v9787 = vpack.c.b16 %v9401, %v9786
      %v9788 = vrot.slane %v9787, 1
      %v9789 = vrot.slane %v9434, 1
      %v9790 = vsel %vm2158, %v9788, %v9789
      %v9791 = vrot.slane %v9435, 1
      %v9792 = vsel %vm2158, %v9789, %v9791
      %v9793 = vrot.slane %v9436, 1
      %v9794 = vsel %vm2158, %v9791, %v9793
      %v9795 = vrot.slane %v9437, 1
      %v9796 = vsel %vm2158, %v9793, %v9795
      %v9797 = vrot.slane %v9438, 1
      %v9798 = vsel %vm2158, %v9795, %v9797
      %v9799 = vrot.slane %v9439, 1
      %v9800 = vsel %vm2158, %v9797, %v9799
      %v9801 = vrot.slane %v9440, 1
      %v9802 = vsel %vm2158, %v9799, %v9801
      %v9803 = vrot.slane %v9441, 1
      %v9804 = vsel %vm2158, %v9801, %v9803
      %v9805 = vrot.slane %v9442, 1
      %v9806 = vsel %vm2158, %v9803, %v9805
      %v9807 = vrot.slane %v9443, 1
      %v9808 = vsel %vm2158, %v9805, %v9807
      %v9809 = vrot.slane %v9444, 1
      %v9810 = vsel %vm2158, %v9807, %v9809
      %v9811 = vrot.slane %v9445, 1
      %v9812 = vsel %vm2158, %v9809, %v9811
      %v9813 = vrot.slane %v9446, 1
      %v9814 = vsel %vm2158, %v9811, %v9813
      %v9815 = vrot.slane %v9447, 1
      %v9816 = vsel %vm2158, %v9813, %v9815
      %v9817 = vrot.slane %v9448, 1
      %v9818 = vsel %vm2158, %v9815, %v9817
      %v9819 = vrot.slane %v9449, 1
      %v9820 = vsel %vm2158, %v9817, %v9819
      %v9853 = vunpack.c.l.b16 %v9769
      %v9854 = vunpack.c.l.b16 %v9770
      %v9855 = vunpack.c.l.b16 %v9771
      %v9856 = vunpack.c.l.b16 %v9772
      %v9857 = vunpack.c.l.b16 %v9773
      %v9858 = vunpack.c.l.b16 %v9774
      %v9859 = vunpack.c.l.b16 %v9775
      %v9860 = vunpack.c.l.b16 %v9776
      %v9861 = vunpack.c.l.b16 %v9777
      %v9862 = vunpack.c.l.b16 %v9778
      %v9863 = vunpack.c.l.b16 %v9779
      %v9864 = vunpack.c.l.b16 %v9780
      %v9865 = vunpack.c.l.b16 %v9781
      %v9866 = vunpack.c.l.b16 %v9782
      %v9867 = vunpack.c.l.b16 %v9783
      %v9868 = vunpack.c.l.b16 %v9784
      %v9869 = vpack.c.b16 %v9854, %v9853
      %v9870 = vpack.c.b16 %v9856, %v9855
      %v9871 = vpack.c.b16 %v9858, %v9857
      %v9872 = vpack.c.b16 %v9860, %v9859
      %v9873 = vpack.c.b16 %v9862, %v9861
      %v9874 = vpack.c.b16 %v9864, %v9863
      %v9875 = vpack.c.b16 %v9866, %v9865
      %v9876 = vpack.c.b16 %v9868, %v9867
      %9885 = vmatpush.bf16.msra.mxu0 %v9876
      %9886 = vmatpush.bf16.msra.mxu0 %v9875
      %9887 = vmatpush.bf16.msra.mxu0 %v9874
      %9888 = vmatpush.bf16.msra.mxu0 %v9873
      %9889 = vmatpush.bf16.msra.mxu0 %v9872
      %9890 = vmatpush.bf16.msra.mxu0 %v9871
      %9891 = vmatpush.bf16.msra.mxu0 %v9870
      %9892 = vmatpush.bf16.msra.mxu0 %v9869
      %9893 = vmatmul.bf16.gmra.mxu0 %v9790
      %v9894 = vpop.f32.mrf.mxu0
      %v9895 = vadd.f32 0.0, %v9894
      %v9896 = vpop.f32.mrf.mxu0
      %v9897 = vadd.f32 0.0, %v9896
      %9898 = vmatmul.bf16.gmra.mxu0 %v9792
      %v9899 = vpop.f32.mrf.mxu0
      %v9900 = vadd.f32 0.0, %v9899
      %v9901 = vpop.f32.mrf.mxu0
      %v9902 = vadd.f32 0.0, %v9901
      %9903 = vmatmul.bf16.gmra.mxu0 %v9794
      %v9904 = vpop.f32.mrf.mxu0
      %v9905 = vadd.f32 0.0, %v9904
      %v9906 = vpop.f32.mrf.mxu0
      %v9907 = vadd.f32 0.0, %v9906
      %9908 = vmatmul.bf16.gmra.mxu0 %v9796
      %v9909 = vpop.f32.mrf.mxu0
      %v9910 = vadd.f32 0.0, %v9909
      %v9911 = vpop.f32.mrf.mxu0
      %v9912 = vadd.f32 0.0, %v9911
      %9913 = vmatmul.bf16.gmra.mxu0 %v9798
      %v9914 = vpop.f32.mrf.mxu0
      %v9915 = vadd.f32 0.0, %v9914
      %v9916 = vpop.f32.mrf.mxu0
      %v9917 = vadd.f32 0.0, %v9916
      %9918 = vmatmul.bf16.gmra.mxu0 %v9800
      %v9919 = vpop.f32.mrf.mxu0
      %v9920 = vadd.f32 0.0, %v9919
      %v9921 = vpop.f32.mrf.mxu0
      %v9922 = vadd.f32 0.0, %v9921
      %9923 = vmatmul.bf16.gmra.mxu0 %v9802
      %v9924 = vpop.f32.mrf.mxu0
      %v9925 = vadd.f32 0.0, %v9924
      %v9926 = vpop.f32.mrf.mxu0
      %v9927 = vadd.f32 0.0, %v9926
      %9928 = vmatmul.bf16.gmra.mxu0 %v9804
      %v9929 = vpop.f32.mrf.mxu0
      %v9930 = vadd.f32 0.0, %v9929
      %v9931 = vpop.f32.mrf.mxu0
      %v9932 = vadd.f32 0.0, %v9931
      %9933 = vmatmul.bf16.gmra.mxu0 %v9806
      %v9934 = vpop.f32.mrf.mxu0
      %v9935 = vadd.f32 0.0, %v9934
      %v9936 = vpop.f32.mrf.mxu0
      %v9937 = vadd.f32 0.0, %v9936
      %9938 = vmatmul.bf16.gmra.mxu0 %v9808
      %v9939 = vpop.f32.mrf.mxu0
      %v9940 = vadd.f32 0.0, %v9939
      %v9941 = vpop.f32.mrf.mxu0
      %v9942 = vadd.f32 0.0, %v9941
      %9943 = vmatmul.bf16.gmra.mxu0 %v9810
      %v9944 = vpop.f32.mrf.mxu0
      %v9945 = vadd.f32 0.0, %v9944
      %v9946 = vpop.f32.mrf.mxu0
      %v9947 = vadd.f32 0.0, %v9946
      %9948 = vmatmul.bf16.gmra.mxu0 %v9812
      %v9949 = vpop.f32.mrf.mxu0
      %v9950 = vadd.f32 0.0, %v9949
      %v9951 = vpop.f32.mrf.mxu0
      %v9952 = vadd.f32 0.0, %v9951
      %9953 = vmatmul.bf16.gmra.mxu0 %v9814
      %v9954 = vpop.f32.mrf.mxu0
      %v9955 = vadd.f32 0.0, %v9954
      %v9956 = vpop.f32.mrf.mxu0
      %v9957 = vadd.f32 0.0, %v9956
      %9958 = vmatmul.bf16.gmra.mxu0 %v9816
      %v9959 = vpop.f32.mrf.mxu0
      %v9960 = vadd.f32 0.0, %v9959
      %v9961 = vpop.f32.mrf.mxu0
      %v9962 = vadd.f32 0.0, %v9961
      %9963 = vmatmul.bf16.gmra.mxu0 %v9818
      %v9964 = vpop.f32.mrf.mxu0
      %v9965 = vadd.f32 0.0, %v9964
      %v9966 = vpop.f32.mrf.mxu0
      %v9967 = vadd.f32 0.0, %v9966
      %9968 = vmatmul.bf16.gmra.mxu0 %v9820
      %v9969 = vpop.f32.mrf.mxu0
      %v9970 = vadd.f32 0.0, %v9969
      %v9971 = vpop.f32.mrf.mxu0
      %v9972 = vadd.f32 0.0, %v9971
      %9973 = vdwg.mxu0
      %v9974 = vadd.f32 %v9735, %v9895
      %v9975 = vadd.f32 %v9736, %v9897
      %v9976 = vadd.f32 %v9737, %v9900
      %v9977 = vadd.f32 %v9738, %v9902
      %v9978 = vadd.f32 %v9739, %v9905
      %v9979 = vadd.f32 %v9740, %v9907
      %v9980 = vadd.f32 %v9741, %v9910
      %v9981 = vadd.f32 %v9742, %v9912
      %v9982 = vadd.f32 %v9743, %v9915
      %v9983 = vadd.f32 %v9744, %v9917
      %v9984 = vadd.f32 %v9745, %v9920
      %v9985 = vadd.f32 %v9746, %v9922
      %v9986 = vadd.f32 %v9747, %v9925
      %v9987 = vadd.f32 %v9748, %v9927
      %v9988 = vadd.f32 %v9749, %v9930
      %v9989 = vadd.f32 %v9750, %v9932
      %v9990 = vadd.f32 %v9751, %v9935
      %v9991 = vadd.f32 %v9752, %v9937
      %v9992 = vadd.f32 %v9753, %v9940
      %v9993 = vadd.f32 %v9754, %v9942
      %v9994 = vadd.f32 %v9755, %v9945
      %v9995 = vadd.f32 %v9756, %v9947
      %v9996 = vadd.f32 %v9757, %v9950
      %v9997 = vadd.f32 %v9758, %v9952
      %v9998 = vadd.f32 %v9759, %v9955
      %v9999 = vadd.f32 %v9760, %v9957
      %v10000 = vadd.f32 %v9761, %v9960
      %v10001 = vadd.f32 %v9762, %v9962
      %v10002 = vadd.f32 %v9763, %v9965
      %v10003 = vadd.f32 %v9764, %v9967
      %v10004 = vadd.f32 %v9765, %v9970
      %v10005 = vadd.f32 %v9766, %v9972
      %v10006 = vld [vmem:[#allocation3 + $0x18] sm:$0xf]
      %v10007 = vld [vmem:[#allocation3 + $0x1c] sm:$0xf]
      %v10008 = vld [vmem:[#allocation3 + $0x20] sm:$0xf]
      %v10009 = vld [vmem:[#allocation3 + $0x24] sm:$0xf]
      %v10010 = vld [vmem:[#allocation3 + $0x28] sm:$0xf]
      %v10011 = vld [vmem:[#allocation3 + $0x2c] sm:$0xf]
      %v10012 = vld [vmem:[#allocation3 + $0x30] sm:$0xf]
      %v10013 = vld [vmem:[#allocation3 + $0x34] sm:$0xf]
      %v10014 = vld [vmem:[#allocation3 + $0x38] sm:$0xf]
      %v10015 = vld [vmem:[#allocation3 + $0x3c] sm:$0xf]
      %v10016 = vld [vmem:[#allocation3 + $0x40] sm:$0xf]
      %v10017 = vld [vmem:[#allocation3 + $0x44] sm:$0xf]
      %v10018 = vld [vmem:[#allocation3 + $0x48] sm:$0xf]
      %v10019 = vld [vmem:[#allocation3 + $0x4c] sm:$0xf]
      %v10020 = vld [vmem:[#allocation3 + $0x50] sm:$0xf]
      %v10021 = vld [vmem:[#allocation3 + $0x54] sm:$0xf]
      %v10022 = vld [vmem:[#allocation3 + $0x58] sm:$0xf]
      %v10023 = vld [vmem:[#allocation3 + $0x5c] sm:$0xf]
      %v10024 = vld [vmem:[#allocation3 + $0x60] sm:$0xf]
      %v10025 = vld [vmem:[#allocation3 + $0x64] sm:$0xf]
      %v10026 = vld [vmem:[#allocation3 + $0x68] sm:$0xf]
      %v10027 = vld [vmem:[#allocation3 + $0x6c] sm:$0xf]
      %v10028 = vld [vmem:[#allocation3 + $0x70] sm:$0xf]
      %v10029 = vld [vmem:[#allocation3 + $0x74] sm:$0xf]
      %v10030 = vld [vmem:[#allocation3 + $0x78] sm:$0xf]
      %v10031 = vld [vmem:[#allocation3 + $0x7c] sm:$0xf]
      %v10032 = vld [vmem:[#allocation3 + $0x80] sm:$0xf]
      %v10033 = vld [vmem:[#allocation3 + $0x84] sm:$0xf]
      %v10034 = vld [vmem:[#allocation3 + $0x88] sm:$0xf]
      %v10035 = vld [vmem:[#allocation3 + $0x8c] sm:$0xf]
      %v10036 = vld [vmem:[#allocation3 + $0x90] sm:$0xf]
      %v10037 = vld [vmem:[#allocation3 + $0x94] sm:$0xf]
      %s10038 = scalar_lea.vmem %s5, 384
      %v10039 = vld [vmem:[%s10038] sm:$0xf]
      %v10040 = vld [vmem:[%s10038 + $0x4] sm:$0xf]
      %v10041 = vld [vmem:[%s10038 + $0x8] sm:$0xf]
      %v10042 = vld [vmem:[%s10038 + $0xc] sm:$0xf]
      %v10043 = vld [vmem:[%s10038 + $0x10] sm:$0xf]
      %v10044 = vld [vmem:[%s10038 + $0x14] sm:$0xf]
      %v10045 = vld [vmem:[%s10038 + $0x18] sm:$0xf]
      %v10046 = vld [vmem:[%s10038 + $0x1c] sm:$0xf]
      %v10047 = vld [vmem:[%s10038 + $0x20] sm:$0xf]
      %v10048 = vld [vmem:[%s10038 + $0x24] sm:$0xf]
      %v10049 = vld [vmem:[%s10038 + $0x28] sm:$0xf]
      %v10050 = vld [vmem:[%s10038 + $0x2c] sm:$0xf]
      %v10051 = vld [vmem:[%s10038 + $0x30] sm:$0xf]
      %v10052 = vld [vmem:[%s10038 + $0x34] sm:$0xf]
      %v10053 = vld [vmem:[%s10038 + $0x38] sm:$0xf]
      %v10054 = vld [vmem:[%s10038 + $0x3c] sm:$0xf]
      %v10087 = vunpack.c.l.b16 %v10006
      %v10088 = vunpack.c.l.b16 %v10007
      %v10089 = vunpack.c.l.b16 %v10008
      %v10090 = vunpack.c.l.b16 %v10009
      %v10091 = vunpack.c.l.b16 %v10010
      %v10092 = vunpack.c.l.b16 %v10011
      %v10093 = vunpack.c.l.b16 %v10012
      %v10094 = vunpack.c.l.b16 %v10013
      %v10095 = vunpack.c.l.b16 %v10014
      %v10096 = vunpack.c.l.b16 %v10015
      %v10097 = vunpack.c.l.b16 %v10016
      %v10098 = vunpack.c.l.b16 %v10017
      %v10099 = vunpack.c.l.b16 %v10018
      %v10100 = vunpack.c.l.b16 %v10019
      %v10101 = vunpack.c.l.b16 %v10020
      %v10102 = vunpack.c.l.b16 %v10021
      %v10103 = vunpack.c.l.b16 %v10022
      %v10104 = vunpack.c.l.b16 %v10023
      %v10105 = vunpack.c.l.b16 %v10024
      %v10106 = vunpack.c.l.b16 %v10025
      %v10107 = vunpack.c.l.b16 %v10026
      %v10108 = vunpack.c.l.b16 %v10027
      %v10109 = vunpack.c.l.b16 %v10028
      %v10110 = vunpack.c.l.b16 %v10029
      %v10111 = vunpack.c.l.b16 %v10030
      %v10112 = vunpack.c.l.b16 %v10031
      %v10113 = vunpack.c.l.b16 %v10032
      %v10114 = vunpack.c.l.b16 %v10033
      %v10115 = vunpack.c.l.b16 %v10034
      %v10116 = vunpack.c.l.b16 %v10035
      %v10117 = vunpack.c.l.b16 %v10036
      %v10118 = vunpack.c.l.b16 %v10037
      %v10119 = vpack.c.b16 %v10088, %v10087
      %v10120 = vpack.c.b16 %v10090, %v10089
      %v10121 = vpack.c.b16 %v10092, %v10091
      %v10122 = vpack.c.b16 %v10094, %v10093
      %v10123 = vpack.c.b16 %v10096, %v10095
      %v10124 = vpack.c.b16 %v10098, %v10097
      %v10125 = vpack.c.b16 %v10100, %v10099
      %v10126 = vpack.c.b16 %v10102, %v10101
      %v10127 = vpack.c.b16 %v10104, %v10103
      %v10128 = vpack.c.b16 %v10106, %v10105
      %v10129 = vpack.c.b16 %v10108, %v10107
      %v10130 = vpack.c.b16 %v10110, %v10109
      %v10131 = vpack.c.b16 %v10112, %v10111
      %v10132 = vpack.c.b16 %v10114, %v10113
      %v10133 = vpack.c.b16 %v10116, %v10115
      %v10134 = vpack.c.b16 %v10118, %v10117
      %v10167 = vunpack.c.l.b16 %v10039
      %v10168 = vunpack.c.l.b16 %v10040
      %v10169 = vunpack.c.l.b16 %v10041
      %v10170 = vunpack.c.l.b16 %v10042
      %v10171 = vunpack.c.l.b16 %v10043
      %v10172 = vunpack.c.l.b16 %v10044
      %v10173 = vunpack.c.l.b16 %v10045
      %v10174 = vunpack.c.l.b16 %v10046
      %v10175 = vunpack.c.l.b16 %v10047
      %v10176 = vunpack.c.l.b16 %v10048
      %v10177 = vunpack.c.l.b16 %v10049
      %v10178 = vunpack.c.l.b16 %v10050
      %v10179 = vunpack.c.l.b16 %v10051
      %v10180 = vunpack.c.l.b16 %v10052
      %v10181 = vunpack.c.l.b16 %v10053
      %v10182 = vunpack.c.l.b16 %v10054
      %v10183 = vpack.c.b16 %v10168, %v10167
      %v10184 = vpack.c.b16 %v10170, %v10169
      %v10185 = vpack.c.b16 %v10172, %v10171
      %v10186 = vpack.c.b16 %v10174, %v10173
      %v10187 = vpack.c.b16 %v10176, %v10175
      %v10188 = vpack.c.b16 %v10178, %v10177
      %v10189 = vpack.c.b16 %v10180, %v10179
      %v10190 = vpack.c.b16 %v10182, %v10181
      %10199 = vmatpush.bf16.msra.mxu0 %v10190
      %10200 = vmatpush.bf16.msra.mxu0 %v10189
      %10201 = vmatpush.bf16.msra.mxu0 %v10188
      %10202 = vmatpush.bf16.msra.mxu0 %v10187
      %10203 = vmatpush.bf16.msra.mxu0 %v10186
      %10204 = vmatpush.bf16.msra.mxu0 %v10185
      %10205 = vmatpush.bf16.msra.mxu0 %v10184
      %10206 = vmatpush.bf16.msra.mxu0 %v10183
      %10207 = vmatmul.bf16.gmra.mxu0 %v10119
      %v10208 = vpop.f32.mrf.mxu0
      %v10209 = vadd.f32 0.0, %v10208
      %v10210 = vpop.f32.mrf.mxu0
      %v10211 = vadd.f32 0.0, %v10210
      %10212 = vmatmul.bf16.gmra.mxu0 %v10120
      %v10213 = vpop.f32.mrf.mxu0
      %v10214 = vadd.f32 0.0, %v10213
      %v10215 = vpop.f32.mrf.mxu0
      %v10216 = vadd.f32 0.0, %v10215
      %10217 = vmatmul.bf16.gmra.mxu0 %v10121
      %v10218 = vpop.f32.mrf.mxu0
      %v10219 = vadd.f32 0.0, %v10218
      %v10220 = vpop.f32.mrf.mxu0
      %v10221 = vadd.f32 0.0, %v10220
      %10222 = vmatmul.bf16.gmra.mxu0 %v10122
      %v10223 = vpop.f32.mrf.mxu0
      %v10224 = vadd.f32 0.0, %v10223
      %v10225 = vpop.f32.mrf.mxu0
      %v10226 = vadd.f32 0.0, %v10225
      %10227 = vmatmul.bf16.gmra.mxu0 %v10123
      %v10228 = vpop.f32.mrf.mxu0
      %v10229 = vadd.f32 0.0, %v10228
      %v10230 = vpop.f32.mrf.mxu0
      %v10231 = vadd.f32 0.0, %v10230
      %10232 = vmatmul.bf16.gmra.mxu0 %v10124
      %v10233 = vpop.f32.mrf.mxu0
      %v10234 = vadd.f32 0.0, %v10233
      %v10235 = vpop.f32.mrf.mxu0
      %v10236 = vadd.f32 0.0, %v10235
      %10237 = vmatmul.bf16.gmra.mxu0 %v10125
      %v10238 = vpop.f32.mrf.mxu0
      %v10239 = vadd.f32 0.0, %v10238
      %v10240 = vpop.f32.mrf.mxu0
      %v10241 = vadd.f32 0.0, %v10240
      %10242 = vmatmul.bf16.gmra.mxu0 %v10126
      %v10243 = vpop.f32.mrf.mxu0
      %v10244 = vadd.f32 0.0, %v10243
      %v10245 = vpop.f32.mrf.mxu0
      %v10246 = vadd.f32 0.0, %v10245
      %10247 = vmatmul.bf16.gmra.mxu0 %v10127
      %v10248 = vpop.f32.mrf.mxu0
      %v10249 = vadd.f32 0.0, %v10248
      %v10250 = vpop.f32.mrf.mxu0
      %v10251 = vadd.f32 0.0, %v10250
      %10252 = vmatmul.bf16.gmra.mxu0 %v10128
      %v10253 = vpop.f32.mrf.mxu0
      %v10254 = vadd.f32 0.0, %v10253
      %v10255 = vpop.f32.mrf.mxu0
      %v10256 = vadd.f32 0.0, %v10255
      %10257 = vmatmul.bf16.gmra.mxu0 %v10129
      %v10258 = vpop.f32.mrf.mxu0
      %v10259 = vadd.f32 0.0, %v10258
      %v10260 = vpop.f32.mrf.mxu0
      %v10261 = vadd.f32 0.0, %v10260
      %10262 = vmatmul.bf16.gmra.mxu0 %v10130
      %v10263 = vpop.f32.mrf.mxu0
      %v10264 = vadd.f32 0.0, %v10263
      %v10265 = vpop.f32.mrf.mxu0
      %v10266 = vadd.f32 0.0, %v10265
      %10267 = vmatmul.bf16.gmra.mxu0 %v10131
      %v10268 = vpop.f32.mrf.mxu0
      %v10269 = vadd.f32 0.0, %v10268
      %v10270 = vpop.f32.mrf.mxu0
      %v10271 = vadd.f32 0.0, %v10270
      %10272 = vmatmul.bf16.gmra.mxu0 %v10132
      %v10273 = vpop.f32.mrf.mxu0
      %v10274 = vadd.f32 0.0, %v10273
      %v10275 = vpop.f32.mrf.mxu0
      %v10276 = vadd.f32 0.0, %v10275
      %10277 = vmatmul.bf16.gmra.mxu0 %v10133
      %v10278 = vpop.f32.mrf.mxu0
      %v10279 = vadd.f32 0.0, %v10278
      %v10280 = vpop.f32.mrf.mxu0
      %v10281 = vadd.f32 0.0, %v10280
      %10282 = vmatmul.bf16.gmra.mxu0 %v10134
      %v10283 = vpop.f32.mrf.mxu0
      %v10284 = vadd.f32 0.0, %v10283
      %v10285 = vpop.f32.mrf.mxu0
      %v10286 = vadd.f32 0.0, %v10285
      %10287 = vdwg.mxu0
      %v10288 = vadd.f32 %v9974, %v10209
      %v10289 = vadd.f32 %v9975, %v10211
      %v10290 = vadd.f32 %v9976, %v10214
      %v10291 = vadd.f32 %v9977, %v10216
      %v10292 = vadd.f32 %v9978, %v10219
      %v10293 = vadd.f32 %v9979, %v10221
      %v10294 = vadd.f32 %v9980, %v10224
      %v10295 = vadd.f32 %v9981, %v10226
      %v10296 = vadd.f32 %v9982, %v10229
      %v10297 = vadd.f32 %v9983, %v10231
      %v10298 = vadd.f32 %v9984, %v10234
      %v10299 = vadd.f32 %v9985, %v10236
      %v10300 = vadd.f32 %v9986, %v10239
      %v10301 = vadd.f32 %v9987, %v10241
      %v10302 = vadd.f32 %v9988, %v10244
      %v10303 = vadd.f32 %v9989, %v10246
      %v10304 = vadd.f32 %v9990, %v10249
      %v10305 = vadd.f32 %v9991, %v10251
      %v10306 = vadd.f32 %v9992, %v10254
      %v10307 = vadd.f32 %v9993, %v10256
      %v10308 = vadd.f32 %v9994, %v10259
      %v10309 = vadd.f32 %v9995, %v10261
      %v10310 = vadd.f32 %v9996, %v10264
      %v10311 = vadd.f32 %v9997, %v10266
      %v10312 = vadd.f32 %v9998, %v10269
      %v10313 = vadd.f32 %v9999, %v10271
      %v10314 = vadd.f32 %v10000, %v10274
      %v10315 = vadd.f32 %v10001, %v10276
      %v10316 = vadd.f32 %v10002, %v10279
      %v10317 = vadd.f32 %v10003, %v10281
      %v10318 = vadd.f32 %v10004, %v10284
      %v10319 = vadd.f32 %v10005, %v10286
      %v10320 = vld [vmem:[#allocation3 + $0x18] sm:$0xf]
      %v10321 = vld [vmem:[#allocation3 + $0x1c] sm:$0xf]
      %v10322 = vld [vmem:[#allocation3 + $0x20] sm:$0xf]
      %v10323 = vld [vmem:[#allocation3 + $0x24] sm:$0xf]
      %v10324 = vld [vmem:[#allocation3 + $0x28] sm:$0xf]
      %v10325 = vld [vmem:[#allocation3 + $0x2c] sm:$0xf]
      %v10326 = vld [vmem:[#allocation3 + $0x30] sm:$0xf]
      %v10327 = vld [vmem:[#allocation3 + $0x34] sm:$0xf]
      %v10328 = vld [vmem:[#allocation3 + $0x38] sm:$0xf]
      %v10329 = vld [vmem:[#allocation3 + $0x3c] sm:$0xf]
      %v10330 = vld [vmem:[#allocation3 + $0x40] sm:$0xf]
      %v10331 = vld [vmem:[#allocation3 + $0x44] sm:$0xf]
      %v10332 = vld [vmem:[#allocation3 + $0x48] sm:$0xf]
      %v10333 = vld [vmem:[#allocation3 + $0x4c] sm:$0xf]
      %v10334 = vld [vmem:[#allocation3 + $0x50] sm:$0xf]
      %v10335 = vld [vmem:[#allocation3 + $0x54] sm:$0xf]
      %v10336 = vld [vmem:[#allocation3 + $0x58] sm:$0xf]
      %v10337 = vld [vmem:[#allocation3 + $0x5c] sm:$0xf]
      %v10338 = vld [vmem:[#allocation3 + $0x60] sm:$0xf]
      %v10339 = vld [vmem:[#allocation3 + $0x64] sm:$0xf]
      %v10340 = vld [vmem:[#allocation3 + $0x68] sm:$0xf]
      %v10341 = vld [vmem:[#allocation3 + $0x6c] sm:$0xf]
      %v10342 = vld [vmem:[#allocation3 + $0x70] sm:$0xf]
      %v10343 = vld [vmem:[#allocation3 + $0x74] sm:$0xf]
      %v10344 = vld [vmem:[#allocation3 + $0x78] sm:$0xf]
      %v10345 = vld [vmem:[#allocation3 + $0x7c] sm:$0xf]
      %v10346 = vld [vmem:[#allocation3 + $0x80] sm:$0xf]
      %v10347 = vld [vmem:[#allocation3 + $0x84] sm:$0xf]
      %v10348 = vld [vmem:[#allocation3 + $0x88] sm:$0xf]
      %v10349 = vld [vmem:[#allocation3 + $0x8c] sm:$0xf]
      %v10350 = vld [vmem:[#allocation3 + $0x90] sm:$0xf]
      %v10351 = vld [vmem:[#allocation3 + $0x94] sm:$0xf]
      %v10352 = vld [vmem:[#allocation3 + $0x98] sm:$0x1]
      %s10353 = scalar_lea.vmem %s5, 448
      %v10354 = vld [vmem:[%s10353] sm:$0xf]
      %v10355 = vld [vmem:[%s10353 + $0x4] sm:$0xf]
      %v10356 = vld [vmem:[%s10353 + $0x8] sm:$0xf]
      %v10357 = vld [vmem:[%s10353 + $0xc] sm:$0xf]
      %v10358 = vld [vmem:[%s10353 + $0x10] sm:$0xf]
      %v10359 = vld [vmem:[%s10353 + $0x14] sm:$0xf]
      %v10360 = vld [vmem:[%s10353 + $0x18] sm:$0xf]
      %v10361 = vld [vmem:[%s10353 + $0x1c] sm:$0xf]
      %v10362 = vld [vmem:[%s10353 + $0x20] sm:$0xf]
      %v10363 = vld [vmem:[%s10353 + $0x24] sm:$0xf]
      %v10364 = vld [vmem:[%s10353 + $0x28] sm:$0xf]
      %v10365 = vld [vmem:[%s10353 + $0x2c] sm:$0xf]
      %v10366 = vld [vmem:[%s10353 + $0x30] sm:$0xf]
      %v10367 = vld [vmem:[%s10353 + $0x34] sm:$0xf]
      %v10368 = vld [vmem:[%s10353 + $0x38] sm:$0xf]
      %v10369 = vld [vmem:[%s10353 + $0x3c] sm:$0xf]
      %v10403 = vunpack.c.l.b16 %v10320
      %v10404 = vunpack.c.l.b16 %v10321
      %v10405 = vunpack.c.l.b16 %v10322
      %v10406 = vunpack.c.l.b16 %v10323
      %v10407 = vunpack.c.l.b16 %v10324
      %v10408 = vunpack.c.l.b16 %v10325
      %v10409 = vunpack.c.l.b16 %v10326
      %v10410 = vunpack.c.l.b16 %v10327
      %v10411 = vunpack.c.l.b16 %v10328
      %v10412 = vunpack.c.l.b16 %v10329
      %v10413 = vunpack.c.l.b16 %v10330
      %v10414 = vunpack.c.l.b16 %v10331
      %v10415 = vunpack.c.l.b16 %v10332
      %v10416 = vunpack.c.l.b16 %v10333
      %v10417 = vunpack.c.l.b16 %v10334
      %v10418 = vunpack.c.l.b16 %v10335
      %v10419 = vunpack.c.l.b16 %v10336
      %v10420 = vunpack.c.l.b16 %v10337
      %v10421 = vunpack.c.l.b16 %v10338
      %v10422 = vunpack.c.l.b16 %v10339
      %v10423 = vunpack.c.l.b16 %v10340
      %v10424 = vunpack.c.l.b16 %v10341
      %v10425 = vunpack.c.l.b16 %v10342
      %v10426 = vunpack.c.l.b16 %v10343
      %v10427 = vunpack.c.l.b16 %v10344
      %v10428 = vunpack.c.l.b16 %v10345
      %v10429 = vunpack.c.l.b16 %v10346
      %v10430 = vunpack.c.l.b16 %v10347
      %v10431 = vunpack.c.l.b16 %v10348
      %v10432 = vunpack.c.l.b16 %v10349
      %v10433 = vunpack.c.l.b16 %v10350
      %v10434 = vunpack.c.l.b16 %v10351
      %v10435 = vunpack.c.l.b16 %v10352
      %v10436 = vpack.c.b16 %v10404, %v10403
      %v10437 = vpack.c.b16 %v10406, %v10405
      %v10438 = vpack.c.b16 %v10408, %v10407
      %v10439 = vpack.c.b16 %v10410, %v10409
      %v10440 = vpack.c.b16 %v10412, %v10411
      %v10441 = vpack.c.b16 %v10414, %v10413
      %v10442 = vpack.c.b16 %v10416, %v10415
      %v10443 = vpack.c.b16 %v10418, %v10417
      %v10444 = vpack.c.b16 %v10420, %v10419
      %v10445 = vpack.c.b16 %v10422, %v10421
      %v10446 = vpack.c.b16 %v10424, %v10423
      %v10447 = vpack.c.b16 %v10426, %v10425
      %v10448 = vpack.c.b16 %v10428, %v10427
      %v10449 = vpack.c.b16 %v10430, %v10429
      %v10450 = vpack.c.b16 %v10432, %v10431
      %v10451 = vpack.c.b16 %v10434, %v10433
      %v10452 = vpack.c.b16 %v10435, %v10435
      %v10454 = vshrl.u32 %v10436, 16
      %v10456 = vshll.u32 %v10436, 16
      %v10458 = vrot.slane %v10456, 1
      %v10459 = vor.u32 %v10454, %v10458
      %v10461 = vshll.u32 %v10437, 16
      %v10463 = vrot.slane %v10461, 1
      %v10464 = vsel %vm1753, %v10459, %v10463
      %v10465 = vshrl.u32 %v10437, 16
      %v10467 = vor.u32 %v10465, %v10463
      %v10469 = vshll.u32 %v10438, 16
      %v10471 = vrot.slane %v10469, 1
      %v10472 = vsel %vm1753, %v10467, %v10471
      %v10473 = vshrl.u32 %v10438, 16
      %v10475 = vor.u32 %v10473, %v10471
      %v10477 = vshll.u32 %v10439, 16
      %v10479 = vrot.slane %v10477, 1
      %v10480 = vsel %vm1753, %v10475, %v10479
      %v10481 = vshrl.u32 %v10439, 16
      %v10483 = vor.u32 %v10481, %v10479
      %v10485 = vshll.u32 %v10440, 16
      %v10487 = vrot.slane %v10485, 1
      %v10488 = vsel %vm1753, %v10483, %v10487
      %v10489 = vshrl.u32 %v10440, 16
      %v10491 = vor.u32 %v10489, %v10487
      %v10493 = vshll.u32 %v10441, 16
      %v10495 = vrot.slane %v10493, 1
      %v10496 = vsel %vm1753, %v10491, %v10495
      %v10497 = vshrl.u32 %v10441, 16
      %v10499 = vor.u32 %v10497, %v10495
      %v10501 = vshll.u32 %v10442, 16
      %v10503 = vrot.slane %v10501, 1
      %v10504 = vsel %vm1753, %v10499, %v10503
      %v10505 = vshrl.u32 %v10442, 16
      %v10507 = vor.u32 %v10505, %v10503
      %v10509 = vshll.u32 %v10443, 16
      %v10511 = vrot.slane %v10509, 1
      %v10512 = vsel %vm1753, %v10507, %v10511
      %v10513 = vshrl.u32 %v10443, 16
      %v10515 = vor.u32 %v10513, %v10511
      %v10517 = vshll.u32 %v10444, 16
      %v10519 = vrot.slane %v10517, 1
      %v10520 = vsel %vm1753, %v10515, %v10519
      %v10521 = vshrl.u32 %v10444, 16
      %v10523 = vor.u32 %v10521, %v10519
      %v10525 = vshll.u32 %v10445, 16
      %v10527 = vrot.slane %v10525, 1
      %v10528 = vsel %vm1753, %v10523, %v10527
      %v10529 = vshrl.u32 %v10445, 16
      %v10531 = vor.u32 %v10529, %v10527
      %v10533 = vshll.u32 %v10446, 16
      %v10535 = vrot.slane %v10533, 1
      %v10536 = vsel %vm1753, %v10531, %v10535
      %v10537 = vshrl.u32 %v10446, 16
      %v10539 = vor.u32 %v10537, %v10535
      %v10541 = vshll.u32 %v10447, 16
      %v10543 = vrot.slane %v10541, 1
      %v10544 = vsel %vm1753, %v10539, %v10543
      %v10545 = vshrl.u32 %v10447, 16
      %v10547 = vor.u32 %v10545, %v10543
      %v10549 = vshll.u32 %v10448, 16
      %v10551 = vrot.slane %v10549, 1
      %v10552 = vsel %vm1753, %v10547, %v10551
      %v10553 = vshrl.u32 %v10448, 16
      %v10555 = vor.u32 %v10553, %v10551
      %v10557 = vshll.u32 %v10449, 16
      %v10559 = vrot.slane %v10557, 1
      %v10560 = vsel %vm1753, %v10555, %v10559
      %v10561 = vshrl.u32 %v10449, 16
      %v10563 = vor.u32 %v10561, %v10559
      %v10565 = vshll.u32 %v10450, 16
      %v10567 = vrot.slane %v10565, 1
      %v10568 = vsel %vm1753, %v10563, %v10567
      %v10569 = vshrl.u32 %v10450, 16
      %v10571 = vor.u32 %v10569, %v10567
      %v10573 = vshll.u32 %v10451, 16
      %v10575 = vrot.slane %v10573, 1
      %v10576 = vsel %vm1753, %v10571, %v10575
      %v10577 = vshrl.u32 %v10451, 16
      %v10579 = vor.u32 %v10577, %v10575
      %v10581 = vshll.u32 %v10452, 16
      %v10583 = vrot.slane %v10581, 1
      %v10584 = vsel %vm1753, %v10579, %v10583
      %v10617 = vunpack.c.l.b16 %v10354
      %v10618 = vunpack.c.l.b16 %v10355
      %v10619 = vunpack.c.l.b16 %v10356
      %v10620 = vunpack.c.l.b16 %v10357
      %v10621 = vunpack.c.l.b16 %v10358
      %v10622 = vunpack.c.l.b16 %v10359
      %v10623 = vunpack.c.l.b16 %v10360
      %v10624 = vunpack.c.l.b16 %v10361
      %v10625 = vunpack.c.l.b16 %v10362
      %v10626 = vunpack.c.l.b16 %v10363
      %v10627 = vunpack.c.l.b16 %v10364
      %v10628 = vunpack.c.l.b16 %v10365
      %v10629 = vunpack.c.l.b16 %v10366
      %v10630 = vunpack.c.l.b16 %v10367
      %v10631 = vunpack.c.l.b16 %v10368
      %v10632 = vunpack.c.l.b16 %v10369
      %v10633 = vpack.c.b16 %v10618, %v10617
      %v10634 = vpack.c.b16 %v10620, %v10619
      %v10635 = vpack.c.b16 %v10622, %v10621
      %v10636 = vpack.c.b16 %v10624, %v10623
      %v10637 = vpack.c.b16 %v10626, %v10625
      %v10638 = vpack.c.b16 %v10628, %v10627
      %v10639 = vpack.c.b16 %v10630, %v10629
      %v10640 = vpack.c.b16 %v10632, %v10631
      %10649 = vmatpush.bf16.msra.mxu0 %v10640
      %10650 = vmatpush.bf16.msra.mxu0 %v10639
      %10651 = vmatpush.bf16.msra.mxu0 %v10638
      %10652 = vmatpush.bf16.msra.mxu0 %v10637
      %10653 = vmatpush.bf16.msra.mxu0 %v10636
      %10654 = vmatpush.bf16.msra.mxu0 %v10635
      %10655 = vmatpush.bf16.msra.mxu0 %v10634
      %10656 = vmatpush.bf16.msra.mxu0 %v10633
      %10657 = vmatmul.bf16.gmra.mxu0 %v10464
      %v10658 = vpop.f32.mrf.mxu0
      %v10659 = vadd.f32 0.0, %v10658
      %v10660 = vpop.f32.mrf.mxu0
      %v10661 = vadd.f32 0.0, %v10660
      %10662 = vmatmul.bf16.gmra.mxu0 %v10472
      %v10663 = vpop.f32.mrf.mxu0
      %v10664 = vadd.f32 0.0, %v10663
      %v10665 = vpop.f32.mrf.mxu0
      %v10666 = vadd.f32 0.0, %v10665
      %10667 = vmatmul.bf16.gmra.mxu0 %v10480
      %v10668 = vpop.f32.mrf.mxu0
      %v10669 = vadd.f32 0.0, %v10668
      %v10670 = vpop.f32.mrf.mxu0
      %v10671 = vadd.f32 0.0, %v10670
      %10672 = vmatmul.bf16.gmra.mxu0 %v10488
      %v10673 = vpop.f32.mrf.mxu0
      %v10674 = vadd.f32 0.0, %v10673
      %v10675 = vpop.f32.mrf.mxu0
      %v10676 = vadd.f32 0.0, %v10675
      %10677 = vmatmul.bf16.gmra.mxu0 %v10496
      %v10678 = vpop.f32.mrf.mxu0
      %v10679 = vadd.f32 0.0, %v10678
      %v10680 = vpop.f32.mrf.mxu0
      %v10681 = vadd.f32 0.0, %v10680
      %10682 = vmatmul.bf16.gmra.mxu0 %v10504
      %v10683 = vpop.f32.mrf.mxu0
      %v10684 = vadd.f32 0.0, %v10683
      %v10685 = vpop.f32.mrf.mxu0
      %v10686 = vadd.f32 0.0, %v10685
      %10687 = vmatmul.bf16.gmra.mxu0 %v10512
      %v10688 = vpop.f32.mrf.mxu0
      %v10689 = vadd.f32 0.0, %v10688
      %v10690 = vpop.f32.mrf.mxu0
      %v10691 = vadd.f32 0.0, %v10690
      %10692 = vmatmul.bf16.gmra.mxu0 %v10520
      %v10693 = vpop.f32.mrf.mxu0
      %v10694 = vadd.f32 0.0, %v10693
      %v10695 = vpop.f32.mrf.mxu0
      %v10696 = vadd.f32 0.0, %v10695
      %10697 = vmatmul.bf16.gmra.mxu0 %v10528
      %v10698 = vpop.f32.mrf.mxu0
      %v10699 = vadd.f32 0.0, %v10698
      %v10700 = vpop.f32.mrf.mxu0
      %v10701 = vadd.f32 0.0, %v10700
      %10702 = vmatmul.bf16.gmra.mxu0 %v10536
      %v10703 = vpop.f32.mrf.mxu0
      %v10704 = vadd.f32 0.0, %v10703
      %v10705 = vpop.f32.mrf.mxu0
      %v10706 = vadd.f32 0.0, %v10705
      %10707 = vmatmul.bf16.gmra.mxu0 %v10544
      %v10708 = vpop.f32.mrf.mxu0
      %v10709 = vadd.f32 0.0, %v10708
      %v10710 = vpop.f32.mrf.mxu0
      %v10711 = vadd.f32 0.0, %v10710
      %10712 = vmatmul.bf16.gmra.mxu0 %v10552
      %v10713 = vpop.f32.mrf.mxu0
      %v10714 = vadd.f32 0.0, %v10713
      %v10715 = vpop.f32.mrf.mxu0
      %v10716 = vadd.f32 0.0, %v10715
      %10717 = vmatmul.bf16.gmra.mxu0 %v10560
      %v10718 = vpop.f32.mrf.mxu0
      %v10719 = vadd.f32 0.0, %v10718
      %v10720 = vpop.f32.mrf.mxu0
      %v10721 = vadd.f32 0.0, %v10720
      %10722 = vmatmul.bf16.gmra.mxu0 %v10568
      %v10723 = vpop.f32.mrf.mxu0
      %v10724 = vadd.f32 0.0, %v10723
      %v10725 = vpop.f32.mrf.mxu0
      %v10726 = vadd.f32 0.0, %v10725
      %10727 = vmatmul.bf16.gmra.mxu0 %v10576
      %v10728 = vpop.f32.mrf.mxu0
      %v10729 = vadd.f32 0.0, %v10728
      %v10730 = vpop.f32.mrf.mxu0
      %v10731 = vadd.f32 0.0, %v10730
      %10732 = vmatmul.bf16.gmra.mxu0 %v10584
      %v10733 = vpop.f32.mrf.mxu0
      %v10734 = vadd.f32 0.0, %v10733
      %v10735 = vpop.f32.mrf.mxu0
      %v10736 = vadd.f32 0.0, %v10735
      %10737 = vdwg.mxu0
      %v10738 = vadd.f32 %v10288, %v10659
      %v10739 = vadd.f32 %v10289, %v10661
      %v10740 = vadd.f32 %v10290, %v10664
      %v10741 = vadd.f32 %v10291, %v10666
      %v10742 = vadd.f32 %v10292, %v10669
      %v10743 = vadd.f32 %v10293, %v10671
      %v10744 = vadd.f32 %v10294, %v10674
      %v10745 = vadd.f32 %v10295, %v10676
      %v10746 = vadd.f32 %v10296, %v10679
      %v10747 = vadd.f32 %v10297, %v10681
      %v10748 = vadd.f32 %v10298, %v10684
      %v10749 = vadd.f32 %v10299, %v10686
      %v10750 = vadd.f32 %v10300, %v10689
      %v10751 = vadd.f32 %v10301, %v10691
      %v10752 = vadd.f32 %v10302, %v10694
      %v10753 = vadd.f32 %v10303, %v10696
      %v10754 = vadd.f32 %v10304, %v10699
      %v10755 = vadd.f32 %v10305, %v10701
      %v10756 = vadd.f32 %v10306, %v10704
      %v10757 = vadd.f32 %v10307, %v10706
      %v10758 = vadd.f32 %v10308, %v10709
      %v10759 = vadd.f32 %v10309, %v10711
      %v10760 = vadd.f32 %v10310, %v10714
      %v10761 = vadd.f32 %v10311, %v10716
      %v10762 = vadd.f32 %v10312, %v10719
      %v10763 = vadd.f32 %v10313, %v10721
      %v10764 = vadd.f32 %v10314, %v10724
      %v10765 = vadd.f32 %v10315, %v10726
      %v10766 = vadd.f32 %v10316, %v10729
      %v10767 = vadd.f32 %v10317, %v10731
      %v10768 = vadd.f32 %v10318, %v10734
      %v10769 = vadd.f32 %v10319, %v10736
      %v10770 = vld [vmem:[#allocation3 + $0x18] sm:$0xe]
      %s10771 = scalar_lea.vmem %s5, 512
      %v10772 = vld [vmem:[%s10771] sm:$0xf]
      %v10773 = vld [vmem:[%s10771 + $0x4] sm:$0xf]
      %v10774 = vld [vmem:[%s10771 + $0x8] sm:$0xf]
      %v10775 = vld [vmem:[%s10771 + $0xc] sm:$0xf]
      %v10776 = vld [vmem:[%s10771 + $0x10] sm:$0xf]
      %v10777 = vld [vmem:[%s10771 + $0x14] sm:$0xf]
      %v10778 = vld [vmem:[%s10771 + $0x18] sm:$0xf]
      %v10779 = vld [vmem:[%s10771 + $0x1c] sm:$0xf]
      %v10780 = vld [vmem:[%s10771 + $0x20] sm:$0xf]
      %v10781 = vld [vmem:[%s10771 + $0x24] sm:$0xf]
      %v10782 = vld [vmem:[%s10771 + $0x28] sm:$0xf]
      %v10783 = vld [vmem:[%s10771 + $0x2c] sm:$0xf]
      %v10784 = vld [vmem:[%s10771 + $0x30] sm:$0xf]
      %v10785 = vld [vmem:[%s10771 + $0x34] sm:$0xf]
      %v10786 = vld [vmem:[%s10771 + $0x38] sm:$0xf]
      %v10787 = vld [vmem:[%s10771 + $0x3c] sm:$0xf]
      %v10789 = vunpack.c.l.b16 %v10770
      %v10790 = vpack.c.b16 %v10404, %v10789
      %v10791 = vrot.slane %v10790, 1
      %v10792 = vrot.slane %v10437, 1
      %v10793 = vsel %vm2158, %v10791, %v10792
      %v10794 = vrot.slane %v10438, 1
      %v10795 = vsel %vm2158, %v10792, %v10794
      %v10796 = vrot.slane %v10439, 1
      %v10797 = vsel %vm2158, %v10794, %v10796
      %v10798 = vrot.slane %v10440, 1
      %v10799 = vsel %vm2158, %v10796, %v10798
      %v10800 = vrot.slane %v10441, 1
      %v10801 = vsel %vm2158, %v10798, %v10800
      %v10802 = vrot.slane %v10442, 1
      %v10803 = vsel %vm2158, %v10800, %v10802
      %v10804 = vrot.slane %v10443, 1
      %v10805 = vsel %vm2158, %v10802, %v10804
      %v10806 = vrot.slane %v10444, 1
      %v10807 = vsel %vm2158, %v10804, %v10806
      %v10808 = vrot.slane %v10445, 1
      %v10809 = vsel %vm2158, %v10806, %v10808
      %v10810 = vrot.slane %v10446, 1
      %v10811 = vsel %vm2158, %v10808, %v10810
      %v10812 = vrot.slane %v10447, 1
      %v10813 = vsel %vm2158, %v10810, %v10812
      %v10814 = vrot.slane %v10448, 1
      %v10815 = vsel %vm2158, %v10812, %v10814
      %v10816 = vrot.slane %v10449, 1
      %v10817 = vsel %vm2158, %v10814, %v10816
      %v10818 = vrot.slane %v10450, 1
      %v10819 = vsel %vm2158, %v10816, %v10818
      %v10820 = vrot.slane %v10451, 1
      %v10821 = vsel %vm2158, %v10818, %v10820
      %v10822 = vrot.slane %v10452, 1
      %v10823 = vsel %vm2158, %v10820, %v10822
      %v10856 = vunpack.c.l.b16 %v10772
      %v10857 = vunpack.c.l.b16 %v10773
      %v10858 = vunpack.c.l.b16 %v10774
      %v10859 = vunpack.c.l.b16 %v10775
      %v10860 = vunpack.c.l.b16 %v10776
      %v10861 = vunpack.c.l.b16 %v10777
      %v10862 = vunpack.c.l.b16 %v10778
      %v10863 = vunpack.c.l.b16 %v10779
      %v10864 = vunpack.c.l.b16 %v10780
      %v10865 = vunpack.c.l.b16 %v10781
      %v10866 = vunpack.c.l.b16 %v10782
      %v10867 = vunpack.c.l.b16 %v10783
      %v10868 = vunpack.c.l.b16 %v10784
      %v10869 = vunpack.c.l.b16 %v10785
      %v10870 = vunpack.c.l.b16 %v10786
      %v10871 = vunpack.c.l.b16 %v10787
      %v10872 = vpack.c.b16 %v10857, %v10856
      %v10873 = vpack.c.b16 %v10859, %v10858
      %v10874 = vpack.c.b16 %v10861, %v10860
      %v10875 = vpack.c.b16 %v10863, %v10862
      %v10876 = vpack.c.b16 %v10865, %v10864
      %v10877 = vpack.c.b16 %v10867, %v10866
      %v10878 = vpack.c.b16 %v10869, %v10868
      %v10879 = vpack.c.b16 %v10871, %v10870
      %10888 = vmatpush.bf16.msra.mxu0 %v10879
      %10889 = vmatpush.bf16.msra.mxu0 %v10878
      %10890 = vmatpush.bf16.msra.mxu0 %v10877
      %10891 = vmatpush.bf16.msra.mxu0 %v10876
      %10892 = vmatpush.bf16.msra.mxu0 %v10875
      %10893 = vmatpush.bf16.msra.mxu0 %v10874
      %10894 = vmatpush.bf16.msra.mxu0 %v10873
      %10895 = vmatpush.bf16.msra.mxu0 %v10872
      %10896 = vmatmul.bf16.gmra.mxu0 %v10793
      %v10897 = vpop.f32.mrf.mxu0
      %v10898 = vadd.f32 0.0, %v10897
      %v10899 = vpop.f32.mrf.mxu0
      %v10900 = vadd.f32 0.0, %v10899
      %10901 = vmatmul.bf16.gmra.mxu0 %v10795
      %v10902 = vpop.f32.mrf.mxu0
      %v10903 = vadd.f32 0.0, %v10902
      %v10904 = vpop.f32.mrf.mxu0
      %v10905 = vadd.f32 0.0, %v10904
      %10906 = vmatmul.bf16.gmra.mxu0 %v10797
      %v10907 = vpop.f32.mrf.mxu0
      %v10908 = vadd.f32 0.0, %v10907
      %v10909 = vpop.f32.mrf.mxu0
      %v10910 = vadd.f32 0.0, %v10909
      %10911 = vmatmul.bf16.gmra.mxu0 %v10799
      %v10912 = vpop.f32.mrf.mxu0
      %v10913 = vadd.f32 0.0, %v10912
      %v10914 = vpop.f32.mrf.mxu0
      %v10915 = vadd.f32 0.0, %v10914
      %10916 = vmatmul.bf16.gmra.mxu0 %v10801
      %v10917 = vpop.f32.mrf.mxu0
      %v10918 = vadd.f32 0.0, %v10917
      %v10919 = vpop.f32.mrf.mxu0
      %v10920 = vadd.f32 0.0, %v10919
      %10921 = vmatmul.bf16.gmra.mxu0 %v10803
      %v10922 = vpop.f32.mrf.mxu0
      %v10923 = vadd.f32 0.0, %v10922
      %v10924 = vpop.f32.mrf.mxu0
      %v10925 = vadd.f32 0.0, %v10924
      %10926 = vmatmul.bf16.gmra.mxu0 %v10805
      %v10927 = vpop.f32.mrf.mxu0
      %v10928 = vadd.f32 0.0, %v10927
      %v10929 = vpop.f32.mrf.mxu0
      %v10930 = vadd.f32 0.0, %v10929
      %10931 = vmatmul.bf16.gmra.mxu0 %v10807
      %v10932 = vpop.f32.mrf.mxu0
      %v10933 = vadd.f32 0.0, %v10932
      %v10934 = vpop.f32.mrf.mxu0
      %v10935 = vadd.f32 0.0, %v10934
      %10936 = vmatmul.bf16.gmra.mxu0 %v10809
      %v10937 = vpop.f32.mrf.mxu0
      %v10938 = vadd.f32 0.0, %v10937
      %v10939 = vpop.f32.mrf.mxu0
      %v10940 = vadd.f32 0.0, %v10939
      %10941 = vmatmul.bf16.gmra.mxu0 %v10811
      %v10942 = vpop.f32.mrf.mxu0
      %v10943 = vadd.f32 0.0, %v10942
      %v10944 = vpop.f32.mrf.mxu0
      %v10945 = vadd.f32 0.0, %v10944
      %10946 = vmatmul.bf16.gmra.mxu0 %v10813
      %v10947 = vpop.f32.mrf.mxu0
      %v10948 = vadd.f32 0.0, %v10947
      %v10949 = vpop.f32.mrf.mxu0
      %v10950 = vadd.f32 0.0, %v10949
      %10951 = vmatmul.bf16.gmra.mxu0 %v10815
      %v10952 = vpop.f32.mrf.mxu0
      %v10953 = vadd.f32 0.0, %v10952
      %v10954 = vpop.f32.mrf.mxu0
      %v10955 = vadd.f32 0.0, %v10954
      %10956 = vmatmul.bf16.gmra.mxu0 %v10817
      %v10957 = vpop.f32.mrf.mxu0
      %v10958 = vadd.f32 0.0, %v10957
      %v10959 = vpop.f32.mrf.mxu0
      %v10960 = vadd.f32 0.0, %v10959
      %10961 = vmatmul.bf16.gmra.mxu0 %v10819
      %v10962 = vpop.f32.mrf.mxu0
      %v10963 = vadd.f32 0.0, %v10962
      %v10964 = vpop.f32.mrf.mxu0
      %v10965 = vadd.f32 0.0, %v10964
      %10966 = vmatmul.bf16.gmra.mxu0 %v10821
      %v10967 = vpop.f32.mrf.mxu0
      %v10968 = vadd.f32 0.0, %v10967
      %v10969 = vpop.f32.mrf.mxu0
      %v10970 = vadd.f32 0.0, %v10969
      %10971 = vmatmul.bf16.gmra.mxu0 %v10823
      %v10972 = vpop.f32.mrf.mxu0
      %v10973 = vadd.f32 0.0, %v10972
      %v10974 = vpop.f32.mrf.mxu0
      %v10975 = vadd.f32 0.0, %v10974
      %10976 = vdwg.mxu0
      %v10977 = vadd.f32 %v10738, %v10898
      %v10978 = vadd.f32 %v10739, %v10900
      %v10979 = vadd.f32 %v10740, %v10903
      %v10980 = vadd.f32 %v10741, %v10905
      %v10981 = vadd.f32 %v10742, %v10908
      %v10982 = vadd.f32 %v10743, %v10910
      %v10983 = vadd.f32 %v10744, %v10913
      %v10984 = vadd.f32 %v10745, %v10915
      %v10985 = vadd.f32 %v10746, %v10918
      %v10986 = vadd.f32 %v10747, %v10920
      %v10987 = vadd.f32 %v10748, %v10923
      %v10988 = vadd.f32 %v10749, %v10925
      %v10989 = vadd.f32 %v10750, %v10928
      %v10990 = vadd.f32 %v10751, %v10930
      %v10991 = vadd.f32 %v10752, %v10933
      %v10992 = vadd.f32 %v10753, %v10935
      %v10993 = vadd.f32 %v10754, %v10938
      %v10994 = vadd.f32 %v10755, %v10940
      %v10995 = vadd.f32 %v10756, %v10943
      %v10996 = vadd.f32 %v10757, %v10945
      %v10997 = vadd.f32 %v10758, %v10948
      %v10998 = vadd.f32 %v10759, %v10950
      %v10999 = vadd.f32 %v10760, %v10953
      %v11000 = vadd.f32 %v10761, %v10955
      %v11001 = vadd.f32 %v10762, %v10958
      %v11002 = vadd.f32 %v10763, %v10960
      %v11003 = vadd.f32 %v10764, %v10963
      %v11004 = vadd.f32 %v10765, %v10965
      %v11005 = vadd.f32 %v10766, %v10968
      %v11006 = vadd.f32 %v10767, %v10970
      %v11007 = vadd.f32 %v10768, %v10973
      %v11008 = vadd.f32 %v10769, %v10975
      %v11009 = vld [vmem:[%s6] sm:$0x1]
      %v11011 = vperm.slane %v11009, 0
      %v11013 = vmul.f32 %v10977, %v11011
      %v11014 = vmul.f32 %v10978, %v11011
      %v11015 = vmul.f32 %v10979, %v11011
      %v11016 = vmul.f32 %v10980, %v11011
      %v11017 = vmul.f32 %v10981, %v11011
      %v11018 = vmul.f32 %v10982, %v11011
      %v11019 = vmul.f32 %v10983, %v11011
      %v11020 = vmul.f32 %v10984, %v11011
      %v11021 = vmul.f32 %v10985, %v11011
      %v11022 = vmul.f32 %v10986, %v11011
      %v11023 = vmul.f32 %v10987, %v11011
      %v11024 = vmul.f32 %v10988, %v11011
      %v11025 = vmul.f32 %v10989, %v11011
      %v11026 = vmul.f32 %v10990, %v11011
      %v11027 = vmul.f32 %v10991, %v11011
      %v11028 = vmul.f32 %v10992, %v11011
      %v11029 = vmul.f32 %v10993, %v11011
      %v11030 = vmul.f32 %v10994, %v11011
      %v11031 = vmul.f32 %v10995, %v11011
      %v11032 = vmul.f32 %v10996, %v11011
      %v11033 = vmul.f32 %v10997, %v11011
      %v11034 = vmul.f32 %v10998, %v11011
      %v11035 = vmul.f32 %v10999, %v11011
      %v11036 = vmul.f32 %v11000, %v11011
      %v11037 = vmul.f32 %v11001, %v11011
      %v11038 = vmul.f32 %v11002, %v11011
      %v11039 = vmul.f32 %v11003, %v11011
      %v11040 = vmul.f32 %v11004, %v11011
      %v11041 = vmul.f32 %v11005, %v11011
      %v11042 = vmul.f32 %v11006, %v11011
      %v11043 = vmul.f32 %v11007, %v11011
      %v11044 = vmul.f32 %v11008, %v11011
      %v11045 = vld [vmem:[%s7] sm:$0x1]
      %v11047 = vperm.slane %v11045, 0
      %v11049 = vadd.f32 %v11013, %v11047
      %v11050 = vadd.f32 %v11014, %v11047
      %v11051 = vadd.f32 %v11015, %v11047
      %v11052 = vadd.f32 %v11016, %v11047
      %v11053 = vadd.f32 %v11017, %v11047
      %v11054 = vadd.f32 %v11018, %v11047
      %v11055 = vadd.f32 %v11019, %v11047
      %v11056 = vadd.f32 %v11020, %v11047
      %v11057 = vadd.f32 %v11021, %v11047
      %v11058 = vadd.f32 %v11022, %v11047
      %v11059 = vadd.f32 %v11023, %v11047
      %v11060 = vadd.f32 %v11024, %v11047
      %v11061 = vadd.f32 %v11025, %v11047
      %v11062 = vadd.f32 %v11026, %v11047
      %v11063 = vadd.f32 %v11027, %v11047
      %v11064 = vadd.f32 %v11028, %v11047
      %v11065 = vadd.f32 %v11029, %v11047
      %v11066 = vadd.f32 %v11030, %v11047
      %v11067 = vadd.f32 %v11031, %v11047
      %v11068 = vadd.f32 %v11032, %v11047
      %v11069 = vadd.f32 %v11033, %v11047
      %v11070 = vadd.f32 %v11034, %v11047
      %v11071 = vadd.f32 %v11035, %v11047
      %v11072 = vadd.f32 %v11036, %v11047
      %v11073 = vadd.f32 %v11037, %v11047
      %v11074 = vadd.f32 %v11038, %v11047
      %v11075 = vadd.f32 %v11039, %v11047
      %v11076 = vadd.f32 %v11040, %v11047
      %v11077 = vadd.f32 %v11041, %v11047
      %v11078 = vadd.f32 %v11042, %v11047
      %v11079 = vadd.f32 %v11043, %v11047
      %v11080 = vadd.f32 %v11044, %v11047
      %v11081 = vmax.f32 %v11049, 0.0
      %v11082 = vmax.f32 %v11050, 0.0
      %v11083 = vmax.f32 %v11051, 0.0
      %v11084 = vmax.f32 %v11052, 0.0
      %v11085 = vmax.f32 %v11053, 0.0
      %v11086 = vmax.f32 %v11054, 0.0
      %v11087 = vmax.f32 %v11055, 0.0
      %v11088 = vmax.f32 %v11056, 0.0
      %v11089 = vmax.f32 %v11057, 0.0
      %v11090 = vmax.f32 %v11058, 0.0
      %v11091 = vmax.f32 %v11059, 0.0
      %v11092 = vmax.f32 %v11060, 0.0
      %v11093 = vmax.f32 %v11061, 0.0
      %v11094 = vmax.f32 %v11062, 0.0
      %v11095 = vmax.f32 %v11063, 0.0
      %v11096 = vmax.f32 %v11064, 0.0
      %v11097 = vmax.f32 %v11065, 0.0
      %v11098 = vmax.f32 %v11066, 0.0
      %v11099 = vmax.f32 %v11067, 0.0
      %v11100 = vmax.f32 %v11068, 0.0
      %v11101 = vmax.f32 %v11069, 0.0
      %v11102 = vmax.f32 %v11070, 0.0
      %v11103 = vmax.f32 %v11071, 0.0
      %v11104 = vmax.f32 %v11072, 0.0
      %v11105 = vmax.f32 %v11073, 0.0
      %v11106 = vmax.f32 %v11074, 0.0
      %v11107 = vmax.f32 %v11075, 0.0
      %v11108 = vmax.f32 %v11076, 0.0
      %v11109 = vmax.f32 %v11077, 0.0
      %v11110 = vmax.f32 %v11078, 0.0
      %v11111 = vmax.f32 %v11079, 0.0
      %v11112 = vmax.f32 %v11080, 0.0
      %v11113 = vpack.c.bf16 %v11081, %v11081
      %v11114 = vpack.c.bf16 %v11082, %v11082
      %v11115 = vpack.c.bf16 %v11083, %v11083
      %v11116 = vpack.c.bf16 %v11084, %v11084
      %v11117 = vpack.c.bf16 %v11085, %v11085
      %v11118 = vpack.c.bf16 %v11086, %v11086
      %v11119 = vpack.c.bf16 %v11087, %v11087
      %v11120 = vpack.c.bf16 %v11088, %v11088
      %v11121 = vpack.c.bf16 %v11089, %v11089
      %v11122 = vpack.c.bf16 %v11090, %v11090
      %v11123 = vpack.c.bf16 %v11091, %v11091
      %v11124 = vpack.c.bf16 %v11092, %v11092
      %v11125 = vpack.c.bf16 %v11093, %v11093
      %v11126 = vpack.c.bf16 %v11094, %v11094
      %v11127 = vpack.c.bf16 %v11095, %v11095
      %v11128 = vpack.c.bf16 %v11096, %v11096
      %v11129 = vpack.c.bf16 %v11097, %v11097
      %v11130 = vpack.c.bf16 %v11098, %v11098
      %v11131 = vpack.c.bf16 %v11099, %v11099
      %v11132 = vpack.c.bf16 %v11100, %v11100
      %v11133 = vpack.c.bf16 %v11101, %v11101
      %v11134 = vpack.c.bf16 %v11102, %v11102
      %v11135 = vpack.c.bf16 %v11103, %v11103
      %v11136 = vpack.c.bf16 %v11104, %v11104
      %v11137 = vpack.c.bf16 %v11105, %v11105
      %v11138 = vpack.c.bf16 %v11106, %v11106
      %v11139 = vpack.c.bf16 %v11107, %v11107
      %v11140 = vpack.c.bf16 %v11108, %v11108
      %v11141 = vpack.c.bf16 %v11109, %v11109
      %v11142 = vpack.c.bf16 %v11110, %v11110
      %v11143 = vpack.c.bf16 %v11111, %v11111
      %v11144 = vpack.c.bf16 %v11112, %v11112
      %11145 = vst [vmem:[%s325] sm:$0xf] %v11113
      %11146 = vst [vmem:[%s325 + $0x4] sm:$0xf] %v11114
      %11147 = vst [vmem:[%s325 + $0x8] sm:$0xf] %v11115
      %11148 = vst [vmem:[%s325 + $0xc] sm:$0xf] %v11116
      %11149 = vst [vmem:[%s325 + $0x10] sm:$0xf] %v11117
      %11150 = vst [vmem:[%s325 + $0x14] sm:$0xf] %v11118
      %11151 = vst [vmem:[%s325 + $0x18] sm:$0xf] %v11119
      %11152 = vst [vmem:[%s325 + $0x1c] sm:$0xf] %v11120
      %11153 = vst [vmem:[%s325 + $0x20] sm:$0xf] %v11121
      %11154 = vst [vmem:[%s325 + $0x24] sm:$0xf] %v11122
      %11155 = vst [vmem:[%s325 + $0x28] sm:$0xf] %v11123
      %11156 = vst [vmem:[%s325 + $0x2c] sm:$0xf] %v11124
      %11157 = vst [vmem:[%s325 + $0x30] sm:$0xf] %v11125
      %11158 = vst [vmem:[%s325 + $0x34] sm:$0xf] %v11126
      %11159 = vst [vmem:[%s325 + $0x38] sm:$0xf] %v11127
      %11160 = vst [vmem:[%s325 + $0x3c] sm:$0xf] %v11128
      %11161 = vst [vmem:[%s325 + $0x40] sm:$0xf] %v11129
      %11162 = vst [vmem:[%s325 + $0x44] sm:$0xf] %v11130
      %11163 = vst [vmem:[%s325 + $0x48] sm:$0xf] %v11131
      %11164 = vst [vmem:[%s325 + $0x4c] sm:$0xf] %v11132
      %11165 = vst [vmem:[%s325 + $0x50] sm:$0xf] %v11133
      %11166 = vst [vmem:[%s325 + $0x54] sm:$0xf] %v11134
      %11167 = vst [vmem:[%s325 + $0x58] sm:$0xf] %v11135
      %11168 = vst [vmem:[%s325 + $0x5c] sm:$0xf] %v11136
      %11169 = vst [vmem:[%s325 + $0x60] sm:$0xf] %v11137
      %11170 = vst [vmem:[%s325 + $0x64] sm:$0xf] %v11138
      %11171 = vst [vmem:[%s325 + $0x68] sm:$0xf] %v11139
      %11172 = vst [vmem:[%s325 + $0x6c] sm:$0xf] %v11140
      %11173 = vst [vmem:[%s325 + $0x70] sm:$0xf] %v11141
      %11174 = vst [vmem:[%s325 + $0x74] sm:$0xf] %v11142
      %11175 = vst [vmem:[%s325 + $0x78] sm:$0xf] %v11143
      %11176 = vst [vmem:[%s325 + $0x7c] sm:$0xf] %v11144
      %v11177 = vld [vmem:[#allocation3 + $0x80] sm:$0xf]
      %v11178 = vld [vmem:[#allocation3 + $0x84] sm:$0xf]
      %v11179 = vld [vmem:[#allocation3 + $0x88] sm:$0xf]
      %v11180 = vld [vmem:[#allocation3 + $0x8c] sm:$0xf]
      %v11181 = vld [vmem:[#allocation3 + $0x90] sm:$0xf]
      %v11182 = vld [vmem:[#allocation3 + $0x94] sm:$0xf]
      %v11183 = vld [vmem:[#allocation3 + $0x98] sm:$0xf]
      %v11184 = vld [vmem:[#allocation3 + $0x9c] sm:$0xf]
      %v11185 = vld [vmem:[#allocation3 + $0xa0] sm:$0xf]
      %v11186 = vld [vmem:[#allocation3 + $0xa4] sm:$0xf]
      %v11187 = vld [vmem:[#allocation3 + $0xa8] sm:$0xf]
      %v11188 = vld [vmem:[#allocation3 + $0xac] sm:$0xf]
      %v11189 = vld [vmem:[#allocation3 + $0xb0] sm:$0xf]
      %v11190 = vld [vmem:[#allocation3 + $0xb4] sm:$0xf]
      %v11191 = vld [vmem:[#allocation3 + $0xb8] sm:$0xf]
      %v11192 = vld [vmem:[#allocation3 + $0xbc] sm:$0xf]
      %v11193 = vld [vmem:[%s5] sm:$0xf]
      %v11194 = vld [vmem:[%s5 + $0x4] sm:$0xf]
      %v11195 = vld [vmem:[%s5 + $0x8] sm:$0xf]
      %v11196 = vld [vmem:[%s5 + $0xc] sm:$0xf]
      %v11197 = vld [vmem:[%s5 + $0x10] sm:$0xf]
      %v11198 = vld [vmem:[%s5 + $0x14] sm:$0xf]
      %v11199 = vld [vmem:[%s5 + $0x18] sm:$0xf]
      %v11200 = vld [vmem:[%s5 + $0x1c] sm:$0xf]
      %v11201 = vld [vmem:[%s5 + $0x20] sm:$0xf]
      %v11202 = vld [vmem:[%s5 + $0x24] sm:$0xf]
      %v11203 = vld [vmem:[%s5 + $0x28] sm:$0xf]
      %v11204 = vld [vmem:[%s5 + $0x2c] sm:$0xf]
      %v11205 = vld [vmem:[%s5 + $0x30] sm:$0xf]
      %v11206 = vld [vmem:[%s5 + $0x34] sm:$0xf]
      %v11207 = vld [vmem:[%s5 + $0x38] sm:$0xf]
      %v11208 = vld [vmem:[%s5 + $0x3c] sm:$0xf]
      %v11209 = vld [vmem:[#allocation3 + $0xc0] sm:$0x1]
      %v11210 = vld [vmem:[%s8226] sm:$0xf]
      %v11211 = vld [vmem:[%s8226 + $0x4] sm:$0xf]
      %v11212 = vld [vmem:[%s8226 + $0x8] sm:$0xf]
      %v11213 = vld [vmem:[%s8226 + $0xc] sm:$0xf]
      %v11214 = vld [vmem:[%s8226 + $0x10] sm:$0xf]
      %v11215 = vld [vmem:[%s8226 + $0x14] sm:$0xf]
      %v11216 = vld [vmem:[%s8226 + $0x18] sm:$0xf]
      %v11217 = vld [vmem:[%s8226 + $0x1c] sm:$0xf]
      %v11218 = vld [vmem:[%s8226 + $0x20] sm:$0xf]
      %v11219 = vld [vmem:[%s8226 + $0x24] sm:$0xf]
      %v11220 = vld [vmem:[%s8226 + $0x28] sm:$0xf]
      %v11221 = vld [vmem:[%s8226 + $0x2c] sm:$0xf]
      %v11222 = vld [vmem:[%s8226 + $0x30] sm:$0xf]
      %v11223 = vld [vmem:[%s8226 + $0x34] sm:$0xf]
      %v11224 = vld [vmem:[%s8226 + $0x38] sm:$0xf]
      %v11225 = vld [vmem:[%s8226 + $0x3c] sm:$0xf]
      %v11243 = vunpack.c.l.b16 %v11177
      %v11244 = vunpack.c.l.b16 %v11178
      %v11245 = vunpack.c.l.b16 %v11179
      %v11246 = vunpack.c.l.b16 %v11180
      %v11247 = vunpack.c.l.b16 %v11181
      %v11248 = vunpack.c.l.b16 %v11182
      %v11249 = vunpack.c.l.b16 %v11183
      %v11250 = vunpack.c.l.b16 %v11184
      %v11251 = vunpack.c.l.b16 %v11185
      %v11252 = vunpack.c.l.b16 %v11186
      %v11253 = vunpack.c.l.b16 %v11187
      %v11254 = vunpack.c.l.b16 %v11188
      %v11255 = vunpack.c.l.b16 %v11189
      %v11256 = vunpack.c.l.b16 %v11190
      %v11257 = vunpack.c.l.b16 %v11191
      %v11258 = vunpack.c.l.b16 %v11192
      %v11259 = vunpack.c.l.b16 %v11209
      %v11260 = vpack.c.b16 %v11244, %v11243
      %v11261 = vpack.c.b16 %v11246, %v11245
      %v11262 = vpack.c.b16 %v11248, %v11247
      %v11263 = vpack.c.b16 %v11250, %v11249
      %v11264 = vpack.c.b16 %v11252, %v11251
      %v11265 = vpack.c.b16 %v11254, %v11253
      %v11266 = vpack.c.b16 %v11256, %v11255
      %v11267 = vpack.c.b16 %v11258, %v11257
      %v11268 = vpack.c.b16 %v11259, %v11259
      %v11270 = vshrl.u32 %v11260, 16
      %v11272 = vshll.u32 %v11260, 16
      %v11274 = vrot.slane %v11272, 1
      %v11275 = vor.u32 %v11270, %v11274
      %v11277 = vshll.u32 %v11261, 16
      %v11279 = vrot.slane %v11277, 1
      %v11280 = vsel %vm1753, %v11275, %v11279
      %v11281 = vshrl.u32 %v11261, 16
      %v11283 = vor.u32 %v11281, %v11279
      %v11285 = vshll.u32 %v11262, 16
      %v11287 = vrot.slane %v11285, 1
      %v11288 = vsel %vm1753, %v11283, %v11287
      %v11289 = vshrl.u32 %v11262, 16
      %v11291 = vor.u32 %v11289, %v11287
      %v11293 = vshll.u32 %v11263, 16
      %v11295 = vrot.slane %v11293, 1
      %v11296 = vsel %vm1753, %v11291, %v11295
      %v11297 = vshrl.u32 %v11263, 16
      %v11299 = vor.u32 %v11297, %v11295
      %v11301 = vshll.u32 %v11264, 16
      %v11303 = vrot.slane %v11301, 1
      %v11304 = vsel %vm1753, %v11299, %v11303
      %v11305 = vshrl.u32 %v11264, 16
      %v11307 = vor.u32 %v11305, %v11303
      %v11309 = vshll.u32 %v11265, 16
      %v11311 = vrot.slane %v11309, 1
      %v11312 = vsel %vm1753, %v11307, %v11311
      %v11313 = vshrl.u32 %v11265, 16
      %v11315 = vor.u32 %v11313, %v11311
      %v11317 = vshll.u32 %v11266, 16
      %v11319 = vrot.slane %v11317, 1
      %v11320 = vsel %vm1753, %v11315, %v11319
      %v11321 = vshrl.u32 %v11266, 16
      %v11323 = vor.u32 %v11321, %v11319
      %v11325 = vshll.u32 %v11267, 16
      %v11327 = vrot.slane %v11325, 1
      %v11328 = vsel %vm1753, %v11323, %v11327
      %v11329 = vshrl.u32 %v11267, 16
      %v11331 = vor.u32 %v11329, %v11327
      %v11333 = vshll.u32 %v11268, 16
      %v11335 = vrot.slane %v11333, 1
      %v11336 = vsel %vm1753, %v11331, %v11335
      %v11361 = vunpack.c.l.b16 %v11210
      %v11362 = vunpack.c.l.b16 %v11211
      %v11363 = vunpack.c.l.b16 %v11212
      %v11364 = vunpack.c.l.b16 %v11213
      %v11365 = vunpack.c.l.b16 %v11214
      %v11366 = vunpack.c.l.b16 %v11215
      %v11367 = vunpack.c.l.b16 %v11216
      %v11368 = vunpack.c.l.b16 %v11217
      %v11369 = vunpack.c.l.b16 %v11218
      %v11370 = vunpack.c.l.b16 %v11219
      %v11371 = vunpack.c.l.b16 %v11220
      %v11372 = vunpack.c.l.b16 %v11221
      %v11373 = vunpack.c.l.b16 %v11222
      %v11374 = vunpack.c.l.b16 %v11223
      %v11375 = vunpack.c.l.b16 %v11224
      %v11376 = vunpack.c.l.b16 %v11225
      %v11377 = vpack.c.b16 %v11362, %v11361
      %v11378 = vpack.c.b16 %v11364, %v11363
      %v11379 = vpack.c.b16 %v11366, %v11365
      %v11380 = vpack.c.b16 %v11368, %v11367
      %v11381 = vpack.c.b16 %v11370, %v11369
      %v11382 = vpack.c.b16 %v11372, %v11371
      %v11383 = vpack.c.b16 %v11374, %v11373
      %v11384 = vpack.c.b16 %v11376, %v11375
      %11393 = vmatpush.bf16.msra.mxu0 %v11384
      %11394 = vmatpush.bf16.msra.mxu0 %v11383
      %11395 = vmatpush.bf16.msra.mxu0 %v11382
      %11396 = vmatpush.bf16.msra.mxu0 %v11381
      %11397 = vmatpush.bf16.msra.mxu0 %v11380
      %11398 = vmatpush.bf16.msra.mxu0 %v11379
      %11399 = vmatpush.bf16.msra.mxu0 %v11378
      %11400 = vmatpush.bf16.msra.mxu0 %v11377
      %11401 = vmatmul.bf16.gmra.mxu0 %v11280
      %v11402 = vpop.f32.mrf.mxu0
      %v11403 = vadd.f32 0.0, %v11402
      %v11404 = vpop.f32.mrf.mxu0
      %v11405 = vadd.f32 0.0, %v11404
      %11406 = vmatmul.bf16.gmra.mxu0 %v11288
      %v11407 = vpop.f32.mrf.mxu0
      %v11408 = vadd.f32 0.0, %v11407
      %v11409 = vpop.f32.mrf.mxu0
      %v11410 = vadd.f32 0.0, %v11409
      %11411 = vmatmul.bf16.gmra.mxu0 %v11296
      %v11412 = vpop.f32.mrf.mxu0
      %v11413 = vadd.f32 0.0, %v11412
      %v11414 = vpop.f32.mrf.mxu0
      %v11415 = vadd.f32 0.0, %v11414
      %11416 = vmatmul.bf16.gmra.mxu0 %v11304
      %v11417 = vpop.f32.mrf.mxu0
      %v11418 = vadd.f32 0.0, %v11417
      %v11419 = vpop.f32.mrf.mxu0
      %v11420 = vadd.f32 0.0, %v11419
      %11421 = vmatmul.bf16.gmra.mxu0 %v11312
      %v11422 = vpop.f32.mrf.mxu0
      %v11423 = vadd.f32 0.0, %v11422
      %v11424 = vpop.f32.mrf.mxu0
      %v11425 = vadd.f32 0.0, %v11424
      %11426 = vmatmul.bf16.gmra.mxu0 %v11320
      %v11427 = vpop.f32.mrf.mxu0
      %v11428 = vadd.f32 0.0, %v11427
      %v11429 = vpop.f32.mrf.mxu0
      %v11430 = vadd.f32 0.0, %v11429
      %11431 = vmatmul.bf16.gmra.mxu0 %v11328
      %v11432 = vpop.f32.mrf.mxu0
      %v11433 = vadd.f32 0.0, %v11432
      %v11434 = vpop.f32.mrf.mxu0
      %v11435 = vadd.f32 0.0, %v11434
      %11436 = vmatmul.bf16.gmra.mxu0 %v11336
      %v11437 = vpop.f32.mrf.mxu0
      %v11438 = vadd.f32 0.0, %v11437
      %v11439 = vpop.f32.mrf.mxu0
      %v11440 = vadd.f32 0.0, %v11439
      %11441 = vdwg.mxu0
      %v11466 = vunpack.c.l.b16 %v11193
      %v11467 = vunpack.c.l.b16 %v11194
      %v11468 = vunpack.c.l.b16 %v11195
      %v11469 = vunpack.c.l.b16 %v11196
      %v11470 = vunpack.c.l.b16 %v11197
      %v11471 = vunpack.c.l.b16 %v11198
      %v11472 = vunpack.c.l.b16 %v11199
      %v11473 = vunpack.c.l.b16 %v11200
      %v11474 = vunpack.c.l.b16 %v11201
      %v11475 = vunpack.c.l.b16 %v11202
      %v11476 = vunpack.c.l.b16 %v11203
      %v11477 = vunpack.c.l.b16 %v11204
      %v11478 = vunpack.c.l.b16 %v11205
      %v11479 = vunpack.c.l.b16 %v11206
      %v11480 = vunpack.c.l.b16 %v11207
      %v11481 = vunpack.c.l.b16 %v11208
      %v11482 = vpack.c.b16 %v11467, %v11466
      %v11483 = vpack.c.b16 %v11469, %v11468
      %v11484 = vpack.c.b16 %v11471, %v11470
      %v11485 = vpack.c.b16 %v11473, %v11472
      %v11486 = vpack.c.b16 %v11475, %v11474
      %v11487 = vpack.c.b16 %v11477, %v11476
      %v11488 = vpack.c.b16 %v11479, %v11478
      %v11489 = vpack.c.b16 %v11481, %v11480
      %11498 = vmatpush.bf16.msra.mxu0 %v11489
      %11499 = vmatpush.bf16.msra.mxu0 %v11488
      %11500 = vmatpush.bf16.msra.mxu0 %v11487
      %11501 = vmatpush.bf16.msra.mxu0 %v11486
      %11502 = vmatpush.bf16.msra.mxu0 %v11485
      %11503 = vmatpush.bf16.msra.mxu0 %v11484
      %11504 = vmatpush.bf16.msra.mxu0 %v11483
      %11505 = vmatpush.bf16.msra.mxu0 %v11482
      %11506 = vmatmul.bf16.gmra.mxu0 %v11260
      %v11507 = vpop.f32.mrf.mxu0
      %v11508 = vadd.f32 %v11403, %v11507
      %v11509 = vpop.f32.mrf.mxu0
      %v11510 = vadd.f32 %v11405, %v11509
      %11511 = vmatmul.bf16.gmra.mxu0 %v11261
      %v11512 = vpop.f32.mrf.mxu0
      %v11513 = vadd.f32 %v11408, %v11512
      %v11514 = vpop.f32.mrf.mxu0
      %v11515 = vadd.f32 %v11410, %v11514
      %11516 = vmatmul.bf16.gmra.mxu0 %v11262
      %v11517 = vpop.f32.mrf.mxu0
      %v11518 = vadd.f32 %v11413, %v11517
      %v11519 = vpop.f32.mrf.mxu0
      %v11520 = vadd.f32 %v11415, %v11519
      %11521 = vmatmul.bf16.gmra.mxu0 %v11263
      %v11522 = vpop.f32.mrf.mxu0
      %v11523 = vadd.f32 %v11418, %v11522
      %v11524 = vpop.f32.mrf.mxu0
      %v11525 = vadd.f32 %v11420, %v11524
      %11526 = vmatmul.bf16.gmra.mxu0 %v11264
      %v11527 = vpop.f32.mrf.mxu0
      %v11528 = vadd.f32 %v11423, %v11527
      %v11529 = vpop.f32.mrf.mxu0
      %v11530 = vadd.f32 %v11425, %v11529
      %11531 = vmatmul.bf16.gmra.mxu0 %v11265
      %v11532 = vpop.f32.mrf.mxu0
      %v11533 = vadd.f32 %v11428, %v11532
      %v11534 = vpop.f32.mrf.mxu0
      %v11535 = vadd.f32 %v11430, %v11534
      %11536 = vmatmul.bf16.gmra.mxu0 %v11266
      %v11537 = vpop.f32.mrf.mxu0
      %v11538 = vadd.f32 %v11433, %v11537
      %v11539 = vpop.f32.mrf.mxu0
      %v11540 = vadd.f32 %v11435, %v11539
      %11541 = vmatmul.bf16.gmra.mxu0 %v11267
      %v11542 = vpop.f32.mrf.mxu0
      %v11543 = vadd.f32 %v11438, %v11542
      %v11544 = vpop.f32.mrf.mxu0
      %v11545 = vadd.f32 %v11440, %v11544
      %11546 = vdwg.mxu0
      %v11547 = vld [vmem:[#allocation3 + $0x80] sm:$0xe]
      %v11548 = vld [vmem:[%s8765] sm:$0xf]
      %v11549 = vld [vmem:[%s8765 + $0x4] sm:$0xf]
      %v11550 = vld [vmem:[%s8765 + $0x8] sm:$0xf]
      %v11551 = vld [vmem:[%s8765 + $0xc] sm:$0xf]
      %v11552 = vld [vmem:[%s8765 + $0x10] sm:$0xf]
      %v11553 = vld [vmem:[%s8765 + $0x14] sm:$0xf]
      %v11554 = vld [vmem:[%s8765 + $0x18] sm:$0xf]
      %v11555 = vld [vmem:[%s8765 + $0x1c] sm:$0xf]
      %v11556 = vld [vmem:[%s8765 + $0x20] sm:$0xf]
      %v11557 = vld [vmem:[%s8765 + $0x24] sm:$0xf]
      %v11558 = vld [vmem:[%s8765 + $0x28] sm:$0xf]
      %v11559 = vld [vmem:[%s8765 + $0x2c] sm:$0xf]
      %v11560 = vld [vmem:[%s8765 + $0x30] sm:$0xf]
      %v11561 = vld [vmem:[%s8765 + $0x34] sm:$0xf]
      %v11562 = vld [vmem:[%s8765 + $0x38] sm:$0xf]
      %v11563 = vld [vmem:[%s8765 + $0x3c] sm:$0xf]
      %v11565 = vunpack.c.l.b16 %v11547
      %v11566 = vpack.c.b16 %v11244, %v11565
      %v11567 = vrot.slane %v11566, 1
      %v11568 = vrot.slane %v11261, 1
      %v11569 = vsel %vm2158, %v11567, %v11568
      %v11570 = vrot.slane %v11262, 1
      %v11571 = vsel %vm2158, %v11568, %v11570
      %v11572 = vrot.slane %v11263, 1
      %v11573 = vsel %vm2158, %v11570, %v11572
      %v11574 = vrot.slane %v11264, 1
      %v11575 = vsel %vm2158, %v11572, %v11574
      %v11576 = vrot.slane %v11265, 1
      %v11577 = vsel %vm2158, %v11574, %v11576
      %v11578 = vrot.slane %v11266, 1
      %v11579 = vsel %vm2158, %v11576, %v11578
      %v11580 = vrot.slane %v11267, 1
      %v11581 = vsel %vm2158, %v11578, %v11580
      %v11582 = vrot.slane %v11268, 1
      %v11583 = vsel %vm2158, %v11580, %v11582
      %v11608 = vunpack.c.l.b16 %v11548
      %v11609 = vunpack.c.l.b16 %v11549
      %v11610 = vunpack.c.l.b16 %v11550
      %v11611 = vunpack.c.l.b16 %v11551
      %v11612 = vunpack.c.l.b16 %v11552
      %v11613 = vunpack.c.l.b16 %v11553
      %v11614 = vunpack.c.l.b16 %v11554
      %v11615 = vunpack.c.l.b16 %v11555
      %v11616 = vunpack.c.l.b16 %v11556
      %v11617 = vunpack.c.l.b16 %v11557
      %v11618 = vunpack.c.l.b16 %v11558
      %v11619 = vunpack.c.l.b16 %v11559
      %v11620 = vunpack.c.l.b16 %v11560
      %v11621 = vunpack.c.l.b16 %v11561
      %v11622 = vunpack.c.l.b16 %v11562
      %v11623 = vunpack.c.l.b16 %v11563
      %v11624 = vpack.c.b16 %v11609, %v11608
      %v11625 = vpack.c.b16 %v11611, %v11610
      %v11626 = vpack.c.b16 %v11613, %v11612
      %v11627 = vpack.c.b16 %v11615, %v11614
      %v11628 = vpack.c.b16 %v11617, %v11616
      %v11629 = vpack.c.b16 %v11619, %v11618
      %v11630 = vpack.c.b16 %v11621, %v11620
      %v11631 = vpack.c.b16 %v11623, %v11622
      %11640 = vmatpush.bf16.msra.mxu0 %v11631
      %11641 = vmatpush.bf16.msra.mxu0 %v11630
      %11642 = vmatpush.bf16.msra.mxu0 %v11629
      %11643 = vmatpush.bf16.msra.mxu0 %v11628
      %11644 = vmatpush.bf16.msra.mxu0 %v11627
      %11645 = vmatpush.bf16.msra.mxu0 %v11626
      %11646 = vmatpush.bf16.msra.mxu0 %v11625
      %11647 = vmatpush.bf16.msra.mxu0 %v11624
      %11648 = vmatmul.bf16.gmra.mxu0 %v11569
      %v11649 = vpop.f32.mrf.mxu0
      %v11650 = vadd.f32 0.0, %v11649
      %v11651 = vpop.f32.mrf.mxu0
      %v11652 = vadd.f32 0.0, %v11651
      %11653 = vmatmul.bf16.gmra.mxu0 %v11571
      %v11654 = vpop.f32.mrf.mxu0
      %v11655 = vadd.f32 0.0, %v11654
      %v11656 = vpop.f32.mrf.mxu0
      %v11657 = vadd.f32 0.0, %v11656
      %11658 = vmatmul.bf16.gmra.mxu0 %v11573
      %v11659 = vpop.f32.mrf.mxu0
      %v11660 = vadd.f32 0.0, %v11659
      %v11661 = vpop.f32.mrf.mxu0
      %v11662 = vadd.f32 0.0, %v11661
      %11663 = vmatmul.bf16.gmra.mxu0 %v11575
      %v11664 = vpop.f32.mrf.mxu0
      %v11665 = vadd.f32 0.0, %v11664
      %v11666 = vpop.f32.mrf.mxu0
      %v11667 = vadd.f32 0.0, %v11666
      %11668 = vmatmul.bf16.gmra.mxu0 %v11577
      %v11669 = vpop.f32.mrf.mxu0
      %v11670 = vadd.f32 0.0, %v11669
      %v11671 = vpop.f32.mrf.mxu0
      %v11672 = vadd.f32 0.0, %v11671
      %11673 = vmatmul.bf16.gmra.mxu0 %v11579
      %v11674 = vpop.f32.mrf.mxu0
      %v11675 = vadd.f32 0.0, %v11674
      %v11676 = vpop.f32.mrf.mxu0
      %v11677 = vadd.f32 0.0, %v11676
      %11678 = vmatmul.bf16.gmra.mxu0 %v11581
      %v11679 = vpop.f32.mrf.mxu0
      %v11680 = vadd.f32 0.0, %v11679
      %v11681 = vpop.f32.mrf.mxu0
      %v11682 = vadd.f32 0.0, %v11681
      %11683 = vmatmul.bf16.gmra.mxu0 %v11583
      %v11684 = vpop.f32.mrf.mxu0
      %v11685 = vadd.f32 0.0, %v11684
      %v11686 = vpop.f32.mrf.mxu0
      %v11687 = vadd.f32 0.0, %v11686
      %11688 = vdwg.mxu0
      %v11689 = vadd.f32 %v11508, %v11650
      %v11690 = vadd.f32 %v11510, %v11652
      %v11691 = vadd.f32 %v11513, %v11655
      %v11692 = vadd.f32 %v11515, %v11657
      %v11693 = vadd.f32 %v11518, %v11660
      %v11694 = vadd.f32 %v11520, %v11662
      %v11695 = vadd.f32 %v11523, %v11665
      %v11696 = vadd.f32 %v11525, %v11667
      %v11697 = vadd.f32 %v11528, %v11670
      %v11698 = vadd.f32 %v11530, %v11672
      %v11699 = vadd.f32 %v11533, %v11675
      %v11700 = vadd.f32 %v11535, %v11677
      %v11701 = vadd.f32 %v11538, %v11680
      %v11702 = vadd.f32 %v11540, %v11682
      %v11703 = vadd.f32 %v11543, %v11685
      %v11704 = vadd.f32 %v11545, %v11687
      %v11705 = vld [vmem:[#allocation3 + $0x8c] sm:$0xf]
      %v11706 = vld [vmem:[#allocation3 + $0x90] sm:$0xf]
      %v11707 = vld [vmem:[#allocation3 + $0x94] sm:$0xf]
      %v11708 = vld [vmem:[#allocation3 + $0x98] sm:$0xf]
      %v11709 = vld [vmem:[#allocation3 + $0x9c] sm:$0xf]
      %v11710 = vld [vmem:[#allocation3 + $0xa0] sm:$0xf]
      %v11711 = vld [vmem:[#allocation3 + $0xa4] sm:$0xf]
      %v11712 = vld [vmem:[#allocation3 + $0xa8] sm:$0xf]
      %v11713 = vld [vmem:[#allocation3 + $0xac] sm:$0xf]
      %v11714 = vld [vmem:[#allocation3 + $0xb0] sm:$0xf]
      %v11715 = vld [vmem:[#allocation3 + $0xb4] sm:$0xf]
      %v11716 = vld [vmem:[#allocation3 + $0xb8] sm:$0xf]
      %v11717 = vld [vmem:[#allocation3 + $0xbc] sm:$0xf]
      %v11718 = vld [vmem:[#allocation3 + $0xc0] sm:$0xf]
      %v11719 = vld [vmem:[#allocation3 + $0xc4] sm:$0xf]
      %v11720 = vld [vmem:[#allocation3 + $0xc8] sm:$0xf]
      %v11721 = vld [vmem:[%s9035] sm:$0xf]
      %v11722 = vld [vmem:[%s9035 + $0x4] sm:$0xf]
      %v11723 = vld [vmem:[%s9035 + $0x8] sm:$0xf]
      %v11724 = vld [vmem:[%s9035 + $0xc] sm:$0xf]
      %v11725 = vld [vmem:[%s9035 + $0x10] sm:$0xf]
      %v11726 = vld [vmem:[%s9035 + $0x14] sm:$0xf]
      %v11727 = vld [vmem:[%s9035 + $0x18] sm:$0xf]
      %v11728 = vld [vmem:[%s9035 + $0x1c] sm:$0xf]
      %v11729 = vld [vmem:[%s9035 + $0x20] sm:$0xf]
      %v11730 = vld [vmem:[%s9035 + $0x24] sm:$0xf]
      %v11731 = vld [vmem:[%s9035 + $0x28] sm:$0xf]
      %v11732 = vld [vmem:[%s9035 + $0x2c] sm:$0xf]
      %v11733 = vld [vmem:[%s9035 + $0x30] sm:$0xf]
      %v11734 = vld [vmem:[%s9035 + $0x34] sm:$0xf]
      %v11735 = vld [vmem:[%s9035 + $0x38] sm:$0xf]
      %v11736 = vld [vmem:[%s9035 + $0x3c] sm:$0xf]
      %v11753 = vunpack.c.l.b16 %v11705
      %v11754 = vunpack.c.l.b16 %v11706
      %v11755 = vunpack.c.l.b16 %v11707
      %v11756 = vunpack.c.l.b16 %v11708
      %v11757 = vunpack.c.l.b16 %v11709
      %v11758 = vunpack.c.l.b16 %v11710
      %v11759 = vunpack.c.l.b16 %v11711
      %v11760 = vunpack.c.l.b16 %v11712
      %v11761 = vunpack.c.l.b16 %v11713
      %v11762 = vunpack.c.l.b16 %v11714
      %v11763 = vunpack.c.l.b16 %v11715
      %v11764 = vunpack.c.l.b16 %v11716
      %v11765 = vunpack.c.l.b16 %v11717
      %v11766 = vunpack.c.l.b16 %v11718
      %v11767 = vunpack.c.l.b16 %v11719
      %v11768 = vunpack.c.l.b16 %v11720
      %v11769 = vpack.c.b16 %v11754, %v11753
      %v11770 = vpack.c.b16 %v11756, %v11755
      %v11771 = vpack.c.b16 %v11758, %v11757
      %v11772 = vpack.c.b16 %v11760, %v11759
      %v11773 = vpack.c.b16 %v11762, %v11761
      %v11774 = vpack.c.b16 %v11764, %v11763
      %v11775 = vpack.c.b16 %v11766, %v11765
      %v11776 = vpack.c.b16 %v11768, %v11767
      %v11801 = vunpack.c.l.b16 %v11721
      %v11802 = vunpack.c.l.b16 %v11722
      %v11803 = vunpack.c.l.b16 %v11723
      %v11804 = vunpack.c.l.b16 %v11724
      %v11805 = vunpack.c.l.b16 %v11725
      %v11806 = vunpack.c.l.b16 %v11726
      %v11807 = vunpack.c.l.b16 %v11727
      %v11808 = vunpack.c.l.b16 %v11728
      %v11809 = vunpack.c.l.b16 %v11729
      %v11810 = vunpack.c.l.b16 %v11730
      %v11811 = vunpack.c.l.b16 %v11731
      %v11812 = vunpack.c.l.b16 %v11732
      %v11813 = vunpack.c.l.b16 %v11733
      %v11814 = vunpack.c.l.b16 %v11734
      %v11815 = vunpack.c.l.b16 %v11735
      %v11816 = vunpack.c.l.b16 %v11736
      %v11817 = vpack.c.b16 %v11802, %v11801
      %v11818 = vpack.c.b16 %v11804, %v11803
      %v11819 = vpack.c.b16 %v11806, %v11805
      %v11820 = vpack.c.b16 %v11808, %v11807
      %v11821 = vpack.c.b16 %v11810, %v11809
      %v11822 = vpack.c.b16 %v11812, %v11811
      %v11823 = vpack.c.b16 %v11814, %v11813
      %v11824 = vpack.c.b16 %v11816, %v11815
      %11833 = vmatpush.bf16.msra.mxu0 %v11824
      %11834 = vmatpush.bf16.msra.mxu0 %v11823
      %11835 = vmatpush.bf16.msra.mxu0 %v11822
      %11836 = vmatpush.bf16.msra.mxu0 %v11821
      %11837 = vmatpush.bf16.msra.mxu0 %v11820
      %11838 = vmatpush.bf16.msra.mxu0 %v11819
      %11839 = vmatpush.bf16.msra.mxu0 %v11818
      %11840 = vmatpush.bf16.msra.mxu0 %v11817
      %11841 = vmatmul.bf16.gmra.mxu0 %v11769
      %v11842 = vpop.f32.mrf.mxu0
      %v11843 = vadd.f32 0.0, %v11842
      %v11844 = vpop.f32.mrf.mxu0
      %v11845 = vadd.f32 0.0, %v11844
      %11846 = vmatmul.bf16.gmra.mxu0 %v11770
      %v11847 = vpop.f32.mrf.mxu0
      %v11848 = vadd.f32 0.0, %v11847
      %v11849 = vpop.f32.mrf.mxu0
      %v11850 = vadd.f32 0.0, %v11849
      %11851 = vmatmul.bf16.gmra.mxu0 %v11771
      %v11852 = vpop.f32.mrf.mxu0
      %v11853 = vadd.f32 0.0, %v11852
      %v11854 = vpop.f32.mrf.mxu0
      %v11855 = vadd.f32 0.0, %v11854
      %11856 = vmatmul.bf16.gmra.mxu0 %v11772
      %v11857 = vpop.f32.mrf.mxu0
      %v11858 = vadd.f32 0.0, %v11857
      %v11859 = vpop.f32.mrf.mxu0
      %v11860 = vadd.f32 0.0, %v11859
      %11861 = vmatmul.bf16.gmra.mxu0 %v11773
      %v11862 = vpop.f32.mrf.mxu0
      %v11863 = vadd.f32 0.0, %v11862
      %v11864 = vpop.f32.mrf.mxu0
      %v11865 = vadd.f32 0.0, %v11864
      %11866 = vmatmul.bf16.gmra.mxu0 %v11774
      %v11867 = vpop.f32.mrf.mxu0
      %v11868 = vadd.f32 0.0, %v11867
      %v11869 = vpop.f32.mrf.mxu0
      %v11870 = vadd.f32 0.0, %v11869
      %11871 = vmatmul.bf16.gmra.mxu0 %v11775
      %v11872 = vpop.f32.mrf.mxu0
      %v11873 = vadd.f32 0.0, %v11872
      %v11874 = vpop.f32.mrf.mxu0
      %v11875 = vadd.f32 0.0, %v11874
      %11876 = vmatmul.bf16.gmra.mxu0 %v11776
      %v11877 = vpop.f32.mrf.mxu0
      %v11878 = vadd.f32 0.0, %v11877
      %v11879 = vpop.f32.mrf.mxu0
      %v11880 = vadd.f32 0.0, %v11879
      %11881 = vdwg.mxu0
      %v11882 = vadd.f32 %v11689, %v11843
      %v11883 = vadd.f32 %v11690, %v11845
      %v11884 = vadd.f32 %v11691, %v11848
      %v11885 = vadd.f32 %v11692, %v11850
      %v11886 = vadd.f32 %v11693, %v11853
      %v11887 = vadd.f32 %v11694, %v11855
      %v11888 = vadd.f32 %v11695, %v11858
      %v11889 = vadd.f32 %v11696, %v11860
      %v11890 = vadd.f32 %v11697, %v11863
      %v11891 = vadd.f32 %v11698, %v11865
      %v11892 = vadd.f32 %v11699, %v11868
      %v11893 = vadd.f32 %v11700, %v11870
      %v11894 = vadd.f32 %v11701, %v11873
      %v11895 = vadd.f32 %v11702, %v11875
      %v11896 = vadd.f32 %v11703, %v11878
      %v11897 = vadd.f32 %v11704, %v11880
      %v11898 = vld [vmem:[#allocation3 + $0x8c] sm:$0xf]
      %v11899 = vld [vmem:[#allocation3 + $0x90] sm:$0xf]
      %v11900 = vld [vmem:[#allocation3 + $0x94] sm:$0xf]
      %v11901 = vld [vmem:[#allocation3 + $0x98] sm:$0xf]
      %v11902 = vld [vmem:[#allocation3 + $0x9c] sm:$0xf]
      %v11903 = vld [vmem:[#allocation3 + $0xa0] sm:$0xf]
      %v11904 = vld [vmem:[#allocation3 + $0xa4] sm:$0xf]
      %v11905 = vld [vmem:[#allocation3 + $0xa8] sm:$0xf]
      %v11906 = vld [vmem:[#allocation3 + $0xac] sm:$0xf]
      %v11907 = vld [vmem:[#allocation3 + $0xb0] sm:$0xf]
      %v11908 = vld [vmem:[#allocation3 + $0xb4] sm:$0xf]
      %v11909 = vld [vmem:[#allocation3 + $0xb8] sm:$0xf]
      %v11910 = vld [vmem:[#allocation3 + $0xbc] sm:$0xf]
      %v11911 = vld [vmem:[#allocation3 + $0xc0] sm:$0xf]
      %v11912 = vld [vmem:[#allocation3 + $0xc4] sm:$0xf]
      %v11913 = vld [vmem:[#allocation3 + $0xc8] sm:$0xf]
      %v11914 = vld [vmem:[#allocation3 + $0xcc] sm:$0x1]
      %v11915 = vld [vmem:[%s9350] sm:$0xf]
      %v11916 = vld [vmem:[%s9350 + $0x4] sm:$0xf]
      %v11917 = vld [vmem:[%s9350 + $0x8] sm:$0xf]
      %v11918 = vld [vmem:[%s9350 + $0xc] sm:$0xf]
      %v11919 = vld [vmem:[%s9350 + $0x10] sm:$0xf]
      %v11920 = vld [vmem:[%s9350 + $0x14] sm:$0xf]
      %v11921 = vld [vmem:[%s9350 + $0x18] sm:$0xf]
      %v11922 = vld [vmem:[%s9350 + $0x1c] sm:$0xf]
      %v11923 = vld [vmem:[%s9350 + $0x20] sm:$0xf]
      %v11924 = vld [vmem:[%s9350 + $0x24] sm:$0xf]
      %v11925 = vld [vmem:[%s9350 + $0x28] sm:$0xf]
      %v11926 = vld [vmem:[%s9350 + $0x2c] sm:$0xf]
      %v11927 = vld [vmem:[%s9350 + $0x30] sm:$0xf]
      %v11928 = vld [vmem:[%s9350 + $0x34] sm:$0xf]
      %v11929 = vld [vmem:[%s9350 + $0x38] sm:$0xf]
      %v11930 = vld [vmem:[%s9350 + $0x3c] sm:$0xf]
      %v11948 = vunpack.c.l.b16 %v11898
      %v11949 = vunpack.c.l.b16 %v11899
      %v11950 = vunpack.c.l.b16 %v11900
      %v11951 = vunpack.c.l.b16 %v11901
      %v11952 = vunpack.c.l.b16 %v11902
      %v11953 = vunpack.c.l.b16 %v11903
      %v11954 = vunpack.c.l.b16 %v11904
      %v11955 = vunpack.c.l.b16 %v11905
      %v11956 = vunpack.c.l.b16 %v11906
      %v11957 = vunpack.c.l.b16 %v11907
      %v11958 = vunpack.c.l.b16 %v11908
      %v11959 = vunpack.c.l.b16 %v11909
      %v11960 = vunpack.c.l.b16 %v11910
      %v11961 = vunpack.c.l.b16 %v11911
      %v11962 = vunpack.c.l.b16 %v11912
      %v11963 = vunpack.c.l.b16 %v11913
      %v11964 = vunpack.c.l.b16 %v11914
      %v11965 = vpack.c.b16 %v11949, %v11948
      %v11966 = vpack.c.b16 %v11951, %v11950
      %v11967 = vpack.c.b16 %v11953, %v11952
      %v11968 = vpack.c.b16 %v11955, %v11954
      %v11969 = vpack.c.b16 %v11957, %v11956
      %v11970 = vpack.c.b16 %v11959, %v11958
      %v11971 = vpack.c.b16 %v11961, %v11960
      %v11972 = vpack.c.b16 %v11963, %v11962
      %v11973 = vpack.c.b16 %v11964, %v11964
      %v11975 = vshrl.u32 %v11965, 16
      %v11977 = vshll.u32 %v11965, 16
      %v11979 = vrot.slane %v11977, 1
      %v11980 = vor.u32 %v11975, %v11979
      %v11982 = vshll.u32 %v11966, 16
      %v11984 = vrot.slane %v11982, 1
      %v11985 = vsel %vm1753, %v11980, %v11984
      %v11986 = vshrl.u32 %v11966, 16
      %v11988 = vor.u32 %v11986, %v11984
      %v11990 = vshll.u32 %v11967, 16
      %v11992 = vrot.slane %v11990, 1
      %v11993 = vsel %vm1753, %v11988, %v11992
      %v11994 = vshrl.u32 %v11967, 16
      %v11996 = vor.u32 %v11994, %v11992
      %v11998 = vshll.u32 %v11968, 16
      %v12000 = vrot.slane %v11998, 1
      %v12001 = vsel %vm1753, %v11996, %v12000
      %v12002 = vshrl.u32 %v11968, 16
      %v12004 = vor.u32 %v12002, %v12000
      %v12006 = vshll.u32 %v11969, 16
      %v12008 = vrot.slane %v12006, 1
      %v12009 = vsel %vm1753, %v12004, %v12008
      %v12010 = vshrl.u32 %v11969, 16
      %v12012 = vor.u32 %v12010, %v12008
      %v12014 = vshll.u32 %v11970, 16
      %v12016 = vrot.slane %v12014, 1
      %v12017 = vsel %vm1753, %v12012, %v12016
      %v12018 = vshrl.u32 %v11970, 16
      %v12020 = vor.u32 %v12018, %v12016
      %v12022 = vshll.u32 %v11971, 16
      %v12024 = vrot.slane %v12022, 1
      %v12025 = vsel %vm1753, %v12020, %v12024
      %v12026 = vshrl.u32 %v11971, 16
      %v12028 = vor.u32 %v12026, %v12024
      %v12030 = vshll.u32 %v11972, 16
      %v12032 = vrot.slane %v12030, 1
      %v12033 = vsel %vm1753, %v12028, %v12032
      %v12034 = vshrl.u32 %v11972, 16
      %v12036 = vor.u32 %v12034, %v12032
      %v12038 = vshll.u32 %v11973, 16
      %v12040 = vrot.slane %v12038, 1
      %v12041 = vsel %vm1753, %v12036, %v12040
      %v12066 = vunpack.c.l.b16 %v11915
      %v12067 = vunpack.c.l.b16 %v11916
      %v12068 = vunpack.c.l.b16 %v11917
      %v12069 = vunpack.c.l.b16 %v11918
      %v12070 = vunpack.c.l.b16 %v11919
      %v12071 = vunpack.c.l.b16 %v11920
      %v12072 = vunpack.c.l.b16 %v11921
      %v12073 = vunpack.c.l.b16 %v11922
      %v12074 = vunpack.c.l.b16 %v11923
      %v12075 = vunpack.c.l.b16 %v11924
      %v12076 = vunpack.c.l.b16 %v11925
      %v12077 = vunpack.c.l.b16 %v11926
      %v12078 = vunpack.c.l.b16 %v11927
      %v12079 = vunpack.c.l.b16 %v11928
      %v12080 = vunpack.c.l.b16 %v11929
      %v12081 = vunpack.c.l.b16 %v11930
      %v12082 = vpack.c.b16 %v12067, %v12066
      %v12083 = vpack.c.b16 %v12069, %v12068
      %v12084 = vpack.c.b16 %v12071, %v12070
      %v12085 = vpack.c.b16 %v12073, %v12072
      %v12086 = vpack.c.b16 %v12075, %v12074
      %v12087 = vpack.c.b16 %v12077, %v12076
      %v12088 = vpack.c.b16 %v12079, %v12078
      %v12089 = vpack.c.b16 %v12081, %v12080
      %12098 = vmatpush.bf16.msra.mxu0 %v12089
      %12099 = vmatpush.bf16.msra.mxu0 %v12088
      %12100 = vmatpush.bf16.msra.mxu0 %v12087
      %12101 = vmatpush.bf16.msra.mxu0 %v12086
      %12102 = vmatpush.bf16.msra.mxu0 %v12085
      %12103 = vmatpush.bf16.msra.mxu0 %v12084
      %12104 = vmatpush.bf16.msra.mxu0 %v12083
      %12105 = vmatpush.bf16.msra.mxu0 %v12082
      %12106 = vmatmul.bf16.gmra.mxu0 %v11985
      %v12107 = vpop.f32.mrf.mxu0
      %v12108 = vadd.f32 0.0, %v12107
      %v12109 = vpop.f32.mrf.mxu0
      %v12110 = vadd.f32 0.0, %v12109
      %12111 = vmatmul.bf16.gmra.mxu0 %v11993
      %v12112 = vpop.f32.mrf.mxu0
      %v12113 = vadd.f32 0.0, %v12112
      %v12114 = vpop.f32.mrf.mxu0
      %v12115 = vadd.f32 0.0, %v12114
      %12116 = vmatmul.bf16.gmra.mxu0 %v12001
      %v12117 = vpop.f32.mrf.mxu0
      %v12118 = vadd.f32 0.0, %v12117
      %v12119 = vpop.f32.mrf.mxu0
      %v12120 = vadd.f32 0.0, %v12119
      %12121 = vmatmul.bf16.gmra.mxu0 %v12009
      %v12122 = vpop.f32.mrf.mxu0
      %v12123 = vadd.f32 0.0, %v12122
      %v12124 = vpop.f32.mrf.mxu0
      %v12125 = vadd.f32 0.0, %v12124
      %12126 = vmatmul.bf16.gmra.mxu0 %v12017
      %v12127 = vpop.f32.mrf.mxu0
      %v12128 = vadd.f32 0.0, %v12127
      %v12129 = vpop.f32.mrf.mxu0
      %v12130 = vadd.f32 0.0, %v12129
      %12131 = vmatmul.bf16.gmra.mxu0 %v12025
      %v12132 = vpop.f32.mrf.mxu0
      %v12133 = vadd.f32 0.0, %v12132
      %v12134 = vpop.f32.mrf.mxu0
      %v12135 = vadd.f32 0.0, %v12134
      %12136 = vmatmul.bf16.gmra.mxu0 %v12033
      %v12137 = vpop.f32.mrf.mxu0
      %v12138 = vadd.f32 0.0, %v12137
      %v12139 = vpop.f32.mrf.mxu0
      %v12140 = vadd.f32 0.0, %v12139
      %12141 = vmatmul.bf16.gmra.mxu0 %v12041
      %v12142 = vpop.f32.mrf.mxu0
      %v12143 = vadd.f32 0.0, %v12142
      %v12144 = vpop.f32.mrf.mxu0
      %v12145 = vadd.f32 0.0, %v12144
      %12146 = vdwg.mxu0
      %v12147 = vadd.f32 %v11882, %v12108
      %v12148 = vadd.f32 %v11883, %v12110
      %v12149 = vadd.f32 %v11884, %v12113
      %v12150 = vadd.f32 %v11885, %v12115
      %v12151 = vadd.f32 %v11886, %v12118
      %v12152 = vadd.f32 %v11887, %v12120
      %v12153 = vadd.f32 %v11888, %v12123
      %v12154 = vadd.f32 %v11889, %v12125
      %v12155 = vadd.f32 %v11890, %v12128
      %v12156 = vadd.f32 %v11891, %v12130
      %v12157 = vadd.f32 %v11892, %v12133
      %v12158 = vadd.f32 %v11893, %v12135
      %v12159 = vadd.f32 %v11894, %v12138
      %v12160 = vadd.f32 %v11895, %v12140
      %v12161 = vadd.f32 %v11896, %v12143
      %v12162 = vadd.f32 %v11897, %v12145
      %v12163 = vld [vmem:[#allocation3 + $0x8c] sm:$0xe]
      %v12164 = vld [vmem:[%s9768] sm:$0xf]
      %v12165 = vld [vmem:[%s9768 + $0x4] sm:$0xf]
      %v12166 = vld [vmem:[%s9768 + $0x8] sm:$0xf]
      %v12167 = vld [vmem:[%s9768 + $0xc] sm:$0xf]
      %v12168 = vld [vmem:[%s9768 + $0x10] sm:$0xf]
      %v12169 = vld [vmem:[%s9768 + $0x14] sm:$0xf]
      %v12170 = vld [vmem:[%s9768 + $0x18] sm:$0xf]
      %v12171 = vld [vmem:[%s9768 + $0x1c] sm:$0xf]
      %v12172 = vld [vmem:[%s9768 + $0x20] sm:$0xf]
      %v12173 = vld [vmem:[%s9768 + $0x24] sm:$0xf]
      %v12174 = vld [vmem:[%s9768 + $0x28] sm:$0xf]
      %v12175 = vld [vmem:[%s9768 + $0x2c] sm:$0xf]
      %v12176 = vld [vmem:[%s9768 + $0x30] sm:$0xf]
      %v12177 = vld [vmem:[%s9768 + $0x34] sm:$0xf]
      %v12178 = vld [vmem:[%s9768 + $0x38] sm:$0xf]
      %v12179 = vld [vmem:[%s9768 + $0x3c] sm:$0xf]
      %v12181 = vunpack.c.l.b16 %v12163
      %v12182 = vpack.c.b16 %v11949, %v12181
      %v12183 = vrot.slane %v12182, 1
      %v12184 = vrot.slane %v11966, 1
      %v12185 = vsel %vm2158, %v12183, %v12184
      %v12186 = vrot.slane %v11967, 1
      %v12187 = vsel %vm2158, %v12184, %v12186
      %v12188 = vrot.slane %v11968, 1
      %v12189 = vsel %vm2158, %v12186, %v12188
      %v12190 = vrot.slane %v11969, 1
      %v12191 = vsel %vm2158, %v12188, %v12190
      %v12192 = vrot.slane %v11970, 1
      %v12193 = vsel %vm2158, %v12190, %v12192
      %v12194 = vrot.slane %v11971, 1
      %v12195 = vsel %vm2158, %v12192, %v12194
      %v12196 = vrot.slane %v11972, 1
      %v12197 = vsel %vm2158, %v12194, %v12196
      %v12198 = vrot.slane %v11973, 1
      %v12199 = vsel %vm2158, %v12196, %v12198
      %v12224 = vunpack.c.l.b16 %v12164
      %v12225 = vunpack.c.l.b16 %v12165
      %v12226 = vunpack.c.l.b16 %v12166
      %v12227 = vunpack.c.l.b16 %v12167
      %v12228 = vunpack.c.l.b16 %v12168
      %v12229 = vunpack.c.l.b16 %v12169
      %v12230 = vunpack.c.l.b16 %v12170
      %v12231 = vunpack.c.l.b16 %v12171
      %v12232 = vunpack.c.l.b16 %v12172
      %v12233 = vunpack.c.l.b16 %v12173
      %v12234 = vunpack.c.l.b16 %v12174
      %v12235 = vunpack.c.l.b16 %v12175
      %v12236 = vunpack.c.l.b16 %v12176
      %v12237 = vunpack.c.l.b16 %v12177
      %v12238 = vunpack.c.l.b16 %v12178
      %v12239 = vunpack.c.l.b16 %v12179
      %v12240 = vpack.c.b16 %v12225, %v12224
      %v12241 = vpack.c.b16 %v12227, %v12226
      %v12242 = vpack.c.b16 %v12229, %v12228
      %v12243 = vpack.c.b16 %v12231, %v12230
      %v12244 = vpack.c.b16 %v12233, %v12232
      %v12245 = vpack.c.b16 %v12235, %v12234
      %v12246 = vpack.c.b16 %v12237, %v12236
      %v12247 = vpack.c.b16 %v12239, %v12238
      %12256 = vmatpush.bf16.msra.mxu0 %v12247
      %12257 = vmatpush.bf16.msra.mxu0 %v12246
      %12258 = vmatpush.bf16.msra.mxu0 %v12245
      %12259 = vmatpush.bf16.msra.mxu0 %v12244
      %12260 = vmatpush.bf16.msra.mxu0 %v12243
      %12261 = vmatpush.bf16.msra.mxu0 %v12242
      %12262 = vmatpush.bf16.msra.mxu0 %v12241
      %12263 = vmatpush.bf16.msra.mxu0 %v12240
      %12264 = vmatmul.bf16.gmra.mxu0 %v12185
      %v12265 = vpop.f32.mrf.mxu0
      %v12266 = vadd.f32 0.0, %v12265
      %v12267 = vpop.f32.mrf.mxu0
      %v12268 = vadd.f32 0.0, %v12267
      %12269 = vmatmul.bf16.gmra.mxu0 %v12187
      %v12270 = vpop.f32.mrf.mxu0
      %v12271 = vadd.f32 0.0, %v12270
      %v12272 = vpop.f32.mrf.mxu0
      %v12273 = vadd.f32 0.0, %v12272
      %12274 = vmatmul.bf16.gmra.mxu0 %v12189
      %v12275 = vpop.f32.mrf.mxu0
      %v12276 = vadd.f32 0.0, %v12275
      %v12277 = vpop.f32.mrf.mxu0
      %v12278 = vadd.f32 0.0, %v12277
      %12279 = vmatmul.bf16.gmra.mxu0 %v12191
      %v12280 = vpop.f32.mrf.mxu0
      %v12281 = vadd.f32 0.0, %v12280
      %v12282 = vpop.f32.mrf.mxu0
      %v12283 = vadd.f32 0.0, %v12282
      %12284 = vmatmul.bf16.gmra.mxu0 %v12193
      %v12285 = vpop.f32.mrf.mxu0
      %v12286 = vadd.f32 0.0, %v12285
      %v12287 = vpop.f32.mrf.mxu0
      %v12288 = vadd.f32 0.0, %v12287
      %12289 = vmatmul.bf16.gmra.mxu0 %v12195
      %v12290 = vpop.f32.mrf.mxu0
      %v12291 = vadd.f32 0.0, %v12290
      %v12292 = vpop.f32.mrf.mxu0
      %v12293 = vadd.f32 0.0, %v12292
      %12294 = vmatmul.bf16.gmra.mxu0 %v12197
      %v12295 = vpop.f32.mrf.mxu0
      %v12296 = vadd.f32 0.0, %v12295
      %v12297 = vpop.f32.mrf.mxu0
      %v12298 = vadd.f32 0.0, %v12297
      %12299 = vmatmul.bf16.gmra.mxu0 %v12199
      %v12300 = vpop.f32.mrf.mxu0
      %v12301 = vadd.f32 0.0, %v12300
      %v12302 = vpop.f32.mrf.mxu0
      %v12303 = vadd.f32 0.0, %v12302
      %12304 = vdwg.mxu0
      %v12305 = vadd.f32 %v12147, %v12266
      %v12306 = vadd.f32 %v12148, %v12268
      %v12307 = vadd.f32 %v12149, %v12271
      %v12308 = vadd.f32 %v12150, %v12273
      %v12309 = vadd.f32 %v12151, %v12276
      %v12310 = vadd.f32 %v12152, %v12278
      %v12311 = vadd.f32 %v12153, %v12281
      %v12312 = vadd.f32 %v12154, %v12283
      %v12313 = vadd.f32 %v12155, %v12286
      %v12314 = vadd.f32 %v12156, %v12288
      %v12315 = vadd.f32 %v12157, %v12291
      %v12316 = vadd.f32 %v12158, %v12293
      %v12317 = vadd.f32 %v12159, %v12296
      %v12318 = vadd.f32 %v12160, %v12298
      %v12319 = vadd.f32 %v12161, %v12301
      %v12320 = vadd.f32 %v12162, %v12303
      %v12321 = vld [vmem:[#allocation3 + $0x98] sm:$0xf]
      %v12322 = vld [vmem:[#allocation3 + $0x9c] sm:$0xf]
      %v12323 = vld [vmem:[#allocation3 + $0xa0] sm:$0xf]
      %v12324 = vld [vmem:[#allocation3 + $0xa4] sm:$0xf]
      %v12325 = vld [vmem:[#allocation3 + $0xa8] sm:$0xf]
      %v12326 = vld [vmem:[#allocation3 + $0xac] sm:$0xf]
      %v12327 = vld [vmem:[#allocation3 + $0xb0] sm:$0xf]
      %v12328 = vld [vmem:[#allocation3 + $0xb4] sm:$0xf]
      %v12329 = vld [vmem:[#allocation3 + $0xb8] sm:$0xf]
      %v12330 = vld [vmem:[#allocation3 + $0xbc] sm:$0xf]
      %v12331 = vld [vmem:[#allocation3 + $0xc0] sm:$0xf]
      %v12332 = vld [vmem:[#allocation3 + $0xc4] sm:$0xf]
      %v12333 = vld [vmem:[#allocation3 + $0xc8] sm:$0xf]
      %v12334 = vld [vmem:[#allocation3 + $0xcc] sm:$0xf]
      %v12335 = vld [vmem:[#allocation3 + $0xd0] sm:$0xf]
      %v12336 = vld [vmem:[#allocation3 + $0xd4] sm:$0xf]
      %v12337 = vld [vmem:[%s10038] sm:$0xf]
      %v12338 = vld [vmem:[%s10038 + $0x4] sm:$0xf]
      %v12339 = vld [vmem:[%s10038 + $0x8] sm:$0xf]
      %v12340 = vld [vmem:[%s10038 + $0xc] sm:$0xf]
      %v12341 = vld [vmem:[%s10038 + $0x10] sm:$0xf]
      %v12342 = vld [vmem:[%s10038 + $0x14] sm:$0xf]
      %v12343 = vld [vmem:[%s10038 + $0x18] sm:$0xf]
      %v12344 = vld [vmem:[%s10038 + $0x1c] sm:$0xf]
      %v12345 = vld [vmem:[%s10038 + $0x20] sm:$0xf]
      %v12346 = vld [vmem:[%s10038 + $0x24] sm:$0xf]
      %v12347 = vld [vmem:[%s10038 + $0x28] sm:$0xf]
      %v12348 = vld [vmem:[%s10038 + $0x2c] sm:$0xf]
      %v12349 = vld [vmem:[%s10038 + $0x30] sm:$0xf]
      %v12350 = vld [vmem:[%s10038 + $0x34] sm:$0xf]
      %v12351 = vld [vmem:[%s10038 + $0x38] sm:$0xf]
      %v12352 = vld [vmem:[%s10038 + $0x3c] sm:$0xf]
      %v12369 = vunpack.c.l.b16 %v12321
      %v12370 = vunpack.c.l.b16 %v12322
      %v12371 = vunpack.c.l.b16 %v12323
      %v12372 = vunpack.c.l.b16 %v12324
      %v12373 = vunpack.c.l.b16 %v12325
      %v12374 = vunpack.c.l.b16 %v12326
      %v12375 = vunpack.c.l.b16 %v12327
      %v12376 = vunpack.c.l.b16 %v12328
      %v12377 = vunpack.c.l.b16 %v12329
      %v12378 = vunpack.c.l.b16 %v12330
      %v12379 = vunpack.c.l.b16 %v12331
      %v12380 = vunpack.c.l.b16 %v12332
      %v12381 = vunpack.c.l.b16 %v12333
      %v12382 = vunpack.c.l.b16 %v12334
      %v12383 = vunpack.c.l.b16 %v12335
      %v12384 = vunpack.c.l.b16 %v12336
      %v12385 = vpack.c.b16 %v12370, %v12369
      %v12386 = vpack.c.b16 %v12372, %v12371
      %v12387 = vpack.c.b16 %v12374, %v12373
      %v12388 = vpack.c.b16 %v12376, %v12375
      %v12389 = vpack.c.b16 %v12378, %v12377
      %v12390 = vpack.c.b16 %v12380, %v12379
      %v12391 = vpack.c.b16 %v12382, %v12381
      %v12392 = vpack.c.b16 %v12384, %v12383
      %v12417 = vunpack.c.l.b16 %v12337
      %v12418 = vunpack.c.l.b16 %v12338
      %v12419 = vunpack.c.l.b16 %v12339
      %v12420 = vunpack.c.l.b16 %v12340
      %v12421 = vunpack.c.l.b16 %v12341
      %v12422 = vunpack.c.l.b16 %v12342
      %v12423 = vunpack.c.l.b16 %v12343
      %v12424 = vunpack.c.l.b16 %v12344
      %v12425 = vunpack.c.l.b16 %v12345
      %v12426 = vunpack.c.l.b16 %v12346
      %v12427 = vunpack.c.l.b16 %v12347
      %v12428 = vunpack.c.l.b16 %v12348
      %v12429 = vunpack.c.l.b16 %v12349
      %v12430 = vunpack.c.l.b16 %v12350
      %v12431 = vunpack.c.l.b16 %v12351
      %v12432 = vunpack.c.l.b16 %v12352
      %v12433 = vpack.c.b16 %v12418, %v12417
      %v12434 = vpack.c.b16 %v12420, %v12419
      %v12435 = vpack.c.b16 %v12422, %v12421
      %v12436 = vpack.c.b16 %v12424, %v12423
      %v12437 = vpack.c.b16 %v12426, %v12425
      %v12438 = vpack.c.b16 %v12428, %v12427
      %v12439 = vpack.c.b16 %v12430, %v12429
      %v12440 = vpack.c.b16 %v12432, %v12431
      %12449 = vmatpush.bf16.msra.mxu0 %v12440
      %12450 = vmatpush.bf16.msra.mxu0 %v12439
      %12451 = vmatpush.bf16.msra.mxu0 %v12438
      %12452 = vmatpush.bf16.msra.mxu0 %v12437
      %12453 = vmatpush.bf16.msra.mxu0 %v12436
      %12454 = vmatpush.bf16.msra.mxu0 %v12435
      %12455 = vmatpush.bf16.msra.mxu0 %v12434
      %12456 = vmatpush.bf16.msra.mxu0 %v12433
      %12457 = vmatmul.bf16.gmra.mxu0 %v12385
      %v12458 = vpop.f32.mrf.mxu0
      %v12459 = vadd.f32 0.0, %v12458
      %v12460 = vpop.f32.mrf.mxu0
      %v12461 = vadd.f32 0.0, %v12460
      %12462 = vmatmul.bf16.gmra.mxu0 %v12386
      %v12463 = vpop.f32.mrf.mxu0
      %v12464 = vadd.f32 0.0, %v12463
      %v12465 = vpop.f32.mrf.mxu0
      %v12466 = vadd.f32 0.0, %v12465
      %12467 = vmatmul.bf16.gmra.mxu0 %v12387
      %v12468 = vpop.f32.mrf.mxu0
      %v12469 = vadd.f32 0.0, %v12468
      %v12470 = vpop.f32.mrf.mxu0
      %v12471 = vadd.f32 0.0, %v12470
      %12472 = vmatmul.bf16.gmra.mxu0 %v12388
      %v12473 = vpop.f32.mrf.mxu0
      %v12474 = vadd.f32 0.0, %v12473
      %v12475 = vpop.f32.mrf.mxu0
      %v12476 = vadd.f32 0.0, %v12475
      %12477 = vmatmul.bf16.gmra.mxu0 %v12389
      %v12478 = vpop.f32.mrf.mxu0
      %v12479 = vadd.f32 0.0, %v12478
      %v12480 = vpop.f32.mrf.mxu0
      %v12481 = vadd.f32 0.0, %v12480
      %12482 = vmatmul.bf16.gmra.mxu0 %v12390
      %v12483 = vpop.f32.mrf.mxu0
      %v12484 = vadd.f32 0.0, %v12483
      %v12485 = vpop.f32.mrf.mxu0
      %v12486 = vadd.f32 0.0, %v12485
      %12487 = vmatmul.bf16.gmra.mxu0 %v12391
      %v12488 = vpop.f32.mrf.mxu0
      %v12489 = vadd.f32 0.0, %v12488
      %v12490 = vpop.f32.mrf.mxu0
      %v12491 = vadd.f32 0.0, %v12490
      %12492 = vmatmul.bf16.gmra.mxu0 %v12392
      %v12493 = vpop.f32.mrf.mxu0
      %v12494 = vadd.f32 0.0, %v12493
      %v12495 = vpop.f32.mrf.mxu0
      %v12496 = vadd.f32 0.0, %v12495
      %12497 = vdwg.mxu0
      %v12498 = vadd.f32 %v12305, %v12459
      %v12499 = vadd.f32 %v12306, %v12461
      %v12500 = vadd.f32 %v12307, %v12464
      %v12501 = vadd.f32 %v12308, %v12466
      %v12502 = vadd.f32 %v12309, %v12469
      %v12503 = vadd.f32 %v12310, %v12471
      %v12504 = vadd.f32 %v12311, %v12474
      %v12505 = vadd.f32 %v12312, %v12476
      %v12506 = vadd.f32 %v12313, %v12479
      %v12507 = vadd.f32 %v12314, %v12481
      %v12508 = vadd.f32 %v12315, %v12484
      %v12509 = vadd.f32 %v12316, %v12486
      %v12510 = vadd.f32 %v12317, %v12489
      %v12511 = vadd.f32 %v12318, %v12491
      %v12512 = vadd.f32 %v12319, %v12494
      %v12513 = vadd.f32 %v12320, %v12496
      %v12514 = vld [vmem:[#allocation3 + $0x98] sm:$0xf]
      %v12515 = vld [vmem:[#allocation3 + $0x9c] sm:$0xf]
      %v12516 = vld [vmem:[#allocation3 + $0xa0] sm:$0xf]
      %v12517 = vld [vmem:[#allocation3 + $0xa4] sm:$0xf]
      %v12518 = vld [vmem:[#allocation3 + $0xa8] sm:$0xf]
      %v12519 = vld [vmem:[#allocation3 + $0xac] sm:$0xf]
      %v12520 = vld [vmem:[#allocation3 + $0xb0] sm:$0xf]
      %v12521 = vld [vmem:[#allocation3 + $0xb4] sm:$0xf]
      %v12522 = vld [vmem:[#allocation3 + $0xb8] sm:$0xf]
      %v12523 = vld [vmem:[#allocation3 + $0xbc] sm:$0xf]
      %v12524 = vld [vmem:[#allocation3 + $0xc0] sm:$0xf]
      %v12525 = vld [vmem:[#allocation3 + $0xc4] sm:$0xf]
      %v12526 = vld [vmem:[#allocation3 + $0xc8] sm:$0xf]
      %v12527 = vld [vmem:[#allocation3 + $0xcc] sm:$0xf]
      %v12528 = vld [vmem:[#allocation3 + $0xd0] sm:$0xf]
      %v12529 = vld [vmem:[#allocation3 + $0xd4] sm:$0xf]
      %v12530 = vld [vmem:[#allocation3 + $0xd8] sm:$0x1]
      %v12531 = vld [vmem:[%s10353] sm:$0xf]
      %v12532 = vld [vmem:[%s10353 + $0x4] sm:$0xf]
      %v12533 = vld [vmem:[%s10353 + $0x8] sm:$0xf]
      %v12534 = vld [vmem:[%s10353 + $0xc] sm:$0xf]
      %v12535 = vld [vmem:[%s10353 + $0x10] sm:$0xf]
      %v12536 = vld [vmem:[%s10353 + $0x14] sm:$0xf]
      %v12537 = vld [vmem:[%s10353 + $0x18] sm:$0xf]
      %v12538 = vld [vmem:[%s10353 + $0x1c] sm:$0xf]
      %v12539 = vld [vmem:[%s10353 + $0x20] sm:$0xf]
      %v12540 = vld [vmem:[%s10353 + $0x24] sm:$0xf]
      %v12541 = vld [vmem:[%s10353 + $0x28] sm:$0xf]
      %v12542 = vld [vmem:[%s10353 + $0x2c] sm:$0xf]
      %v12543 = vld [vmem:[%s10353 + $0x30] sm:$0xf]
      %v12544 = vld [vmem:[%s10353 + $0x34] sm:$0xf]
      %v12545 = vld [vmem:[%s10353 + $0x38] sm:$0xf]
      %v12546 = vld [vmem:[%s10353 + $0x3c] sm:$0xf]
      %v12564 = vunpack.c.l.b16 %v12514
      %v12565 = vunpack.c.l.b16 %v12515
      %v12566 = vunpack.c.l.b16 %v12516
      %v12567 = vunpack.c.l.b16 %v12517
      %v12568 = vunpack.c.l.b16 %v12518
      %v12569 = vunpack.c.l.b16 %v12519
      %v12570 = vunpack.c.l.b16 %v12520
      %v12571 = vunpack.c.l.b16 %v12521
      %v12572 = vunpack.c.l.b16 %v12522
      %v12573 = vunpack.c.l.b16 %v12523
      %v12574 = vunpack.c.l.b16 %v12524
      %v12575 = vunpack.c.l.b16 %v12525
      %v12576 = vunpack.c.l.b16 %v12526
      %v12577 = vunpack.c.l.b16 %v12527
      %v12578 = vunpack.c.l.b16 %v12528
      %v12579 = vunpack.c.l.b16 %v12529
      %v12580 = vunpack.c.l.b16 %v12530
      %v12581 = vpack.c.b16 %v12565, %v12564
      %v12582 = vpack.c.b16 %v12567, %v12566
      %v12583 = vpack.c.b16 %v12569, %v12568
      %v12584 = vpack.c.b16 %v12571, %v12570
      %v12585 = vpack.c.b16 %v12573, %v12572
      %v12586 = vpack.c.b16 %v12575, %v12574
      %v12587 = vpack.c.b16 %v12577, %v12576
      %v12588 = vpack.c.b16 %v12579, %v12578
      %v12589 = vpack.c.b16 %v12580, %v12580
      %v12591 = vshrl.u32 %v12581, 16
      %v12593 = vshll.u32 %v12581, 16
      %v12595 = vrot.slane %v12593, 1
      %v12596 = vor.u32 %v12591, %v12595
      %v12598 = vshll.u32 %v12582, 16
      %v12600 = vrot.slane %v12598, 1
      %v12601 = vsel %vm1753, %v12596, %v12600
      %v12602 = vshrl.u32 %v12582, 16
      %v12604 = vor.u32 %v12602, %v12600
      %v12606 = vshll.u32 %v12583, 16
      %v12608 = vrot.slane %v12606, 1
      %v12609 = vsel %vm1753, %v12604, %v12608
      %v12610 = vshrl.u32 %v12583, 16
      %v12612 = vor.u32 %v12610, %v12608
      %v12614 = vshll.u32 %v12584, 16
      %v12616 = vrot.slane %v12614, 1
      %v12617 = vsel %vm1753, %v12612, %v12616
      %v12618 = vshrl.u32 %v12584, 16
      %v12620 = vor.u32 %v12618, %v12616
      %v12622 = vshll.u32 %v12585, 16
      %v12624 = vrot.slane %v12622, 1
      %v12625 = vsel %vm1753, %v12620, %v12624
      %v12626 = vshrl.u32 %v12585, 16
      %v12628 = vor.u32 %v12626, %v12624
      %v12630 = vshll.u32 %v12586, 16
      %v12632 = vrot.slane %v12630, 1
      %v12633 = vsel %vm1753, %v12628, %v12632
      %v12634 = vshrl.u32 %v12586, 16
      %v12636 = vor.u32 %v12634, %v12632
      %v12638 = vshll.u32 %v12587, 16
      %v12640 = vrot.slane %v12638, 1
      %v12641 = vsel %vm1753, %v12636, %v12640
      %v12642 = vshrl.u32 %v12587, 16
      %v12644 = vor.u32 %v12642, %v12640
      %v12646 = vshll.u32 %v12588, 16
      %v12648 = vrot.slane %v12646, 1
      %v12649 = vsel %vm1753, %v12644, %v12648
      %v12650 = vshrl.u32 %v12588, 16
      %v12652 = vor.u32 %v12650, %v12648
      %v12654 = vshll.u32 %v12589, 16
      %v12656 = vrot.slane %v12654, 1
      %v12657 = vsel %vm1753, %v12652, %v12656
      %v12682 = vunpack.c.l.b16 %v12531
      %v12683 = vunpack.c.l.b16 %v12532
      %v12684 = vunpack.c.l.b16 %v12533
      %v12685 = vunpack.c.l.b16 %v12534
      %v12686 = vunpack.c.l.b16 %v12535
      %v12687 = vunpack.c.l.b16 %v12536
      %v12688 = vunpack.c.l.b16 %v12537
      %v12689 = vunpack.c.l.b16 %v12538
      %v12690 = vunpack.c.l.b16 %v12539
      %v12691 = vunpack.c.l.b16 %v12540
      %v12692 = vunpack.c.l.b16 %v12541
      %v12693 = vunpack.c.l.b16 %v12542
      %v12694 = vunpack.c.l.b16 %v12543
      %v12695 = vunpack.c.l.b16 %v12544
      %v12696 = vunpack.c.l.b16 %v12545
      %v12697 = vunpack.c.l.b16 %v12546
      %v12698 = vpack.c.b16 %v12683, %v12682
      %v12699 = vpack.c.b16 %v12685, %v12684
      %v12700 = vpack.c.b16 %v12687, %v12686
      %v12701 = vpack.c.b16 %v12689, %v12688
      %v12702 = vpack.c.b16 %v12691, %v12690
      %v12703 = vpack.c.b16 %v12693, %v12692
      %v12704 = vpack.c.b16 %v12695, %v12694
      %v12705 = vpack.c.b16 %v12697, %v12696
      %12714 = vmatpush.bf16.msra.mxu0 %v12705
      %12715 = vmatpush.bf16.msra.mxu0 %v12704
      %12716 = vmatpush.bf16.msra.mxu0 %v12703
      %12717 = vmatpush.bf16.msra.mxu0 %v12702
      %12718 = vmatpush.bf16.msra.mxu0 %v12701
      %12719 = vmatpush.bf16.msra.mxu0 %v12700
      %12720 = vmatpush.bf16.msra.mxu0 %v12699
      %12721 = vmatpush.bf16.msra.mxu0 %v12698
      %12722 = vmatmul.bf16.gmra.mxu0 %v12601
      %v12723 = vpop.f32.mrf.mxu0
      %v12724 = vadd.f32 0.0, %v12723
      %v12725 = vpop.f32.mrf.mxu0
      %v12726 = vadd.f32 0.0, %v12725
      %12727 = vmatmul.bf16.gmra.mxu0 %v12609
      %v12728 = vpop.f32.mrf.mxu0
      %v12729 = vadd.f32 0.0, %v12728
      %v12730 = vpop.f32.mrf.mxu0
      %v12731 = vadd.f32 0.0, %v12730
      %12732 = vmatmul.bf16.gmra.mxu0 %v12617
      %v12733 = vpop.f32.mrf.mxu0
      %v12734 = vadd.f32 0.0, %v12733
      %v12735 = vpop.f32.mrf.mxu0
      %v12736 = vadd.f32 0.0, %v12735
      %12737 = vmatmul.bf16.gmra.mxu0 %v12625
      %v12738 = vpop.f32.mrf.mxu0
      %v12739 = vadd.f32 0.0, %v12738
      %v12740 = vpop.f32.mrf.mxu0
      %v12741 = vadd.f32 0.0, %v12740
      %12742 = vmatmul.bf16.gmra.mxu0 %v12633
      %v12743 = vpop.f32.mrf.mxu0
      %v12744 = vadd.f32 0.0, %v12743
      %v12745 = vpop.f32.mrf.mxu0
      %v12746 = vadd.f32 0.0, %v12745
      %12747 = vmatmul.bf16.gmra.mxu0 %v12641
      %v12748 = vpop.f32.mrf.mxu0
      %v12749 = vadd.f32 0.0, %v12748
      %v12750 = vpop.f32.mrf.mxu0
      %v12751 = vadd.f32 0.0, %v12750
      %12752 = vmatmul.bf16.gmra.mxu0 %v12649
      %v12753 = vpop.f32.mrf.mxu0
      %v12754 = vadd.f32 0.0, %v12753
      %v12755 = vpop.f32.mrf.mxu0
      %v12756 = vadd.f32 0.0, %v12755
      %12757 = vmatmul.bf16.gmra.mxu0 %v12657
      %v12758 = vpop.f32.mrf.mxu0
      %v12759 = vadd.f32 0.0, %v12758
      %v12760 = vpop.f32.mrf.mxu0
      %v12761 = vadd.f32 0.0, %v12760
      %12762 = vdwg.mxu0
      %v12763 = vadd.f32 %v12498, %v12724
      %v12764 = vadd.f32 %v12499, %v12726
      %v12765 = vadd.f32 %v12500, %v12729
      %v12766 = vadd.f32 %v12501, %v12731
      %v12767 = vadd.f32 %v12502, %v12734
      %v12768 = vadd.f32 %v12503, %v12736
      %v12769 = vadd.f32 %v12504, %v12739
      %v12770 = vadd.f32 %v12505, %v12741
      %v12771 = vadd.f32 %v12506, %v12744
      %v12772 = vadd.f32 %v12507, %v12746
      %v12773 = vadd.f32 %v12508, %v12749
      %v12774 = vadd.f32 %v12509, %v12751
      %v12775 = vadd.f32 %v12510, %v12754
      %v12776 = vadd.f32 %v12511, %v12756
      %v12777 = vadd.f32 %v12512, %v12759
      %v12778 = vadd.f32 %v12513, %v12761
      %v12779 = vld [vmem:[#allocation3 + $0x98] sm:$0xe]
      %v12780 = vld [vmem:[%s10771] sm:$0xf]
      %v12781 = vld [vmem:[%s10771 + $0x4] sm:$0xf]
      %v12782 = vld [vmem:[%s10771 + $0x8] sm:$0xf]
      %v12783 = vld [vmem:[%s10771 + $0xc] sm:$0xf]
      %v12784 = vld [vmem:[%s10771 + $0x10] sm:$0xf]
      %v12785 = vld [vmem:[%s10771 + $0x14] sm:$0xf]
      %v12786 = vld [vmem:[%s10771 + $0x18] sm:$0xf]
      %v12787 = vld [vmem:[%s10771 + $0x1c] sm:$0xf]
      %v12788 = vld [vmem:[%s10771 + $0x20] sm:$0xf]
      %v12789 = vld [vmem:[%s10771 + $0x24] sm:$0xf]
      %v12790 = vld [vmem:[%s10771 + $0x28] sm:$0xf]
      %v12791 = vld [vmem:[%s10771 + $0x2c] sm:$0xf]
      %v12792 = vld [vmem:[%s10771 + $0x30] sm:$0xf]
      %v12793 = vld [vmem:[%s10771 + $0x34] sm:$0xf]
      %v12794 = vld [vmem:[%s10771 + $0x38] sm:$0xf]
      %v12795 = vld [vmem:[%s10771 + $0x3c] sm:$0xf]
      %v12797 = vunpack.c.l.b16 %v12779
      %v12798 = vpack.c.b16 %v12565, %v12797
      %v12799 = vrot.slane %v12798, 1
      %v12800 = vrot.slane %v12582, 1
      %v12801 = vsel %vm2158, %v12799, %v12800
      %v12802 = vrot.slane %v12583, 1
      %v12803 = vsel %vm2158, %v12800, %v12802
      %v12804 = vrot.slane %v12584, 1
      %v12805 = vsel %vm2158, %v12802, %v12804
      %v12806 = vrot.slane %v12585, 1
      %v12807 = vsel %vm2158, %v12804, %v12806
      %v12808 = vrot.slane %v12586, 1
      %v12809 = vsel %vm2158, %v12806, %v12808
      %v12810 = vrot.slane %v12587, 1
      %v12811 = vsel %vm2158, %v12808, %v12810
      %v12812 = vrot.slane %v12588, 1
      %v12813 = vsel %vm2158, %v12810, %v12812
      %v12814 = vrot.slane %v12589, 1
      %v12815 = vsel %vm2158, %v12812, %v12814
      %v12840 = vunpack.c.l.b16 %v12780
      %v12841 = vunpack.c.l.b16 %v12781
      %v12842 = vunpack.c.l.b16 %v12782
      %v12843 = vunpack.c.l.b16 %v12783
      %v12844 = vunpack.c.l.b16 %v12784
      %v12845 = vunpack.c.l.b16 %v12785
      %v12846 = vunpack.c.l.b16 %v12786
      %v12847 = vunpack.c.l.b16 %v12787
      %v12848 = vunpack.c.l.b16 %v12788
      %v12849 = vunpack.c.l.b16 %v12789
      %v12850 = vunpack.c.l.b16 %v12790
      %v12851 = vunpack.c.l.b16 %v12791
      %v12852 = vunpack.c.l.b16 %v12792
      %v12853 = vunpack.c.l.b16 %v12793
      %v12854 = vunpack.c.l.b16 %v12794
      %v12855 = vunpack.c.l.b16 %v12795
      %v12856 = vpack.c.b16 %v12841, %v12840
      %v12857 = vpack.c.b16 %v12843, %v12842
      %v12858 = vpack.c.b16 %v12845, %v12844
      %v12859 = vpack.c.b16 %v12847, %v12846
      %v12860 = vpack.c.b16 %v12849, %v12848
      %v12861 = vpack.c.b16 %v12851, %v12850
      %v12862 = vpack.c.b16 %v12853, %v12852
      %v12863 = vpack.c.b16 %v12855, %v12854
      %12872 = vmatpush.bf16.msra.mxu0 %v12863
      %12873 = vmatpush.bf16.msra.mxu0 %v12862
      %12874 = vmatpush.bf16.msra.mxu0 %v12861
      %12875 = vmatpush.bf16.msra.mxu0 %v12860
      %12876 = vmatpush.bf16.msra.mxu0 %v12859
      %12877 = vmatpush.bf16.msra.mxu0 %v12858
      %12878 = vmatpush.bf16.msra.mxu0 %v12857
      %12879 = vmatpush.bf16.msra.mxu0 %v12856
      %12880 = vmatmul.bf16.gmra.mxu0 %v12801
      %v12881 = vpop.f32.mrf.mxu0
      %v12882 = vadd.f32 0.0, %v12881
      %v12883 = vpop.f32.mrf.mxu0
      %v12884 = vadd.f32 0.0, %v12883
      %12885 = vmatmul.bf16.gmra.mxu0 %v12803
      %v12886 = vpop.f32.mrf.mxu0
      %v12887 = vadd.f32 0.0, %v12886
      %v12888 = vpop.f32.mrf.mxu0
      %v12889 = vadd.f32 0.0, %v12888
      %12890 = vmatmul.bf16.gmra.mxu0 %v12805
      %v12891 = vpop.f32.mrf.mxu0
      %v12892 = vadd.f32 0.0, %v12891
      %v12893 = vpop.f32.mrf.mxu0
      %v12894 = vadd.f32 0.0, %v12893
      %12895 = vmatmul.bf16.gmra.mxu0 %v12807
      %v12896 = vpop.f32.mrf.mxu0
      %v12897 = vadd.f32 0.0, %v12896
      %v12898 = vpop.f32.mrf.mxu0
      %v12899 = vadd.f32 0.0, %v12898
      %12900 = vmatmul.bf16.gmra.mxu0 %v12809
      %v12901 = vpop.f32.mrf.mxu0
      %v12902 = vadd.f32 0.0, %v12901
      %v12903 = vpop.f32.mrf.mxu0
      %v12904 = vadd.f32 0.0, %v12903
      %12905 = vmatmul.bf16.gmra.mxu0 %v12811
      %v12906 = vpop.f32.mrf.mxu0
      %v12907 = vadd.f32 0.0, %v12906
      %v12908 = vpop.f32.mrf.mxu0
      %v12909 = vadd.f32 0.0, %v12908
      %12910 = vmatmul.bf16.gmra.mxu0 %v12813
      %v12911 = vpop.f32.mrf.mxu0
      %v12912 = vadd.f32 0.0, %v12911
      %v12913 = vpop.f32.mrf.mxu0
      %v12914 = vadd.f32 0.0, %v12913
      %12915 = vmatmul.bf16.gmra.mxu0 %v12815
      %v12916 = vpop.f32.mrf.mxu0
      %v12917 = vadd.f32 0.0, %v12916
      %v12918 = vpop.f32.mrf.mxu0
      %v12919 = vadd.f32 0.0, %v12918
      %12920 = vdwg.mxu0
      %v12921 = vadd.f32 %v12763, %v12882
      %v12922 = vadd.f32 %v12764, %v12884
      %v12923 = vadd.f32 %v12765, %v12887
      %v12924 = vadd.f32 %v12766, %v12889
      %v12925 = vadd.f32 %v12767, %v12892
      %v12926 = vadd.f32 %v12768, %v12894
      %v12927 = vadd.f32 %v12769, %v12897
      %v12928 = vadd.f32 %v12770, %v12899
      %v12929 = vadd.f32 %v12771, %v12902
      %v12930 = vadd.f32 %v12772, %v12904
      %v12931 = vadd.f32 %v12773, %v12907
      %v12932 = vadd.f32 %v12774, %v12909
      %v12933 = vadd.f32 %v12775, %v12912
      %v12934 = vadd.f32 %v12776, %v12914
      %v12935 = vadd.f32 %v12777, %v12917
      %v12936 = vadd.f32 %v12778, %v12919
      %v12937 = vld [vmem:[%s6] sm:$0x1]
      %v12939 = vperm.slane %v12937, 0
      %v12941 = vmul.f32 %v12921, %v12939
      %v12942 = vmul.f32 %v12922, %v12939
      %v12943 = vmul.f32 %v12923, %v12939
      %v12944 = vmul.f32 %v12924, %v12939
      %v12945 = vmul.f32 %v12925, %v12939
      %v12946 = vmul.f32 %v12926, %v12939
      %v12947 = vmul.f32 %v12927, %v12939
      %v12948 = vmul.f32 %v12928, %v12939
      %v12949 = vmul.f32 %v12929, %v12939
      %v12950 = vmul.f32 %v12930, %v12939
      %v12951 = vmul.f32 %v12931, %v12939
      %v12952 = vmul.f32 %v12932, %v12939
      %v12953 = vmul.f32 %v12933, %v12939
      %v12954 = vmul.f32 %v12934, %v12939
      %v12955 = vmul.f32 %v12935, %v12939
      %v12956 = vmul.f32 %v12936, %v12939
      %v12957 = vld [vmem:[%s7] sm:$0x1]
      %v12959 = vperm.slane %v12957, 0
      %v12961 = vadd.f32 %v12941, %v12959
      %v12962 = vadd.f32 %v12942, %v12959
      %v12963 = vadd.f32 %v12943, %v12959
      %v12964 = vadd.f32 %v12944, %v12959
      %v12965 = vadd.f32 %v12945, %v12959
      %v12966 = vadd.f32 %v12946, %v12959
      %v12967 = vadd.f32 %v12947, %v12959
      %v12968 = vadd.f32 %v12948, %v12959
      %v12969 = vadd.f32 %v12949, %v12959
      %v12970 = vadd.f32 %v12950, %v12959
      %v12971 = vadd.f32 %v12951, %v12959
      %v12972 = vadd.f32 %v12952, %v12959
      %v12973 = vadd.f32 %v12953, %v12959
      %v12974 = vadd.f32 %v12954, %v12959
      %v12975 = vadd.f32 %v12955, %v12959
      %v12976 = vadd.f32 %v12956, %v12959
      %v12977 = vmax.f32 %v12961, 0.0
      %v12978 = vmax.f32 %v12962, 0.0
      %v12979 = vmax.f32 %v12963, 0.0
      %v12980 = vmax.f32 %v12964, 0.0
      %v12981 = vmax.f32 %v12965, 0.0
      %v12982 = vmax.f32 %v12966, 0.0
      %v12983 = vmax.f32 %v12967, 0.0
      %v12984 = vmax.f32 %v12968, 0.0
      %v12985 = vmax.f32 %v12969, 0.0
      %v12986 = vmax.f32 %v12970, 0.0
      %v12987 = vmax.f32 %v12971, 0.0
      %v12988 = vmax.f32 %v12972, 0.0
      %v12989 = vmax.f32 %v12973, 0.0
      %v12990 = vmax.f32 %v12974, 0.0
      %v12991 = vmax.f32 %v12975, 0.0
      %v12992 = vmax.f32 %v12976, 0.0
      %v12993 = vpack.c.bf16 %v12977, %v12977
      %v12994 = vpack.c.bf16 %v12978, %v12978
      %v12995 = vpack.c.bf16 %v12979, %v12979
      %v12996 = vpack.c.bf16 %v12980, %v12980
      %v12997 = vpack.c.bf16 %v12981, %v12981
      %v12998 = vpack.c.bf16 %v12982, %v12982
      %v12999 = vpack.c.bf16 %v12983, %v12983
      %v13000 = vpack.c.bf16 %v12984, %v12984
      %v13001 = vpack.c.bf16 %v12985, %v12985
      %v13002 = vpack.c.bf16 %v12986, %v12986
      %v13003 = vpack.c.bf16 %v12987, %v12987
      %v13004 = vpack.c.bf16 %v12988, %v12988
      %v13005 = vpack.c.bf16 %v12989, %v12989
      %v13006 = vpack.c.bf16 %v12990, %v12990
      %v13007 = vpack.c.bf16 %v12991, %v12991
      %v13008 = vpack.c.bf16 %v12992, %v12992
      %13009 = vst [vmem:[%s325 + $0x80] sm:$0xf] %v12993
      %13010 = vst [vmem:[%s325 + $0x84] sm:$0xf] %v12994
      %13011 = vst [vmem:[%s325 + $0x88] sm:$0xf] %v12995
      %13012 = vst [vmem:[%s325 + $0x8c] sm:$0xf] %v12996
      %13013 = vst [vmem:[%s325 + $0x90] sm:$0xf] %v12997
      %13014 = vst [vmem:[%s325 + $0x94] sm:$0xf] %v12998
      %13015 = vst [vmem:[%s325 + $0x98] sm:$0xf] %v12999
      %13016 = vst [vmem:[%s325 + $0x9c] sm:$0xf] %v13000
      %13017 = vst [vmem:[%s325 + $0xa0] sm:$0xf] %v13001
      %13018 = vst [vmem:[%s325 + $0xa4] sm:$0xf] %v13002
      %13019 = vst [vmem:[%s325 + $0xa8] sm:$0xf] %v13003
      %13020 = vst [vmem:[%s325 + $0xac] sm:$0xf] %v13004
      %13021 = vst [vmem:[%s325 + $0xb0] sm:$0xf] %v13005
      %13022 = vst [vmem:[%s325 + $0xb4] sm:$0xf] %v13006
      %13023 = vst [vmem:[%s325 + $0xb8] sm:$0xf] %v13007
      %13024 = vst [vmem:[%s325 + $0xbc] sm:$0xf] %v13008
      %p13025 = scmp.lt.s32.totalorder %s19, 1
      %s13026 = scalar_select %p13025, %s19, 1
      %s13027 = smul.addr %s13026, 48
      %s13028 = smul.addr %s13027, 4
      %s13029 = scalar_lea.vmem %s8, %s13028
      // Predicated region
      $region53: #{up_forward.1} parent=51 // pred_check
        %p13030 = pneg %p215
      $region54: #{up_forward.1} parent=51 // pred_check_branch
        %13032 = sbr.rel (%p13030) target = $region56
      $region55: #{up_forward.1} parent=51 // pred_region
        _
      $region56: #{up_forward.1} parent=51 // pred_fallthru
        _
    $region52: #{up_forward.1} parent=5 // pred_fallthru
      _
    %p13033 = scmp.le.s32.totalorder 2, %s14
    // Predicated region
    $region57: #{up_forward.1} parent=5 // pred_check
      %p13034 = pneg %p13033
    $region58: #{up_forward.1} parent=5 // pred_check_branch
      %13036 = sbr.rel (%p13034) target = $region60
    $region59: #{up_forward.1} parent=5 // pred_region
      %s13037 = ssub.s32 %s14, 2
      // Predicated region
      $region61: #{up_forward.1} parent=59 // pred_check
        %p13038 = pneg %p221
      $region62: #{up_forward.1} parent=59 // pred_check_branch
        %13040 = sbr.rel (%p13038) target = $region64
      $region63: #{up_forward.1} parent=59 // pred_region
        %p13041 = scmp.lt.s32.totalorder %s20, 1
        %s13042 = scalar_select %p13041, %s20, 1
        %s13043 = smul.addr %s13042, 48
        %s13044 = smul.addr %s13043, 4
        %s13045 = scalar_lea.vmem %s8, %s13044
      $region64: #{up_forward.1} parent=59 // pred_fallthru
        _
    $region60: #{up_forward.1} parent=5 // pred_fallthru
      _
  $region6: #{up_forward.1} parent=0 // loop_footer
    %s18 = sadd.s32 1, %s14
  $region7: #{up_forward.1} parent=0 // loop_footer_branch
    %13 = sbr.rel target = $region3
  $region8: #{up_forward.1} parent=0 // loop_exit
    _

</llo_original>
